<compile_context>
chip_gen: v6e
topology: v6e:2x2x1
jax: 0.10.0
libtpu: 0.0.40
codegen_flags: <defaults>
</compile_context>

<pallas_src>
import jax
import jax.numpy as jnp
from jax import lax
from jax.experimental import pallas as pl
from jax.experimental.pallas import tpu as pltpu


def _round_up(x, m):
    return ((x + m - 1) // m) * m


def _birnn_attention_kernel(
    emb_ref,    # [S, E, TB]    bf16  embedded tokens, feature-major (lane = batch)
    len_ref,    # [1, TB]       i32   sequence lengths (>= 1)
    win_ref,    # [8H, E]       bf16  [Wih_f ; Wih_b]
    whh_ref,    # [8H, 2H]      bf16  block_diag(Whh_f, Whh_b)
    bct_ref,    # [8H, 1]       f32   [b_f ; b_b]  (b_ih + b_hh per direction)
    awf_ref,    # [H, 1]        f32   attention weight (fwd half)
    awb_ref,    # [H, 1]        f32   attention weight (bwd half)
    ab_ref,     # [1, 1]        f32   attention bias
    wfc_ref,    # [Opad, 2H]    bf16  fc_binary weight (rows padded)
    bfc_ref,    # [Opad, 1]     f32   fc_binary bias (padded)
    out_ref,    # [Opad, TB]    f32   logits, feature-major
    ginf_ref,   # scratch VMEM [S, 4H, TB] bf16  fwd input-gate preactivations
    ginb_ref,   # scratch VMEM [S, 4H, TB] bf16  bwd input-gate preactivations
    outf_ref,   # scratch VMEM [S, H, TB]  bf16  fwd hidden states
    outb_ref,   # scratch VMEM [S, H, TB]  bf16  bwd hidden states
):
    S, E, TB = emb_ref.shape
    H = awf_ref.shape[0]
    G = 4 * H

    # ---- hoisted input projection, chunked over S, written straight to bf16 scratch ----
    win = win_ref[...]                                     # bf16 [8H, E]
    bct = bct_ref[...]                                     # f32  [8H, 1]

    def proj_body(t, _):
        g = jnp.dot(win, emb_ref[t], preferred_element_type=jnp.float32) + bct
        g = g.astype(jnp.bfloat16)                         # [8H, TB]
        ginf_ref[t] = g[:G]
        ginb_ref[t] = g[G:]
        return 0

    lax.fori_loop(0, S, proj_body, 0, unroll=(S if S <= 16 else 4))

    # ---- loop-invariant reads hoisted off the serial path ----
    whh = whh_ref[...]                                     # bf16 [8H, 2H]
    lens = len_ref[...]                                    # i32  [1, TB]

    def cell(g, h, c, m):
        # g: [4H, TB] f32   h/c: [H, TB] f32   m: [1, TB] bool
        i = jax.nn.sigmoid(g[0:H])
        f = jax.nn.sigmoid(g[H:2 * H])
        u = jnp.tanh(g[2 * H:3 * H])
        o = jax.nn.sigmoid(g[3 * H:4 * H])
        c_new = f * c + i * u
        h_new = o * jnp.tanh(c_new)
        # packed-sequence semantics: only advance state on valid timesteps
        return jnp.where(m, h_new, h), jnp.where(m, c_new, c)

    def step(t, carry):
        h_cat, c_f, c_b = carry                            # [2H,TB], [H,TB], [H,TB] f32
        rt = S - 1 - t
        # single fused block-diagonal recurrent matmul on the serial critical path
        g = jnp.dot(whh, h_cat.astype(jnp.bfloat16),
                    preferred_element_type=jnp.float32)    # [8H, TB]
        gf = g[:G] + ginf_ref[t].astype(jnp.float32)
        gb = g[G:] + ginb_ref[rt].astype(jnp.float32)
        m_f = lens > t
        m_b = lens > rt
        h_f, c_f = cell(gf, h_cat[:H], c_f, m_f)
        h_b, c_b = cell(gb, h_cat[H:], c_b, m_b)
        outf_ref[t] = jnp.where(m_f, h_f, 0.0).astype(jnp.bfloat16)
        outb_ref[rt] = jnp.where(m_b, h_b, 0.0).astype(jnp.bfloat16)
        return jnp.concatenate([h_f, h_b], axis=0), c_f, c_b

    carry = (jnp.zeros((2 * H, TB), jnp.float32),
             jnp.zeros((H, TB), jnp.float32),
             jnp.zeros((H, TB), jnp.float32))
    if S <= 16:
        # very small static S: full unroll lets the scheduler interleave fwd/bwd chains
        for t in range(S):
            carry = step(t, carry)
    else:
        # bounded unroll keeps fwd/bwd interleaving visible without vreg-spill blowup
        carry = lax.fori_loop(0, S, step, carry, unroll=2)

    # ---- attention over the sequence (lane-dense [S, TB] statistics) ----
    out_f = outf_ref[...].astype(jnp.float32)              # [S, H, TB]
    out_b = outb_ref[...].astype(jnp.float32)
    scores = (jnp.sum(out_f * awf_ref[...][None], axis=1)
              + jnp.sum(out_b * awb_ref[...][None], axis=1)
              + ab_ref[...])                               # [S, TB]
    t_iota = lax.broadcasted_iota(jnp.int32, (S, TB), 0)
    valid = t_iota < lens                                  # [S, TB] bool
    scores = jnp.where(valid, scores, -jnp.inf)
    m_max = jnp.max(scores, axis=0, keepdims=True)         # [1, TB]
    e = jnp.exp(scores - m_max) * valid.astype(jnp.float32)
    inv_denom = pl.reciprocal(jnp.sum(e, axis=0, keepdims=True), approx=True)
    w = e * inv_denom                                      # [S, TB]
    ctx_f = jnp.sum(w[:, None, :] * out_f, axis=0)         # [H, TB]
    ctx_b = jnp.sum(w[:, None, :] * out_b, axis=0)

    # ---- fc_binary ----
    ctx = jnp.concatenate([ctx_f, ctx_b], axis=0).astype(jnp.bfloat16)    # [2H, TB]
    out_ref[...] = (jnp.dot(wfc_ref[...], ctx, preferred_element_type=jnp.float32)
                    + bfc_ref[...])


def _estimate_tile_vmem_bytes(S, E, H, O_pad, TB):
    """Rough per-tile VMEM footprint in bytes, including (16,128) layout padding."""
    lane = max(_round_up(TB, 128), 128)

    def sub16(n):
        return _round_up(n, 16)

    scratch = (2 * S * sub16(4 * H) + 2 * S * sub16(H)) * lane * 2          # bf16
    emb_tile = 2 * S * sub16(E) * lane * 2                                  # double-buffered bf16
    out_tile = 2 * _round_up(O_pad, 8) * lane * 4                           # f32
    weights = (2 * (8 * H) * (_round_up(E, 128) + _round_up(2 * H, 128)) * 2
               + 2 * sub16(O_pad) * _round_up(2 * H, 128) * 2)
    return scratch + emb_tile + out_tile + weights + (1 << 20)


def _pick_batch_tile(B, S, E, H, O_pad, budget=40 << 20):
    """Pick batch tile TB (lane dim).  For large batches keep NB >= 2 grid steps so
    the next tile's DMA hides under the current tile's latency-bound recurrence, and
    keep the per-tile footprint under `budget` (safe for v7x's 64 MiB/TC)."""
    if B <= 128:
        TB = _round_up(B, 8)          # single tile; lane dim must equal padded batch
        return TB, 1, TB
    TB = 128
    while True:
        nxt = TB * 2
        if _round_up(B, nxt) // nxt < 2:                               # keep NB >= 2
            break
        if _estimate_tile_vmem_bytes(S, E, H, O_pad, nxt) > budget:    # keep within VMEM
            break
        TB = nxt
    B_pad = _round_up(B, TB)
    return TB, B_pad // TB, B_pad


def init_params(key, vocab_size, embedding_dim, hidden_dim, output_dim, pad_idx):
    E, H, O = embedding_dim, hidden_dim, output_dim
    ks = jax.random.split(key, 12)

    def u(k, shape, scale):
        return jax.random.uniform(k, shape, jnp.float32, -scale, scale)

    s_lstm = 1.0 / (H ** 0.5)
    s_head = 1.0 / ((2 * H) ** 0.5)

    emb = 0.1 * jax.random.normal(ks[0], (vocab_size, E), jnp.float32)
    emb = emb.at[pad_idx].set(0.0)                                     # nn.Embedding padding_idx

    return dict(
        embedding=emb,
        wih_f=u(ks[1], (4 * H, E), s_lstm), whh_f=u(ks[2], (4 * H, H), s_lstm),
        bih_f=u(ks[3], (4 * H,), s_lstm),   bhh_f=u(ks[4], (4 * H,), s_lstm),
        wih_b=u(ks[5], (4 * H, E), s_lstm), whh_b=u(ks[6], (4 * H, H), s_lstm),
        bih_b=u(ks[7], (4 * H,), s_lstm),   bhh_b=u(ks[8], (4 * H,), s_lstm),
        att_w=u(ks[9], (1, 2 * H), s_head), att_b=jnp.zeros((1,), jnp.float32),
        fc_w=u(ks[10], (O, 2 * H), s_head), fc_b=u(ks[11], (O,), s_head),
    )


def birnn_attention(text, text_lengths, params):
    """text: [B, S] int32, text_lengths: [B] int32 -> logits [B, O]."""
    B, S = text.shape
    E = params["embedding"].shape[1]
    H = params["whh_f"].shape[1]
    O = params["fc_w"].shape[0]
    O_pad = _round_up(max(O, 8), 8)

    # ---- glue: embedding gather (dropout = identity at inference) ----
    # TODO(synk): training-mode dropout is not implemented (inference only).
    embedded = params["embedding"][text].astype(jnp.bfloat16)         # [B, S, E] bf16
    emb_fm = jnp.transpose(embedded, (1, 2, 0))                       # [S, E, B] feature-major

    # pack_padded_sequence requires lengths >= 1; clamping also guards the softmax
    lengths = jnp.maximum(text_lengths.astype(jnp.int32), 1)

    TB, NB, B_pad = _pick_batch_tile(B, S, E, H, O_pad)
    if B_pad != B:
        emb_fm = jnp.pad(emb_fm, ((0, 0), (0, 0), (0, B_pad - B)))
        lengths = jnp.concatenate(
            [lengths, jnp.ones((B_pad - B,), jnp.int32)], axis=0)
    len_row = lengths.reshape(1, B_pad)

    # ---- weights: fuse / block-diag / pad / cast in the wrapper ----
    win_cat = jnp.concatenate([params["wih_f"], params["wih_b"]],
                              axis=0).astype(jnp.bfloat16)            # [8H, E]
    b_cat = jnp.concatenate([params["bih_f"] + params["bhh_f"],
                             params["bih_b"] + params["bhh_b"]],
                            axis=0).reshape(8 * H, 1)                 # [8H, 1] f32
    whh_blk = jnp.zeros((8 * H, 2 * H), jnp.float32)
    whh_blk = whh_blk.at[:4 * H, :H].set(params["whh_f"])
    whh_blk = whh_blk.at[4 * H:, H:].set(params["whh_b"])
    whh_blk = whh_blk.astype(jnp.bfloat16)                            # [8H, 2H]
    aw_f = params["att_w"][0, :H].reshape(H, 1)
    aw_b = params["att_w"][0, H:].reshape(H, 1)
    att_b = params["att_b"].reshape(1, 1)
    wfc = jnp.zeros((O_pad, 2 * H), jnp.float32).at[:O].set(params["fc_w"])
    wfc = wfc.astype(jnp.bfloat16)                                    # [Opad, 2H]
    bfc = jnp.zeros((O_pad, 1), jnp.float32).at[:O, 0].set(params["fc_b"])

    def full(shape):
        return pl.BlockSpec(shape, lambda b: (0,) * len(shape))

    in_specs = [
        pl.BlockSpec((S, E, TB), lambda b: (0, 0, b)),                # emb (batch in lanes)
        pl.BlockSpec((1, TB), lambda b: (0, b)),                      # lengths
        full((8 * H, E)),                                             # win_cat
        full((8 * H, 2 * H)),                                         # whh_blk
        full((8 * H, 1)),                                             # b_cat
        full((H, 1)), full((H, 1)), full((1, 1)),                     # attention
        full((O_pad, 2 * H)), full((O_pad, 1)),                       # fc_binary
    ]
    out_specs = pl.BlockSpec((O_pad, TB), lambda b: (0, b))

    est = _estimate_tile_vmem_bytes(S, E, H, O_pad, TB)
    vmem_limit = max(32 << 20, min(int(est * 1.5) + (8 << 20), 63 << 20))

    logits_fm = pl.pallas_call(
        _birnn_attention_kernel,
        out_shape=jax.ShapeDtypeStruct((O_pad, B_pad), jnp.float32),
        grid=(NB,),
        in_specs=in_specs,
        out_specs=out_specs,
        scratch_shapes=[
            pltpu.VMEM((S, 4 * H, TB), jnp.bfloat16),                 # fwd gate preacts
            pltpu.VMEM((S, 4 * H, TB), jnp.bfloat16),                 # bwd gate preacts
            pltpu.VMEM((S, H, TB), jnp.bfloat16),                     # fwd hidden states
            pltpu.VMEM((S, H, TB), jnp.bfloat16),                     # bwd hidden states
        ],
        compiler_params=pltpu.CompilerParams(
            dimension_semantics=("parallel",),                        # megacore / v7x 2 TCs
            vmem_limit_bytes=vmem_limit,
        ),
    )(emb_fm, len_row, win_cat, whh_blk, b_cat,
      aw_f, aw_b, att_b, wfc, bfc)

    return logits_fm[:O, :B].T                                        # [B, O]


def birnn_attention_ref(text, text_lengths, params):
    """Pure-JAX f32 reference replicating the PyTorch forward semantics."""
    B, S = text.shape
    H = params["whh_f"].shape[1]
    embedded = params["embedding"][text].astype(jnp.float32)          # [B, S, E]
    mask = (jnp.arange(S)[None, :] < text_lengths[:, None]).astype(jnp.float32)  # [B, S]

    def direction(wih, whh, b, reverse):
        def step(carry, xs):
            h, c = carry
            x, m = xs
            gates = x @ wih.T + h @ whh.T + b
            i = jax.nn.sigmoid(gates[:, :H]); f = jax.nn.sigmoid(gates[:, H:2 * H])
            g = jnp.tanh(gates[:, 2 * H:3 * H]); o = jax.nn.sigmoid(gates[:, 3 * H:])
            c_new = f * c + i * g
            h_new = o * jnp.tanh(c_new)
            m_ = m[:, None]
            h = jnp.where(m_ > 0, h_new, h)
            c = jnp.where(m_ > 0, c_new, c)
            return (h, c), h * m_
        xs = (jnp.transpose(embedded, (1, 0, 2)), mask.T)
        init = (jnp.zeros((B, H), jnp.float32), jnp.zeros((B, H), jnp.float32))
        _, outs = lax.scan(step, init, xs, reverse=reverse)
        return jnp.transpose(outs, (1, 0, 2))                         # [B, S, H]

    out_f = direction(params["wih_f"], params["whh_f"], params["bih_f"] + params["bhh_f"], False)
    out_b = direction(params["wih_b"], params["whh_b"], params["bih_b"] + params["bhh_b"], True)
    output = jnp.concatenate([out_f, out_b], axis=-1)                 # [B, S, 2H]
    scores = output @ params["att_w"].T + params["att_b"]             # [B, S, 1]
    scores = jnp.where(mask[..., None] > 0, scores, -jnp.inf)
    w = jax.nn.softmax(scores, axis=1)
    ctx = jnp.sum(w * output, axis=1)                                 # [B, 2H]
    return ctx @ params["fc_w"].T + params["fc_b"]


if __name__ == "__main__":
    vocab_size, embedding_dim, hidden_dim, output_dim, pad_idx = 50, 16, 32, 2, 0
    B, S = 2, 8

    key = jax.random.PRNGKey(0)
    pkey, tkey = jax.random.split(key)
    params = init_params(pkey, vocab_size, embedding_dim, hidden_dim, output_dim, pad_idx)

    text = jax.random.randint(tkey, (B, S), 1, vocab_size, dtype=jnp.int32)
    text_lengths = jnp.array([8, 5], dtype=jnp.int32)
    pad_mask = jnp.arange(S)[None, :] < text_lengths[:, None]
    text = jnp.where(pad_mask, text, pad_idx)

    out = jax.jit(birnn_attention)(text, text_lengths, params)
    out = jax.block_until_ready(out)

    ref = birnn_attention_ref(text, text_lengths, params)
    assert out.shape == (B, output_dim)
    # kernel uses bf16 matmul operands + bf16 sequence scratch (f32 accumulation),
    # so allow a small numeric slack against the f32 reference.
    assert jnp.allclose(out, ref, atol=2e-2, rtol=2e-2), (out, ref)
    print("KERNEL_OK")
</pallas_src>

<mosaic_0001>
module attributes {stable_mosaic.version = 11 : i64} {
  func.func @_birnn_attention_kernel(%arg0: i32, %arg1: memref<8x16x8xbf16, #tpu.memory_space<vmem>>, %arg2: memref<1x8xi32, #tpu.memory_space<vmem>>, %arg3: memref<256x16xbf16, #tpu.memory_space<vmem>>, %arg4: memref<256x64xbf16, #tpu.memory_space<vmem>>, %arg5: memref<256x1xf32, #tpu.memory_space<vmem>>, %arg6: memref<32x1xf32, #tpu.memory_space<vmem>>, %arg7: memref<32x1xf32, #tpu.memory_space<vmem>>, %arg8: memref<1x1xf32, #tpu.memory_space<vmem>>, %arg9: memref<8x64xbf16, #tpu.memory_space<vmem>>, %arg10: memref<8x1xf32, #tpu.memory_space<vmem>>, %arg11: memref<8x8xf32, #tpu.memory_space<vmem>>, %arg12: memref<8x128x8xbf16, #tpu.memory_space<vmem>>, %arg13: memref<8x128x8xbf16, #tpu.memory_space<vmem>>, %arg14: memref<8x32x8xbf16, #tpu.memory_space<vmem>>, %arg15: memref<8x32x8xbf16, #tpu.memory_space<vmem>>) attributes {dimension_semantics = [#tpu.dimension_semantics<parallel>], iteration_bounds = array<i64: 1>, scalar_prefetch = 0 : i64, scratch_operands = 4 : i64, tpu.core_type = #tpu.core_type<tc>, window_params = [{transform_indices = @transform_0, window_bounds = array<i64: 8, 16, 8>}, {transform_indices = @transform_1, window_bounds = array<i64: 1, 8>}, {pipeline_mode = #tpu.pipeline_mode<synchronous>, transform_indices = @transform_2, window_bounds = array<i64: 256, 16>}, {pipeline_mode = #tpu.pipeline_mode<synchronous>, transform_indices = @transform_3, window_bounds = array<i64: 256, 64>}, {pipeline_mode = #tpu.pipeline_mode<synchronous>, transform_indices = @transform_4, window_bounds = array<i64: 256, 1>}, {pipeline_mode = #tpu.pipeline_mode<synchronous>, transform_indices = @transform_5, window_bounds = array<i64: 32, 1>}, {pipeline_mode = #tpu.pipeline_mode<synchronous>, transform_indices = @transform_6, window_bounds = array<i64: 32, 1>}, {pipeline_mode = #tpu.pipeline_mode<synchronous>, transform_indices = @transform_7, window_bounds = array<i64: 1, 1>}, {pipeline_mode = #tpu.pipeline_mode<synchronous>, transform_indices = @transform_8, window_bounds = array<i64: 8, 64>}, {pipeline_mode = #tpu.pipeline_mode<synchronous>, transform_indices = @transform_9, window_bounds = array<i64: 8, 1>}, {transform_indices = @transform_10, window_bounds = array<i64: 8, 8>}]} {
    %c0 = arith.constant 0 : index
    %c0_0 = arith.constant 0 : index
    %0 = vector.load %arg3[%c0, %c0_0] : memref<256x16xbf16, #tpu.memory_space<vmem>>, vector<256x16xbf16>
    %c0_1 = arith.constant 0 : index
    %c0_2 = arith.constant 0 : index
    %1 = vector.load %arg5[%c0_1, %c0_2] : memref<256x1xf32, #tpu.memory_space<vmem>>, vector<256x1xf32>
    %c0_i32 = arith.constant 0 : i32
    %2 = arith.index_cast %c0_i32 : i32 to index
    %c0_3 = arith.constant 0 : index
    %c0_4 = arith.constant 0 : index
    %3 = vector.load %arg1[%2, %c0_3, %c0_4] : memref<8x16x8xbf16, #tpu.memory_space<vmem>>, vector<1x16x8xbf16>
    %4 = vector.shape_cast %3 : vector<1x16x8xbf16> to vector<16x8xbf16>
    %cst = arith.constant dense<0.000000e+00> : vector<256x8xf32>
    %5 = tpu.matmul %0, %4, %cst {dimension_numbers = #tpu.dot_dimension_numbers<[1], [0], [0], [1], [0, 0, 1, 1], [], []>} : vector<256x16xbf16>, vector<16x8xbf16>, vector<256x8xf32> -> vector<256x8xf32>
    %6 = vector.broadcast %1 : vector<256x1xf32> to vector<256x8xf32>
    %7 = arith.addf %5, %6 : vector<256x8xf32>
    %8 = arith.truncf %7 : vector<256x8xf32> to vector<256x8xbf16>
    %9 = vector.extract_strided_slice %8 {offsets = [0, 0], sizes = [128, 8], strides = [1, 1]} : vector<256x8xbf16> to vector<128x8xbf16>
    %10 = arith.index_cast %c0_i32 : i32 to index
    %c0_5 = arith.constant 0 : index
    %c0_6 = arith.constant 0 : index
    %11 = vector.load %arg12[%10, %c0_5, %c0_6] : memref<8x128x8xbf16, #tpu.memory_space<vmem>>, vector<1x128x8xbf16>
    %12 = vector.shape_cast %11 : vector<1x128x8xbf16> to vector<128x8xbf16>
    %13 = vector.shape_cast %9 : vector<128x8xbf16> to vector<1x128x8xbf16>
    tpu.vector_store %arg12[%10, %c0_5, %c0_6], %13 {strides = array<i32>} : memref<8x128x8xbf16, #tpu.memory_space<vmem>>, vector<1x128x8xbf16>,
    %14 = vector.extract_strided_slice %8 {offsets = [128, 0], sizes = [128, 8], strides = [1, 1]} : vector<256x8xbf16> to vector<128x8xbf16>
    %15 = arith.index_cast %c0_i32 : i32 to index
    %c0_7 = arith.constant 0 : index
    %c0_8 = arith.constant 0 : index
    %16 = vector.load %arg13[%15, %c0_7, %c0_8] : memref<8x128x8xbf16, #tpu.memory_space<vmem>>, vector<1x128x8xbf16>
    %17 = vector.shape_cast %16 : vector<1x128x8xbf16> to vector<128x8xbf16>
    %18 = vector.shape_cast %14 : vector<128x8xbf16> to vector<1x128x8xbf16>
    tpu.vector_store %arg13[%15, %c0_7, %c0_8], %18 {strides = array<i32>} : memref<8x128x8xbf16, #tpu.memory_space<vmem>>, vector<1x128x8xbf16>,
    %c1_i32 = arith.constant 1 : i32
    %19 = arith.index_cast %c1_i32 : i32 to index
    %c0_9 = arith.constant 0 : index
    %c0_10 = arith.constant 0 : index
    %20 = vector.load %arg1[%19, %c0_9, %c0_10] : memref<8x16x8xbf16, #tpu.memory_space<vmem>>, vector<1x16x8xbf16>
    %21 = vector.shape_cast %20 : vector<1x16x8xbf16> to vector<16x8xbf16>
    %cst_11 = arith.constant dense<0.000000e+00> : vector<256x8xf32>
    %22 = tpu.matmul %0, %21, %cst_11 {dimension_numbers = #tpu.dot_dimension_numbers<[1], [0], [0], [1], [0, 0, 1, 1], [], []>} : vector<256x16xbf16>, vector<16x8xbf16>, vector<256x8xf32> -> vector<256x8xf32>
    %23 = vector.broadcast %1 : vector<256x1xf32> to vector<256x8xf32>
    %24 = arith.addf %22, %23 : vector<256x8xf32>
    %25 = arith.truncf %24 : vector<256x8xf32> to vector<256x8xbf16>
    %26 = vector.extract_strided_slice %25 {offsets = [0, 0], sizes = [128, 8], strides = [1, 1]} : vector<256x8xbf16> to vector<128x8xbf16>
    %27 = arith.index_cast %c1_i32 : i32 to index
    %c0_12 = arith.constant 0 : index
    %c0_13 = arith.constant 0 : index
    %28 = vector.load %arg12[%27, %c0_12, %c0_13] : memref<8x128x8xbf16, #tpu.memory_space<vmem>>, vector<1x128x8xbf16>
    %29 = vector.shape_cast %28 : vector<1x128x8xbf16> to vector<128x8xbf16>
    %30 = vector.shape_cast %26 : vector<128x8xbf16> to vector<1x128x8xbf16>
    tpu.vector_store %arg12[%27, %c0_12, %c0_13], %30 {strides = array<i32>} : memref<8x128x8xbf16, #tpu.memory_space<vmem>>, vector<1x128x8xbf16>,
    %31 = vector.extract_strided_slice %25 {offsets = [128, 0], sizes = [128, 8], strides = [1, 1]} : vector<256x8xbf16> to vector<128x8xbf16>
    %32 = arith.index_cast %c1_i32 : i32 to index
    %c0_14 = arith.constant 0 : index
    %c0_15 = arith.constant 0 : index
    %33 = vector.load %arg13[%32, %c0_14, %c0_15] : memref<8x128x8xbf16, #tpu.memory_space<vmem>>, vector<1x128x8xbf16>
    %34 = vector.shape_cast %33 : vector<1x128x8xbf16> to vector<128x8xbf16>
    %35 = vector.shape_cast %31 : vector<128x8xbf16> to vector<1x128x8xbf16>
    tpu.vector_store %arg13[%32, %c0_14, %c0_15], %35 {strides = array<i32>} : memref<8x128x8xbf16, #tpu.memory_space<vmem>>, vector<1x128x8xbf16>,
    %c2_i32 = arith.constant 2 : i32
    %36 = arith.index_cast %c2_i32 : i32 to index
    %c0_16 = arith.constant 0 : index
    %c0_17 = arith.constant 0 : index
    %37 = vector.load %arg1[%36, %c0_16, %c0_17] : memref<8x16x8xbf16, #tpu.memory_space<vmem>>, vector<1x16x8xbf16>
    %38 = vector.shape_cast %37 : vector<1x16x8xbf16> to vector<16x8xbf16>
    %cst_18 = arith.constant dense<0.000000e+00> : vector<256x8xf32>
    %39 = tpu.matmul %0, %38, %cst_18 {dimension_numbers = #tpu.dot_dimension_numbers<[1], [0], [0], [1], [0, 0, 1, 1], [], []>} : vector<256x16xbf16>, vector<16x8xbf16>, vector<256x8xf32> -> vector<256x8xf32>
    %40 = vector.broadcast %1 : vector<256x1xf32> to vector<256x8xf32>
    %41 = arith.addf %39, %40 : vector<256x8xf32>
    %42 = arith.truncf %41 : vector<256x8xf32> to vector<256x8xbf16>
    %43 = vector.extract_strided_slice %42 {offsets = [0, 0], sizes = [128, 8], strides = [1, 1]} : vector<256x8xbf16> to vector<128x8xbf16>
    %44 = arith.index_cast %c2_i32 : i32 to index
    %c0_19 = arith.constant 0 : index
    %c0_20 = arith.constant 0 : index
    %45 = vector.load %arg12[%44, %c0_19, %c0_20] : memref<8x128x8xbf16, #tpu.memory_space<vmem>>, vector<1x128x8xbf16>
    %46 = vector.shape_cast %45 : vector<1x128x8xbf16> to vector<128x8xbf16>
    %47 = vector.shape_cast %43 : vector<128x8xbf16> to vector<1x128x8xbf16>
    tpu.vector_store %arg12[%44, %c0_19, %c0_20], %47 {strides = array<i32>} : memref<8x128x8xbf16, #tpu.memory_space<vmem>>, vector<1x128x8xbf16>,
    %48 = vector.extract_strided_slice %42 {offsets = [128, 0], sizes = [128, 8], strides = [1, 1]} : vector<256x8xbf16> to vector<128x8xbf16>
    %49 = arith.index_cast %c2_i32 : i32 to index
    %c0_21 = arith.constant 0 : index
    %c0_22 = arith.constant 0 : index
    %50 = vector.load %arg13[%49, %c0_21, %c0_22] : memref<8x128x8xbf16, #tpu.memory_space<vmem>>, vector<1x128x8xbf16>
    %51 = vector.shape_cast %50 : vector<1x128x8xbf16> to vector<128x8xbf16>
    %52 = vector.shape_cast %48 : vector<128x8xbf16> to vector<1x128x8xbf16>
    tpu.vector_store %arg13[%49, %c0_21, %c0_22], %52 {strides = array<i32>} : memref<8x128x8xbf16, #tpu.memory_space<vmem>>, vector<1x128x8xbf16>,
    %c3_i32 = arith.constant 3 : i32
    %53 = arith.index_cast %c3_i32 : i32 to index
    %c0_23 = arith.constant 0 : index
    %c0_24 = arith.constant 0 : index
    %54 = vector.load %arg1[%53, %c0_23, %c0_24] : memref<8x16x8xbf16, #tpu.memory_space<vmem>>, vector<1x16x8xbf16>
    %55 = vector.shape_cast %54 : vector<1x16x8xbf16> to vector<16x8xbf16>
    %cst_25 = arith.constant dense<0.000000e+00> : vector<256x8xf32>
    %56 = tpu.matmul %0, %55, %cst_25 {dimension_numbers = #tpu.dot_dimension_numbers<[1], [0], [0], [1], [0, 0, 1, 1], [], []>} : vector<256x16xbf16>, vector<16x8xbf16>, vector<256x8xf32> -> vector<256x8xf32>
    %57 = vector.broadcast %1 : vector<256x1xf32> to vector<256x8xf32>
    %58 = arith.addf %56, %57 : vector<256x8xf32>
    %59 = arith.truncf %58 : vector<256x8xf32> to vector<256x8xbf16>
    %60 = vector.extract_strided_slice %59 {offsets = [0, 0], sizes = [128, 8], strides = [1, 1]} : vector<256x8xbf16> to vector<128x8xbf16>
    %61 = arith.index_cast %c3_i32 : i32 to index
    %c0_26 = arith.constant 0 : index
    %c0_27 = arith.constant 0 : index
    %62 = vector.load %arg12[%61, %c0_26, %c0_27] : memref<8x128x8xbf16, #tpu.memory_space<vmem>>, vector<1x128x8xbf16>
    %63 = vector.shape_cast %62 : vector<1x128x8xbf16> to vector<128x8xbf16>
    %64 = vector.shape_cast %60 : vector<128x8xbf16> to vector<1x128x8xbf16>
    tpu.vector_store %arg12[%61, %c0_26, %c0_27], %64 {strides = array<i32>} : memref<8x128x8xbf16, #tpu.memory_space<vmem>>, vector<1x128x8xbf16>,
    %65 = vector.extract_strided_slice %59 {offsets = [128, 0], sizes = [128, 8], strides = [1, 1]} : vector<256x8xbf16> to vector<128x8xbf16>
    %66 = arith.index_cast %c3_i32 : i32 to index
    %c0_28 = arith.constant 0 : index
    %c0_29 = arith.constant 0 : index
    %67 = vector.load %arg13[%66, %c0_28, %c0_29] : memref<8x128x8xbf16, #tpu.memory_space<vmem>>, vector<1x128x8xbf16>
    %68 = vector.shape_cast %67 : vector<1x128x8xbf16> to vector<128x8xbf16>
    %69 = vector.shape_cast %65 : vector<128x8xbf16> to vector<1x128x8xbf16>
    tpu.vector_store %arg13[%66, %c0_28, %c0_29], %69 {strides = array<i32>} : memref<8x128x8xbf16, #tpu.memory_space<vmem>>, vector<1x128x8xbf16>,
    %c4_i32 = arith.constant 4 : i32
    %70 = arith.index_cast %c4_i32 : i32 to index
    %c0_30 = arith.constant 0 : index
    %c0_31 = arith.constant 0 : index
    %71 = vector.load %arg1[%70, %c0_30, %c0_31] : memref<8x16x8xbf16, #tpu.memory_space<vmem>>, vector<1x16x8xbf16>
    %72 = vector.shape_cast %71 : vector<1x16x8xbf16> to vector<16x8xbf16>
    %cst_32 = arith.constant dense<0.000000e+00> : vector<256x8xf32>
    %73 = tpu.matmul %0, %72, %cst_32 {dimension_numbers = #tpu.dot_dimension_numbers<[1], [0], [0], [1], [0, 0, 1, 1], [], []>} : vector<256x16xbf16>, vector<16x8xbf16>, vector<256x8xf32> -> vector<256x8xf32>
    %74 = vector.broadcast %1 : vector<256x1xf32> to vector<256x8xf32>
    %75 = arith.addf %73, %74 : vector<256x8xf32>
    %76 = arith.truncf %75 : vector<256x8xf32> to vector<256x8xbf16>
    %77 = vector.extract_strided_slice %76 {offsets = [0, 0], sizes = [128, 8], strides = [1, 1]} : vector<256x8xbf16> to vector<128x8xbf16>
    %78 = arith.index_cast %c4_i32 : i32 to index
    %c0_33 = arith.constant 0 : index
    %c0_34 = arith.constant 0 : index
    %79 = vector.load %arg12[%78, %c0_33, %c0_34] : memref<8x128x8xbf16, #tpu.memory_space<vmem>>, vector<1x128x8xbf16>
    %80 = vector.shape_cast %79 : vector<1x128x8xbf16> to vector<128x8xbf16>
    %81 = vector.shape_cast %77 : vector<128x8xbf16> to vector<1x128x8xbf16>
    tpu.vector_store %arg12[%78, %c0_33, %c0_34], %81 {strides = array<i32>} : memref<8x128x8xbf16, #tpu.memory_space<vmem>>, vector<1x128x8xbf16>,
    %82 = vector.extract_strided_slice %76 {offsets = [128, 0], sizes = [128, 8], strides = [1, 1]} : vector<256x8xbf16> to vector<128x8xbf16>
    %83 = arith.index_cast %c4_i32 : i32 to index
    %c0_35 = arith.constant 0 : index
    %c0_36 = arith.constant 0 : index
    %84 = vector.load %arg13[%83, %c0_35, %c0_36] : memref<8x128x8xbf16, #tpu.memory_space<vmem>>, vector<1x128x8xbf16>
    %85 = vector.shape_cast %84 : vector<1x128x8xbf16> to vector<128x8xbf16>
    %86 = vector.shape_cast %82 : vector<128x8xbf16> to vector<1x128x8xbf16>
    tpu.vector_store %arg13[%83, %c0_35, %c0_36], %86 {strides = array<i32>} : memref<8x128x8xbf16, #tpu.memory_space<vmem>>, vector<1x128x8xbf16>,
    %c5_i32 = arith.constant 5 : i32
    %87 = arith.index_cast %c5_i32 : i32 to index
    %c0_37 = arith.constant 0 : index
    %c0_38 = arith.constant 0 : index
    %88 = vector.load %arg1[%87, %c0_37, %c0_38] : memref<8x16x8xbf16, #tpu.memory_space<vmem>>, vector<1x16x8xbf16>
    %89 = vector.shape_cast %88 : vector<1x16x8xbf16> to vector<16x8xbf16>
    %cst_39 = arith.constant dense<0.000000e+00> : vector<256x8xf32>
    %90 = tpu.matmul %0, %89, %cst_39 {dimension_numbers = #tpu.dot_dimension_numbers<[1], [0], [0], [1], [0, 0, 1, 1], [], []>} : vector<256x16xbf16>, vector<16x8xbf16>, vector<256x8xf32> -> vector<256x8xf32>
    %91 = vector.broadcast %1 : vector<256x1xf32> to vector<256x8xf32>
    %92 = arith.addf %90, %91 : vector<256x8xf32>
    %93 = arith.truncf %92 : vector<256x8xf32> to vector<256x8xbf16>
    %94 = vector.extract_strided_slice %93 {offsets = [0, 0], sizes = [128, 8], strides = [1, 1]} : vector<256x8xbf16> to vector<128x8xbf16>
    %95 = arith.index_cast %c5_i32 : i32 to index
    %c0_40 = arith.constant 0 : index
    %c0_41 = arith.constant 0 : index
    %96 = vector.load %arg12[%95, %c0_40, %c0_41] : memref<8x128x8xbf16, #tpu.memory_space<vmem>>, vector<1x128x8xbf16>
    %97 = vector.shape_cast %96 : vector<1x128x8xbf16> to vector<128x8xbf16>
    %98 = vector.shape_cast %94 : vector<128x8xbf16> to vector<1x128x8xbf16>
    tpu.vector_store %arg12[%95, %c0_40, %c0_41], %98 {strides = array<i32>} : memref<8x128x8xbf16, #tpu.memory_space<vmem>>, vector<1x128x8xbf16>,
    %99 = vector.extract_strided_slice %93 {offsets = [128, 0], sizes = [128, 8], strides = [1, 1]} : vector<256x8xbf16> to vector<128x8xbf16>
    %100 = arith.index_cast %c5_i32 : i32 to index
    %c0_42 = arith.constant 0 : index
    %c0_43 = arith.constant 0 : index
    %101 = vector.load %arg13[%100, %c0_42, %c0_43] : memref<8x128x8xbf16, #tpu.memory_space<vmem>>, vector<1x128x8xbf16>
    %102 = vector.shape_cast %101 : vector<1x128x8xbf16> to vector<128x8xbf16>
    %103 = vector.shape_cast %99 : vector<128x8xbf16> to vector<1x128x8xbf16>
    tpu.vector_store %arg13[%100, %c0_42, %c0_43], %103 {strides = array<i32>} : memref<8x128x8xbf16, #tpu.memory_space<vmem>>, vector<1x128x8xbf16>,
    %c6_i32 = arith.constant 6 : i32
    %104 = arith.index_cast %c6_i32 : i32 to index
    %c0_44 = arith.constant 0 : index
    %c0_45 = arith.constant 0 : index
    %105 = vector.load %arg1[%104, %c0_44, %c0_45] : memref<8x16x8xbf16, #tpu.memory_space<vmem>>, vector<1x16x8xbf16>
    %106 = vector.shape_cast %105 : vector<1x16x8xbf16> to vector<16x8xbf16>
    %cst_46 = arith.constant dense<0.000000e+00> : vector<256x8xf32>
    %107 = tpu.matmul %0, %106, %cst_46 {dimension_numbers = #tpu.dot_dimension_numbers<[1], [0], [0], [1], [0, 0, 1, 1], [], []>} : vector<256x16xbf16>, vector<16x8xbf16>, vector<256x8xf32> -> vector<256x8xf32>
    %108 = vector.broadcast %1 : vector<256x1xf32> to vector<256x8xf32>
    %109 = arith.addf %107, %108 : vector<256x8xf32>
    %110 = arith.truncf %109 : vector<256x8xf32> to vector<256x8xbf16>
    %111 = vector.extract_strided_slice %110 {offsets = [0, 0], sizes = [128, 8], strides = [1, 1]} : vector<256x8xbf16> to vector<128x8xbf16>
    %112 = arith.index_cast %c6_i32 : i32 to index
    %c0_47 = arith.constant 0 : index
    %c0_48 = arith.constant 0 : index
    %113 = vector.load %arg12[%112, %c0_47, %c0_48] : memref<8x128x8xbf16, #tpu.memory_space<vmem>>, vector<1x128x8xbf16>
    %114 = vector.shape_cast %113 : vector<1x128x8xbf16> to vector<128x8xbf16>
    %115 = vector.shape_cast %111 : vector<128x8xbf16> to vector<1x128x8xbf16>
    tpu.vector_store %arg12[%112, %c0_47, %c0_48], %115 {strides = array<i32>} : memref<8x128x8xbf16, #tpu.memory_space<vmem>>, vector<1x128x8xbf16>,
    %116 = vector.extract_strided_slice %110 {offsets = [128, 0], sizes = [128, 8], strides = [1, 1]} : vector<256x8xbf16> to vector<128x8xbf16>
    %117 = arith.index_cast %c6_i32 : i32 to index
    %c0_49 = arith.constant 0 : index
    %c0_50 = arith.constant 0 : index
    %118 = vector.load %arg13[%117, %c0_49, %c0_50] : memref<8x128x8xbf16, #tpu.memory_space<vmem>>, vector<1x128x8xbf16>
    %119 = vector.shape_cast %118 : vector<1x128x8xbf16> to vector<128x8xbf16>
    %120 = vector.shape_cast %116 : vector<128x8xbf16> to vector<1x128x8xbf16>
    tpu.vector_store %arg13[%117, %c0_49, %c0_50], %120 {strides = array<i32>} : memref<8x128x8xbf16, #tpu.memory_space<vmem>>, vector<1x128x8xbf16>,
    %c7_i32 = arith.constant 7 : i32
    %121 = arith.index_cast %c7_i32 : i32 to index
    %c0_51 = arith.constant 0 : index
    %c0_52 = arith.constant 0 : index
    %122 = vector.load %arg1[%121, %c0_51, %c0_52] : memref<8x16x8xbf16, #tpu.memory_space<vmem>>, vector<1x16x8xbf16>
    %123 = vector.shape_cast %122 : vector<1x16x8xbf16> to vector<16x8xbf16>
    %cst_53 = arith.constant dense<0.000000e+00> : vector<256x8xf32>
    %124 = tpu.matmul %0, %123, %cst_53 {dimension_numbers = #tpu.dot_dimension_numbers<[1], [0], [0], [1], [0, 0, 1, 1], [], []>} : vector<256x16xbf16>, vector<16x8xbf16>, vector<256x8xf32> -> vector<256x8xf32>
    %125 = vector.broadcast %1 : vector<256x1xf32> to vector<256x8xf32>
    %126 = arith.addf %124, %125 : vector<256x8xf32>
    %127 = arith.truncf %126 : vector<256x8xf32> to vector<256x8xbf16>
    %128 = vector.extract_strided_slice %127 {offsets = [0, 0], sizes = [128, 8], strides = [1, 1]} : vector<256x8xbf16> to vector<128x8xbf16>
    %129 = arith.index_cast %c7_i32 : i32 to index
    %c0_54 = arith.constant 0 : index
    %c0_55 = arith.constant 0 : index
    %130 = vector.load %arg12[%129, %c0_54, %c0_55] : memref<8x128x8xbf16, #tpu.memory_space<vmem>>, vector<1x128x8xbf16>
    %131 = vector.shape_cast %130 : vector<1x128x8xbf16> to vector<128x8xbf16>
    %132 = vector.shape_cast %128 : vector<128x8xbf16> to vector<1x128x8xbf16>
    tpu.vector_store %arg12[%129, %c0_54, %c0_55], %132 {strides = array<i32>} : memref<8x128x8xbf16, #tpu.memory_space<vmem>>, vector<1x128x8xbf16>,
    %133 = vector.extract_strided_slice %127 {offsets = [128, 0], sizes = [128, 8], strides = [1, 1]} : vector<256x8xbf16> to vector<128x8xbf16>
    %134 = arith.index_cast %c7_i32 : i32 to index
    %c0_56 = arith.constant 0 : index
    %c0_57 = arith.constant 0 : index
    %135 = vector.load %arg13[%134, %c0_56, %c0_57] : memref<8x128x8xbf16, #tpu.memory_space<vmem>>, vector<1x128x8xbf16>
    %136 = vector.shape_cast %135 : vector<1x128x8xbf16> to vector<128x8xbf16>
    %137 = vector.shape_cast %133 : vector<128x8xbf16> to vector<1x128x8xbf16>
    tpu.vector_store %arg13[%134, %c0_56, %c0_57], %137 {strides = array<i32>} : memref<8x128x8xbf16, #tpu.memory_space<vmem>>, vector<1x128x8xbf16>,
    %c8_i32 = arith.constant 8 : i32
    %c0_58 = arith.constant 0 : index
    %c0_59 = arith.constant 0 : index
    %138 = vector.load %arg4[%c0_58, %c0_59] : memref<256x64xbf16, #tpu.memory_space<vmem>>, vector<256x64xbf16>
    %c0_60 = arith.constant 0 : index
    %c0_61 = arith.constant 0 : index
    %139 = vector.load %arg2[%c0_60, %c0_61] : memref<1x8xi32, #tpu.memory_space<vmem>>, vector<1x8xi32>
    %cst_62 = arith.constant 0.000000e+00 : f32
    %140 = vector.broadcast %cst_62 : f32 to vector<64x8xf32>
    %cst_63 = arith.constant 0.000000e+00 : f32
    %141 = vector.broadcast %cst_63 : f32 to vector<32x8xf32>
    %cst_64 = arith.constant 0.000000e+00 : f32
    %142 = vector.broadcast %cst_64 : f32 to vector<32x8xf32>
    %143 = arith.truncf %140 : vector<64x8xf32> to vector<64x8xbf16>
    %cst_65 = arith.constant dense<0.000000e+00> : vector<256x8xf32>
    %144 = tpu.matmul %138, %143, %cst_65 {dimension_numbers = #tpu.dot_dimension_numbers<[1], [0], [0], [1], [0, 0, 1, 1], [], []>} : vector<256x64xbf16>, vector<64x8xbf16>, vector<256x8xf32> -> vector<256x8xf32>
    %145 = vector.extract_strided_slice %144 {offsets = [0, 0], sizes = [128, 8], strides = [1, 1]} : vector<256x8xf32> to vector<128x8xf32>
    %c0_66 = arith.constant 0 : index
    %c0_67 = arith.constant 0 : index
    %c0_68 = arith.constant 0 : index
    %146 = vector.load %arg12[%c0_66, %c0_67, %c0_68] : memref<8x128x8xbf16, #tpu.memory_space<vmem>>, vector<1x128x8xbf16>
    %147 = vector.shape_cast %146 : vector<1x128x8xbf16> to vector<128x8xbf16>
    %148 = arith.extf %147 : vector<128x8xbf16> to vector<128x8xf32>
    %149 = arith.addf %145, %148 : vector<128x8xf32>
    %150 = vector.extract_strided_slice %144 {offsets = [128, 0], sizes = [128, 8], strides = [1, 1]} : vector<256x8xf32> to vector<128x8xf32>
    %c7 = arith.constant 7 : index
    %c0_69 = arith.constant 0 : index
    %c0_70 = arith.constant 0 : index
    %151 = vector.load %arg13[%c7, %c0_69, %c0_70] : memref<8x128x8xbf16, #tpu.memory_space<vmem>>, vector<1x128x8xbf16>
    %152 = vector.shape_cast %151 : vector<1x128x8xbf16> to vector<128x8xbf16>
    %153 = arith.extf %152 : vector<128x8xbf16> to vector<128x8xf32>
    %154 = arith.addf %150, %153 : vector<128x8xf32>
    %c0_i32_71 = arith.constant 0 : i32
    %155 = vector.broadcast %c0_i32_71 : i32 to vector<1x8xi32>
    %156 = arith.cmpi sgt, %139, %155 : vector<1x8xi32>
    %c7_i32_72 = arith.constant 7 : i32
    %157 = vector.broadcast %c7_i32_72 : i32 to vector<1x8xi32>
    %158 = arith.cmpi sgt, %139, %157 : vector<1x8xi32>
    %159 = vector.extract_strided_slice %140 {offsets = [0, 0], sizes = [32, 8], strides = [1, 1]} : vector<64x8xf32> to vector<32x8xf32>
    %160 = vector.extract_strided_slice %149 {offsets = [0, 0], sizes = [32, 8], strides = [1, 1]} : vector<128x8xf32> to vector<32x8xf32>
    %161 = arith.negf %160 : vector<32x8xf32>
    %162 = math.exp %161 : vector<32x8xf32>
    %cst_73 = arith.constant 1.000000e+00 : f32
    %163 = vector.broadcast %cst_73 : f32 to vector<32x8xf32>
    %164 = arith.addf %163, %162 : vector<32x8xf32>
    %165 = arith.divf %163, %164 : vector<32x8xf32>
    %166 = vector.extract_strided_slice %149 {offsets = [32, 0], sizes = [32, 8], strides = [1, 1]} : vector<128x8xf32> to vector<32x8xf32>
    %167 = arith.negf %166 : vector<32x8xf32>
    %168 = math.exp %167 : vector<32x8xf32>
    %cst_74 = arith.constant 1.000000e+00 : f32
    %169 = vector.broadcast %cst_74 : f32 to vector<32x8xf32>
    %170 = arith.addf %169, %168 : vector<32x8xf32>
    %171 = arith.divf %169, %170 : vector<32x8xf32>
    %172 = vector.extract_strided_slice %149 {offsets = [64, 0], sizes = [32, 8], strides = [1, 1]} : vector<128x8xf32> to vector<32x8xf32>
    %173 = math.tanh %172 : vector<32x8xf32>
    %174 = vector.extract_strided_slice %149 {offsets = [96, 0], sizes = [32, 8], strides = [1, 1]} : vector<128x8xf32> to vector<32x8xf32>
    %175 = arith.negf %174 : vector<32x8xf32>
    %176 = math.exp %175 : vector<32x8xf32>
    %cst_75 = arith.constant 1.000000e+00 : f32
    %177 = vector.broadcast %cst_75 : f32 to vector<32x8xf32>
    %178 = arith.addf %177, %176 : vector<32x8xf32>
    %179 = arith.divf %177, %178 : vector<32x8xf32>
    %180 = arith.mulf %171, %141 : vector<32x8xf32>
    %181 = arith.mulf %165, %173 : vector<32x8xf32>
    %182 = arith.addf %180, %181 : vector<32x8xf32>
    %183 = math.tanh %182 : vector<32x8xf32>
    %184 = arith.mulf %179, %183 : vector<32x8xf32>
    %185 = vector.shape_cast %156 : vector<1x8xi1> to vector<1x8xi1>
    %186 = vector.broadcast %185 : vector<1x8xi1> to vector<32x8xi1>
    %187 = arith.select %186, %184, %159 : vector<32x8xi1>, vector<32x8xf32>
    %188 = vector.shape_cast %156 : vector<1x8xi1> to vector<1x8xi1>
    %189 = vector.broadcast %188 : vector<1x8xi1> to vector<32x8xi1>
    %190 = arith.select %189, %182, %141 : vector<32x8xi1>, vector<32x8xf32>
    %191 = vector.extract_strided_slice %140 {offsets = [32, 0], sizes = [32, 8], strides = [1, 1]} : vector<64x8xf32> to vector<32x8xf32>
    %192 = vector.extract_strided_slice %154 {offsets = [0, 0], sizes = [32, 8], strides = [1, 1]} : vector<128x8xf32> to vector<32x8xf32>
    %193 = arith.negf %192 : vector<32x8xf32>
    %194 = math.exp %193 : vector<32x8xf32>
    %cst_76 = arith.constant 1.000000e+00 : f32
    %195 = vector.broadcast %cst_76 : f32 to vector<32x8xf32>
    %196 = arith.addf %195, %194 : vector<32x8xf32>
    %197 = arith.divf %195, %196 : vector<32x8xf32>
    %198 = vector.extract_strided_slice %154 {offsets = [32, 0], sizes = [32, 8], strides = [1, 1]} : vector<128x8xf32> to vector<32x8xf32>
    %199 = arith.negf %198 : vector<32x8xf32>
    %200 = math.exp %199 : vector<32x8xf32>
    %cst_77 = arith.constant 1.000000e+00 : f32
    %201 = vector.broadcast %cst_77 : f32 to vector<32x8xf32>
    %202 = arith.addf %201, %200 : vector<32x8xf32>
    %203 = arith.divf %201, %202 : vector<32x8xf32>
    %204 = vector.extract_strided_slice %154 {offsets = [64, 0], sizes = [32, 8], strides = [1, 1]} : vector<128x8xf32> to vector<32x8xf32>
    %205 = math.tanh %204 : vector<32x8xf32>
    %206 = vector.extract_strided_slice %154 {offsets = [96, 0], sizes = [32, 8], strides = [1, 1]} : vector<128x8xf32> to vector<32x8xf32>
    %207 = arith.negf %206 : vector<32x8xf32>
    %208 = math.exp %207 : vector<32x8xf32>
    %cst_78 = arith.constant 1.000000e+00 : f32
    %209 = vector.broadcast %cst_78 : f32 to vector<32x8xf32>
    %210 = arith.addf %209, %208 : vector<32x8xf32>
    %211 = arith.divf %209, %210 : vector<32x8xf32>
    %212 = arith.mulf %203, %142 : vector<32x8xf32>
    %213 = arith.mulf %197, %205 : vector<32x8xf32>
    %214 = arith.addf %212, %213 : vector<32x8xf32>
    %215 = math.tanh %214 : vector<32x8xf32>
    %216 = arith.mulf %211, %215 : vector<32x8xf32>
    %217 = vector.shape_cast %158 : vector<1x8xi1> to vector<1x8xi1>
    %218 = vector.broadcast %217 : vector<1x8xi1> to vector<32x8xi1>
    %219 = arith.select %218, %216, %191 : vector<32x8xi1>, vector<32x8xf32>
    %220 = vector.shape_cast %158 : vector<1x8xi1> to vector<1x8xi1>
    %221 = vector.broadcast %220 : vector<1x8xi1> to vector<32x8xi1>
    %222 = arith.select %221, %214, %142 : vector<32x8xi1>, vector<32x8xf32>
    %cst_79 = arith.constant 0.000000e+00 : f32
    %223 = vector.shape_cast %156 : vector<1x8xi1> to vector<1x8xi1>
    %224 = vector.broadcast %223 : vector<1x8xi1> to vector<32x8xi1>
    %225 = vector.broadcast %cst_79 : f32 to vector<32x8xf32>
    %226 = arith.select %224, %187, %225 : vector<32x8xi1>, vector<32x8xf32>
    %227 = arith.truncf %226 : vector<32x8xf32> to vector<32x8xbf16>
    %c0_80 = arith.constant 0 : index
    %c0_81 = arith.constant 0 : index
    %c0_82 = arith.constant 0 : index
    %228 = vector.load %arg14[%c0_80, %c0_81, %c0_82] : memref<8x32x8xbf16, #tpu.memory_space<vmem>>, vector<1x32x8xbf16>
    %229 = vector.shape_cast %228 : vector<1x32x8xbf16> to vector<32x8xbf16>
    %230 = vector.shape_cast %227 : vector<32x8xbf16> to vector<1x32x8xbf16>
    tpu.vector_store %arg14[%c0_80, %c0_81, %c0_82], %230 {strides = array<i32>} : memref<8x32x8xbf16, #tpu.memory_space<vmem>>, vector<1x32x8xbf16>,
    %cst_83 = arith.constant 0.000000e+00 : f32
    %231 = vector.shape_cast %158 : vector<1x8xi1> to vector<1x8xi1>
    %232 = vector.broadcast %231 : vector<1x8xi1> to vector<32x8xi1>
    %233 = vector.broadcast %cst_83 : f32 to vector<32x8xf32>
    %234 = arith.select %232, %219, %233 : vector<32x8xi1>, vector<32x8xf32>
    %235 = arith.truncf %234 : vector<32x8xf32> to vector<32x8xbf16>
    %c7_84 = arith.constant 7 : index
    %c0_85 = arith.constant 0 : index
    %c0_86 = arith.constant 0 : index
    %236 = vector.load %arg15[%c7_84, %c0_85, %c0_86] : memref<8x32x8xbf16, #tpu.memory_space<vmem>>, vector<1x32x8xbf16>
    %237 = vector.shape_cast %236 : vector<1x32x8xbf16> to vector<32x8xbf16>
    %238 = vector.shape_cast %235 : vector<32x8xbf16> to vector<1x32x8xbf16>
    tpu.vector_store %arg15[%c7_84, %c0_85, %c0_86], %238 {strides = array<i32>} : memref<8x32x8xbf16, #tpu.memory_space<vmem>>, vector<1x32x8xbf16>,
    %239 = tpu.concatenate %187, %219 in 0 : vector<32x8xf32>, vector<32x8xf32> -> vector<64x8xf32>
    %240 = arith.truncf %239 : vector<64x8xf32> to vector<64x8xbf16>
    %cst_87 = arith.constant dense<0.000000e+00> : vector<256x8xf32>
    %241 = tpu.matmul %138, %240, %cst_87 {dimension_numbers = #tpu.dot_dimension_numbers<[1], [0], [0], [1], [0, 0, 1, 1], [], []>} : vector<256x64xbf16>, vector<64x8xbf16>, vector<256x8xf32> -> vector<256x8xf32>
    %242 = vector.extract_strided_slice %241 {offsets = [0, 0], sizes = [128, 8], strides = [1, 1]} : vector<256x8xf32> to vector<128x8xf32>
    %c1 = arith.constant 1 : index
    %c0_88 = arith.constant 0 : index
    %c0_89 = arith.constant 0 : index
    %243 = vector.load %arg12[%c1, %c0_88, %c0_89] : memref<8x128x8xbf16, #tpu.memory_space<vmem>>, vector<1x128x8xbf16>
    %244 = vector.shape_cast %243 : vector<1x128x8xbf16> to vector<128x8xbf16>
    %245 = arith.extf %244 : vector<128x8xbf16> to vector<128x8xf32>
    %246 = arith.addf %242, %245 : vector<128x8xf32>
    %247 = vector.extract_strided_slice %241 {offsets = [128, 0], sizes = [128, 8], strides = [1, 1]} : vector<256x8xf32> to vector<128x8xf32>
    %c6 = arith.constant 6 : index
    %c0_90 = arith.constant 0 : index
    %c0_91 = arith.constant 0 : index
    %248 = vector.load %arg13[%c6, %c0_90, %c0_91] : memref<8x128x8xbf16, #tpu.memory_space<vmem>>, vector<1x128x8xbf16>
    %249 = vector.shape_cast %248 : vector<1x128x8xbf16> to vector<128x8xbf16>
    %250 = arith.extf %249 : vector<128x8xbf16> to vector<128x8xf32>
    %251 = arith.addf %247, %250 : vector<128x8xf32>
    %c1_i32_92 = arith.constant 1 : i32
    %252 = vector.broadcast %c1_i32_92 : i32 to vector<1x8xi32>
    %253 = arith.cmpi sgt, %139, %252 : vector<1x8xi32>
    %c6_i32_93 = arith.constant 6 : i32
    %254 = vector.broadcast %c6_i32_93 : i32 to vector<1x8xi32>
    %255 = arith.cmpi sgt, %139, %254 : vector<1x8xi32>
    %256 = vector.extract_strided_slice %239 {offsets = [0, 0], sizes = [32, 8], strides = [1, 1]} : vector<64x8xf32> to vector<32x8xf32>
    %257 = vector.extract_strided_slice %246 {offsets = [0, 0], sizes = [32, 8], strides = [1, 1]} : vector<128x8xf32> to vector<32x8xf32>
    %258 = arith.negf %257 : vector<32x8xf32>
    %259 = math.exp %258 : vector<32x8xf32>
    %cst_94 = arith.constant 1.000000e+00 : f32
    %260 = vector.broadcast %cst_94 : f32 to vector<32x8xf32>
    %261 = arith.addf %260, %259 : vector<32x8xf32>
    %262 = arith.divf %260, %261 : vector<32x8xf32>
    %263 = vector.extract_strided_slice %246 {offsets = [32, 0], sizes = [32, 8], strides = [1, 1]} : vector<128x8xf32> to vector<32x8xf32>
    %264 = arith.negf %263 : vector<32x8xf32>
    %265 = math.exp %264 : vector<32x8xf32>
    %cst_95 = arith.constant 1.000000e+00 : f32
    %266 = vector.broadcast %cst_95 : f32 to vector<32x8xf32>
    %267 = arith.addf %266, %265 : vector<32x8xf32>
    %268 = arith.divf %266, %267 : vector<32x8xf32>
    %269 = vector.extract_strided_slice %246 {offsets = [64, 0], sizes = [32, 8], strides = [1, 1]} : vector<128x8xf32> to vector<32x8xf32>
    %270 = math.tanh %269 : vector<32x8xf32>
    %271 = vector.extract_strided_slice %246 {offsets = [96, 0], sizes = [32, 8], strides = [1, 1]} : vector<128x8xf32> to vector<32x8xf32>
    %272 = arith.negf %271 : vector<32x8xf32>
    %273 = math.exp %272 : vector<32x8xf32>
    %cst_96 = arith.constant 1.000000e+00 : f32
    %274 = vector.broadcast %cst_96 : f32 to vector<32x8xf32>
    %275 = arith.addf %274, %273 : vector<32x8xf32>
    %276 = arith.divf %274, %275 : vector<32x8xf32>
    %277 = arith.mulf %268, %190 : vector<32x8xf32>
    %278 = arith.mulf %262, %270 : vector<32x8xf32>
    %279 = arith.addf %277, %278 : vector<32x8xf32>
    %280 = math.tanh %279 : vector<32x8xf32>
    %281 = arith.mulf %276, %280 : vector<32x8xf32>
    %282 = vector.shape_cast %253 : vector<1x8xi1> to vector<1x8xi1>
    %283 = vector.broadcast %282 : vector<1x8xi1> to vector<32x8xi1>
    %284 = arith.select %283, %281, %256 : vector<32x8xi1>, vector<32x8xf32>
    %285 = vector.shape_cast %253 : vector<1x8xi1> to vector<1x8xi1>
    %286 = vector.broadcast %285 : vector<1x8xi1> to vector<32x8xi1>
    %287 = arith.select %286, %279, %190 : vector<32x8xi1>, vector<32x8xf32>
    %288 = vector.extract_strided_slice %239 {offsets = [32, 0], sizes = [32, 8], strides = [1, 1]} : vector<64x8xf32> to vector<32x8xf32>
    %289 = vector.extract_strided_slice %251 {offsets = [0, 0], sizes = [32, 8], strides = [1, 1]} : vector<128x8xf32> to vector<32x8xf32>
    %290 = arith.negf %289 : vector<32x8xf32>
    %291 = math.exp %290 : vector<32x8xf32>
    %cst_97 = arith.constant 1.000000e+00 : f32
    %292 = vector.broadcast %cst_97 : f32 to vector<32x8xf32>
    %293 = arith.addf %292, %291 : vector<32x8xf32>
    %294 = arith.divf %292, %293 : vector<32x8xf32>
    %295 = vector.extract_strided_slice %251 {offsets = [32, 0], sizes = [32, 8], strides = [1, 1]} : vector<128x8xf32> to vector<32x8xf32>
    %296 = arith.negf %295 : vector<32x8xf32>
    %297 = math.exp %296 : vector<32x8xf32>
    %cst_98 = arith.constant 1.000000e+00 : f32
    %298 = vector.broadcast %cst_98 : f32 to vector<32x8xf32>
    %299 = arith.addf %298, %297 : vector<32x8xf32>
    %300 = arith.divf %298, %299 : vector<32x8xf32>
    %301 = vector.extract_strided_slice %251 {offsets = [64, 0], sizes = [32, 8], strides = [1, 1]} : vector<128x8xf32> to vector<32x8xf32>
    %302 = math.tanh %301 : vector<32x8xf32>
    %303 = vector.extract_strided_slice %251 {offsets = [96, 0], sizes = [32, 8], strides = [1, 1]} : vector<128x8xf32> to vector<32x8xf32>
    %304 = arith.negf %303 : vector<32x8xf32>
    %305 = math.exp %304 : vector<32x8xf32>
    %cst_99 = arith.constant 1.000000e+00 : f32
    %306 = vector.broadcast %cst_99 : f32 to vector<32x8xf32>
    %307 = arith.addf %306, %305 : vector<32x8xf32>
    %308 = arith.divf %306, %307 : vector<32x8xf32>
    %309 = arith.mulf %300, %222 : vector<32x8xf32>
    %310 = arith.mulf %294, %302 : vector<32x8xf32>
    %311 = arith.addf %309, %310 : vector<32x8xf32>
    %312 = math.tanh %311 : vector<32x8xf32>
    %313 = arith.mulf %308, %312 : vector<32x8xf32>
    %314 = vector.shape_cast %255 : vector<1x8xi1> to vector<1x8xi1>
    %315 = vector.broadcast %314 : vector<1x8xi1> to vector<32x8xi1>
    %316 = arith.select %315, %313, %288 : vector<32x8xi1>, vector<32x8xf32>
    %317 = vector.shape_cast %255 : vector<1x8xi1> to vector<1x8xi1>
    %318 = vector.broadcast %317 : vector<1x8xi1> to vector<32x8xi1>
    %319 = arith.select %318, %311, %222 : vector<32x8xi1>, vector<32x8xf32>
    %cst_100 = arith.constant 0.000000e+00 : f32
    %320 = vector.shape_cast %253 : vector<1x8xi1> to vector<1x8xi1>
    %321 = vector.broadcast %320 : vector<1x8xi1> to vector<32x8xi1>
    %322 = vector.broadcast %cst_100 : f32 to vector<32x8xf32>
    %323 = arith.select %321, %284, %322 : vector<32x8xi1>, vector<32x8xf32>
    %324 = arith.truncf %323 : vector<32x8xf32> to vector<32x8xbf16>
    %c1_101 = arith.constant 1 : index
    %c0_102 = arith.constant 0 : index
    %c0_103 = arith.constant 0 : index
    %325 = vector.load %arg14[%c1_101, %c0_102, %c0_103] : memref<8x32x8xbf16, #tpu.memory_space<vmem>>, vector<1x32x8xbf16>
    %326 = vector.shape_cast %325 : vector<1x32x8xbf16> to vector<32x8xbf16>
    %327 = vector.shape_cast %324 : vector<32x8xbf16> to vector<1x32x8xbf16>
    tpu.vector_store %arg14[%c1_101, %c0_102, %c0_103], %327 {strides = array<i32>} : memref<8x32x8xbf16, #tpu.memory_space<vmem>>, vector<1x32x8xbf16>,
    %cst_104 = arith.constant 0.000000e+00 : f32
    %328 = vector.shape_cast %255 : vector<1x8xi1> to vector<1x8xi1>
    %329 = vector.broadcast %328 : vector<1x8xi1> to vector<32x8xi1>
    %330 = vector.broadcast %cst_104 : f32 to vector<32x8xf32>
    %331 = arith.select %329, %316, %330 : vector<32x8xi1>, vector<32x8xf32>
    %332 = arith.truncf %331 : vector<32x8xf32> to vector<32x8xbf16>
    %c6_105 = arith.constant 6 : index
    %c0_106 = arith.constant 0 : index
    %c0_107 = arith.constant 0 : index
    %333 = vector.load %arg15[%c6_105, %c0_106, %c0_107] : memref<8x32x8xbf16, #tpu.memory_space<vmem>>, vector<1x32x8xbf16>
    %334 = vector.shape_cast %333 : vector<1x32x8xbf16> to vector<32x8xbf16>
    %335 = vector.shape_cast %332 : vector<32x8xbf16> to vector<1x32x8xbf16>
    tpu.vector_store %arg15[%c6_105, %c0_106, %c0_107], %335 {strides = array<i32>} : memref<8x32x8xbf16, #tpu.memory_space<vmem>>, vector<1x32x8xbf16>,
    %336 = tpu.concatenate %284, %316 in 0 : vector<32x8xf32>, vector<32x8xf32> -> vector<64x8xf32>
    %337 = arith.truncf %336 : vector<64x8xf32> to vector<64x8xbf16>
    %cst_108 = arith.constant dense<0.000000e+00> : vector<256x8xf32>
    %338 = tpu.matmul %138, %337, %cst_108 {dimension_numbers = #tpu.dot_dimension_numbers<[1], [0], [0], [1], [0, 0, 1, 1], [], []>} : vector<256x64xbf16>, vector<64x8xbf16>, vector<256x8xf32> -> vector<256x8xf32>
    %339 = vector.extract_strided_slice %338 {offsets = [0, 0], sizes = [128, 8], strides = [1, 1]} : vector<256x8xf32> to vector<128x8xf32>
    %c2 = arith.constant 2 : index
    %c0_109 = arith.constant 0 : index
    %c0_110 = arith.constant 0 : index
    %340 = vector.load %arg12[%c2, %c0_109, %c0_110] : memref<8x128x8xbf16, #tpu.memory_space<vmem>>, vector<1x128x8xbf16>
    %341 = vector.shape_cast %340 : vector<1x128x8xbf16> to vector<128x8xbf16>
    %342 = arith.extf %341 : vector<128x8xbf16> to vector<128x8xf32>
    %343 = arith.addf %339, %342 : vector<128x8xf32>
    %344 = vector.extract_strided_slice %338 {offsets = [128, 0], sizes = [128, 8], strides = [1, 1]} : vector<256x8xf32> to vector<128x8xf32>
    %c5 = arith.constant 5 : index
    %c0_111 = arith.constant 0 : index
    %c0_112 = arith.constant 0 : index
    %345 = vector.load %arg13[%c5, %c0_111, %c0_112] : memref<8x128x8xbf16, #tpu.memory_space<vmem>>, vector<1x128x8xbf16>
    %346 = vector.shape_cast %345 : vector<1x128x8xbf16> to vector<128x8xbf16>
    %347 = arith.extf %346 : vector<128x8xbf16> to vector<128x8xf32>
    %348 = arith.addf %344, %347 : vector<128x8xf32>
    %c2_i32_113 = arith.constant 2 : i32
    %349 = vector.broadcast %c2_i32_113 : i32 to vector<1x8xi32>
    %350 = arith.cmpi sgt, %139, %349 : vector<1x8xi32>
    %c5_i32_114 = arith.constant 5 : i32
    %351 = vector.broadcast %c5_i32_114 : i32 to vector<1x8xi32>
    %352 = arith.cmpi sgt, %139, %351 : vector<1x8xi32>
    %353 = vector.extract_strided_slice %336 {offsets = [0, 0], sizes = [32, 8], strides = [1, 1]} : vector<64x8xf32> to vector<32x8xf32>
    %354 = vector.extract_strided_slice %343 {offsets = [0, 0], sizes = [32, 8], strides = [1, 1]} : vector<128x8xf32> to vector<32x8xf32>
    %355 = arith.negf %354 : vector<32x8xf32>
    %356 = math.exp %355 : vector<32x8xf32>
    %cst_115 = arith.constant 1.000000e+00 : f32
    %357 = vector.broadcast %cst_115 : f32 to vector<32x8xf32>
    %358 = arith.addf %357, %356 : vector<32x8xf32>
    %359 = arith.divf %357, %358 : vector<32x8xf32>
    %360 = vector.extract_strided_slice %343 {offsets = [32, 0], sizes = [32, 8], strides = [1, 1]} : vector<128x8xf32> to vector<32x8xf32>
    %361 = arith.negf %360 : vector<32x8xf32>
    %362 = math.exp %361 : vector<32x8xf32>
    %cst_116 = arith.constant 1.000000e+00 : f32
    %363 = vector.broadcast %cst_116 : f32 to vector<32x8xf32>
    %364 = arith.addf %363, %362 : vector<32x8xf32>
    %365 = arith.divf %363, %364 : vector<32x8xf32>
    %366 = vector.extract_strided_slice %343 {offsets = [64, 0], sizes = [32, 8], strides = [1, 1]} : vector<128x8xf32> to vector<32x8xf32>
    %367 = math.tanh %366 : vector<32x8xf32>
    %368 = vector.extract_strided_slice %343 {offsets = [96, 0], sizes = [32, 8], strides = [1, 1]} : vector<128x8xf32> to vector<32x8xf32>
    %369 = arith.negf %368 : vector<32x8xf32>
    %370 = math.exp %369 : vector<32x8xf32>
    %cst_117 = arith.constant 1.000000e+00 : f32
    %371 = vector.broadcast %cst_117 : f32 to vector<32x8xf32>
    %372 = arith.addf %371, %370 : vector<32x8xf32>
    %373 = arith.divf %371, %372 : vector<32x8xf32>
    %374 = arith.mulf %365, %287 : vector<32x8xf32>
    %375 = arith.mulf %359, %367 : vector<32x8xf32>
    %376 = arith.addf %374, %375 : vector<32x8xf32>
    %377 = math.tanh %376 : vector<32x8xf32>
    %378 = arith.mulf %373, %377 : vector<32x8xf32>
    %379 = vector.shape_cast %350 : vector<1x8xi1> to vector<1x8xi1>
    %380 = vector.broadcast %379 : vector<1x8xi1> to vector<32x8xi1>
    %381 = arith.select %380, %378, %353 : vector<32x8xi1>, vector<32x8xf32>
    %382 = vector.shape_cast %350 : vector<1x8xi1> to vector<1x8xi1>
    %383 = vector.broadcast %382 : vector<1x8xi1> to vector<32x8xi1>
    %384 = arith.select %383, %376, %287 : vector<32x8xi1>, vector<32x8xf32>
    %385 = vector.extract_strided_slice %336 {offsets = [32, 0], sizes = [32, 8], strides = [1, 1]} : vector<64x8xf32> to vector<32x8xf32>
    %386 = vector.extract_strided_slice %348 {offsets = [0, 0], sizes = [32, 8], strides = [1, 1]} : vector<128x8xf32> to vector<32x8xf32>
    %387 = arith.negf %386 : vector<32x8xf32>
    %388 = math.exp %387 : vector<32x8xf32>
    %cst_118 = arith.constant 1.000000e+00 : f32
    %389 = vector.broadcast %cst_118 : f32 to vector<32x8xf32>
    %390 = arith.addf %389, %388 : vector<32x8xf32>
    %391 = arith.divf %389, %390 : vector<32x8xf32>
    %392 = vector.extract_strided_slice %348 {offsets = [32, 0], sizes = [32, 8], strides = [1, 1]} : vector<128x8xf32> to vector<32x8xf32>
    %393 = arith.negf %392 : vector<32x8xf32>
    %394 = math.exp %393 : vector<32x8xf32>
    %cst_119 = arith.constant 1.000000e+00 : f32
    %395 = vector.broadcast %cst_119 : f32 to vector<32x8xf32>
    %396 = arith.addf %395, %394 : vector<32x8xf32>
    %397 = arith.divf %395, %396 : vector<32x8xf32>
    %398 = vector.extract_strided_slice %348 {offsets = [64, 0], sizes = [32, 8], strides = [1, 1]} : vector<128x8xf32> to vector<32x8xf32>
    %399 = math.tanh %398 : vector<32x8xf32>
    %400 = vector.extract_strided_slice %348 {offsets = [96, 0], sizes = [32, 8], strides = [1, 1]} : vector<128x8xf32> to vector<32x8xf32>
    %401 = arith.negf %400 : vector<32x8xf32>
    %402 = math.exp %401 : vector<32x8xf32>
    %cst_120 = arith.constant 1.000000e+00 : f32
    %403 = vector.broadcast %cst_120 : f32 to vector<32x8xf32>
    %404 = arith.addf %403, %402 : vector<32x8xf32>
    %405 = arith.divf %403, %404 : vector<32x8xf32>
    %406 = arith.mulf %397, %319 : vector<32x8xf32>
    %407 = arith.mulf %391, %399 : vector<32x8xf32>
    %408 = arith.addf %406, %407 : vector<32x8xf32>
    %409 = math.tanh %408 : vector<32x8xf32>
    %410 = arith.mulf %405, %409 : vector<32x8xf32>
    %411 = vector.shape_cast %352 : vector<1x8xi1> to vector<1x8xi1>
    %412 = vector.broadcast %411 : vector<1x8xi1> to vector<32x8xi1>
    %413 = arith.select %412, %410, %385 : vector<32x8xi1>, vector<32x8xf32>
    %414 = vector.shape_cast %352 : vector<1x8xi1> to vector<1x8xi1>
    %415 = vector.broadcast %414 : vector<1x8xi1> to vector<32x8xi1>
    %416 = arith.select %415, %408, %319 : vector<32x8xi1>, vector<32x8xf32>
    %cst_121 = arith.constant 0.000000e+00 : f32
    %417 = vector.shape_cast %350 : vector<1x8xi1> to vector<1x8xi1>
    %418 = vector.broadcast %417 : vector<1x8xi1> to vector<32x8xi1>
    %419 = vector.broadcast %cst_121 : f32 to vector<32x8xf32>
    %420 = arith.select %418, %381, %419 : vector<32x8xi1>, vector<32x8xf32>
    %421 = arith.truncf %420 : vector<32x8xf32> to vector<32x8xbf16>
    %c2_122 = arith.constant 2 : index
    %c0_123 = arith.constant 0 : index
    %c0_124 = arith.constant 0 : index
    %422 = vector.load %arg14[%c2_122, %c0_123, %c0_124] : memref<8x32x8xbf16, #tpu.memory_space<vmem>>, vector<1x32x8xbf16>
    %423 = vector.shape_cast %422 : vector<1x32x8xbf16> to vector<32x8xbf16>
    %424 = vector.shape_cast %421 : vector<32x8xbf16> to vector<1x32x8xbf16>
    tpu.vector_store %arg14[%c2_122, %c0_123, %c0_124], %424 {strides = array<i32>} : memref<8x32x8xbf16, #tpu.memory_space<vmem>>, vector<1x32x8xbf16>,
    %cst_125 = arith.constant 0.000000e+00 : f32
    %425 = vector.shape_cast %352 : vector<1x8xi1> to vector<1x8xi1>
    %426 = vector.broadcast %425 : vector<1x8xi1> to vector<32x8xi1>
    %427 = vector.broadcast %cst_125 : f32 to vector<32x8xf32>
    %428 = arith.select %426, %413, %427 : vector<32x8xi1>, vector<32x8xf32>
    %429 = arith.truncf %428 : vector<32x8xf32> to vector<32x8xbf16>
    %c5_126 = arith.constant 5 : index
    %c0_127 = arith.constant 0 : index
    %c0_128 = arith.constant 0 : index
    %430 = vector.load %arg15[%c5_126, %c0_127, %c0_128] : memref<8x32x8xbf16, #tpu.memory_space<vmem>>, vector<1x32x8xbf16>
    %431 = vector.shape_cast %430 : vector<1x32x8xbf16> to vector<32x8xbf16>
    %432 = vector.shape_cast %429 : vector<32x8xbf16> to vector<1x32x8xbf16>
    tpu.vector_store %arg15[%c5_126, %c0_127, %c0_128], %432 {strides = array<i32>} : memref<8x32x8xbf16, #tpu.memory_space<vmem>>, vector<1x32x8xbf16>,
    %433 = tpu.concatenate %381, %413 in 0 : vector<32x8xf32>, vector<32x8xf32> -> vector<64x8xf32>
    %434 = arith.truncf %433 : vector<64x8xf32> to vector<64x8xbf16>
    %cst_129 = arith.constant dense<0.000000e+00> : vector<256x8xf32>
    %435 = tpu.matmul %138, %434, %cst_129 {dimension_numbers = #tpu.dot_dimension_numbers<[1], [0], [0], [1], [0, 0, 1, 1], [], []>} : vector<256x64xbf16>, vector<64x8xbf16>, vector<256x8xf32> -> vector<256x8xf32>
    %436 = vector.extract_strided_slice %435 {offsets = [0, 0], sizes = [128, 8], strides = [1, 1]} : vector<256x8xf32> to vector<128x8xf32>
    %c3 = arith.constant 3 : index
    %c0_130 = arith.constant 0 : index
    %c0_131 = arith.constant 0 : index
    %437 = vector.load %arg12[%c3, %c0_130, %c0_131] : memref<8x128x8xbf16, #tpu.memory_space<vmem>>, vector<1x128x8xbf16>
    %438 = vector.shape_cast %437 : vector<1x128x8xbf16> to vector<128x8xbf16>
    %439 = arith.extf %438 : vector<128x8xbf16> to vector<128x8xf32>
    %440 = arith.addf %436, %439 : vector<128x8xf32>
    %441 = vector.extract_strided_slice %435 {offsets = [128, 0], sizes = [128, 8], strides = [1, 1]} : vector<256x8xf32> to vector<128x8xf32>
    %c4 = arith.constant 4 : index
    %c0_132 = arith.constant 0 : index
    %c0_133 = arith.constant 0 : index
    %442 = vector.load %arg13[%c4, %c0_132, %c0_133] : memref<8x128x8xbf16, #tpu.memory_space<vmem>>, vector<1x128x8xbf16>
    %443 = vector.shape_cast %442 : vector<1x128x8xbf16> to vector<128x8xbf16>
    %444 = arith.extf %443 : vector<128x8xbf16> to vector<128x8xf32>
    %445 = arith.addf %441, %444 : vector<128x8xf32>
    %c3_i32_134 = arith.constant 3 : i32
    %446 = vector.broadcast %c3_i32_134 : i32 to vector<1x8xi32>
    %447 = arith.cmpi sgt, %139, %446 : vector<1x8xi32>
    %c4_i32_135 = arith.constant 4 : i32
    %448 = vector.broadcast %c4_i32_135 : i32 to vector<1x8xi32>
    %449 = arith.cmpi sgt, %139, %448 : vector<1x8xi32>
    %450 = vector.extract_strided_slice %433 {offsets = [0, 0], sizes = [32, 8], strides = [1, 1]} : vector<64x8xf32> to vector<32x8xf32>
    %451 = vector.extract_strided_slice %440 {offsets = [0, 0], sizes = [32, 8], strides = [1, 1]} : vector<128x8xf32> to vector<32x8xf32>
    %452 = arith.negf %451 : vector<32x8xf32>
    %453 = math.exp %452 : vector<32x8xf32>
    %cst_136 = arith.constant 1.000000e+00 : f32
    %454 = vector.broadcast %cst_136 : f32 to vector<32x8xf32>
    %455 = arith.addf %454, %453 : vector<32x8xf32>
    %456 = arith.divf %454, %455 : vector<32x8xf32>
    %457 = vector.extract_strided_slice %440 {offsets = [32, 0], sizes = [32, 8], strides = [1, 1]} : vector<128x8xf32> to vector<32x8xf32>
    %458 = arith.negf %457 : vector<32x8xf32>
    %459 = math.exp %458 : vector<32x8xf32>
    %cst_137 = arith.constant 1.000000e+00 : f32
    %460 = vector.broadcast %cst_137 : f32 to vector<32x8xf32>
    %461 = arith.addf %460, %459 : vector<32x8xf32>
    %462 = arith.divf %460, %461 : vector<32x8xf32>
    %463 = vector.extract_strided_slice %440 {offsets = [64, 0], sizes = [32, 8], strides = [1, 1]} : vector<128x8xf32> to vector<32x8xf32>
    %464 = math.tanh %463 : vector<32x8xf32>
    %465 = vector.extract_strided_slice %440 {offsets = [96, 0], sizes = [32, 8], strides = [1, 1]} : vector<128x8xf32> to vector<32x8xf32>
    %466 = arith.negf %465 : vector<32x8xf32>
    %467 = math.exp %466 : vector<32x8xf32>
    %cst_138 = arith.constant 1.000000e+00 : f32
    %468 = vector.broadcast %cst_138 : f32 to vector<32x8xf32>
    %469 = arith.addf %468, %467 : vector<32x8xf32>
    %470 = arith.divf %468, %469 : vector<32x8xf32>
    %471 = arith.mulf %462, %384 : vector<32x8xf32>
    %472 = arith.mulf %456, %464 : vector<32x8xf32>
    %473 = arith.addf %471, %472 : vector<32x8xf32>
    %474 = math.tanh %473 : vector<32x8xf32>
    %475 = arith.mulf %470, %474 : vector<32x8xf32>
    %476 = vector.shape_cast %447 : vector<1x8xi1> to vector<1x8xi1>
    %477 = vector.broadcast %476 : vector<1x8xi1> to vector<32x8xi1>
    %478 = arith.select %477, %475, %450 : vector<32x8xi1>, vector<32x8xf32>
    %479 = vector.shape_cast %447 : vector<1x8xi1> to vector<1x8xi1>
    %480 = vector.broadcast %479 : vector<1x8xi1> to vector<32x8xi1>
    %481 = arith.select %480, %473, %384 : vector<32x8xi1>, vector<32x8xf32>
    %482 = vector.extract_strided_slice %433 {offsets = [32, 0], sizes = [32, 8], strides = [1, 1]} : vector<64x8xf32> to vector<32x8xf32>
    %483 = vector.extract_strided_slice %445 {offsets = [0, 0], sizes = [32, 8], strides = [1, 1]} : vector<128x8xf32> to vector<32x8xf32>
    %484 = arith.negf %483 : vector<32x8xf32>
    %485 = math.exp %484 : vector<32x8xf32>
    %cst_139 = arith.constant 1.000000e+00 : f32
    %486 = vector.broadcast %cst_139 : f32 to vector<32x8xf32>
    %487 = arith.addf %486, %485 : vector<32x8xf32>
    %488 = arith.divf %486, %487 : vector<32x8xf32>
    %489 = vector.extract_strided_slice %445 {offsets = [32, 0], sizes = [32, 8], strides = [1, 1]} : vector<128x8xf32> to vector<32x8xf32>
    %490 = arith.negf %489 : vector<32x8xf32>
    %491 = math.exp %490 : vector<32x8xf32>
    %cst_140 = arith.constant 1.000000e+00 : f32
    %492 = vector.broadcast %cst_140 : f32 to vector<32x8xf32>
    %493 = arith.addf %492, %491 : vector<32x8xf32>
    %494 = arith.divf %492, %493 : vector<32x8xf32>
    %495 = vector.extract_strided_slice %445 {offsets = [64, 0], sizes = [32, 8], strides = [1, 1]} : vector<128x8xf32> to vector<32x8xf32>
    %496 = math.tanh %495 : vector<32x8xf32>
    %497 = vector.extract_strided_slice %445 {offsets = [96, 0], sizes = [32, 8], strides = [1, 1]} : vector<128x8xf32> to vector<32x8xf32>
    %498 = arith.negf %497 : vector<32x8xf32>
    %499 = math.exp %498 : vector<32x8xf32>
    %cst_141 = arith.constant 1.000000e+00 : f32
    %500 = vector.broadcast %cst_141 : f32 to vector<32x8xf32>
    %501 = arith.addf %500, %499 : vector<32x8xf32>
    %502 = arith.divf %500, %501 : vector<32x8xf32>
    %503 = arith.mulf %494, %416 : vector<32x8xf32>
    %504 = arith.mulf %488, %496 : vector<32x8xf32>
    %505 = arith.addf %503, %504 : vector<32x8xf32>
    %506 = math.tanh %505 : vector<32x8xf32>
    %507 = arith.mulf %502, %506 : vector<32x8xf32>
    %508 = vector.shape_cast %449 : vector<1x8xi1> to vector<1x8xi1>
    %509 = vector.broadcast %508 : vector<1x8xi1> to vector<32x8xi1>
    %510 = arith.select %509, %507, %482 : vector<32x8xi1>, vector<32x8xf32>
    %511 = vector.shape_cast %449 : vector<1x8xi1> to vector<1x8xi1>
    %512 = vector.broadcast %511 : vector<1x8xi1> to vector<32x8xi1>
    %513 = arith.select %512, %505, %416 : vector<32x8xi1>, vector<32x8xf32>
    %cst_142 = arith.constant 0.000000e+00 : f32
    %514 = vector.shape_cast %447 : vector<1x8xi1> to vector<1x8xi1>
    %515 = vector.broadcast %514 : vector<1x8xi1> to vector<32x8xi1>
    %516 = vector.broadcast %cst_142 : f32 to vector<32x8xf32>
    %517 = arith.select %515, %478, %516 : vector<32x8xi1>, vector<32x8xf32>
    %518 = arith.truncf %517 : vector<32x8xf32> to vector<32x8xbf16>
    %c3_143 = arith.constant 3 : index
    %c0_144 = arith.constant 0 : index
    %c0_145 = arith.constant 0 : index
    %519 = vector.load %arg14[%c3_143, %c0_144, %c0_145] : memref<8x32x8xbf16, #tpu.memory_space<vmem>>, vector<1x32x8xbf16>
    %520 = vector.shape_cast %519 : vector<1x32x8xbf16> to vector<32x8xbf16>
    %521 = vector.shape_cast %518 : vector<32x8xbf16> to vector<1x32x8xbf16>
    tpu.vector_store %arg14[%c3_143, %c0_144, %c0_145], %521 {strides = array<i32>} : memref<8x32x8xbf16, #tpu.memory_space<vmem>>, vector<1x32x8xbf16>,
    %cst_146 = arith.constant 0.000000e+00 : f32
    %522 = vector.shape_cast %449 : vector<1x8xi1> to vector<1x8xi1>
    %523 = vector.broadcast %522 : vector<1x8xi1> to vector<32x8xi1>
    %524 = vector.broadcast %cst_146 : f32 to vector<32x8xf32>
    %525 = arith.select %523, %510, %524 : vector<32x8xi1>, vector<32x8xf32>
    %526 = arith.truncf %525 : vector<32x8xf32> to vector<32x8xbf16>
    %c4_147 = arith.constant 4 : index
    %c0_148 = arith.constant 0 : index
    %c0_149 = arith.constant 0 : index
    %527 = vector.load %arg15[%c4_147, %c0_148, %c0_149] : memref<8x32x8xbf16, #tpu.memory_space<vmem>>, vector<1x32x8xbf16>
    %528 = vector.shape_cast %527 : vector<1x32x8xbf16> to vector<32x8xbf16>
    %529 = vector.shape_cast %526 : vector<32x8xbf16> to vector<1x32x8xbf16>
    tpu.vector_store %arg15[%c4_147, %c0_148, %c0_149], %529 {strides = array<i32>} : memref<8x32x8xbf16, #tpu.memory_space<vmem>>, vector<1x32x8xbf16>,
    %530 = tpu.concatenate %478, %510 in 0 : vector<32x8xf32>, vector<32x8xf32> -> vector<64x8xf32>
    %531 = arith.truncf %530 : vector<64x8xf32> to vector<64x8xbf16>
    %cst_150 = arith.constant dense<0.000000e+00> : vector<256x8xf32>
    %532 = tpu.matmul %138, %531, %cst_150 {dimension_numbers = #tpu.dot_dimension_numbers<[1], [0], [0], [1], [0, 0, 1, 1], [], []>} : vector<256x64xbf16>, vector<64x8xbf16>, vector<256x8xf32> -> vector<256x8xf32>
    %533 = vector.extract_strided_slice %532 {offsets = [0, 0], sizes = [128, 8], strides = [1, 1]} : vector<256x8xf32> to vector<128x8xf32>
    %c4_151 = arith.constant 4 : index
    %c0_152 = arith.constant 0 : index
    %c0_153 = arith.constant 0 : index
    %534 = vector.load %arg12[%c4_151, %c0_152, %c0_153] : memref<8x128x8xbf16, #tpu.memory_space<vmem>>, vector<1x128x8xbf16>
    %535 = vector.shape_cast %534 : vector<1x128x8xbf16> to vector<128x8xbf16>
    %536 = arith.extf %535 : vector<128x8xbf16> to vector<128x8xf32>
    %537 = arith.addf %533, %536 : vector<128x8xf32>
    %538 = vector.extract_strided_slice %532 {offsets = [128, 0], sizes = [128, 8], strides = [1, 1]} : vector<256x8xf32> to vector<128x8xf32>
    %c3_154 = arith.constant 3 : index
    %c0_155 = arith.constant 0 : index
    %c0_156 = arith.constant 0 : index
    %539 = vector.load %arg13[%c3_154, %c0_155, %c0_156] : memref<8x128x8xbf16, #tpu.memory_space<vmem>>, vector<1x128x8xbf16>
    %540 = vector.shape_cast %539 : vector<1x128x8xbf16> to vector<128x8xbf16>
    %541 = arith.extf %540 : vector<128x8xbf16> to vector<128x8xf32>
    %542 = arith.addf %538, %541 : vector<128x8xf32>
    %c4_i32_157 = arith.constant 4 : i32
    %543 = vector.broadcast %c4_i32_157 : i32 to vector<1x8xi32>
    %544 = arith.cmpi sgt, %139, %543 : vector<1x8xi32>
    %c3_i32_158 = arith.constant 3 : i32
    %545 = vector.broadcast %c3_i32_158 : i32 to vector<1x8xi32>
    %546 = arith.cmpi sgt, %139, %545 : vector<1x8xi32>
    %547 = vector.extract_strided_slice %530 {offsets = [0, 0], sizes = [32, 8], strides = [1, 1]} : vector<64x8xf32> to vector<32x8xf32>
    %548 = vector.extract_strided_slice %537 {offsets = [0, 0], sizes = [32, 8], strides = [1, 1]} : vector<128x8xf32> to vector<32x8xf32>
    %549 = arith.negf %548 : vector<32x8xf32>
    %550 = math.exp %549 : vector<32x8xf32>
    %cst_159 = arith.constant 1.000000e+00 : f32
    %551 = vector.broadcast %cst_159 : f32 to vector<32x8xf32>
    %552 = arith.addf %551, %550 : vector<32x8xf32>
    %553 = arith.divf %551, %552 : vector<32x8xf32>
    %554 = vector.extract_strided_slice %537 {offsets = [32, 0], sizes = [32, 8], strides = [1, 1]} : vector<128x8xf32> to vector<32x8xf32>
    %555 = arith.negf %554 : vector<32x8xf32>
    %556 = math.exp %555 : vector<32x8xf32>
    %cst_160 = arith.constant 1.000000e+00 : f32
    %557 = vector.broadcast %cst_160 : f32 to vector<32x8xf32>
    %558 = arith.addf %557, %556 : vector<32x8xf32>
    %559 = arith.divf %557, %558 : vector<32x8xf32>
    %560 = vector.extract_strided_slice %537 {offsets = [64, 0], sizes = [32, 8], strides = [1, 1]} : vector<128x8xf32> to vector<32x8xf32>
    %561 = math.tanh %560 : vector<32x8xf32>
    %562 = vector.extract_strided_slice %537 {offsets = [96, 0], sizes = [32, 8], strides = [1, 1]} : vector<128x8xf32> to vector<32x8xf32>
    %563 = arith.negf %562 : vector<32x8xf32>
    %564 = math.exp %563 : vector<32x8xf32>
    %cst_161 = arith.constant 1.000000e+00 : f32
    %565 = vector.broadcast %cst_161 : f32 to vector<32x8xf32>
    %566 = arith.addf %565, %564 : vector<32x8xf32>
    %567 = arith.divf %565, %566 : vector<32x8xf32>
    %568 = arith.mulf %559, %481 : vector<32x8xf32>
    %569 = arith.mulf %553, %561 : vector<32x8xf32>
    %570 = arith.addf %568, %569 : vector<32x8xf32>
    %571 = math.tanh %570 : vector<32x8xf32>
    %572 = arith.mulf %567, %571 : vector<32x8xf32>
    %573 = vector.shape_cast %544 : vector<1x8xi1> to vector<1x8xi1>
    %574 = vector.broadcast %573 : vector<1x8xi1> to vector<32x8xi1>
    %575 = arith.select %574, %572, %547 : vector<32x8xi1>, vector<32x8xf32>
    %576 = vector.shape_cast %544 : vector<1x8xi1> to vector<1x8xi1>
    %577 = vector.broadcast %576 : vector<1x8xi1> to vector<32x8xi1>
    %578 = arith.select %577, %570, %481 : vector<32x8xi1>, vector<32x8xf32>
    %579 = vector.extract_strided_slice %530 {offsets = [32, 0], sizes = [32, 8], strides = [1, 1]} : vector<64x8xf32> to vector<32x8xf32>
    %580 = vector.extract_strided_slice %542 {offsets = [0, 0], sizes = [32, 8], strides = [1, 1]} : vector<128x8xf32> to vector<32x8xf32>
    %581 = arith.negf %580 : vector<32x8xf32>
    %582 = math.exp %581 : vector<32x8xf32>
    %cst_162 = arith.constant 1.000000e+00 : f32
    %583 = vector.broadcast %cst_162 : f32 to vector<32x8xf32>
    %584 = arith.addf %583, %582 : vector<32x8xf32>
    %585 = arith.divf %583, %584 : vector<32x8xf32>
    %586 = vector.extract_strided_slice %542 {offsets = [32, 0], sizes = [32, 8], strides = [1, 1]} : vector<128x8xf32> to vector<32x8xf32>
    %587 = arith.negf %586 : vector<32x8xf32>
    %588 = math.exp %587 : vector<32x8xf32>
    %cst_163 = arith.constant 1.000000e+00 : f32
    %589 = vector.broadcast %cst_163 : f32 to vector<32x8xf32>
    %590 = arith.addf %589, %588 : vector<32x8xf32>
    %591 = arith.divf %589, %590 : vector<32x8xf32>
    %592 = vector.extract_strided_slice %542 {offsets = [64, 0], sizes = [32, 8], strides = [1, 1]} : vector<128x8xf32> to vector<32x8xf32>
    %593 = math.tanh %592 : vector<32x8xf32>
    %594 = vector.extract_strided_slice %542 {offsets = [96, 0], sizes = [32, 8], strides = [1, 1]} : vector<128x8xf32> to vector<32x8xf32>
    %595 = arith.negf %594 : vector<32x8xf32>
    %596 = math.exp %595 : vector<32x8xf32>
    %cst_164 = arith.constant 1.000000e+00 : f32
    %597 = vector.broadcast %cst_164 : f32 to vector<32x8xf32>
    %598 = arith.addf %597, %596 : vector<32x8xf32>
    %599 = arith.divf %597, %598 : vector<32x8xf32>
    %600 = arith.mulf %591, %513 : vector<32x8xf32>
    %601 = arith.mulf %585, %593 : vector<32x8xf32>
    %602 = arith.addf %600, %601 : vector<32x8xf32>
    %603 = math.tanh %602 : vector<32x8xf32>
    %604 = arith.mulf %599, %603 : vector<32x8xf32>
    %605 = vector.shape_cast %546 : vector<1x8xi1> to vector<1x8xi1>
    %606 = vector.broadcast %605 : vector<1x8xi1> to vector<32x8xi1>
    %607 = arith.select %606, %604, %579 : vector<32x8xi1>, vector<32x8xf32>
    %608 = vector.shape_cast %546 : vector<1x8xi1> to vector<1x8xi1>
    %609 = vector.broadcast %608 : vector<1x8xi1> to vector<32x8xi1>
    %610 = arith.select %609, %602, %513 : vector<32x8xi1>, vector<32x8xf32>
    %cst_165 = arith.constant 0.000000e+00 : f32
    %611 = vector.shape_cast %544 : vector<1x8xi1> to vector<1x8xi1>
    %612 = vector.broadcast %611 : vector<1x8xi1> to vector<32x8xi1>
    %613 = vector.broadcast %cst_165 : f32 to vector<32x8xf32>
    %614 = arith.select %612, %575, %613 : vector<32x8xi1>, vector<32x8xf32>
    %615 = arith.truncf %614 : vector<32x8xf32> to vector<32x8xbf16>
    %c4_166 = arith.constant 4 : index
    %c0_167 = arith.constant 0 : index
    %c0_168 = arith.constant 0 : index
    %616 = vector.load %arg14[%c4_166, %c0_167, %c0_168] : memref<8x32x8xbf16, #tpu.memory_space<vmem>>, vector<1x32x8xbf16>
    %617 = vector.shape_cast %616 : vector<1x32x8xbf16> to vector<32x8xbf16>
    %618 = vector.shape_cast %615 : vector<32x8xbf16> to vector<1x32x8xbf16>
    tpu.vector_store %arg14[%c4_166, %c0_167, %c0_168], %618 {strides = array<i32>} : memref<8x32x8xbf16, #tpu.memory_space<vmem>>, vector<1x32x8xbf16>,
    %cst_169 = arith.constant 0.000000e+00 : f32
    %619 = vector.shape_cast %546 : vector<1x8xi1> to vector<1x8xi1>
    %620 = vector.broadcast %619 : vector<1x8xi1> to vector<32x8xi1>
    %621 = vector.broadcast %cst_169 : f32 to vector<32x8xf32>
    %622 = arith.select %620, %607, %621 : vector<32x8xi1>, vector<32x8xf32>
    %623 = arith.truncf %622 : vector<32x8xf32> to vector<32x8xbf16>
    %c3_170 = arith.constant 3 : index
    %c0_171 = arith.constant 0 : index
    %c0_172 = arith.constant 0 : index
    %624 = vector.load %arg15[%c3_170, %c0_171, %c0_172] : memref<8x32x8xbf16, #tpu.memory_space<vmem>>, vector<1x32x8xbf16>
    %625 = vector.shape_cast %624 : vector<1x32x8xbf16> to vector<32x8xbf16>
    %626 = vector.shape_cast %623 : vector<32x8xbf16> to vector<1x32x8xbf16>
    tpu.vector_store %arg15[%c3_170, %c0_171, %c0_172], %626 {strides = array<i32>} : memref<8x32x8xbf16, #tpu.memory_space<vmem>>, vector<1x32x8xbf16>,
    %627 = tpu.concatenate %575, %607 in 0 : vector<32x8xf32>, vector<32x8xf32> -> vector<64x8xf32>
    %628 = arith.truncf %627 : vector<64x8xf32> to vector<64x8xbf16>
    %cst_173 = arith.constant dense<0.000000e+00> : vector<256x8xf32>
    %629 = tpu.matmul %138, %628, %cst_173 {dimension_numbers = #tpu.dot_dimension_numbers<[1], [0], [0], [1], [0, 0, 1, 1], [], []>} : vector<256x64xbf16>, vector<64x8xbf16>, vector<256x8xf32> -> vector<256x8xf32>
    %630 = vector.extract_strided_slice %629 {offsets = [0, 0], sizes = [128, 8], strides = [1, 1]} : vector<256x8xf32> to vector<128x8xf32>
    %c5_174 = arith.constant 5 : index
    %c0_175 = arith.constant 0 : index
    %c0_176 = arith.constant 0 : index
    %631 = vector.load %arg12[%c5_174, %c0_175, %c0_176] : memref<8x128x8xbf16, #tpu.memory_space<vmem>>, vector<1x128x8xbf16>
    %632 = vector.shape_cast %631 : vector<1x128x8xbf16> to vector<128x8xbf16>
    %633 = arith.extf %632 : vector<128x8xbf16> to vector<128x8xf32>
    %634 = arith.addf %630, %633 : vector<128x8xf32>
    %635 = vector.extract_strided_slice %629 {offsets = [128, 0], sizes = [128, 8], strides = [1, 1]} : vector<256x8xf32> to vector<128x8xf32>
    %c2_177 = arith.constant 2 : index
    %c0_178 = arith.constant 0 : index
    %c0_179 = arith.constant 0 : index
    %636 = vector.load %arg13[%c2_177, %c0_178, %c0_179] : memref<8x128x8xbf16, #tpu.memory_space<vmem>>, vector<1x128x8xbf16>
    %637 = vector.shape_cast %636 : vector<1x128x8xbf16> to vector<128x8xbf16>
    %638 = arith.extf %637 : vector<128x8xbf16> to vector<128x8xf32>
    %639 = arith.addf %635, %638 : vector<128x8xf32>
    %c5_i32_180 = arith.constant 5 : i32
    %640 = vector.broadcast %c5_i32_180 : i32 to vector<1x8xi32>
    %641 = arith.cmpi sgt, %139, %640 : vector<1x8xi32>
    %c2_i32_181 = arith.constant 2 : i32
    %642 = vector.broadcast %c2_i32_181 : i32 to vector<1x8xi32>
    %643 = arith.cmpi sgt, %139, %642 : vector<1x8xi32>
    %644 = vector.extract_strided_slice %627 {offsets = [0, 0], sizes = [32, 8], strides = [1, 1]} : vector<64x8xf32> to vector<32x8xf32>
    %645 = vector.extract_strided_slice %634 {offsets = [0, 0], sizes = [32, 8], strides = [1, 1]} : vector<128x8xf32> to vector<32x8xf32>
    %646 = arith.negf %645 : vector<32x8xf32>
    %647 = math.exp %646 : vector<32x8xf32>
    %cst_182 = arith.constant 1.000000e+00 : f32
    %648 = vector.broadcast %cst_182 : f32 to vector<32x8xf32>
    %649 = arith.addf %648, %647 : vector<32x8xf32>
    %650 = arith.divf %648, %649 : vector<32x8xf32>
    %651 = vector.extract_strided_slice %634 {offsets = [32, 0], sizes = [32, 8], strides = [1, 1]} : vector<128x8xf32> to vector<32x8xf32>
    %652 = arith.negf %651 : vector<32x8xf32>
    %653 = math.exp %652 : vector<32x8xf32>
    %cst_183 = arith.constant 1.000000e+00 : f32
    %654 = vector.broadcast %cst_183 : f32 to vector<32x8xf32>
    %655 = arith.addf %654, %653 : vector<32x8xf32>
    %656 = arith.divf %654, %655 : vector<32x8xf32>
    %657 = vector.extract_strided_slice %634 {offsets = [64, 0], sizes = [32, 8], strides = [1, 1]} : vector<128x8xf32> to vector<32x8xf32>
    %658 = math.tanh %657 : vector<32x8xf32>
    %659 = vector.extract_strided_slice %634 {offsets = [96, 0], sizes = [32, 8], strides = [1, 1]} : vector<128x8xf32> to vector<32x8xf32>
    %660 = arith.negf %659 : vector<32x8xf32>
    %661 = math.exp %660 : vector<32x8xf32>
    %cst_184 = arith.constant 1.000000e+00 : f32
    %662 = vector.broadcast %cst_184 : f32 to vector<32x8xf32>
    %663 = arith.addf %662, %661 : vector<32x8xf32>
    %664 = arith.divf %662, %663 : vector<32x8xf32>
    %665 = arith.mulf %656, %578 : vector<32x8xf32>
    %666 = arith.mulf %650, %658 : vector<32x8xf32>
    %667 = arith.addf %665, %666 : vector<32x8xf32>
    %668 = math.tanh %667 : vector<32x8xf32>
    %669 = arith.mulf %664, %668 : vector<32x8xf32>
    %670 = vector.shape_cast %641 : vector<1x8xi1> to vector<1x8xi1>
    %671 = vector.broadcast %670 : vector<1x8xi1> to vector<32x8xi1>
    %672 = arith.select %671, %669, %644 : vector<32x8xi1>, vector<32x8xf32>
    %673 = vector.shape_cast %641 : vector<1x8xi1> to vector<1x8xi1>
    %674 = vector.broadcast %673 : vector<1x8xi1> to vector<32x8xi1>
    %675 = arith.select %674, %667, %578 : vector<32x8xi1>, vector<32x8xf32>
    %676 = vector.extract_strided_slice %627 {offsets = [32, 0], sizes = [32, 8], strides = [1, 1]} : vector<64x8xf32> to vector<32x8xf32>
    %677 = vector.extract_strided_slice %639 {offsets = [0, 0], sizes = [32, 8], strides = [1, 1]} : vector<128x8xf32> to vector<32x8xf32>
    %678 = arith.negf %677 : vector<32x8xf32>
    %679 = math.exp %678 : vector<32x8xf32>
    %cst_185 = arith.constant 1.000000e+00 : f32
    %680 = vector.broadcast %cst_185 : f32 to vector<32x8xf32>
    %681 = arith.addf %680, %679 : vector<32x8xf32>
    %682 = arith.divf %680, %681 : vector<32x8xf32>
    %683 = vector.extract_strided_slice %639 {offsets = [32, 0], sizes = [32, 8], strides = [1, 1]} : vector<128x8xf32> to vector<32x8xf32>
    %684 = arith.negf %683 : vector<32x8xf32>
    %685 = math.exp %684 : vector<32x8xf32>
    %cst_186 = arith.constant 1.000000e+00 : f32
    %686 = vector.broadcast %cst_186 : f32 to vector<32x8xf32>
    %687 = arith.addf %686, %685 : vector<32x8xf32>
    %688 = arith.divf %686, %687 : vector<32x8xf32>
    %689 = vector.extract_strided_slice %639 {offsets = [64, 0], sizes = [32, 8], strides = [1, 1]} : vector<128x8xf32> to vector<32x8xf32>
    %690 = math.tanh %689 : vector<32x8xf32>
    %691 = vector.extract_strided_slice %639 {offsets = [96, 0], sizes = [32, 8], strides = [1, 1]} : vector<128x8xf32> to vector<32x8xf32>
    %692 = arith.negf %691 : vector<32x8xf32>
    %693 = math.exp %692 : vector<32x8xf32>
    %cst_187 = arith.constant 1.000000e+00 : f32
    %694 = vector.broadcast %cst_187 : f32 to vector<32x8xf32>
    %695 = arith.addf %694, %693 : vector<32x8xf32>
    %696 = arith.divf %694, %695 : vector<32x8xf32>
    %697 = arith.mulf %688, %610 : vector<32x8xf32>
    %698 = arith.mulf %682, %690 : vector<32x8xf32>
    %699 = arith.addf %697, %698 : vector<32x8xf32>
    %700 = math.tanh %699 : vector<32x8xf32>
    %701 = arith.mulf %696, %700 : vector<32x8xf32>
    %702 = vector.shape_cast %643 : vector<1x8xi1> to vector<1x8xi1>
    %703 = vector.broadcast %702 : vector<1x8xi1> to vector<32x8xi1>
    %704 = arith.select %703, %701, %676 : vector<32x8xi1>, vector<32x8xf32>
    %705 = vector.shape_cast %643 : vector<1x8xi1> to vector<1x8xi1>
    %706 = vector.broadcast %705 : vector<1x8xi1> to vector<32x8xi1>
    %707 = arith.select %706, %699, %610 : vector<32x8xi1>, vector<32x8xf32>
    %cst_188 = arith.constant 0.000000e+00 : f32
    %708 = vector.shape_cast %641 : vector<1x8xi1> to vector<1x8xi1>
    %709 = vector.broadcast %708 : vector<1x8xi1> to vector<32x8xi1>
    %710 = vector.broadcast %cst_188 : f32 to vector<32x8xf32>
    %711 = arith.select %709, %672, %710 : vector<32x8xi1>, vector<32x8xf32>
    %712 = arith.truncf %711 : vector<32x8xf32> to vector<32x8xbf16>
    %c5_189 = arith.constant 5 : index
    %c0_190 = arith.constant 0 : index
    %c0_191 = arith.constant 0 : index
    %713 = vector.load %arg14[%c5_189, %c0_190, %c0_191] : memref<8x32x8xbf16, #tpu.memory_space<vmem>>, vector<1x32x8xbf16>
    %714 = vector.shape_cast %713 : vector<1x32x8xbf16> to vector<32x8xbf16>
    %715 = vector.shape_cast %712 : vector<32x8xbf16> to vector<1x32x8xbf16>
    tpu.vector_store %arg14[%c5_189, %c0_190, %c0_191], %715 {strides = array<i32>} : memref<8x32x8xbf16, #tpu.memory_space<vmem>>, vector<1x32x8xbf16>,
    %cst_192 = arith.constant 0.000000e+00 : f32
    %716 = vector.shape_cast %643 : vector<1x8xi1> to vector<1x8xi1>
    %717 = vector.broadcast %716 : vector<1x8xi1> to vector<32x8xi1>
    %718 = vector.broadcast %cst_192 : f32 to vector<32x8xf32>
    %719 = arith.select %717, %704, %718 : vector<32x8xi1>, vector<32x8xf32>
    %720 = arith.truncf %719 : vector<32x8xf32> to vector<32x8xbf16>
    %c2_193 = arith.constant 2 : index
    %c0_194 = arith.constant 0 : index
    %c0_195 = arith.constant 0 : index
    %721 = vector.load %arg15[%c2_193, %c0_194, %c0_195] : memref<8x32x8xbf16, #tpu.memory_space<vmem>>, vector<1x32x8xbf16>
    %722 = vector.shape_cast %721 : vector<1x32x8xbf16> to vector<32x8xbf16>
    %723 = vector.shape_cast %720 : vector<32x8xbf16> to vector<1x32x8xbf16>
    tpu.vector_store %arg15[%c2_193, %c0_194, %c0_195], %723 {strides = array<i32>} : memref<8x32x8xbf16, #tpu.memory_space<vmem>>, vector<1x32x8xbf16>,
    %724 = tpu.concatenate %672, %704 in 0 : vector<32x8xf32>, vector<32x8xf32> -> vector<64x8xf32>
    %725 = arith.truncf %724 : vector<64x8xf32> to vector<64x8xbf16>
    %cst_196 = arith.constant dense<0.000000e+00> : vector<256x8xf32>
    %726 = tpu.matmul %138, %725, %cst_196 {dimension_numbers = #tpu.dot_dimension_numbers<[1], [0], [0], [1], [0, 0, 1, 1], [], []>} : vector<256x64xbf16>, vector<64x8xbf16>, vector<256x8xf32> -> vector<256x8xf32>
    %727 = vector.extract_strided_slice %726 {offsets = [0, 0], sizes = [128, 8], strides = [1, 1]} : vector<256x8xf32> to vector<128x8xf32>
    %c6_197 = arith.constant 6 : index
    %c0_198 = arith.constant 0 : index
    %c0_199 = arith.constant 0 : index
    %728 = vector.load %arg12[%c6_197, %c0_198, %c0_199] : memref<8x128x8xbf16, #tpu.memory_space<vmem>>, vector<1x128x8xbf16>
    %729 = vector.shape_cast %728 : vector<1x128x8xbf16> to vector<128x8xbf16>
    %730 = arith.extf %729 : vector<128x8xbf16> to vector<128x8xf32>
    %731 = arith.addf %727, %730 : vector<128x8xf32>
    %732 = vector.extract_strided_slice %726 {offsets = [128, 0], sizes = [128, 8], strides = [1, 1]} : vector<256x8xf32> to vector<128x8xf32>
    %c1_200 = arith.constant 1 : index
    %c0_201 = arith.constant 0 : index
    %c0_202 = arith.constant 0 : index
    %733 = vector.load %arg13[%c1_200, %c0_201, %c0_202] : memref<8x128x8xbf16, #tpu.memory_space<vmem>>, vector<1x128x8xbf16>
    %734 = vector.shape_cast %733 : vector<1x128x8xbf16> to vector<128x8xbf16>
    %735 = arith.extf %734 : vector<128x8xbf16> to vector<128x8xf32>
    %736 = arith.addf %732, %735 : vector<128x8xf32>
    %c6_i32_203 = arith.constant 6 : i32
    %737 = vector.broadcast %c6_i32_203 : i32 to vector<1x8xi32>
    %738 = arith.cmpi sgt, %139, %737 : vector<1x8xi32>
    %c1_i32_204 = arith.constant 1 : i32
    %739 = vector.broadcast %c1_i32_204 : i32 to vector<1x8xi32>
    %740 = arith.cmpi sgt, %139, %739 : vector<1x8xi32>
    %741 = vector.extract_strided_slice %724 {offsets = [0, 0], sizes = [32, 8], strides = [1, 1]} : vector<64x8xf32> to vector<32x8xf32>
    %742 = vector.extract_strided_slice %731 {offsets = [0, 0], sizes = [32, 8], strides = [1, 1]} : vector<128x8xf32> to vector<32x8xf32>
    %743 = arith.negf %742 : vector<32x8xf32>
    %744 = math.exp %743 : vector<32x8xf32>
    %cst_205 = arith.constant 1.000000e+00 : f32
    %745 = vector.broadcast %cst_205 : f32 to vector<32x8xf32>
    %746 = arith.addf %745, %744 : vector<32x8xf32>
    %747 = arith.divf %745, %746 : vector<32x8xf32>
    %748 = vector.extract_strided_slice %731 {offsets = [32, 0], sizes = [32, 8], strides = [1, 1]} : vector<128x8xf32> to vector<32x8xf32>
    %749 = arith.negf %748 : vector<32x8xf32>
    %750 = math.exp %749 : vector<32x8xf32>
    %cst_206 = arith.constant 1.000000e+00 : f32
    %751 = vector.broadcast %cst_206 : f32 to vector<32x8xf32>
    %752 = arith.addf %751, %750 : vector<32x8xf32>
    %753 = arith.divf %751, %752 : vector<32x8xf32>
    %754 = vector.extract_strided_slice %731 {offsets = [64, 0], sizes = [32, 8], strides = [1, 1]} : vector<128x8xf32> to vector<32x8xf32>
    %755 = math.tanh %754 : vector<32x8xf32>
    %756 = vector.extract_strided_slice %731 {offsets = [96, 0], sizes = [32, 8], strides = [1, 1]} : vector<128x8xf32> to vector<32x8xf32>
    %757 = arith.negf %756 : vector<32x8xf32>
    %758 = math.exp %757 : vector<32x8xf32>
    %cst_207 = arith.constant 1.000000e+00 : f32
    %759 = vector.broadcast %cst_207 : f32 to vector<32x8xf32>
    %760 = arith.addf %759, %758 : vector<32x8xf32>
    %761 = arith.divf %759, %760 : vector<32x8xf32>
    %762 = arith.mulf %753, %675 : vector<32x8xf32>
    %763 = arith.mulf %747, %755 : vector<32x8xf32>
    %764 = arith.addf %762, %763 : vector<32x8xf32>
    %765 = math.tanh %764 : vector<32x8xf32>
    %766 = arith.mulf %761, %765 : vector<32x8xf32>
    %767 = vector.shape_cast %738 : vector<1x8xi1> to vector<1x8xi1>
    %768 = vector.broadcast %767 : vector<1x8xi1> to vector<32x8xi1>
    %769 = arith.select %768, %766, %741 : vector<32x8xi1>, vector<32x8xf32>
    %770 = vector.shape_cast %738 : vector<1x8xi1> to vector<1x8xi1>
    %771 = vector.broadcast %770 : vector<1x8xi1> to vector<32x8xi1>
    %772 = arith.select %771, %764, %675 : vector<32x8xi1>, vector<32x8xf32>
    %773 = vector.extract_strided_slice %724 {offsets = [32, 0], sizes = [32, 8], strides = [1, 1]} : vector<64x8xf32> to vector<32x8xf32>
    %774 = vector.extract_strided_slice %736 {offsets = [0, 0], sizes = [32, 8], strides = [1, 1]} : vector<128x8xf32> to vector<32x8xf32>
    %775 = arith.negf %774 : vector<32x8xf32>
    %776 = math.exp %775 : vector<32x8xf32>
    %cst_208 = arith.constant 1.000000e+00 : f32
    %777 = vector.broadcast %cst_208 : f32 to vector<32x8xf32>
    %778 = arith.addf %777, %776 : vector<32x8xf32>
    %779 = arith.divf %777, %778 : vector<32x8xf32>
    %780 = vector.extract_strided_slice %736 {offsets = [32, 0], sizes = [32, 8], strides = [1, 1]} : vector<128x8xf32> to vector<32x8xf32>
    %781 = arith.negf %780 : vector<32x8xf32>
    %782 = math.exp %781 : vector<32x8xf32>
    %cst_209 = arith.constant 1.000000e+00 : f32
    %783 = vector.broadcast %cst_209 : f32 to vector<32x8xf32>
    %784 = arith.addf %783, %782 : vector<32x8xf32>
    %785 = arith.divf %783, %784 : vector<32x8xf32>
    %786 = vector.extract_strided_slice %736 {offsets = [64, 0], sizes = [32, 8], strides = [1, 1]} : vector<128x8xf32> to vector<32x8xf32>
    %787 = math.tanh %786 : vector<32x8xf32>
    %788 = vector.extract_strided_slice %736 {offsets = [96, 0], sizes = [32, 8], strides = [1, 1]} : vector<128x8xf32> to vector<32x8xf32>
    %789 = arith.negf %788 : vector<32x8xf32>
    %790 = math.exp %789 : vector<32x8xf32>
    %cst_210 = arith.constant 1.000000e+00 : f32
    %791 = vector.broadcast %cst_210 : f32 to vector<32x8xf32>
    %792 = arith.addf %791, %790 : vector<32x8xf32>
    %793 = arith.divf %791, %792 : vector<32x8xf32>
    %794 = arith.mulf %785, %707 : vector<32x8xf32>
    %795 = arith.mulf %779, %787 : vector<32x8xf32>
    %796 = arith.addf %794, %795 : vector<32x8xf32>
    %797 = math.tanh %796 : vector<32x8xf32>
    %798 = arith.mulf %793, %797 : vector<32x8xf32>
    %799 = vector.shape_cast %740 : vector<1x8xi1> to vector<1x8xi1>
    %800 = vector.broadcast %799 : vector<1x8xi1> to vector<32x8xi1>
    %801 = arith.select %800, %798, %773 : vector<32x8xi1>, vector<32x8xf32>
    %802 = vector.shape_cast %740 : vector<1x8xi1> to vector<1x8xi1>
    %803 = vector.broadcast %802 : vector<1x8xi1> to vector<32x8xi1>
    %804 = arith.select %803, %796, %707 : vector<32x8xi1>, vector<32x8xf32>
    %cst_211 = arith.constant 0.000000e+00 : f32
    %805 = vector.shape_cast %738 : vector<1x8xi1> to vector<1x8xi1>
    %806 = vector.broadcast %805 : vector<1x8xi1> to vector<32x8xi1>
    %807 = vector.broadcast %cst_211 : f32 to vector<32x8xf32>
    %808 = arith.select %806, %769, %807 : vector<32x8xi1>, vector<32x8xf32>
    %809 = arith.truncf %808 : vector<32x8xf32> to vector<32x8xbf16>
    %c6_212 = arith.constant 6 : index
    %c0_213 = arith.constant 0 : index
    %c0_214 = arith.constant 0 : index
    %810 = vector.load %arg14[%c6_212, %c0_213, %c0_214] : memref<8x32x8xbf16, #tpu.memory_space<vmem>>, vector<1x32x8xbf16>
    %811 = vector.shape_cast %810 : vector<1x32x8xbf16> to vector<32x8xbf16>
    %812 = vector.shape_cast %809 : vector<32x8xbf16> to vector<1x32x8xbf16>
    tpu.vector_store %arg14[%c6_212, %c0_213, %c0_214], %812 {strides = array<i32>} : memref<8x32x8xbf16, #tpu.memory_space<vmem>>, vector<1x32x8xbf16>,
    %cst_215 = arith.constant 0.000000e+00 : f32
    %813 = vector.shape_cast %740 : vector<1x8xi1> to vector<1x8xi1>
    %814 = vector.broadcast %813 : vector<1x8xi1> to vector<32x8xi1>
    %815 = vector.broadcast %cst_215 : f32 to vector<32x8xf32>
    %816 = arith.select %814, %801, %815 : vector<32x8xi1>, vector<32x8xf32>
    %817 = arith.truncf %816 : vector<32x8xf32> to vector<32x8xbf16>
    %c1_216 = arith.constant 1 : index
    %c0_217 = arith.constant 0 : index
    %c0_218 = arith.constant 0 : index
    %818 = vector.load %arg15[%c1_216, %c0_217, %c0_218] : memref<8x32x8xbf16, #tpu.memory_space<vmem>>, vector<1x32x8xbf16>
    %819 = vector.shape_cast %818 : vector<1x32x8xbf16> to vector<32x8xbf16>
    %820 = vector.shape_cast %817 : vector<32x8xbf16> to vector<1x32x8xbf16>
    tpu.vector_store %arg15[%c1_216, %c0_217, %c0_218], %820 {strides = array<i32>} : memref<8x32x8xbf16, #tpu.memory_space<vmem>>, vector<1x32x8xbf16>,
    %821 = tpu.concatenate %769, %801 in 0 : vector<32x8xf32>, vector<32x8xf32> -> vector<64x8xf32>
    %822 = arith.truncf %821 : vector<64x8xf32> to vector<64x8xbf16>
    %cst_219 = arith.constant dense<0.000000e+00> : vector<256x8xf32>
    %823 = tpu.matmul %138, %822, %cst_219 {dimension_numbers = #tpu.dot_dimension_numbers<[1], [0], [0], [1], [0, 0, 1, 1], [], []>} : vector<256x64xbf16>, vector<64x8xbf16>, vector<256x8xf32> -> vector<256x8xf32>
    %824 = vector.extract_strided_slice %823 {offsets = [0, 0], sizes = [128, 8], strides = [1, 1]} : vector<256x8xf32> to vector<128x8xf32>
    %c7_220 = arith.constant 7 : index
    %c0_221 = arith.constant 0 : index
    %c0_222 = arith.constant 0 : index
    %825 = vector.load %arg12[%c7_220, %c0_221, %c0_222] : memref<8x128x8xbf16, #tpu.memory_space<vmem>>, vector<1x128x8xbf16>
    %826 = vector.shape_cast %825 : vector<1x128x8xbf16> to vector<128x8xbf16>
    %827 = arith.extf %826 : vector<128x8xbf16> to vector<128x8xf32>
    %828 = arith.addf %824, %827 : vector<128x8xf32>
    %829 = vector.extract_strided_slice %823 {offsets = [128, 0], sizes = [128, 8], strides = [1, 1]} : vector<256x8xf32> to vector<128x8xf32>
    %c0_223 = arith.constant 0 : index
    %c0_224 = arith.constant 0 : index
    %c0_225 = arith.constant 0 : index
    %830 = vector.load %arg13[%c0_223, %c0_224, %c0_225] : memref<8x128x8xbf16, #tpu.memory_space<vmem>>, vector<1x128x8xbf16>
    %831 = vector.shape_cast %830 : vector<1x128x8xbf16> to vector<128x8xbf16>
    %832 = arith.extf %831 : vector<128x8xbf16> to vector<128x8xf32>
    %833 = arith.addf %829, %832 : vector<128x8xf32>
    %c7_i32_226 = arith.constant 7 : i32
    %834 = vector.broadcast %c7_i32_226 : i32 to vector<1x8xi32>
    %835 = arith.cmpi sgt, %139, %834 : vector<1x8xi32>
    %c0_i32_227 = arith.constant 0 : i32
    %836 = vector.broadcast %c0_i32_227 : i32 to vector<1x8xi32>
    %837 = arith.cmpi sgt, %139, %836 : vector<1x8xi32>
    %838 = vector.extract_strided_slice %821 {offsets = [0, 0], sizes = [32, 8], strides = [1, 1]} : vector<64x8xf32> to vector<32x8xf32>
    %839 = vector.extract_strided_slice %828 {offsets = [0, 0], sizes = [32, 8], strides = [1, 1]} : vector<128x8xf32> to vector<32x8xf32>
    %840 = arith.negf %839 : vector<32x8xf32>
    %841 = math.exp %840 : vector<32x8xf32>
    %cst_228 = arith.constant 1.000000e+00 : f32
    %842 = vector.broadcast %cst_228 : f32 to vector<32x8xf32>
    %843 = arith.addf %842, %841 : vector<32x8xf32>
    %844 = arith.divf %842, %843 : vector<32x8xf32>
    %845 = vector.extract_strided_slice %828 {offsets = [32, 0], sizes = [32, 8], strides = [1, 1]} : vector<128x8xf32> to vector<32x8xf32>
    %846 = arith.negf %845 : vector<32x8xf32>
    %847 = math.exp %846 : vector<32x8xf32>
    %cst_229 = arith.constant 1.000000e+00 : f32
    %848 = vector.broadcast %cst_229 : f32 to vector<32x8xf32>
    %849 = arith.addf %848, %847 : vector<32x8xf32>
    %850 = arith.divf %848, %849 : vector<32x8xf32>
    %851 = vector.extract_strided_slice %828 {offsets = [64, 0], sizes = [32, 8], strides = [1, 1]} : vector<128x8xf32> to vector<32x8xf32>
    %852 = math.tanh %851 : vector<32x8xf32>
    %853 = vector.extract_strided_slice %828 {offsets = [96, 0], sizes = [32, 8], strides = [1, 1]} : vector<128x8xf32> to vector<32x8xf32>
    %854 = arith.negf %853 : vector<32x8xf32>
    %855 = math.exp %854 : vector<32x8xf32>
    %cst_230 = arith.constant 1.000000e+00 : f32
    %856 = vector.broadcast %cst_230 : f32 to vector<32x8xf32>
    %857 = arith.addf %856, %855 : vector<32x8xf32>
    %858 = arith.divf %856, %857 : vector<32x8xf32>
    %859 = arith.mulf %850, %772 : vector<32x8xf32>
    %860 = arith.mulf %844, %852 : vector<32x8xf32>
    %861 = arith.addf %859, %860 : vector<32x8xf32>
    %862 = math.tanh %861 : vector<32x8xf32>
    %863 = arith.mulf %858, %862 : vector<32x8xf32>
    %864 = vector.shape_cast %835 : vector<1x8xi1> to vector<1x8xi1>
    %865 = vector.broadcast %864 : vector<1x8xi1> to vector<32x8xi1>
    %866 = arith.select %865, %863, %838 : vector<32x8xi1>, vector<32x8xf32>
    %867 = vector.extract_strided_slice %821 {offsets = [32, 0], sizes = [32, 8], strides = [1, 1]} : vector<64x8xf32> to vector<32x8xf32>
    %868 = vector.extract_strided_slice %833 {offsets = [0, 0], sizes = [32, 8], strides = [1, 1]} : vector<128x8xf32> to vector<32x8xf32>
    %869 = arith.negf %868 : vector<32x8xf32>
    %870 = math.exp %869 : vector<32x8xf32>
    %cst_231 = arith.constant 1.000000e+00 : f32
    %871 = vector.broadcast %cst_231 : f32 to vector<32x8xf32>
    %872 = arith.addf %871, %870 : vector<32x8xf32>
    %873 = arith.divf %871, %872 : vector<32x8xf32>
    %874 = vector.extract_strided_slice %833 {offsets = [32, 0], sizes = [32, 8], strides = [1, 1]} : vector<128x8xf32> to vector<32x8xf32>
    %875 = arith.negf %874 : vector<32x8xf32>
    %876 = math.exp %875 : vector<32x8xf32>
    %cst_232 = arith.constant 1.000000e+00 : f32
    %877 = vector.broadcast %cst_232 : f32 to vector<32x8xf32>
    %878 = arith.addf %877, %876 : vector<32x8xf32>
    %879 = arith.divf %877, %878 : vector<32x8xf32>
    %880 = vector.extract_strided_slice %833 {offsets = [64, 0], sizes = [32, 8], strides = [1, 1]} : vector<128x8xf32> to vector<32x8xf32>
    %881 = math.tanh %880 : vector<32x8xf32>
    %882 = vector.extract_strided_slice %833 {offsets = [96, 0], sizes = [32, 8], strides = [1, 1]} : vector<128x8xf32> to vector<32x8xf32>
    %883 = arith.negf %882 : vector<32x8xf32>
    %884 = math.exp %883 : vector<32x8xf32>
    %cst_233 = arith.constant 1.000000e+00 : f32
    %885 = vector.broadcast %cst_233 : f32 to vector<32x8xf32>
    %886 = arith.addf %885, %884 : vector<32x8xf32>
    %887 = arith.divf %885, %886 : vector<32x8xf32>
    %888 = arith.mulf %879, %804 : vector<32x8xf32>
    %889 = arith.mulf %873, %881 : vector<32x8xf32>
    %890 = arith.addf %888, %889 : vector<32x8xf32>
    %891 = math.tanh %890 : vector<32x8xf32>
    %892 = arith.mulf %887, %891 : vector<32x8xf32>
    %893 = vector.shape_cast %837 : vector<1x8xi1> to vector<1x8xi1>
    %894 = vector.broadcast %893 : vector<1x8xi1> to vector<32x8xi1>
    %895 = arith.select %894, %892, %867 : vector<32x8xi1>, vector<32x8xf32>
    %cst_234 = arith.constant 0.000000e+00 : f32
    %896 = vector.shape_cast %835 : vector<1x8xi1> to vector<1x8xi1>
    %897 = vector.broadcast %896 : vector<1x8xi1> to vector<32x8xi1>
    %898 = vector.broadcast %cst_234 : f32 to vector<32x8xf32>
    %899 = arith.select %897, %866, %898 : vector<32x8xi1>, vector<32x8xf32>
    %900 = arith.truncf %899 : vector<32x8xf32> to vector<32x8xbf16>
    %c7_235 = arith.constant 7 : index
    %c0_236 = arith.constant 0 : index
    %c0_237 = arith.constant 0 : index
    %901 = vector.load %arg14[%c7_235, %c0_236, %c0_237] : memref<8x32x8xbf16, #tpu.memory_space<vmem>>, vector<1x32x8xbf16>
    %902 = vector.shape_cast %901 : vector<1x32x8xbf16> to vector<32x8xbf16>
    %903 = vector.shape_cast %900 : vector<32x8xbf16> to vector<1x32x8xbf16>
    tpu.vector_store %arg14[%c7_235, %c0_236, %c0_237], %903 {strides = array<i32>} : memref<8x32x8xbf16, #tpu.memory_space<vmem>>, vector<1x32x8xbf16>,
    %cst_238 = arith.constant 0.000000e+00 : f32
    %904 = vector.shape_cast %837 : vector<1x8xi1> to vector<1x8xi1>
    %905 = vector.broadcast %904 : vector<1x8xi1> to vector<32x8xi1>
    %906 = vector.broadcast %cst_238 : f32 to vector<32x8xf32>
    %907 = arith.select %905, %895, %906 : vector<32x8xi1>, vector<32x8xf32>
    %908 = arith.truncf %907 : vector<32x8xf32> to vector<32x8xbf16>
    %c0_239 = arith.constant 0 : index
    %c0_240 = arith.constant 0 : index
    %c0_241 = arith.constant 0 : index
    %909 = vector.load %arg15[%c0_239, %c0_240, %c0_241] : memref<8x32x8xbf16, #tpu.memory_space<vmem>>, vector<1x32x8xbf16>
    %910 = vector.shape_cast %909 : vector<1x32x8xbf16> to vector<32x8xbf16>
    %911 = vector.shape_cast %908 : vector<32x8xbf16> to vector<1x32x8xbf16>
    tpu.vector_store %arg15[%c0_239, %c0_240, %c0_241], %911 {strides = array<i32>} : memref<8x32x8xbf16, #tpu.memory_space<vmem>>, vector<1x32x8xbf16>,
    %c0_242 = arith.constant 0 : index
    %c0_243 = arith.constant 0 : index
    %c0_244 = arith.constant 0 : index
    %912 = vector.load %arg14[%c0_242, %c0_243, %c0_244] : memref<8x32x8xbf16, #tpu.memory_space<vmem>>, vector<8x32x8xbf16>
    %913 = arith.extf %912 : vector<8x32x8xbf16> to vector<8x32x8xf32>
    %c0_245 = arith.constant 0 : index
    %c0_246 = arith.constant 0 : index
    %c0_247 = arith.constant 0 : index
    %914 = vector.load %arg15[%c0_245, %c0_246, %c0_247] : memref<8x32x8xbf16, #tpu.memory_space<vmem>>, vector<8x32x8xbf16>
    %915 = arith.extf %914 : vector<8x32x8xbf16> to vector<8x32x8xf32>
    %c0_248 = arith.constant 0 : index
    %c0_249 = arith.constant 0 : index
    %916 = vector.load %arg6[%c0_248, %c0_249] : memref<32x1xf32, #tpu.memory_space<vmem>>, vector<32x1xf32>
    %917 = vector.shape_cast %916 : vector<32x1xf32> to vector<1x32x1xf32>
    %918 = vector.broadcast %917 : vector<1x32x1xf32> to vector<8x32x8xf32>
    %919 = arith.mulf %913, %918 : vector<8x32x8xf32>
    %cst_250 = arith.constant dense<0.000000e+00> : vector<8x8xf32>
    %920 = vector.multi_reduction <add>, %919, %cst_250 [1] : vector<8x32x8xf32> to vector<8x8xf32>
    %c0_251 = arith.constant 0 : index
    %c0_252 = arith.constant 0 : index
    %921 = vector.load %arg7[%c0_251, %c0_252] : memref<32x1xf32, #tpu.memory_space<vmem>>, vector<32x1xf32>
    %922 = vector.shape_cast %921 : vector<32x1xf32> to vector<1x32x1xf32>
    %923 = vector.broadcast %922 : vector<1x32x1xf32> to vector<8x32x8xf32>
    %924 = arith.mulf %915, %923 : vector<8x32x8xf32>
    %cst_253 = arith.constant dense<0.000000e+00> : vector<8x8xf32>
    %925 = vector.multi_reduction <add>, %924, %cst_253 [1] : vector<8x32x8xf32> to vector<8x8xf32>
    %926 = arith.addf %920, %925 : vector<8x8xf32>
    %c0_254 = arith.constant 0 : index
    %c0_255 = arith.constant 0 : index
    %927 = vector.load %arg8[%c0_254, %c0_255] : memref<1x1xf32, #tpu.memory_space<vmem>>, vector<1x1xf32>
    %928 = vector.broadcast %927 : vector<1x1xf32> to vector<8x8xf32>
    %929 = arith.addf %926, %928 : vector<8x8xf32>
    %930 = tpu.iota {dimensions = array<i32: 0>} : vector<8x8xi32>
    %931 = vector.broadcast %139 : vector<1x8xi32> to vector<8x8xi32>
    %932 = arith.cmpi slt, %930, %931 : vector<8x8xi32>
    %cst_256 = arith.constant 0xFF800000 : f32
    %933 = vector.broadcast %cst_256 : f32 to vector<8x8xf32>
    %934 = arith.select %932, %929, %933 : vector<8x8xi1>, vector<8x8xf32>
    %cst_257 = arith.constant dense<0xFF800000> : vector<8xf32>
    %935 = vector.multi_reduction <maximumf>, %934, %cst_257 [0] : vector<8x8xf32> to vector<8xf32>
    %936 = vector.shape_cast %935 : vector<8xf32> to vector<1x8xf32>
    %937 = vector.broadcast %936 : vector<1x8xf32> to vector<8x8xf32>
    %938 = arith.subf %934, %937 : vector<8x8xf32>
    %939 = math.exp %938 : vector<8x8xf32>
    %940 = arith.extui %932 : vector<8x8xi1> to vector<8x8xi32>
    %941 = arith.sitofp %940 : vector<8x8xi32> to vector<8x8xf32>
    %942 = arith.mulf %939, %941 : vector<8x8xf32>
    %cst_258 = arith.constant dense<0.000000e+00> : vector<8xf32>
    %943 = vector.multi_reduction <add>, %942, %cst_258 [0] : vector<8x8xf32> to vector<8xf32>
    %944 = vector.shape_cast %943 : vector<8xf32> to vector<1x8xf32>
    %945 = tpu.reciprocal %944 {approx = true} : vector<1x8xf32> -> vector<1x8xf32>
    %946 = vector.broadcast %945 : vector<1x8xf32> to vector<8x8xf32>
    %947 = arith.mulf %942, %946 : vector<8x8xf32>
    %948 = vector.shape_cast %947 : vector<8x8xf32> to vector<8x1x8xf32>
    %949 = vector.broadcast %948 : vector<8x1x8xf32> to vector<8x32x8xf32>
    %950 = arith.mulf %949, %913 : vector<8x32x8xf32>
    %cst_259 = arith.constant dense<0.000000e+00> : vector<32x8xf32>
    %951 = vector.multi_reduction <add>, %950, %cst_259 [0] : vector<8x32x8xf32> to vector<32x8xf32>
    %952 = vector.shape_cast %947 : vector<8x8xf32> to vector<8x1x8xf32>
    %953 = vector.broadcast %952 : vector<8x1x8xf32> to vector<8x32x8xf32>
    %954 = arith.mulf %953, %915 : vector<8x32x8xf32>
    %cst_260 = arith.constant dense<0.000000e+00> : vector<32x8xf32>
    %955 = vector.multi_reduction <add>, %954, %cst_260 [0] : vector<8x32x8xf32> to vector<32x8xf32>
    %956 = tpu.concatenate %951, %955 in 0 : vector<32x8xf32>, vector<32x8xf32> -> vector<64x8xf32>
    %957 = arith.truncf %956 : vector<64x8xf32> to vector<64x8xbf16>
    %c0_261 = arith.constant 0 : index
    %c0_262 = arith.constant 0 : index
    %958 = vector.load %arg9[%c0_261, %c0_262] : memref<8x64xbf16, #tpu.memory_space<vmem>>, vector<8x64xbf16>
    %cst_263 = arith.constant dense<0.000000e+00> : vector<8x8xf32>
    %959 = tpu.matmul %958, %957, %cst_263 {dimension_numbers = #tpu.dot_dimension_numbers<[1], [0], [0], [1], [0, 0, 1, 1], [], []>} : vector<8x64xbf16>, vector<64x8xbf16>, vector<8x8xf32> -> vector<8x8xf32>
    %c0_264 = arith.constant 0 : index
    %c0_265 = arith.constant 0 : index
    %960 = vector.load %arg10[%c0_264, %c0_265] : memref<8x1xf32, #tpu.memory_space<vmem>>, vector<8x1xf32>
    %961 = vector.broadcast %960 : vector<8x1xf32> to vector<8x8xf32>
    %962 = arith.addf %959, %961 : vector<8x8xf32>
    %c0_266 = arith.constant 0 : index
    %c0_267 = arith.constant 0 : index
    %963 = vector.load %arg11[%c0_266, %c0_267] : memref<8x8xf32, #tpu.memory_space<vmem>>, vector<8x8xf32>
    tpu.vector_store %arg11[%c0_266, %c0_267], %962 {strides = array<i32>} : memref<8x8xf32, #tpu.memory_space<vmem>>, vector<8x8xf32>,
    return
  }
  func.func @transform_0(%arg0: i32) -> (i32, i32, i32) {
    %c0_i32 = arith.constant 0 : i32
    %c0_i32_0 = arith.constant 0 : i32
    %c0_i32_1 = arith.constant 0 : i32
    return %c0_i32, %c0_i32_0, %arg0 : i32, i32, i32
  }
  func.func @transform_1(%arg0: i32) -> (i32, i32) {
    %c0_i32 = arith.constant 0 : i32
    %c0_i32_0 = arith.constant 0 : i32
    return %c0_i32, %arg0 : i32, i32
  }
  func.func @transform_2(%arg0: i32) -> (i32, i32) {
    %c0_i32 = arith.constant 0 : i32
    %c0_i32_0 = arith.constant 0 : i32
    %c0_i32_1 = arith.constant 0 : i32
    return %c0_i32, %c0_i32_0 : i32, i32
  }
  func.func @transform_3(%arg0: i32) -> (i32, i32) {
    %c0_i32 = arith.constant 0 : i32
    %c0_i32_0 = arith.constant 0 : i32
    %c0_i32_1 = arith.constant 0 : i32
    return %c0_i32, %c0_i32_0 : i32, i32
  }
  func.func @transform_4(%arg0: i32) -> (i32, i32) {
    %c0_i32 = arith.constant 0 : i32
    %c0_i32_0 = arith.constant 0 : i32
    %c0_i32_1 = arith.constant 0 : i32
    return %c0_i32, %c0_i32_0 : i32, i32
  }
  func.func @transform_5(%arg0: i32) -> (i32, i32) {
    %c0_i32 = arith.constant 0 : i32
    %c0_i32_0 = arith.constant 0 : i32
    %c0_i32_1 = arith.constant 0 : i32
    return %c0_i32, %c0_i32_0 : i32, i32
  }
  func.func @transform_6(%arg0: i32) -> (i32, i32) {
    %c0_i32 = arith.constant 0 : i32
    %c0_i32_0 = arith.constant 0 : i32
    %c0_i32_1 = arith.constant 0 : i32
    return %c0_i32, %c0_i32_0 : i32, i32
  }
  func.func @transform_7(%arg0: i32) -> (i32, i32) {
    %c0_i32 = arith.constant 0 : i32
    %c0_i32_0 = arith.constant 0 : i32
    %c0_i32_1 = arith.constant 0 : i32
    return %c0_i32, %c0_i32_0 : i32, i32
  }
  func.func @transform_8(%arg0: i32) -> (i32, i32) {
    %c0_i32 = arith.constant 0 : i32
    %c0_i32_0 = arith.constant 0 : i32
    %c0_i32_1 = arith.constant 0 : i32
    return %c0_i32, %c0_i32_0 : i32, i32
  }
  func.func @transform_9(%arg0: i32) -> (i32, i32) {
    %c0_i32 = arith.constant 0 : i32
    %c0_i32_0 = arith.constant 0 : i32
    %c0_i32_1 = arith.constant 0 : i32
    return %c0_i32, %c0_i32_0 : i32, i32
  }
  func.func @transform_10(%arg0: i32) -> (i32, i32) {
    %c0_i32 = arith.constant 0 : i32
    %c0_i32_0 = arith.constant 0 : i32
    return %c0_i32, %arg0 : i32, i32
  }
}

</mosaic_0001>

<llo_original>
// kernel: birnn_attention.1
$region0: #{birnn_attention.1}
  #allocation0 [shape = 'u32[]', space=smem, size = 0x4, offset = 0x4, fixed_abs, tag = 'smem constant byte address 0x4 - core index']
  #allocation1 [shape = 'u32[144,128]{1,0:T(1,128)}', space=vmem, size = 0x12000, scoped, tag = 'internal scratch']
  #allocation2 [shape = 'bf16[8,128,8]{2,1,0:T(8,128)(2,1)}', space=vmem, size = 0x40000, scoped, tag = 'scratch operand']
  #allocation3 [shape = 'bf16[8,128,8]{2,1,0:T(8,128)(2,1)}', space=vmem, size = 0x40000, scoped, tag = 'scratch operand']
  #allocation4 [shape = 'bf16[8,32,8]{2,1,0:T(8,128)(2,1)}', space=vmem, size = 0x10000, scoped, tag = 'scratch operand']
  #allocation5 [shape = 'bf16[8,32,8]{2,1,0:T(8,128)(2,1)}', space=vmem, size = 0x10000, scoped, tag = 'scratch operand']
  #allocation6 [shape = 'f32[1,1]{1,0:T(1,128)S(1)}', space=vmem, size = 0x200, scoped, tag = 'scoped memory for birnn_attention.1']
  %s0 = inlined_call_operand.vmem [shape: bf16[8,16,8], index: 0, kind: input, shape index: {}]
  %s1 = inlined_call_operand.vmem [shape: s32[1,8], index: 1, kind: input, shape index: {}]
  %s2 = inlined_call_operand.vmem [shape: bf16[256,16], index: 2, kind: input, shape index: {}]
  %s3 = inlined_call_operand.vmem [shape: bf16[256,64], index: 3, kind: input, shape index: {}]
  %s4 = inlined_call_operand.vmem [shape: f32[256,1], index: 4, kind: input, shape index: {}]
  %s5 = inlined_call_operand.vmem [shape: f32[32,1], index: 5, kind: input, shape index: {}]
  %s6 = inlined_call_operand.vmem [shape: f32[32,1], index: 6, kind: input, shape index: {}]
  %s7 = inlined_call_operand.<no memory space> [shape: f32[1,1], index: 7, kind: input, shape index: {}]
  %s8 = inlined_call_operand.vmem [shape: bf16[8,64], index: 8, kind: input, shape index: {}]
  %s9 = inlined_call_operand.vmem [shape: f32[8,1], index: 9, kind: input, shape index: {}]
  %s10 = inlined_call_operand.vmem [shape: f32[8,8], index: 10, kind: output, shape index: {}]
  %s11 = sld [smem:[#allocation0]]
  $region50: #{birnn_attention.1} parent=0
    _
  %s13 = ssub.s32 1, %s11
  %s14 = scalar_select 0, %s13, %s11
  %v15 = vstv %s7
  %16 = vst [vmem:[#allocation6] sm:$0x1] %v15
  // Predicated region
  $region2: #{birnn_attention.1} parent=0 // pred_check
    _
  $region3: #{birnn_attention.1} parent=0 // pred_check_branch
    %18 = sbr.rel (0) target = $region5
  $region4: #{birnn_attention.1} parent=0 // pred_region
    _
  $region5: #{birnn_attention.1} parent=0 // pred_fallthru
    _
  // Predicated region
  $region6: #{birnn_attention.1} parent=0 // pred_check
    _
  $region7: #{birnn_attention.1} parent=0 // pred_check_branch
    %20 = sbr.rel (0) target = $region9
  $region8: #{birnn_attention.1} parent=0 // pred_region
    _
  $region9: #{birnn_attention.1} parent=0 // pred_fallthru
    _
  // Predicated region
  $region10: #{birnn_attention.1} parent=0 // pred_check
    _
  $region11: #{birnn_attention.1} parent=0 // pred_check_branch
    %22 = sbr.rel (0) target = $region13
  $region12: #{birnn_attention.1} parent=0 // pred_region
    _
  $region13: #{birnn_attention.1} parent=0 // pred_fallthru
    _
  // Predicated region
  $region14: #{birnn_attention.1} parent=0 // pred_check
    _
  $region15: #{birnn_attention.1} parent=0 // pred_check_branch
    %24 = sbr.rel (0) target = $region17
  $region16: #{birnn_attention.1} parent=0 // pred_region
    _
  $region17: #{birnn_attention.1} parent=0 // pred_fallthru
    _
  // Predicated region
  $region18: #{birnn_attention.1} parent=0 // pred_check
    _
  $region19: #{birnn_attention.1} parent=0 // pred_check_branch
    %26 = sbr.rel (0) target = $region21
  $region20: #{birnn_attention.1} parent=0 // pred_region
    _
  $region21: #{birnn_attention.1} parent=0 // pred_fallthru
    _
  // Predicated region
  $region22: #{birnn_attention.1} parent=0 // pred_check
    _
  $region23: #{birnn_attention.1} parent=0 // pred_check_branch
    %28 = sbr.rel (0) target = $region25
  $region24: #{birnn_attention.1} parent=0 // pred_region
    _
  $region25: #{birnn_attention.1} parent=0 // pred_fallthru
    _
  // Predicated region
  $region26: #{birnn_attention.1} parent=0 // pred_check
    _
  $region27: #{birnn_attention.1} parent=0 // pred_check_branch
    %30 = sbr.rel (0) target = $region29
  $region28: #{birnn_attention.1} parent=0 // pred_region
    _
  $region29: #{birnn_attention.1} parent=0 // pred_fallthru
    _
  // Predicated region
  $region30: #{birnn_attention.1} parent=0 // pred_check
    _
  $region31: #{birnn_attention.1} parent=0 // pred_check_branch
    %32 = sbr.rel (0) target = $region33
  $region32: #{birnn_attention.1} parent=0 // pred_region
    _
  $region33: #{birnn_attention.1} parent=0 // pred_fallthru
    _
  // Predicated region
  $region34: #{birnn_attention.1} parent=0 // pred_check
    _
  $region35: #{birnn_attention.1} parent=0 // pred_check_branch
    %34 = sbr.rel (0) target = $region37
  $region36: #{birnn_attention.1} parent=0 // pred_region
    _
  $region37: #{birnn_attention.1} parent=0 // pred_fallthru
    _
  // Predicated region
  $region38: #{birnn_attention.1} parent=0 // pred_check
    _
  $region39: #{birnn_attention.1} parent=0 // pred_check_branch
    %36 = sbr.rel (0) target = $region41
  $region40: #{birnn_attention.1} parent=0 // pred_region
    _
  $region41: #{birnn_attention.1} parent=0 // pred_fallthru
    _
  %v38 = vld [vmem:[%s2] sm:$0xf]
  %v39 = vld [vmem:[%s2 + $0x4] sm:$0xf]
  %v40 = vld [vmem:[%s2 + $0x8] sm:$0xf]
  %v41 = vld [vmem:[%s2 + $0xc] sm:$0xf]
  %v42 = vld [vmem:[%s2 + $0x10] sm:$0xf]
  %v43 = vld [vmem:[%s2 + $0x14] sm:$0xf]
  %v44 = vld [vmem:[%s2 + $0x18] sm:$0xf]
  %v45 = vld [vmem:[%s2 + $0x1c] sm:$0xf]
  %v46 = vld [vmem:[%s2 + $0x20] sm:$0xf]
  %v47 = vld [vmem:[%s2 + $0x24] sm:$0xf]
  %v48 = vld [vmem:[%s2 + $0x28] sm:$0xf]
  %v49 = vld [vmem:[%s2 + $0x2c] sm:$0xf]
  %v50 = vld [vmem:[%s2 + $0x30] sm:$0xf]
  %v51 = vld [vmem:[%s2 + $0x34] sm:$0xf]
  %v52 = vld [vmem:[%s2 + $0x38] sm:$0xf]
  %v53 = vld [vmem:[%s2 + $0x3c] sm:$0xf]
  %v54 = vld [vmem:[%s2 + $0x40] sm:$0xf]
  %v55 = vld [vmem:[%s2 + $0x44] sm:$0xf]
  %v56 = vld [vmem:[%s2 + $0x48] sm:$0xf]
  %v57 = vld [vmem:[%s2 + $0x4c] sm:$0xf]
  %v58 = vld [vmem:[%s2 + $0x50] sm:$0xf]
  %v59 = vld [vmem:[%s2 + $0x54] sm:$0xf]
  %v60 = vld [vmem:[%s2 + $0x58] sm:$0xf]
  %v61 = vld [vmem:[%s2 + $0x5c] sm:$0xf]
  %v62 = vld [vmem:[%s2 + $0x60] sm:$0xf]
  %v63 = vld [vmem:[%s2 + $0x64] sm:$0xf]
  %v64 = vld [vmem:[%s2 + $0x68] sm:$0xf]
  %v65 = vld [vmem:[%s2 + $0x6c] sm:$0xf]
  %v66 = vld [vmem:[%s2 + $0x70] sm:$0xf]
  %v67 = vld [vmem:[%s2 + $0x74] sm:$0xf]
  %v68 = vld [vmem:[%s2 + $0x78] sm:$0xf]
  %v69 = vld [vmem:[%s2 + $0x7c] sm:$0xf]
  %v70 = vld [vmem:[%s4] sm:$0xff]
  %v71 = vld [vmem:[%s4 + $0x8] sm:$0xff]
  %v72 = vld [vmem:[%s4 + $0x10] sm:$0xff]
  %v73 = vld [vmem:[%s4 + $0x18] sm:$0xff]
  %v74 = vld [vmem:[%s4 + $0x20] sm:$0xff]
  %v75 = vld [vmem:[%s4 + $0x28] sm:$0xff]
  %v76 = vld [vmem:[%s4 + $0x30] sm:$0xff]
  %v77 = vld [vmem:[%s4 + $0x38] sm:$0xff]
  %v78 = vld [vmem:[%s4 + $0x40] sm:$0xff]
  %v79 = vld [vmem:[%s4 + $0x48] sm:$0xff]
  %v80 = vld [vmem:[%s4 + $0x50] sm:$0xff]
  %v81 = vld [vmem:[%s4 + $0x58] sm:$0xff]
  %v82 = vld [vmem:[%s4 + $0x60] sm:$0xff]
  %v83 = vld [vmem:[%s4 + $0x68] sm:$0xff]
  %v84 = vld [vmem:[%s4 + $0x70] sm:$0xff]
  %v85 = vld [vmem:[%s4 + $0x78] sm:$0xff]
  %v86 = vld [vmem:[%s4 + $0x80] sm:$0xff]
  %v87 = vld [vmem:[%s4 + $0x88] sm:$0xff]
  %v88 = vld [vmem:[%s4 + $0x90] sm:$0xff]
  %v89 = vld [vmem:[%s4 + $0x98] sm:$0xff]
  %v90 = vld [vmem:[%s4 + $0xa0] sm:$0xff]
  %v91 = vld [vmem:[%s4 + $0xa8] sm:$0xff]
  %v92 = vld [vmem:[%s4 + $0xb0] sm:$0xff]
  %v93 = vld [vmem:[%s4 + $0xb8] sm:$0xff]
  %v94 = vld [vmem:[%s4 + $0xc0] sm:$0xff]
  %v95 = vld [vmem:[%s4 + $0xc8] sm:$0xff]
  %v96 = vld [vmem:[%s4 + $0xd0] sm:$0xff]
  %v97 = vld [vmem:[%s4 + $0xd8] sm:$0xff]
  %v98 = vld [vmem:[%s4 + $0xe0] sm:$0xff]
  %v99 = vld [vmem:[%s4 + $0xe8] sm:$0xff]
  %v100 = vld [vmem:[%s4 + $0xf0] sm:$0xff]
  %v101 = vld [vmem:[%s4 + $0xf8] sm:$0xff]
  %v102 = vld [vmem:[%s0] sm:$0xf]
  %v103 = vld [vmem:[%s0 + $0x4] sm:$0xf]
  %105 = vset.pattern.permute.xlu0 0
  %106 = vperm.xlu0 %105, %v70
  %v107 = vpop.permute.xlu0 %106
  %110 = vset.pattern.permute.xlu0 0
  %111 = vperm.xlu0 %110, %v71
  %v112 = vpop.permute.xlu0 %111
  %115 = vset.pattern.permute.xlu0 0
  %116 = vperm.xlu0 %115, %v72
  %v117 = vpop.permute.xlu0 %116
  %120 = vset.pattern.permute.xlu0 0
  %121 = vperm.xlu0 %120, %v73
  %v122 = vpop.permute.xlu0 %121
  %125 = vset.pattern.permute.xlu0 0
  %126 = vperm.xlu0 %125, %v74
  %v127 = vpop.permute.xlu0 %126
  %130 = vset.pattern.permute.xlu0 0
  %131 = vperm.xlu0 %130, %v75
  %v132 = vpop.permute.xlu0 %131
  %135 = vset.pattern.permute.xlu0 0
  %136 = vperm.xlu0 %135, %v76
  %v137 = vpop.permute.xlu0 %136
  %140 = vset.pattern.permute.xlu0 0
  %141 = vperm.xlu0 %140, %v77
  %v142 = vpop.permute.xlu0 %141
  %145 = vset.pattern.permute.xlu0 0
  %146 = vperm.xlu0 %145, %v78
  %v147 = vpop.permute.xlu0 %146
  %150 = vset.pattern.permute.xlu0 0
  %151 = vperm.xlu0 %150, %v79
  %v152 = vpop.permute.xlu0 %151
  %155 = vset.pattern.permute.xlu0 0
  %156 = vperm.xlu0 %155, %v80
  %v157 = vpop.permute.xlu0 %156
  %160 = vset.pattern.permute.xlu0 0
  %161 = vperm.xlu0 %160, %v81
  %v162 = vpop.permute.xlu0 %161
  %165 = vset.pattern.permute.xlu0 0
  %166 = vperm.xlu0 %165, %v82
  %v167 = vpop.permute.xlu0 %166
  %170 = vset.pattern.permute.xlu0 0
  %171 = vperm.xlu0 %170, %v83
  %v172 = vpop.permute.xlu0 %171
  %175 = vset.pattern.permute.xlu0 0
  %176 = vperm.xlu0 %175, %v84
  %v177 = vpop.permute.xlu0 %176
  %180 = vset.pattern.permute.xlu0 0
  %181 = vperm.xlu0 %180, %v85
  %v182 = vpop.permute.xlu0 %181
  %185 = vset.pattern.permute.xlu0 0
  %186 = vperm.xlu0 %185, %v86
  %v187 = vpop.permute.xlu0 %186
  %190 = vset.pattern.permute.xlu0 0
  %191 = vperm.xlu0 %190, %v87
  %v192 = vpop.permute.xlu0 %191
  %195 = vset.pattern.permute.xlu0 0
  %196 = vperm.xlu0 %195, %v88
  %v197 = vpop.permute.xlu0 %196
  %200 = vset.pattern.permute.xlu0 0
  %201 = vperm.xlu0 %200, %v89
  %v202 = vpop.permute.xlu0 %201
  %205 = vset.pattern.permute.xlu0 0
  %206 = vperm.xlu0 %205, %v90
  %v207 = vpop.permute.xlu0 %206
  %210 = vset.pattern.permute.xlu0 0
  %211 = vperm.xlu0 %210, %v91
  %v212 = vpop.permute.xlu0 %211
  %215 = vset.pattern.permute.xlu0 0
  %216 = vperm.xlu0 %215, %v92
  %v217 = vpop.permute.xlu0 %216
  %220 = vset.pattern.permute.xlu0 0
  %221 = vperm.xlu0 %220, %v93
  %v222 = vpop.permute.xlu0 %221
  %225 = vset.pattern.permute.xlu0 0
  %226 = vperm.xlu0 %225, %v94
  %v227 = vpop.permute.xlu0 %226
  %230 = vset.pattern.permute.xlu0 0
  %231 = vperm.xlu0 %230, %v95
  %v232 = vpop.permute.xlu0 %231
  %235 = vset.pattern.permute.xlu0 0
  %236 = vperm.xlu0 %235, %v96
  %v237 = vpop.permute.xlu0 %236
  %240 = vset.pattern.permute.xlu0 0
  %241 = vperm.xlu0 %240, %v97
  %v242 = vpop.permute.xlu0 %241
  %245 = vset.pattern.permute.xlu0 0
  %246 = vperm.xlu0 %245, %v98
  %v247 = vpop.permute.xlu0 %246
  %250 = vset.pattern.permute.xlu0 0
  %251 = vperm.xlu0 %250, %v99
  %v252 = vpop.permute.xlu0 %251
  %255 = vset.pattern.permute.xlu0 0
  %256 = vperm.xlu0 %255, %v100
  %v257 = vpop.permute.xlu0 %256
  %260 = vset.pattern.permute.xlu0 0
  %261 = vperm.xlu0 %260, %v101
  %v262 = vpop.permute.xlu0 %261
  %v296 = vunpack.c.l.b16 %v38
  %v297 = vunpack.c.l.b16 %v39
  %v298 = vunpack.c.l.b16 %v40
  %v299 = vunpack.c.l.b16 %v41
  %v300 = vunpack.c.l.b16 %v42
  %v301 = vunpack.c.l.b16 %v43
  %v302 = vunpack.c.l.b16 %v44
  %v303 = vunpack.c.l.b16 %v45
  %v304 = vunpack.c.l.b16 %v46
  %v305 = vunpack.c.l.b16 %v47
  %v306 = vunpack.c.l.b16 %v48
  %v307 = vunpack.c.l.b16 %v49
  %v308 = vunpack.c.l.b16 %v50
  %v309 = vunpack.c.l.b16 %v51
  %v310 = vunpack.c.l.b16 %v52
  %v311 = vunpack.c.l.b16 %v53
  %v312 = vunpack.c.l.b16 %v54
  %v313 = vunpack.c.l.b16 %v55
  %v314 = vunpack.c.l.b16 %v56
  %v315 = vunpack.c.l.b16 %v57
  %v316 = vunpack.c.l.b16 %v58
  %v317 = vunpack.c.l.b16 %v59
  %v318 = vunpack.c.l.b16 %v60
  %v319 = vunpack.c.l.b16 %v61
  %v320 = vunpack.c.l.b16 %v62
  %v321 = vunpack.c.l.b16 %v63
  %v322 = vunpack.c.l.b16 %v64
  %v323 = vunpack.c.l.b16 %v65
  %v324 = vunpack.c.l.b16 %v66
  %v325 = vunpack.c.l.b16 %v67
  %v326 = vunpack.c.l.b16 %v68
  %v327 = vunpack.c.l.b16 %v69
  %v328 = vpack.c.b16 %v297, %v296
  %v329 = vpack.c.b16 %v299, %v298
  %v330 = vpack.c.b16 %v301, %v300
  %v331 = vpack.c.b16 %v303, %v302
  %v332 = vpack.c.b16 %v305, %v304
  %v333 = vpack.c.b16 %v307, %v306
  %v334 = vpack.c.b16 %v309, %v308
  %v335 = vpack.c.b16 %v311, %v310
  %v336 = vpack.c.b16 %v313, %v312
  %v337 = vpack.c.b16 %v315, %v314
  %v338 = vpack.c.b16 %v317, %v316
  %v339 = vpack.c.b16 %v319, %v318
  %v340 = vpack.c.b16 %v321, %v320
  %v341 = vpack.c.b16 %v323, %v322
  %v342 = vpack.c.b16 %v325, %v324
  %v343 = vpack.c.b16 %v327, %v326
  %v346 = vunpack.c.l.b16 %v102
  %v347 = vunpack.c.l.b16 %v103
  %v348 = vpack.c.b16 %v347, %v346
  %vm350 = vcmask 130048
  %v352 = vsel %vm350, %v328, 0
  %v355 = vsel %vm350, %v329, 0
  %v358 = vsel %vm350, %v330, 0
  %v361 = vsel %vm350, %v331, 0
  %v364 = vsel %vm350, %v332, 0
  %v367 = vsel %vm350, %v333, 0
  %v370 = vsel %vm350, %v334, 0
  %v373 = vsel %vm350, %v335, 0
  %v376 = vsel %vm350, %v336, 0
  %v379 = vsel %vm350, %v337, 0
  %v382 = vsel %vm350, %v338, 0
  %v385 = vsel %vm350, %v339, 0
  %v388 = vsel %vm350, %v340, 0
  %v391 = vsel %vm350, %v341, 0
  %v394 = vsel %vm350, %v342, 0
  %v397 = vsel %vm350, %v343, 0
  %399 = vmatprep.subr.bf16.mxu0 0
  %400 = vmatpush1.bf16.msra.mxu0 0
  %401 = vmatprep.subr.bf16.mxu0 0
  %402 = vmatpush1.bf16.msra.mxu0 0
  %403 = vmatprep.subr.bf16.mxu0 0
  %404 = vmatpush1.bf16.msra.mxu0 0
  %405 = vmatprep.subr.bf16.mxu0 0
  %406 = vmatpush1.bf16.msra.mxu0 0
  %407 = vmatprep.subr.bf16.mxu0 0
  %408 = vmatpush1.bf16.msra.mxu0 0
  %409 = vmatprep.subr.bf16.mxu0 0
  %410 = vmatpush1.bf16.msra.mxu0 0
  %411 = vmatprep.subr.bf16.mxu0 0
  %412 = vmatpush1.bf16.msra.mxu0 0
  %413 = vmatprep.subr.bf16.mxu0 0
  %414 = vmatpush1.bf16.msra.mxu0 %v348
  %415 = vmatprep.subr.bf16.mxu0 0
  %416 = vmatpush2.bf16.msra.mxu0 0
  %417 = vmatprep.subr.bf16.mxu0 0
  %418 = vmatpush2.bf16.msra.mxu0 0
  %419 = vmatprep.subr.bf16.mxu0 0
  %420 = vmatpush2.bf16.msra.mxu0 0
  %421 = vmatprep.subr.bf16.mxu0 0
  %422 = vmatpush2.bf16.msra.mxu0 0
  %423 = vmatprep.subr.bf16.mxu0 0
  %424 = vmatpush2.bf16.msra.mxu0 0
  %425 = vmatprep.subr.bf16.mxu0 0
  %426 = vmatpush2.bf16.msra.mxu0 0
  %427 = vmatprep.subr.bf16.mxu0 0
  %428 = vmatpush2.bf16.msra.mxu0 0
  %429 = vmatprep.subr.bf16.mxu0 0
  %430 = vmatpush2.bf16.msra.mxu0 0
  %431 = vmatprep.mubr.bf16.mxu0 0
  %432 = vmatmul.mubr.bf16.gmra.mxu0 %v352
  %v433 = vpop.f32.mrf.mxu0
  %v434 = vadd.f32 %v107, %v433
  %v435 = vpop.f32.mrf.mxu0
  %v436 = vpop.f32.mrf.mxu0
  %v437 = vadd.f32 %v112, %v436
  %v438 = vpop.f32.mrf.mxu0
  %439 = vmatprep.mubr.bf16.mxu0 0
  %440 = vmatmul.mubr.bf16.gmra.mxu0 %v355
  %v441 = vpop.f32.mrf.mxu0
  %v442 = vadd.f32 %v117, %v441
  %v443 = vpop.f32.mrf.mxu0
  %v444 = vpop.f32.mrf.mxu0
  %v445 = vadd.f32 %v122, %v444
  %v446 = vpop.f32.mrf.mxu0
  %447 = vmatprep.mubr.bf16.mxu0 0
  %448 = vmatmul.mubr.bf16.gmra.mxu0 %v358
  %v449 = vpop.f32.mrf.mxu0
  %v450 = vadd.f32 %v127, %v449
  %v451 = vpop.f32.mrf.mxu0
  %v452 = vpop.f32.mrf.mxu0
  %v453 = vadd.f32 %v132, %v452
  %v454 = vpop.f32.mrf.mxu0
  %455 = vmatprep.mubr.bf16.mxu0 0
  %456 = vmatmul.mubr.bf16.gmra.mxu0 %v361
  %v457 = vpop.f32.mrf.mxu0
  %v458 = vadd.f32 %v137, %v457
  %v459 = vpop.f32.mrf.mxu0
  %v460 = vpop.f32.mrf.mxu0
  %v461 = vadd.f32 %v142, %v460
  %v462 = vpop.f32.mrf.mxu0
  %463 = vmatprep.mubr.bf16.mxu0 0
  %464 = vmatmul.mubr.bf16.gmra.mxu0 %v364
  %v465 = vpop.f32.mrf.mxu0
  %v466 = vadd.f32 %v147, %v465
  %v467 = vpop.f32.mrf.mxu0
  %v468 = vpop.f32.mrf.mxu0
  %v469 = vadd.f32 %v152, %v468
  %v470 = vpop.f32.mrf.mxu0
  %471 = vmatprep.mubr.bf16.mxu0 0
  %472 = vmatmul.mubr.bf16.gmra.mxu0 %v367
  %v473 = vpop.f32.mrf.mxu0
  %v474 = vadd.f32 %v157, %v473
  %v475 = vpop.f32.mrf.mxu0
  %v476 = vpop.f32.mrf.mxu0
  %v477 = vadd.f32 %v162, %v476
  %v478 = vpop.f32.mrf.mxu0
  %479 = vmatprep.mubr.bf16.mxu0 0
  %480 = vmatmul.mubr.bf16.gmra.mxu0 %v370
  %v481 = vpop.f32.mrf.mxu0
  %v482 = vadd.f32 %v167, %v481
  %v483 = vpop.f32.mrf.mxu0
  %v484 = vpop.f32.mrf.mxu0
  %v485 = vadd.f32 %v172, %v484
  %v486 = vpop.f32.mrf.mxu0
  %487 = vmatprep.mubr.bf16.mxu0 0
  %488 = vmatmul.mubr.bf16.gmra.mxu0 %v373
  %v489 = vpop.f32.mrf.mxu0
  %v490 = vadd.f32 %v177, %v489
  %v491 = vpop.f32.mrf.mxu0
  %v492 = vpop.f32.mrf.mxu0
  %v493 = vadd.f32 %v182, %v492
  %v494 = vpop.f32.mrf.mxu0
  %495 = vmatprep.mubr.bf16.mxu0 0
  %496 = vmatmul.mubr.bf16.gmra.mxu0 %v376
  %v497 = vpop.f32.mrf.mxu0
  %v498 = vadd.f32 %v187, %v497
  %v499 = vpop.f32.mrf.mxu0
  %v500 = vpop.f32.mrf.mxu0
  %v501 = vadd.f32 %v192, %v500
  %v502 = vpop.f32.mrf.mxu0
  %503 = vmatprep.mubr.bf16.mxu0 0
  %504 = vmatmul.mubr.bf16.gmra.mxu0 %v379
  %v505 = vpop.f32.mrf.mxu0
  %v506 = vadd.f32 %v197, %v505
  %v507 = vpop.f32.mrf.mxu0
  %v508 = vpop.f32.mrf.mxu0
  %v509 = vadd.f32 %v202, %v508
  %v510 = vpop.f32.mrf.mxu0
  %511 = vmatprep.mubr.bf16.mxu0 0
  %512 = vmatmul.mubr.bf16.gmra.mxu0 %v382
  %v513 = vpop.f32.mrf.mxu0
  %v514 = vadd.f32 %v207, %v513
  %v515 = vpop.f32.mrf.mxu0
  %v516 = vpop.f32.mrf.mxu0
  %v517 = vadd.f32 %v212, %v516
  %v518 = vpop.f32.mrf.mxu0
  %519 = vmatprep.mubr.bf16.mxu0 0
  %520 = vmatmul.mubr.bf16.gmra.mxu0 %v385
  %v521 = vpop.f32.mrf.mxu0
  %v522 = vadd.f32 %v217, %v521
  %v523 = vpop.f32.mrf.mxu0
  %v524 = vpop.f32.mrf.mxu0
  %v525 = vadd.f32 %v222, %v524
  %v526 = vpop.f32.mrf.mxu0
  %527 = vmatprep.mubr.bf16.mxu0 0
  %528 = vmatmul.mubr.bf16.gmra.mxu0 %v388
  %v529 = vpop.f32.mrf.mxu0
  %v530 = vadd.f32 %v227, %v529
  %v531 = vpop.f32.mrf.mxu0
  %v532 = vpop.f32.mrf.mxu0
  %v533 = vadd.f32 %v232, %v532
  %v534 = vpop.f32.mrf.mxu0
  %535 = vmatprep.mubr.bf16.mxu0 0
  %536 = vmatmul.mubr.bf16.gmra.mxu0 %v391
  %v537 = vpop.f32.mrf.mxu0
  %v538 = vadd.f32 %v237, %v537
  %v539 = vpop.f32.mrf.mxu0
  %v540 = vpop.f32.mrf.mxu0
  %v541 = vadd.f32 %v242, %v540
  %v542 = vpop.f32.mrf.mxu0
  %543 = vmatprep.mubr.bf16.mxu0 0
  %544 = vmatmul.mubr.bf16.gmra.mxu0 %v394
  %v545 = vpop.f32.mrf.mxu0
  %v546 = vadd.f32 %v247, %v545
  %v547 = vpop.f32.mrf.mxu0
  %v548 = vpop.f32.mrf.mxu0
  %v549 = vadd.f32 %v252, %v548
  %v550 = vpop.f32.mrf.mxu0
  %551 = vmatprep.mubr.bf16.mxu0 0
  %552 = vmatmul.mubr.bf16.gmra.mxu0 %v397
  %v553 = vpop.f32.mrf.mxu0
  %v554 = vadd.f32 %v257, %v553
  %v555 = vpop.f32.mrf.mxu0
  %v556 = vpop.f32.mrf.mxu0
  %v557 = vadd.f32 %v262, %v556
  %v558 = vpop.f32.mrf.mxu0
  %559 = vdwg.mxu0
  %v560 = vpack.c.bf16 %v437, %v434
  %v561 = vpack.c.bf16 %v445, %v442
  %v562 = vpack.c.bf16 %v453, %v450
  %v563 = vpack.c.bf16 %v461, %v458
  %v564 = vpack.c.bf16 %v469, %v466
  %v565 = vpack.c.bf16 %v477, %v474
  %v566 = vpack.c.bf16 %v485, %v482
  %v567 = vpack.c.bf16 %v493, %v490
  %v568 = vpack.c.bf16 %v501, %v498
  %v569 = vpack.c.bf16 %v509, %v506
  %v570 = vpack.c.bf16 %v517, %v514
  %v571 = vpack.c.bf16 %v525, %v522
  %v572 = vpack.c.bf16 %v533, %v530
  %v573 = vpack.c.bf16 %v541, %v538
  %v574 = vpack.c.bf16 %v549, %v546
  %v575 = vpack.c.bf16 %v557, %v554
  %v584 = vunpack.c.l.b16 %v560
  %v585 = vunpack.c.h.b16 %v560
  %v586 = vunpack.c.l.b16 %v561
  %v587 = vunpack.c.h.b16 %v561
  %v588 = vunpack.c.l.b16 %v562
  %v589 = vunpack.c.h.b16 %v562
  %v590 = vunpack.c.l.b16 %v563
  %v591 = vunpack.c.h.b16 %v563
  %v592 = vunpack.c.l.b16 %v564
  %v593 = vunpack.c.h.b16 %v564
  %v594 = vunpack.c.l.b16 %v565
  %v595 = vunpack.c.h.b16 %v565
  %v596 = vunpack.c.l.b16 %v566
  %v597 = vunpack.c.h.b16 %v566
  %v598 = vunpack.c.l.b16 %v567
  %v599 = vunpack.c.h.b16 %v567
  %v600 = vpack.c.b16 %v584, %v584
  %v601 = vpack.c.b16 %v585, %v585
  %v602 = vpack.c.b16 %v586, %v586
  %v603 = vpack.c.b16 %v587, %v587
  %v604 = vpack.c.b16 %v588, %v588
  %v605 = vpack.c.b16 %v589, %v589
  %v606 = vpack.c.b16 %v590, %v590
  %v607 = vpack.c.b16 %v591, %v591
  %v608 = vpack.c.b16 %v592, %v592
  %v609 = vpack.c.b16 %v593, %v593
  %v610 = vpack.c.b16 %v594, %v594
  %v611 = vpack.c.b16 %v595, %v595
  %v612 = vpack.c.b16 %v596, %v596
  %v613 = vpack.c.b16 %v597, %v597
  %v614 = vpack.c.b16 %v598, %v598
  %v615 = vpack.c.b16 %v599, %v599
  %vm632 = vcmask 60416
  %633 = vst.msk [vmem:[#allocation2] sm:$0xf] %vm632, %v600
  %634 = vst.msk [vmem:[#allocation2 + $0x4] sm:$0xf] %vm632, %v601
  %635 = vst.msk [vmem:[#allocation2 + $0x8] sm:$0xf] %vm632, %v602
  %636 = vst.msk [vmem:[#allocation2 + $0xc] sm:$0xf] %vm632, %v603
  %637 = vst.msk [vmem:[#allocation2 + $0x10] sm:$0xf] %vm632, %v604
  %638 = vst.msk [vmem:[#allocation2 + $0x14] sm:$0xf] %vm632, %v605
  %639 = vst.msk [vmem:[#allocation2 + $0x18] sm:$0xf] %vm632, %v606
  %640 = vst.msk [vmem:[#allocation2 + $0x1c] sm:$0xf] %vm632, %v607
  %641 = vst.msk [vmem:[#allocation2 + $0x20] sm:$0xf] %vm632, %v608
  %642 = vst.msk [vmem:[#allocation2 + $0x24] sm:$0xf] %vm632, %v609
  %643 = vst.msk [vmem:[#allocation2 + $0x28] sm:$0xf] %vm632, %v610
  %644 = vst.msk [vmem:[#allocation2 + $0x2c] sm:$0xf] %vm632, %v611
  %645 = vst.msk [vmem:[#allocation2 + $0x30] sm:$0xf] %vm632, %v612
  %646 = vst.msk [vmem:[#allocation2 + $0x34] sm:$0xf] %vm632, %v613
  %647 = vst.msk [vmem:[#allocation2 + $0x38] sm:$0xf] %vm632, %v614
  %648 = vst.msk [vmem:[#allocation2 + $0x3c] sm:$0xf] %vm632, %v615
  %v657 = vunpack.c.l.b16 %v568
  %v658 = vunpack.c.h.b16 %v568
  %v659 = vunpack.c.l.b16 %v569
  %v660 = vunpack.c.h.b16 %v569
  %v661 = vunpack.c.l.b16 %v570
  %v662 = vunpack.c.h.b16 %v570
  %v663 = vunpack.c.l.b16 %v571
  %v664 = vunpack.c.h.b16 %v571
  %v665 = vunpack.c.l.b16 %v572
  %v666 = vunpack.c.h.b16 %v572
  %v667 = vunpack.c.l.b16 %v573
  %v668 = vunpack.c.h.b16 %v573
  %v669 = vunpack.c.l.b16 %v574
  %v670 = vunpack.c.h.b16 %v574
  %v671 = vunpack.c.l.b16 %v575
  %v672 = vunpack.c.h.b16 %v575
  %v673 = vpack.c.b16 %v657, %v657
  %v674 = vpack.c.b16 %v658, %v658
  %v675 = vpack.c.b16 %v659, %v659
  %v676 = vpack.c.b16 %v660, %v660
  %v677 = vpack.c.b16 %v661, %v661
  %v678 = vpack.c.b16 %v662, %v662
  %v679 = vpack.c.b16 %v663, %v663
  %v680 = vpack.c.b16 %v664, %v664
  %v681 = vpack.c.b16 %v665, %v665
  %v682 = vpack.c.b16 %v666, %v666
  %v683 = vpack.c.b16 %v667, %v667
  %v684 = vpack.c.b16 %v668, %v668
  %v685 = vpack.c.b16 %v669, %v669
  %v686 = vpack.c.b16 %v670, %v670
  %v687 = vpack.c.b16 %v671, %v671
  %v688 = vpack.c.b16 %v672, %v672
  %705 = vst.msk [vmem:[#allocation3] sm:$0xf] %vm632, %v673
  %706 = vst.msk [vmem:[#allocation3 + $0x4] sm:$0xf] %vm632, %v674
  %707 = vst.msk [vmem:[#allocation3 + $0x8] sm:$0xf] %vm632, %v675
  %708 = vst.msk [vmem:[#allocation3 + $0xc] sm:$0xf] %vm632, %v676
  %709 = vst.msk [vmem:[#allocation3 + $0x10] sm:$0xf] %vm632, %v677
  %710 = vst.msk [vmem:[#allocation3 + $0x14] sm:$0xf] %vm632, %v678
  %711 = vst.msk [vmem:[#allocation3 + $0x18] sm:$0xf] %vm632, %v679
  %712 = vst.msk [vmem:[#allocation3 + $0x1c] sm:$0xf] %vm632, %v680
  %713 = vst.msk [vmem:[#allocation3 + $0x20] sm:$0xf] %vm632, %v681
  %714 = vst.msk [vmem:[#allocation3 + $0x24] sm:$0xf] %vm632, %v682
  %715 = vst.msk [vmem:[#allocation3 + $0x28] sm:$0xf] %vm632, %v683
  %716 = vst.msk [vmem:[#allocation3 + $0x2c] sm:$0xf] %vm632, %v684
  %717 = vst.msk [vmem:[#allocation3 + $0x30] sm:$0xf] %vm632, %v685
  %718 = vst.msk [vmem:[#allocation3 + $0x34] sm:$0xf] %vm632, %v686
  %719 = vst.msk [vmem:[#allocation3 + $0x38] sm:$0xf] %vm632, %v687
  %720 = vst.msk [vmem:[#allocation3 + $0x3c] sm:$0xf] %vm632, %v688
  %s721 = scalar_lea.vmem %s0, 8
  %v722 = vld [vmem:[%s721] sm:$0xf]
  %v723 = vld [vmem:[%s721 + $0x4] sm:$0xf]
  %v726 = vunpack.c.l.b16 %v722
  %v727 = vunpack.c.l.b16 %v723
  %v728 = vpack.c.b16 %v727, %v726
  %730 = vmatprep.subr.bf16.mxu0 0
  %731 = vmatpush1.bf16.msra.mxu0 0
  %732 = vmatprep.subr.bf16.mxu0 0
  %733 = vmatpush1.bf16.msra.mxu0 0
  %734 = vmatprep.subr.bf16.mxu0 0
  %735 = vmatpush1.bf16.msra.mxu0 0
  %736 = vmatprep.subr.bf16.mxu0 0
  %737 = vmatpush1.bf16.msra.mxu0 0
  %738 = vmatprep.subr.bf16.mxu0 0
  %739 = vmatpush1.bf16.msra.mxu0 0
  %740 = vmatprep.subr.bf16.mxu0 0
  %741 = vmatpush1.bf16.msra.mxu0 0
  %742 = vmatprep.subr.bf16.mxu0 0
  %743 = vmatpush1.bf16.msra.mxu0 0
  %744 = vmatprep.subr.bf16.mxu0 0
  %745 = vmatpush1.bf16.msra.mxu0 %v728
  %746 = vmatprep.subr.bf16.mxu0 0
  %747 = vmatpush2.bf16.msra.mxu0 0
  %748 = vmatprep.subr.bf16.mxu0 0
  %749 = vmatpush2.bf16.msra.mxu0 0
  %750 = vmatprep.subr.bf16.mxu0 0
  %751 = vmatpush2.bf16.msra.mxu0 0
  %752 = vmatprep.subr.bf16.mxu0 0
  %753 = vmatpush2.bf16.msra.mxu0 0
  %754 = vmatprep.subr.bf16.mxu0 0
  %755 = vmatpush2.bf16.msra.mxu0 0
  %756 = vmatprep.subr.bf16.mxu0 0
  %757 = vmatpush2.bf16.msra.mxu0 0
  %758 = vmatprep.subr.bf16.mxu0 0
  %759 = vmatpush2.bf16.msra.mxu0 0
  %760 = vmatprep.subr.bf16.mxu0 0
  %761 = vmatpush2.bf16.msra.mxu0 0
  %762 = vmatprep.mubr.bf16.mxu0 0
  %763 = vmatmul.mubr.bf16.gmra.mxu0 %v352
  %v764 = vpop.f32.mrf.mxu0
  %v765 = vadd.f32 %v107, %v764
  %v766 = vpop.f32.mrf.mxu0
  %v767 = vpop.f32.mrf.mxu0
  %v768 = vadd.f32 %v112, %v767
  %v769 = vpop.f32.mrf.mxu0
  %770 = vmatprep.mubr.bf16.mxu0 0
  %771 = vmatmul.mubr.bf16.gmra.mxu0 %v355
  %v772 = vpop.f32.mrf.mxu0
  %v773 = vadd.f32 %v117, %v772
  %v774 = vpop.f32.mrf.mxu0
  %v775 = vpop.f32.mrf.mxu0
  %v776 = vadd.f32 %v122, %v775
  %v777 = vpop.f32.mrf.mxu0
  %778 = vmatprep.mubr.bf16.mxu0 0
  %779 = vmatmul.mubr.bf16.gmra.mxu0 %v358
  %v780 = vpop.f32.mrf.mxu0
  %v781 = vadd.f32 %v127, %v780
  %v782 = vpop.f32.mrf.mxu0
  %v783 = vpop.f32.mrf.mxu0
  %v784 = vadd.f32 %v132, %v783
  %v785 = vpop.f32.mrf.mxu0
  %786 = vmatprep.mubr.bf16.mxu0 0
  %787 = vmatmul.mubr.bf16.gmra.mxu0 %v361
  %v788 = vpop.f32.mrf.mxu0
  %v789 = vadd.f32 %v137, %v788
  %v790 = vpop.f32.mrf.mxu0
  %v791 = vpop.f32.mrf.mxu0
  %v792 = vadd.f32 %v142, %v791
  %v793 = vpop.f32.mrf.mxu0
  %794 = vmatprep.mubr.bf16.mxu0 0
  %795 = vmatmul.mubr.bf16.gmra.mxu0 %v364
  %v796 = vpop.f32.mrf.mxu0
  %v797 = vadd.f32 %v147, %v796
  %v798 = vpop.f32.mrf.mxu0
  %v799 = vpop.f32.mrf.mxu0
  %v800 = vadd.f32 %v152, %v799
  %v801 = vpop.f32.mrf.mxu0
  %802 = vmatprep.mubr.bf16.mxu0 0
  %803 = vmatmul.mubr.bf16.gmra.mxu0 %v367
  %v804 = vpop.f32.mrf.mxu0
  %v805 = vadd.f32 %v157, %v804
  %v806 = vpop.f32.mrf.mxu0
  %v807 = vpop.f32.mrf.mxu0
  %v808 = vadd.f32 %v162, %v807
  %v809 = vpop.f32.mrf.mxu0
  %810 = vmatprep.mubr.bf16.mxu0 0
  %811 = vmatmul.mubr.bf16.gmra.mxu0 %v370
  %v812 = vpop.f32.mrf.mxu0
  %v813 = vadd.f32 %v167, %v812
  %v814 = vpop.f32.mrf.mxu0
  %v815 = vpop.f32.mrf.mxu0
  %v816 = vadd.f32 %v172, %v815
  %v817 = vpop.f32.mrf.mxu0
  %818 = vmatprep.mubr.bf16.mxu0 0
  %819 = vmatmul.mubr.bf16.gmra.mxu0 %v373
  %v820 = vpop.f32.mrf.mxu0
  %v821 = vadd.f32 %v177, %v820
  %v822 = vpop.f32.mrf.mxu0
  %v823 = vpop.f32.mrf.mxu0
  %v824 = vadd.f32 %v182, %v823
  %v825 = vpop.f32.mrf.mxu0
  %826 = vmatprep.mubr.bf16.mxu0 0
  %827 = vmatmul.mubr.bf16.gmra.mxu0 %v376
  %v828 = vpop.f32.mrf.mxu0
  %v829 = vadd.f32 %v187, %v828
  %v830 = vpop.f32.mrf.mxu0
  %v831 = vpop.f32.mrf.mxu0
  %v832 = vadd.f32 %v192, %v831
  %v833 = vpop.f32.mrf.mxu0
  %834 = vmatprep.mubr.bf16.mxu0 0
  %835 = vmatmul.mubr.bf16.gmra.mxu0 %v379
  %v836 = vpop.f32.mrf.mxu0
  %v837 = vadd.f32 %v197, %v836
  %v838 = vpop.f32.mrf.mxu0
  %v839 = vpop.f32.mrf.mxu0
  %v840 = vadd.f32 %v202, %v839
  %v841 = vpop.f32.mrf.mxu0
  %842 = vmatprep.mubr.bf16.mxu0 0
  %843 = vmatmul.mubr.bf16.gmra.mxu0 %v382
  %v844 = vpop.f32.mrf.mxu0
  %v845 = vadd.f32 %v207, %v844
  %v846 = vpop.f32.mrf.mxu0
  %v847 = vpop.f32.mrf.mxu0
  %v848 = vadd.f32 %v212, %v847
  %v849 = vpop.f32.mrf.mxu0
  %850 = vmatprep.mubr.bf16.mxu0 0
  %851 = vmatmul.mubr.bf16.gmra.mxu0 %v385
  %v852 = vpop.f32.mrf.mxu0
  %v853 = vadd.f32 %v217, %v852
  %v854 = vpop.f32.mrf.mxu0
  %v855 = vpop.f32.mrf.mxu0
  %v856 = vadd.f32 %v222, %v855
  %v857 = vpop.f32.mrf.mxu0
  %858 = vmatprep.mubr.bf16.mxu0 0
  %859 = vmatmul.mubr.bf16.gmra.mxu0 %v388
  %v860 = vpop.f32.mrf.mxu0
  %v861 = vadd.f32 %v227, %v860
  %v862 = vpop.f32.mrf.mxu0
  %v863 = vpop.f32.mrf.mxu0
  %v864 = vadd.f32 %v232, %v863
  %v865 = vpop.f32.mrf.mxu0
  %866 = vmatprep.mubr.bf16.mxu0 0
  %867 = vmatmul.mubr.bf16.gmra.mxu0 %v391
  %v868 = vpop.f32.mrf.mxu0
  %v869 = vadd.f32 %v237, %v868
  %v870 = vpop.f32.mrf.mxu0
  %v871 = vpop.f32.mrf.mxu0
  %v872 = vadd.f32 %v242, %v871
  %v873 = vpop.f32.mrf.mxu0
  %874 = vmatprep.mubr.bf16.mxu0 0
  %875 = vmatmul.mubr.bf16.gmra.mxu0 %v394
  %v876 = vpop.f32.mrf.mxu0
  %v877 = vadd.f32 %v247, %v876
  %v878 = vpop.f32.mrf.mxu0
  %v879 = vpop.f32.mrf.mxu0
  %v880 = vadd.f32 %v252, %v879
  %v881 = vpop.f32.mrf.mxu0
  %882 = vmatprep.mubr.bf16.mxu0 0
  %883 = vmatmul.mubr.bf16.gmra.mxu0 %v397
  %v884 = vpop.f32.mrf.mxu0
  %v885 = vadd.f32 %v257, %v884
  %v886 = vpop.f32.mrf.mxu0
  %v887 = vpop.f32.mrf.mxu0
  %v888 = vadd.f32 %v262, %v887
  %v889 = vpop.f32.mrf.mxu0
  %890 = vdwg.mxu0
  %v891 = vpack.c.bf16 %v768, %v765
  %v892 = vpack.c.bf16 %v776, %v773
  %v893 = vpack.c.bf16 %v784, %v781
  %v894 = vpack.c.bf16 %v792, %v789
  %v895 = vpack.c.bf16 %v800, %v797
  %v896 = vpack.c.bf16 %v808, %v805
  %v897 = vpack.c.bf16 %v816, %v813
  %v898 = vpack.c.bf16 %v824, %v821
  %v899 = vpack.c.bf16 %v832, %v829
  %v900 = vpack.c.bf16 %v840, %v837
  %v901 = vpack.c.bf16 %v848, %v845
  %v902 = vpack.c.bf16 %v856, %v853
  %v903 = vpack.c.bf16 %v864, %v861
  %v904 = vpack.c.bf16 %v872, %v869
  %v905 = vpack.c.bf16 %v880, %v877
  %v906 = vpack.c.bf16 %v888, %v885
  %v915 = vunpack.c.l.b16 %v891
  %v916 = vunpack.c.h.b16 %v891
  %v917 = vunpack.c.l.b16 %v892
  %v918 = vunpack.c.h.b16 %v892
  %v919 = vunpack.c.l.b16 %v893
  %v920 = vunpack.c.h.b16 %v893
  %v921 = vunpack.c.l.b16 %v894
  %v922 = vunpack.c.h.b16 %v894
  %v923 = vunpack.c.l.b16 %v895
  %v924 = vunpack.c.h.b16 %v895
  %v925 = vunpack.c.l.b16 %v896
  %v926 = vunpack.c.h.b16 %v896
  %v927 = vunpack.c.l.b16 %v897
  %v928 = vunpack.c.h.b16 %v897
  %v929 = vunpack.c.l.b16 %v898
  %v930 = vunpack.c.h.b16 %v898
  %v931 = vpack.c.b16 %v915, %v915
  %v932 = vpack.c.b16 %v916, %v916
  %v933 = vpack.c.b16 %v917, %v917
  %v934 = vpack.c.b16 %v918, %v918
  %v935 = vpack.c.b16 %v919, %v919
  %v936 = vpack.c.b16 %v920, %v920
  %v937 = vpack.c.b16 %v921, %v921
  %v938 = vpack.c.b16 %v922, %v922
  %v939 = vpack.c.b16 %v923, %v923
  %v940 = vpack.c.b16 %v924, %v924
  %v941 = vpack.c.b16 %v925, %v925
  %v942 = vpack.c.b16 %v926, %v926
  %v943 = vpack.c.b16 %v927, %v927
  %v944 = vpack.c.b16 %v928, %v928
  %v945 = vpack.c.b16 %v929, %v929
  %v946 = vpack.c.b16 %v930, %v930
  %s963 = scalar_lea.vmem [#allocation2], 64
  %964 = vst.msk [vmem:[%s963] sm:$0xf] %vm632, %v931
  %965 = vst.msk [vmem:[%s963 + $0x4] sm:$0xf] %vm632, %v932
  %966 = vst.msk [vmem:[%s963 + $0x8] sm:$0xf] %vm632, %v933
  %967 = vst.msk [vmem:[%s963 + $0xc] sm:$0xf] %vm632, %v934
  %968 = vst.msk [vmem:[%s963 + $0x10] sm:$0xf] %vm632, %v935
  %969 = vst.msk [vmem:[%s963 + $0x14] sm:$0xf] %vm632, %v936
  %970 = vst.msk [vmem:[%s963 + $0x18] sm:$0xf] %vm632, %v937
  %971 = vst.msk [vmem:[%s963 + $0x1c] sm:$0xf] %vm632, %v938
  %972 = vst.msk [vmem:[%s963 + $0x20] sm:$0xf] %vm632, %v939
  %973 = vst.msk [vmem:[%s963 + $0x24] sm:$0xf] %vm632, %v940
  %974 = vst.msk [vmem:[%s963 + $0x28] sm:$0xf] %vm632, %v941
  %975 = vst.msk [vmem:[%s963 + $0x2c] sm:$0xf] %vm632, %v942
  %976 = vst.msk [vmem:[%s963 + $0x30] sm:$0xf] %vm632, %v943
  %977 = vst.msk [vmem:[%s963 + $0x34] sm:$0xf] %vm632, %v944
  %978 = vst.msk [vmem:[%s963 + $0x38] sm:$0xf] %vm632, %v945
  %979 = vst.msk [vmem:[%s963 + $0x3c] sm:$0xf] %vm632, %v946
  %v988 = vunpack.c.l.b16 %v899
  %v989 = vunpack.c.h.b16 %v899
  %v990 = vunpack.c.l.b16 %v900
  %v991 = vunpack.c.h.b16 %v900
  %v992 = vunpack.c.l.b16 %v901
  %v993 = vunpack.c.h.b16 %v901
  %v994 = vunpack.c.l.b16 %v902
  %v995 = vunpack.c.h.b16 %v902
  %v996 = vunpack.c.l.b16 %v903
  %v997 = vunpack.c.h.b16 %v903
  %v998 = vunpack.c.l.b16 %v904
  %v999 = vunpack.c.h.b16 %v904
  %v1000 = vunpack.c.l.b16 %v905
  %v1001 = vunpack.c.h.b16 %v905
  %v1002 = vunpack.c.l.b16 %v906
  %v1003 = vunpack.c.h.b16 %v906
  %v1004 = vpack.c.b16 %v988, %v988
  %v1005 = vpack.c.b16 %v989, %v989
  %v1006 = vpack.c.b16 %v990, %v990
  %v1007 = vpack.c.b16 %v991, %v991
  %v1008 = vpack.c.b16 %v992, %v992
  %v1009 = vpack.c.b16 %v993, %v993
  %v1010 = vpack.c.b16 %v994, %v994
  %v1011 = vpack.c.b16 %v995, %v995
  %v1012 = vpack.c.b16 %v996, %v996
  %v1013 = vpack.c.b16 %v997, %v997
  %v1014 = vpack.c.b16 %v998, %v998
  %v1015 = vpack.c.b16 %v999, %v999
  %v1016 = vpack.c.b16 %v1000, %v1000
  %v1017 = vpack.c.b16 %v1001, %v1001
  %v1018 = vpack.c.b16 %v1002, %v1002
  %v1019 = vpack.c.b16 %v1003, %v1003
  %s1036 = scalar_lea.vmem [#allocation3], 64
  %1037 = vst.msk [vmem:[%s1036] sm:$0xf] %vm632, %v1004
  %1038 = vst.msk [vmem:[%s1036 + $0x4] sm:$0xf] %vm632, %v1005
  %1039 = vst.msk [vmem:[%s1036 + $0x8] sm:$0xf] %vm632, %v1006
  %1040 = vst.msk [vmem:[%s1036 + $0xc] sm:$0xf] %vm632, %v1007
  %1041 = vst.msk [vmem:[%s1036 + $0x10] sm:$0xf] %vm632, %v1008
  %1042 = vst.msk [vmem:[%s1036 + $0x14] sm:$0xf] %vm632, %v1009
  %1043 = vst.msk [vmem:[%s1036 + $0x18] sm:$0xf] %vm632, %v1010
  %1044 = vst.msk [vmem:[%s1036 + $0x1c] sm:$0xf] %vm632, %v1011
  %1045 = vst.msk [vmem:[%s1036 + $0x20] sm:$0xf] %vm632, %v1012
  %1046 = vst.msk [vmem:[%s1036 + $0x24] sm:$0xf] %vm632, %v1013
  %1047 = vst.msk [vmem:[%s1036 + $0x28] sm:$0xf] %vm632, %v1014
  %1048 = vst.msk [vmem:[%s1036 + $0x2c] sm:$0xf] %vm632, %v1015
  %1049 = vst.msk [vmem:[%s1036 + $0x30] sm:$0xf] %vm632, %v1016
  %1050 = vst.msk [vmem:[%s1036 + $0x34] sm:$0xf] %vm632, %v1017
  %1051 = vst.msk [vmem:[%s1036 + $0x38] sm:$0xf] %vm632, %v1018
  %1052 = vst.msk [vmem:[%s1036 + $0x3c] sm:$0xf] %vm632, %v1019
  %s1053 = scalar_lea.vmem %s0, 16
  %v1054 = vld [vmem:[%s1053] sm:$0xf]
  %v1055 = vld [vmem:[%s1053 + $0x4] sm:$0xf]
  %v1058 = vunpack.c.l.b16 %v1054
  %v1059 = vunpack.c.l.b16 %v1055
  %v1060 = vpack.c.b16 %v1059, %v1058
  %1062 = vmatprep.subr.bf16.mxu0 0
  %1063 = vmatpush1.bf16.msra.mxu0 0
  %1064 = vmatprep.subr.bf16.mxu0 0
  %1065 = vmatpush1.bf16.msra.mxu0 0
  %1066 = vmatprep.subr.bf16.mxu0 0
  %1067 = vmatpush1.bf16.msra.mxu0 0
  %1068 = vmatprep.subr.bf16.mxu0 0
  %1069 = vmatpush1.bf16.msra.mxu0 0
  %1070 = vmatprep.subr.bf16.mxu0 0
  %1071 = vmatpush1.bf16.msra.mxu0 0
  %1072 = vmatprep.subr.bf16.mxu0 0
  %1073 = vmatpush1.bf16.msra.mxu0 0
  %1074 = vmatprep.subr.bf16.mxu0 0
  %1075 = vmatpush1.bf16.msra.mxu0 0
  %1076 = vmatprep.subr.bf16.mxu0 0
  %1077 = vmatpush1.bf16.msra.mxu0 %v1060
  %1078 = vmatprep.subr.bf16.mxu0 0
  %1079 = vmatpush2.bf16.msra.mxu0 0
  %1080 = vmatprep.subr.bf16.mxu0 0
  %1081 = vmatpush2.bf16.msra.mxu0 0
  %1082 = vmatprep.subr.bf16.mxu0 0
  %1083 = vmatpush2.bf16.msra.mxu0 0
  %1084 = vmatprep.subr.bf16.mxu0 0
  %1085 = vmatpush2.bf16.msra.mxu0 0
  %1086 = vmatprep.subr.bf16.mxu0 0
  %1087 = vmatpush2.bf16.msra.mxu0 0
  %1088 = vmatprep.subr.bf16.mxu0 0
  %1089 = vmatpush2.bf16.msra.mxu0 0
  %1090 = vmatprep.subr.bf16.mxu0 0
  %1091 = vmatpush2.bf16.msra.mxu0 0
  %1092 = vmatprep.subr.bf16.mxu0 0
  %1093 = vmatpush2.bf16.msra.mxu0 0
  %1094 = vmatprep.mubr.bf16.mxu0 0
  %1095 = vmatmul.mubr.bf16.gmra.mxu0 %v352
  %v1096 = vpop.f32.mrf.mxu0
  %v1097 = vadd.f32 %v107, %v1096
  %v1098 = vpop.f32.mrf.mxu0
  %v1099 = vpop.f32.mrf.mxu0
  %v1100 = vadd.f32 %v112, %v1099
  %v1101 = vpop.f32.mrf.mxu0
  %1102 = vmatprep.mubr.bf16.mxu0 0
  %1103 = vmatmul.mubr.bf16.gmra.mxu0 %v355
  %v1104 = vpop.f32.mrf.mxu0
  %v1105 = vadd.f32 %v117, %v1104
  %v1106 = vpop.f32.mrf.mxu0
  %v1107 = vpop.f32.mrf.mxu0
  %v1108 = vadd.f32 %v122, %v1107
  %v1109 = vpop.f32.mrf.mxu0
  %1110 = vmatprep.mubr.bf16.mxu0 0
  %1111 = vmatmul.mubr.bf16.gmra.mxu0 %v358
  %v1112 = vpop.f32.mrf.mxu0
  %v1113 = vadd.f32 %v127, %v1112
  %v1114 = vpop.f32.mrf.mxu0
  %v1115 = vpop.f32.mrf.mxu0
  %v1116 = vadd.f32 %v132, %v1115
  %v1117 = vpop.f32.mrf.mxu0
  %1118 = vmatprep.mubr.bf16.mxu0 0
  %1119 = vmatmul.mubr.bf16.gmra.mxu0 %v361
  %v1120 = vpop.f32.mrf.mxu0
  %v1121 = vadd.f32 %v137, %v1120
  %v1122 = vpop.f32.mrf.mxu0
  %v1123 = vpop.f32.mrf.mxu0
  %v1124 = vadd.f32 %v142, %v1123
  %v1125 = vpop.f32.mrf.mxu0
  %1126 = vmatprep.mubr.bf16.mxu0 0
  %1127 = vmatmul.mubr.bf16.gmra.mxu0 %v364
  %v1128 = vpop.f32.mrf.mxu0
  %v1129 = vadd.f32 %v147, %v1128
  %v1130 = vpop.f32.mrf.mxu0
  %v1131 = vpop.f32.mrf.mxu0
  %v1132 = vadd.f32 %v152, %v1131
  %v1133 = vpop.f32.mrf.mxu0
  %1134 = vmatprep.mubr.bf16.mxu0 0
  %1135 = vmatmul.mubr.bf16.gmra.mxu0 %v367
  %v1136 = vpop.f32.mrf.mxu0
  %v1137 = vadd.f32 %v157, %v1136
  %v1138 = vpop.f32.mrf.mxu0
  %v1139 = vpop.f32.mrf.mxu0
  %v1140 = vadd.f32 %v162, %v1139
  %v1141 = vpop.f32.mrf.mxu0
  %1142 = vmatprep.mubr.bf16.mxu0 0
  %1143 = vmatmul.mubr.bf16.gmra.mxu0 %v370
  %v1144 = vpop.f32.mrf.mxu0
  %v1145 = vadd.f32 %v167, %v1144
  %v1146 = vpop.f32.mrf.mxu0
  %v1147 = vpop.f32.mrf.mxu0
  %v1148 = vadd.f32 %v172, %v1147
  %v1149 = vpop.f32.mrf.mxu0
  %1150 = vmatprep.mubr.bf16.mxu0 0
  %1151 = vmatmul.mubr.bf16.gmra.mxu0 %v373
  %v1152 = vpop.f32.mrf.mxu0
  %v1153 = vadd.f32 %v177, %v1152
  %v1154 = vpop.f32.mrf.mxu0
  %v1155 = vpop.f32.mrf.mxu0
  %v1156 = vadd.f32 %v182, %v1155
  %v1157 = vpop.f32.mrf.mxu0
  %1158 = vmatprep.mubr.bf16.mxu0 0
  %1159 = vmatmul.mubr.bf16.gmra.mxu0 %v376
  %v1160 = vpop.f32.mrf.mxu0
  %v1161 = vadd.f32 %v187, %v1160
  %v1162 = vpop.f32.mrf.mxu0
  %v1163 = vpop.f32.mrf.mxu0
  %v1164 = vadd.f32 %v192, %v1163
  %v1165 = vpop.f32.mrf.mxu0
  %1166 = vmatprep.mubr.bf16.mxu0 0
  %1167 = vmatmul.mubr.bf16.gmra.mxu0 %v379
  %v1168 = vpop.f32.mrf.mxu0
  %v1169 = vadd.f32 %v197, %v1168
  %v1170 = vpop.f32.mrf.mxu0
  %v1171 = vpop.f32.mrf.mxu0
  %v1172 = vadd.f32 %v202, %v1171
  %v1173 = vpop.f32.mrf.mxu0
  %1174 = vmatprep.mubr.bf16.mxu0 0
  %1175 = vmatmul.mubr.bf16.gmra.mxu0 %v382
  %v1176 = vpop.f32.mrf.mxu0
  %v1177 = vadd.f32 %v207, %v1176
  %v1178 = vpop.f32.mrf.mxu0
  %v1179 = vpop.f32.mrf.mxu0
  %v1180 = vadd.f32 %v212, %v1179
  %v1181 = vpop.f32.mrf.mxu0
  %1182 = vmatprep.mubr.bf16.mxu0 0
  %1183 = vmatmul.mubr.bf16.gmra.mxu0 %v385
  %v1184 = vpop.f32.mrf.mxu0
  %v1185 = vadd.f32 %v217, %v1184
  %v1186 = vpop.f32.mrf.mxu0
  %v1187 = vpop.f32.mrf.mxu0
  %v1188 = vadd.f32 %v222, %v1187
  %v1189 = vpop.f32.mrf.mxu0
  %1190 = vmatprep.mubr.bf16.mxu0 0
  %1191 = vmatmul.mubr.bf16.gmra.mxu0 %v388
  %v1192 = vpop.f32.mrf.mxu0
  %v1193 = vadd.f32 %v227, %v1192
  %v1194 = vpop.f32.mrf.mxu0
  %v1195 = vpop.f32.mrf.mxu0
  %v1196 = vadd.f32 %v232, %v1195
  %v1197 = vpop.f32.mrf.mxu0
  %1198 = vmatprep.mubr.bf16.mxu0 0
  %1199 = vmatmul.mubr.bf16.gmra.mxu0 %v391
  %v1200 = vpop.f32.mrf.mxu0
  %v1201 = vadd.f32 %v237, %v1200
  %v1202 = vpop.f32.mrf.mxu0
  %v1203 = vpop.f32.mrf.mxu0
  %v1204 = vadd.f32 %v242, %v1203
  %v1205 = vpop.f32.mrf.mxu0
  %1206 = vmatprep.mubr.bf16.mxu0 0
  %1207 = vmatmul.mubr.bf16.gmra.mxu0 %v394
  %v1208 = vpop.f32.mrf.mxu0
  %v1209 = vadd.f32 %v247, %v1208
  %v1210 = vpop.f32.mrf.mxu0
  %v1211 = vpop.f32.mrf.mxu0
  %v1212 = vadd.f32 %v252, %v1211
  %v1213 = vpop.f32.mrf.mxu0
  %1214 = vmatprep.mubr.bf16.mxu0 0
  %1215 = vmatmul.mubr.bf16.gmra.mxu0 %v397
  %v1216 = vpop.f32.mrf.mxu0
  %v1217 = vadd.f32 %v257, %v1216
  %v1218 = vpop.f32.mrf.mxu0
  %v1219 = vpop.f32.mrf.mxu0
  %v1220 = vadd.f32 %v262, %v1219
  %v1221 = vpop.f32.mrf.mxu0
  %1222 = vdwg.mxu0
  %v1223 = vpack.c.bf16 %v1100, %v1097
  %v1224 = vpack.c.bf16 %v1108, %v1105
  %v1225 = vpack.c.bf16 %v1116, %v1113
  %v1226 = vpack.c.bf16 %v1124, %v1121
  %v1227 = vpack.c.bf16 %v1132, %v1129
  %v1228 = vpack.c.bf16 %v1140, %v1137
  %v1229 = vpack.c.bf16 %v1148, %v1145
  %v1230 = vpack.c.bf16 %v1156, %v1153
  %v1231 = vpack.c.bf16 %v1164, %v1161
  %v1232 = vpack.c.bf16 %v1172, %v1169
  %v1233 = vpack.c.bf16 %v1180, %v1177
  %v1234 = vpack.c.bf16 %v1188, %v1185
  %v1235 = vpack.c.bf16 %v1196, %v1193
  %v1236 = vpack.c.bf16 %v1204, %v1201
  %v1237 = vpack.c.bf16 %v1212, %v1209
  %v1238 = vpack.c.bf16 %v1220, %v1217
  %v1247 = vunpack.c.l.b16 %v1223
  %v1248 = vunpack.c.h.b16 %v1223
  %v1249 = vunpack.c.l.b16 %v1224
  %v1250 = vunpack.c.h.b16 %v1224
  %v1251 = vunpack.c.l.b16 %v1225
  %v1252 = vunpack.c.h.b16 %v1225
  %v1253 = vunpack.c.l.b16 %v1226
  %v1254 = vunpack.c.h.b16 %v1226
  %v1255 = vunpack.c.l.b16 %v1227
  %v1256 = vunpack.c.h.b16 %v1227
  %v1257 = vunpack.c.l.b16 %v1228
  %v1258 = vunpack.c.h.b16 %v1228
  %v1259 = vunpack.c.l.b16 %v1229
  %v1260 = vunpack.c.h.b16 %v1229
  %v1261 = vunpack.c.l.b16 %v1230
  %v1262 = vunpack.c.h.b16 %v1230
  %v1263 = vpack.c.b16 %v1247, %v1247
  %v1264 = vpack.c.b16 %v1248, %v1248
  %v1265 = vpack.c.b16 %v1249, %v1249
  %v1266 = vpack.c.b16 %v1250, %v1250
  %v1267 = vpack.c.b16 %v1251, %v1251
  %v1268 = vpack.c.b16 %v1252, %v1252
  %v1269 = vpack.c.b16 %v1253, %v1253
  %v1270 = vpack.c.b16 %v1254, %v1254
  %v1271 = vpack.c.b16 %v1255, %v1255
  %v1272 = vpack.c.b16 %v1256, %v1256
  %v1273 = vpack.c.b16 %v1257, %v1257
  %v1274 = vpack.c.b16 %v1258, %v1258
  %v1275 = vpack.c.b16 %v1259, %v1259
  %v1276 = vpack.c.b16 %v1260, %v1260
  %v1277 = vpack.c.b16 %v1261, %v1261
  %v1278 = vpack.c.b16 %v1262, %v1262
  %s1295 = scalar_lea.vmem [#allocation2], 128
  %1296 = vst.msk [vmem:[%s1295] sm:$0xf] %vm632, %v1263
  %1297 = vst.msk [vmem:[%s1295 + $0x4] sm:$0xf] %vm632, %v1264
  %1298 = vst.msk [vmem:[%s1295 + $0x8] sm:$0xf] %vm632, %v1265
  %1299 = vst.msk [vmem:[%s1295 + $0xc] sm:$0xf] %vm632, %v1266
  %1300 = vst.msk [vmem:[%s1295 + $0x10] sm:$0xf] %vm632, %v1267
  %1301 = vst.msk [vmem:[%s1295 + $0x14] sm:$0xf] %vm632, %v1268
  %1302 = vst.msk [vmem:[%s1295 + $0x18] sm:$0xf] %vm632, %v1269
  %1303 = vst.msk [vmem:[%s1295 + $0x1c] sm:$0xf] %vm632, %v1270
  %1304 = vst.msk [vmem:[%s1295 + $0x20] sm:$0xf] %vm632, %v1271
  %1305 = vst.msk [vmem:[%s1295 + $0x24] sm:$0xf] %vm632, %v1272
  %1306 = vst.msk [vmem:[%s1295 + $0x28] sm:$0xf] %vm632, %v1273
  %1307 = vst.msk [vmem:[%s1295 + $0x2c] sm:$0xf] %vm632, %v1274
  %1308 = vst.msk [vmem:[%s1295 + $0x30] sm:$0xf] %vm632, %v1275
  %1309 = vst.msk [vmem:[%s1295 + $0x34] sm:$0xf] %vm632, %v1276
  %1310 = vst.msk [vmem:[%s1295 + $0x38] sm:$0xf] %vm632, %v1277
  %1311 = vst.msk [vmem:[%s1295 + $0x3c] sm:$0xf] %vm632, %v1278
  %v1320 = vunpack.c.l.b16 %v1231
  %v1321 = vunpack.c.h.b16 %v1231
  %v1322 = vunpack.c.l.b16 %v1232
  %v1323 = vunpack.c.h.b16 %v1232
  %v1324 = vunpack.c.l.b16 %v1233
  %v1325 = vunpack.c.h.b16 %v1233
  %v1326 = vunpack.c.l.b16 %v1234
  %v1327 = vunpack.c.h.b16 %v1234
  %v1328 = vunpack.c.l.b16 %v1235
  %v1329 = vunpack.c.h.b16 %v1235
  %v1330 = vunpack.c.l.b16 %v1236
  %v1331 = vunpack.c.h.b16 %v1236
  %v1332 = vunpack.c.l.b16 %v1237
  %v1333 = vunpack.c.h.b16 %v1237
  %v1334 = vunpack.c.l.b16 %v1238
  %v1335 = vunpack.c.h.b16 %v1238
  %v1336 = vpack.c.b16 %v1320, %v1320
  %v1337 = vpack.c.b16 %v1321, %v1321
  %v1338 = vpack.c.b16 %v1322, %v1322
  %v1339 = vpack.c.b16 %v1323, %v1323
  %v1340 = vpack.c.b16 %v1324, %v1324
  %v1341 = vpack.c.b16 %v1325, %v1325
  %v1342 = vpack.c.b16 %v1326, %v1326
  %v1343 = vpack.c.b16 %v1327, %v1327
  %v1344 = vpack.c.b16 %v1328, %v1328
  %v1345 = vpack.c.b16 %v1329, %v1329
  %v1346 = vpack.c.b16 %v1330, %v1330
  %v1347 = vpack.c.b16 %v1331, %v1331
  %v1348 = vpack.c.b16 %v1332, %v1332
  %v1349 = vpack.c.b16 %v1333, %v1333
  %v1350 = vpack.c.b16 %v1334, %v1334
  %v1351 = vpack.c.b16 %v1335, %v1335
  %s1368 = scalar_lea.vmem [#allocation3], 128
  %1369 = vst.msk [vmem:[%s1368] sm:$0xf] %vm632, %v1336
  %1370 = vst.msk [vmem:[%s1368 + $0x4] sm:$0xf] %vm632, %v1337
  %1371 = vst.msk [vmem:[%s1368 + $0x8] sm:$0xf] %vm632, %v1338
  %1372 = vst.msk [vmem:[%s1368 + $0xc] sm:$0xf] %vm632, %v1339
  %1373 = vst.msk [vmem:[%s1368 + $0x10] sm:$0xf] %vm632, %v1340
  %1374 = vst.msk [vmem:[%s1368 + $0x14] sm:$0xf] %vm632, %v1341
  %1375 = vst.msk [vmem:[%s1368 + $0x18] sm:$0xf] %vm632, %v1342
  %1376 = vst.msk [vmem:[%s1368 + $0x1c] sm:$0xf] %vm632, %v1343
  %1377 = vst.msk [vmem:[%s1368 + $0x20] sm:$0xf] %vm632, %v1344
  %1378 = vst.msk [vmem:[%s1368 + $0x24] sm:$0xf] %vm632, %v1345
  %1379 = vst.msk [vmem:[%s1368 + $0x28] sm:$0xf] %vm632, %v1346
  %1380 = vst.msk [vmem:[%s1368 + $0x2c] sm:$0xf] %vm632, %v1347
  %1381 = vst.msk [vmem:[%s1368 + $0x30] sm:$0xf] %vm632, %v1348
  %1382 = vst.msk [vmem:[%s1368 + $0x34] sm:$0xf] %vm632, %v1349
  %1383 = vst.msk [vmem:[%s1368 + $0x38] sm:$0xf] %vm632, %v1350
  %1384 = vst.msk [vmem:[%s1368 + $0x3c] sm:$0xf] %vm632, %v1351
  %s1385 = scalar_lea.vmem %s0, 24
  %v1386 = vld [vmem:[%s1385] sm:$0xf]
  %v1387 = vld [vmem:[%s1385 + $0x4] sm:$0xf]
  %v1390 = vunpack.c.l.b16 %v1386
  %v1391 = vunpack.c.l.b16 %v1387
  %v1392 = vpack.c.b16 %v1391, %v1390
  %1394 = vmatprep.subr.bf16.mxu0 0
  %1395 = vmatpush1.bf16.msra.mxu0 0
  %1396 = vmatprep.subr.bf16.mxu0 0
  %1397 = vmatpush1.bf16.msra.mxu0 0
  %1398 = vmatprep.subr.bf16.mxu0 0
  %1399 = vmatpush1.bf16.msra.mxu0 0
  %1400 = vmatprep.subr.bf16.mxu0 0
  %1401 = vmatpush1.bf16.msra.mxu0 0
  %1402 = vmatprep.subr.bf16.mxu0 0
  %1403 = vmatpush1.bf16.msra.mxu0 0
  %1404 = vmatprep.subr.bf16.mxu0 0
  %1405 = vmatpush1.bf16.msra.mxu0 0
  %1406 = vmatprep.subr.bf16.mxu0 0
  %1407 = vmatpush1.bf16.msra.mxu0 0
  %1408 = vmatprep.subr.bf16.mxu0 0
  %1409 = vmatpush1.bf16.msra.mxu0 %v1392
  %1410 = vmatprep.subr.bf16.mxu0 0
  %1411 = vmatpush2.bf16.msra.mxu0 0
  %1412 = vmatprep.subr.bf16.mxu0 0
  %1413 = vmatpush2.bf16.msra.mxu0 0
  %1414 = vmatprep.subr.bf16.mxu0 0
  %1415 = vmatpush2.bf16.msra.mxu0 0
  %1416 = vmatprep.subr.bf16.mxu0 0
  %1417 = vmatpush2.bf16.msra.mxu0 0
  %1418 = vmatprep.subr.bf16.mxu0 0
  %1419 = vmatpush2.bf16.msra.mxu0 0
  %1420 = vmatprep.subr.bf16.mxu0 0
  %1421 = vmatpush2.bf16.msra.mxu0 0
  %1422 = vmatprep.subr.bf16.mxu0 0
  %1423 = vmatpush2.bf16.msra.mxu0 0
  %1424 = vmatprep.subr.bf16.mxu0 0
  %1425 = vmatpush2.bf16.msra.mxu0 0
  %1426 = vmatprep.mubr.bf16.mxu0 0
  %1427 = vmatmul.mubr.bf16.gmra.mxu0 %v352
  %v1428 = vpop.f32.mrf.mxu0
  %v1429 = vadd.f32 %v107, %v1428
  %v1430 = vpop.f32.mrf.mxu0
  %v1431 = vpop.f32.mrf.mxu0
  %v1432 = vadd.f32 %v112, %v1431
  %v1433 = vpop.f32.mrf.mxu0
  %1434 = vmatprep.mubr.bf16.mxu0 0
  %1435 = vmatmul.mubr.bf16.gmra.mxu0 %v355
  %v1436 = vpop.f32.mrf.mxu0
  %v1437 = vadd.f32 %v117, %v1436
  %v1438 = vpop.f32.mrf.mxu0
  %v1439 = vpop.f32.mrf.mxu0
  %v1440 = vadd.f32 %v122, %v1439
  %v1441 = vpop.f32.mrf.mxu0
  %1442 = vmatprep.mubr.bf16.mxu0 0
  %1443 = vmatmul.mubr.bf16.gmra.mxu0 %v358
  %v1444 = vpop.f32.mrf.mxu0
  %v1445 = vadd.f32 %v127, %v1444
  %v1446 = vpop.f32.mrf.mxu0
  %v1447 = vpop.f32.mrf.mxu0
  %v1448 = vadd.f32 %v132, %v1447
  %v1449 = vpop.f32.mrf.mxu0
  %1450 = vmatprep.mubr.bf16.mxu0 0
  %1451 = vmatmul.mubr.bf16.gmra.mxu0 %v361
  %v1452 = vpop.f32.mrf.mxu0
  %v1453 = vadd.f32 %v137, %v1452
  %v1454 = vpop.f32.mrf.mxu0
  %v1455 = vpop.f32.mrf.mxu0
  %v1456 = vadd.f32 %v142, %v1455
  %v1457 = vpop.f32.mrf.mxu0
  %1458 = vmatprep.mubr.bf16.mxu0 0
  %1459 = vmatmul.mubr.bf16.gmra.mxu0 %v364
  %v1460 = vpop.f32.mrf.mxu0
  %v1461 = vadd.f32 %v147, %v1460
  %v1462 = vpop.f32.mrf.mxu0
  %v1463 = vpop.f32.mrf.mxu0
  %v1464 = vadd.f32 %v152, %v1463
  %v1465 = vpop.f32.mrf.mxu0
  %1466 = vmatprep.mubr.bf16.mxu0 0
  %1467 = vmatmul.mubr.bf16.gmra.mxu0 %v367
  %v1468 = vpop.f32.mrf.mxu0
  %v1469 = vadd.f32 %v157, %v1468
  %v1470 = vpop.f32.mrf.mxu0
  %v1471 = vpop.f32.mrf.mxu0
  %v1472 = vadd.f32 %v162, %v1471
  %v1473 = vpop.f32.mrf.mxu0
  %1474 = vmatprep.mubr.bf16.mxu0 0
  %1475 = vmatmul.mubr.bf16.gmra.mxu0 %v370
  %v1476 = vpop.f32.mrf.mxu0
  %v1477 = vadd.f32 %v167, %v1476
  %v1478 = vpop.f32.mrf.mxu0
  %v1479 = vpop.f32.mrf.mxu0
  %v1480 = vadd.f32 %v172, %v1479
  %v1481 = vpop.f32.mrf.mxu0
  %1482 = vmatprep.mubr.bf16.mxu0 0
  %1483 = vmatmul.mubr.bf16.gmra.mxu0 %v373
  %v1484 = vpop.f32.mrf.mxu0
  %v1485 = vadd.f32 %v177, %v1484
  %v1486 = vpop.f32.mrf.mxu0
  %v1487 = vpop.f32.mrf.mxu0
  %v1488 = vadd.f32 %v182, %v1487
  %v1489 = vpop.f32.mrf.mxu0
  %1490 = vmatprep.mubr.bf16.mxu0 0
  %1491 = vmatmul.mubr.bf16.gmra.mxu0 %v376
  %v1492 = vpop.f32.mrf.mxu0
  %v1493 = vadd.f32 %v187, %v1492
  %v1494 = vpop.f32.mrf.mxu0
  %v1495 = vpop.f32.mrf.mxu0
  %v1496 = vadd.f32 %v192, %v1495
  %v1497 = vpop.f32.mrf.mxu0
  %1498 = vmatprep.mubr.bf16.mxu0 0
  %1499 = vmatmul.mubr.bf16.gmra.mxu0 %v379
  %v1500 = vpop.f32.mrf.mxu0
  %v1501 = vadd.f32 %v197, %v1500
  %v1502 = vpop.f32.mrf.mxu0
  %v1503 = vpop.f32.mrf.mxu0
  %v1504 = vadd.f32 %v202, %v1503
  %v1505 = vpop.f32.mrf.mxu0
  %1506 = vmatprep.mubr.bf16.mxu0 0
  %1507 = vmatmul.mubr.bf16.gmra.mxu0 %v382
  %v1508 = vpop.f32.mrf.mxu0
  %v1509 = vadd.f32 %v207, %v1508
  %v1510 = vpop.f32.mrf.mxu0
  %v1511 = vpop.f32.mrf.mxu0
  %v1512 = vadd.f32 %v212, %v1511
  %v1513 = vpop.f32.mrf.mxu0
  %1514 = vmatprep.mubr.bf16.mxu0 0
  %1515 = vmatmul.mubr.bf16.gmra.mxu0 %v385
  %v1516 = vpop.f32.mrf.mxu0
  %v1517 = vadd.f32 %v217, %v1516
  %v1518 = vpop.f32.mrf.mxu0
  %v1519 = vpop.f32.mrf.mxu0
  %v1520 = vadd.f32 %v222, %v1519
  %v1521 = vpop.f32.mrf.mxu0
  %1522 = vmatprep.mubr.bf16.mxu0 0
  %1523 = vmatmul.mubr.bf16.gmra.mxu0 %v388
  %v1524 = vpop.f32.mrf.mxu0
  %v1525 = vadd.f32 %v227, %v1524
  %v1526 = vpop.f32.mrf.mxu0
  %v1527 = vpop.f32.mrf.mxu0
  %v1528 = vadd.f32 %v232, %v1527
  %v1529 = vpop.f32.mrf.mxu0
  %1530 = vmatprep.mubr.bf16.mxu0 0
  %1531 = vmatmul.mubr.bf16.gmra.mxu0 %v391
  %v1532 = vpop.f32.mrf.mxu0
  %v1533 = vadd.f32 %v237, %v1532
  %v1534 = vpop.f32.mrf.mxu0
  %v1535 = vpop.f32.mrf.mxu0
  %v1536 = vadd.f32 %v242, %v1535
  %v1537 = vpop.f32.mrf.mxu0
  %1538 = vmatprep.mubr.bf16.mxu0 0
  %1539 = vmatmul.mubr.bf16.gmra.mxu0 %v394
  %v1540 = vpop.f32.mrf.mxu0
  %v1541 = vadd.f32 %v247, %v1540
  %v1542 = vpop.f32.mrf.mxu0
  %v1543 = vpop.f32.mrf.mxu0
  %v1544 = vadd.f32 %v252, %v1543
  %v1545 = vpop.f32.mrf.mxu0
  %1546 = vmatprep.mubr.bf16.mxu0 0
  %1547 = vmatmul.mubr.bf16.gmra.mxu0 %v397
  %v1548 = vpop.f32.mrf.mxu0
  %v1549 = vadd.f32 %v257, %v1548
  %v1550 = vpop.f32.mrf.mxu0
  %v1551 = vpop.f32.mrf.mxu0
  %v1552 = vadd.f32 %v262, %v1551
  %v1553 = vpop.f32.mrf.mxu0
  %1554 = vdwg.mxu0
  %v1555 = vpack.c.bf16 %v1432, %v1429
  %v1556 = vpack.c.bf16 %v1440, %v1437
  %v1557 = vpack.c.bf16 %v1448, %v1445
  %v1558 = vpack.c.bf16 %v1456, %v1453
  %v1559 = vpack.c.bf16 %v1464, %v1461
  %v1560 = vpack.c.bf16 %v1472, %v1469
  %v1561 = vpack.c.bf16 %v1480, %v1477
  %v1562 = vpack.c.bf16 %v1488, %v1485
  %v1563 = vpack.c.bf16 %v1496, %v1493
  %v1564 = vpack.c.bf16 %v1504, %v1501
  %v1565 = vpack.c.bf16 %v1512, %v1509
  %v1566 = vpack.c.bf16 %v1520, %v1517
  %v1567 = vpack.c.bf16 %v1528, %v1525
  %v1568 = vpack.c.bf16 %v1536, %v1533
  %v1569 = vpack.c.bf16 %v1544, %v1541
  %v1570 = vpack.c.bf16 %v1552, %v1549
  %v1579 = vunpack.c.l.b16 %v1555
  %v1580 = vunpack.c.h.b16 %v1555
  %v1581 = vunpack.c.l.b16 %v1556
  %v1582 = vunpack.c.h.b16 %v1556
  %v1583 = vunpack.c.l.b16 %v1557
  %v1584 = vunpack.c.h.b16 %v1557
  %v1585 = vunpack.c.l.b16 %v1558
  %v1586 = vunpack.c.h.b16 %v1558
  %v1587 = vunpack.c.l.b16 %v1559
  %v1588 = vunpack.c.h.b16 %v1559
  %v1589 = vunpack.c.l.b16 %v1560
  %v1590 = vunpack.c.h.b16 %v1560
  %v1591 = vunpack.c.l.b16 %v1561
  %v1592 = vunpack.c.h.b16 %v1561
  %v1593 = vunpack.c.l.b16 %v1562
  %v1594 = vunpack.c.h.b16 %v1562
  %v1595 = vpack.c.b16 %v1579, %v1579
  %v1596 = vpack.c.b16 %v1580, %v1580
  %v1597 = vpack.c.b16 %v1581, %v1581
  %v1598 = vpack.c.b16 %v1582, %v1582
  %v1599 = vpack.c.b16 %v1583, %v1583
  %v1600 = vpack.c.b16 %v1584, %v1584
  %v1601 = vpack.c.b16 %v1585, %v1585
  %v1602 = vpack.c.b16 %v1586, %v1586
  %v1603 = vpack.c.b16 %v1587, %v1587
  %v1604 = vpack.c.b16 %v1588, %v1588
  %v1605 = vpack.c.b16 %v1589, %v1589
  %v1606 = vpack.c.b16 %v1590, %v1590
  %v1607 = vpack.c.b16 %v1591, %v1591
  %v1608 = vpack.c.b16 %v1592, %v1592
  %v1609 = vpack.c.b16 %v1593, %v1593
  %v1610 = vpack.c.b16 %v1594, %v1594
  %s1627 = scalar_lea.vmem [#allocation2], 192
  %1628 = vst.msk [vmem:[%s1627] sm:$0xf] %vm632, %v1595
  %1629 = vst.msk [vmem:[%s1627 + $0x4] sm:$0xf] %vm632, %v1596
  %1630 = vst.msk [vmem:[%s1627 + $0x8] sm:$0xf] %vm632, %v1597
  %1631 = vst.msk [vmem:[%s1627 + $0xc] sm:$0xf] %vm632, %v1598
  %1632 = vst.msk [vmem:[%s1627 + $0x10] sm:$0xf] %vm632, %v1599
  %1633 = vst.msk [vmem:[%s1627 + $0x14] sm:$0xf] %vm632, %v1600
  %1634 = vst.msk [vmem:[%s1627 + $0x18] sm:$0xf] %vm632, %v1601
  %1635 = vst.msk [vmem:[%s1627 + $0x1c] sm:$0xf] %vm632, %v1602
  %1636 = vst.msk [vmem:[%s1627 + $0x20] sm:$0xf] %vm632, %v1603
  %1637 = vst.msk [vmem:[%s1627 + $0x24] sm:$0xf] %vm632, %v1604
  %1638 = vst.msk [vmem:[%s1627 + $0x28] sm:$0xf] %vm632, %v1605
  %1639 = vst.msk [vmem:[%s1627 + $0x2c] sm:$0xf] %vm632, %v1606
  %1640 = vst.msk [vmem:[%s1627 + $0x30] sm:$0xf] %vm632, %v1607
  %1641 = vst.msk [vmem:[%s1627 + $0x34] sm:$0xf] %vm632, %v1608
  %1642 = vst.msk [vmem:[%s1627 + $0x38] sm:$0xf] %vm632, %v1609
  %1643 = vst.msk [vmem:[%s1627 + $0x3c] sm:$0xf] %vm632, %v1610
  %v1652 = vunpack.c.l.b16 %v1563
  %v1653 = vunpack.c.h.b16 %v1563
  %v1654 = vunpack.c.l.b16 %v1564
  %v1655 = vunpack.c.h.b16 %v1564
  %v1656 = vunpack.c.l.b16 %v1565
  %v1657 = vunpack.c.h.b16 %v1565
  %v1658 = vunpack.c.l.b16 %v1566
  %v1659 = vunpack.c.h.b16 %v1566
  %v1660 = vunpack.c.l.b16 %v1567
  %v1661 = vunpack.c.h.b16 %v1567
  %v1662 = vunpack.c.l.b16 %v1568
  %v1663 = vunpack.c.h.b16 %v1568
  %v1664 = vunpack.c.l.b16 %v1569
  %v1665 = vunpack.c.h.b16 %v1569
  %v1666 = vunpack.c.l.b16 %v1570
  %v1667 = vunpack.c.h.b16 %v1570
  %v1668 = vpack.c.b16 %v1652, %v1652
  %v1669 = vpack.c.b16 %v1653, %v1653
  %v1670 = vpack.c.b16 %v1654, %v1654
  %v1671 = vpack.c.b16 %v1655, %v1655
  %v1672 = vpack.c.b16 %v1656, %v1656
  %v1673 = vpack.c.b16 %v1657, %v1657
  %v1674 = vpack.c.b16 %v1658, %v1658
  %v1675 = vpack.c.b16 %v1659, %v1659
  %v1676 = vpack.c.b16 %v1660, %v1660
  %v1677 = vpack.c.b16 %v1661, %v1661
  %v1678 = vpack.c.b16 %v1662, %v1662
  %v1679 = vpack.c.b16 %v1663, %v1663
  %v1680 = vpack.c.b16 %v1664, %v1664
  %v1681 = vpack.c.b16 %v1665, %v1665
  %v1682 = vpack.c.b16 %v1666, %v1666
  %v1683 = vpack.c.b16 %v1667, %v1667
  %s1700 = scalar_lea.vmem [#allocation3], 192
  %1701 = vst.msk [vmem:[%s1700] sm:$0xf] %vm632, %v1668
  %1702 = vst.msk [vmem:[%s1700 + $0x4] sm:$0xf] %vm632, %v1669
  %1703 = vst.msk [vmem:[%s1700 + $0x8] sm:$0xf] %vm632, %v1670
  %1704 = vst.msk [vmem:[%s1700 + $0xc] sm:$0xf] %vm632, %v1671
  %1705 = vst.msk [vmem:[%s1700 + $0x10] sm:$0xf] %vm632, %v1672
  %1706 = vst.msk [vmem:[%s1700 + $0x14] sm:$0xf] %vm632, %v1673
  %1707 = vst.msk [vmem:[%s1700 + $0x18] sm:$0xf] %vm632, %v1674
  %1708 = vst.msk [vmem:[%s1700 + $0x1c] sm:$0xf] %vm632, %v1675
  %1709 = vst.msk [vmem:[%s1700 + $0x20] sm:$0xf] %vm632, %v1676
  %1710 = vst.msk [vmem:[%s1700 + $0x24] sm:$0xf] %vm632, %v1677
  %1711 = vst.msk [vmem:[%s1700 + $0x28] sm:$0xf] %vm632, %v1678
  %1712 = vst.msk [vmem:[%s1700 + $0x2c] sm:$0xf] %vm632, %v1679
  %1713 = vst.msk [vmem:[%s1700 + $0x30] sm:$0xf] %vm632, %v1680
  %1714 = vst.msk [vmem:[%s1700 + $0x34] sm:$0xf] %vm632, %v1681
  %1715 = vst.msk [vmem:[%s1700 + $0x38] sm:$0xf] %vm632, %v1682
  %1716 = vst.msk [vmem:[%s1700 + $0x3c] sm:$0xf] %vm632, %v1683
  %s1717 = scalar_lea.vmem %s0, 32
  %v1718 = vld [vmem:[%s1717] sm:$0xf]
  %v1719 = vld [vmem:[%s1717 + $0x4] sm:$0xf]
  %v1722 = vunpack.c.l.b16 %v1718
  %v1723 = vunpack.c.l.b16 %v1719
  %v1724 = vpack.c.b16 %v1723, %v1722
  %1726 = vmatprep.subr.bf16.mxu0 0
  %1727 = vmatpush1.bf16.msra.mxu0 0
  %1728 = vmatprep.subr.bf16.mxu0 0
  %1729 = vmatpush1.bf16.msra.mxu0 0
  %1730 = vmatprep.subr.bf16.mxu0 0
  %1731 = vmatpush1.bf16.msra.mxu0 0
  %1732 = vmatprep.subr.bf16.mxu0 0
  %1733 = vmatpush1.bf16.msra.mxu0 0
  %1734 = vmatprep.subr.bf16.mxu0 0
  %1735 = vmatpush1.bf16.msra.mxu0 0
  %1736 = vmatprep.subr.bf16.mxu0 0
  %1737 = vmatpush1.bf16.msra.mxu0 0
  %1738 = vmatprep.subr.bf16.mxu0 0
  %1739 = vmatpush1.bf16.msra.mxu0 0
  %1740 = vmatprep.subr.bf16.mxu0 0
  %1741 = vmatpush1.bf16.msra.mxu0 %v1724
  %1742 = vmatprep.subr.bf16.mxu0 0
  %1743 = vmatpush2.bf16.msra.mxu0 0
  %1744 = vmatprep.subr.bf16.mxu0 0
  %1745 = vmatpush2.bf16.msra.mxu0 0
  %1746 = vmatprep.subr.bf16.mxu0 0
  %1747 = vmatpush2.bf16.msra.mxu0 0
  %1748 = vmatprep.subr.bf16.mxu0 0
  %1749 = vmatpush2.bf16.msra.mxu0 0
  %1750 = vmatprep.subr.bf16.mxu0 0
  %1751 = vmatpush2.bf16.msra.mxu0 0
  %1752 = vmatprep.subr.bf16.mxu0 0
  %1753 = vmatpush2.bf16.msra.mxu0 0
  %1754 = vmatprep.subr.bf16.mxu0 0
  %1755 = vmatpush2.bf16.msra.mxu0 0
  %1756 = vmatprep.subr.bf16.mxu0 0
  %1757 = vmatpush2.bf16.msra.mxu0 0
  %1758 = vmatprep.mubr.bf16.mxu0 0
  %1759 = vmatmul.mubr.bf16.gmra.mxu0 %v352
  %v1760 = vpop.f32.mrf.mxu0
  %v1761 = vadd.f32 %v107, %v1760
  %v1762 = vpop.f32.mrf.mxu0
  %v1763 = vpop.f32.mrf.mxu0
  %v1764 = vadd.f32 %v112, %v1763
  %v1765 = vpop.f32.mrf.mxu0
  %1766 = vmatprep.mubr.bf16.mxu0 0
  %1767 = vmatmul.mubr.bf16.gmra.mxu0 %v355
  %v1768 = vpop.f32.mrf.mxu0
  %v1769 = vadd.f32 %v117, %v1768
  %v1770 = vpop.f32.mrf.mxu0
  %v1771 = vpop.f32.mrf.mxu0
  %v1772 = vadd.f32 %v122, %v1771
  %v1773 = vpop.f32.mrf.mxu0
  %1774 = vmatprep.mubr.bf16.mxu0 0
  %1775 = vmatmul.mubr.bf16.gmra.mxu0 %v358
  %v1776 = vpop.f32.mrf.mxu0
  %v1777 = vadd.f32 %v127, %v1776
  %v1778 = vpop.f32.mrf.mxu0
  %v1779 = vpop.f32.mrf.mxu0
  %v1780 = vadd.f32 %v132, %v1779
  %v1781 = vpop.f32.mrf.mxu0
  %1782 = vmatprep.mubr.bf16.mxu0 0
  %1783 = vmatmul.mubr.bf16.gmra.mxu0 %v361
  %v1784 = vpop.f32.mrf.mxu0
  %v1785 = vadd.f32 %v137, %v1784
  %v1786 = vpop.f32.mrf.mxu0
  %v1787 = vpop.f32.mrf.mxu0
  %v1788 = vadd.f32 %v142, %v1787
  %v1789 = vpop.f32.mrf.mxu0
  %1790 = vmatprep.mubr.bf16.mxu0 0
  %1791 = vmatmul.mubr.bf16.gmra.mxu0 %v364
  %v1792 = vpop.f32.mrf.mxu0
  %v1793 = vadd.f32 %v147, %v1792
  %v1794 = vpop.f32.mrf.mxu0
  %v1795 = vpop.f32.mrf.mxu0
  %v1796 = vadd.f32 %v152, %v1795
  %v1797 = vpop.f32.mrf.mxu0
  %1798 = vmatprep.mubr.bf16.mxu0 0
  %1799 = vmatmul.mubr.bf16.gmra.mxu0 %v367
  %v1800 = vpop.f32.mrf.mxu0
  %v1801 = vadd.f32 %v157, %v1800
  %v1802 = vpop.f32.mrf.mxu0
  %v1803 = vpop.f32.mrf.mxu0
  %v1804 = vadd.f32 %v162, %v1803
  %v1805 = vpop.f32.mrf.mxu0
  %1806 = vmatprep.mubr.bf16.mxu0 0
  %1807 = vmatmul.mubr.bf16.gmra.mxu0 %v370
  %v1808 = vpop.f32.mrf.mxu0
  %v1809 = vadd.f32 %v167, %v1808
  %v1810 = vpop.f32.mrf.mxu0
  %v1811 = vpop.f32.mrf.mxu0
  %v1812 = vadd.f32 %v172, %v1811
  %v1813 = vpop.f32.mrf.mxu0
  %1814 = vmatprep.mubr.bf16.mxu0 0
  %1815 = vmatmul.mubr.bf16.gmra.mxu0 %v373
  %v1816 = vpop.f32.mrf.mxu0
  %v1817 = vadd.f32 %v177, %v1816
  %v1818 = vpop.f32.mrf.mxu0
  %v1819 = vpop.f32.mrf.mxu0
  %v1820 = vadd.f32 %v182, %v1819
  %v1821 = vpop.f32.mrf.mxu0
  %1822 = vmatprep.mubr.bf16.mxu0 0
  %1823 = vmatmul.mubr.bf16.gmra.mxu0 %v376
  %v1824 = vpop.f32.mrf.mxu0
  %v1825 = vadd.f32 %v187, %v1824
  %v1826 = vpop.f32.mrf.mxu0
  %v1827 = vpop.f32.mrf.mxu0
  %v1828 = vadd.f32 %v192, %v1827
  %v1829 = vpop.f32.mrf.mxu0
  %1830 = vmatprep.mubr.bf16.mxu0 0
  %1831 = vmatmul.mubr.bf16.gmra.mxu0 %v379
  %v1832 = vpop.f32.mrf.mxu0
  %v1833 = vadd.f32 %v197, %v1832
  %v1834 = vpop.f32.mrf.mxu0
  %v1835 = vpop.f32.mrf.mxu0
  %v1836 = vadd.f32 %v202, %v1835
  %v1837 = vpop.f32.mrf.mxu0
  %1838 = vmatprep.mubr.bf16.mxu0 0
  %1839 = vmatmul.mubr.bf16.gmra.mxu0 %v382
  %v1840 = vpop.f32.mrf.mxu0
  %v1841 = vadd.f32 %v207, %v1840
  %v1842 = vpop.f32.mrf.mxu0
  %v1843 = vpop.f32.mrf.mxu0
  %v1844 = vadd.f32 %v212, %v1843
  %v1845 = vpop.f32.mrf.mxu0
  %1846 = vmatprep.mubr.bf16.mxu0 0
  %1847 = vmatmul.mubr.bf16.gmra.mxu0 %v385
  %v1848 = vpop.f32.mrf.mxu0
  %v1849 = vadd.f32 %v217, %v1848
  %v1850 = vpop.f32.mrf.mxu0
  %v1851 = vpop.f32.mrf.mxu0
  %v1852 = vadd.f32 %v222, %v1851
  %v1853 = vpop.f32.mrf.mxu0
  %1854 = vmatprep.mubr.bf16.mxu0 0
  %1855 = vmatmul.mubr.bf16.gmra.mxu0 %v388
  %v1856 = vpop.f32.mrf.mxu0
  %v1857 = vadd.f32 %v227, %v1856
  %v1858 = vpop.f32.mrf.mxu0
  %v1859 = vpop.f32.mrf.mxu0
  %v1860 = vadd.f32 %v232, %v1859
  %v1861 = vpop.f32.mrf.mxu0
  %1862 = vmatprep.mubr.bf16.mxu0 0
  %1863 = vmatmul.mubr.bf16.gmra.mxu0 %v391
  %v1864 = vpop.f32.mrf.mxu0
  %v1865 = vadd.f32 %v237, %v1864
  %v1866 = vpop.f32.mrf.mxu0
  %v1867 = vpop.f32.mrf.mxu0
  %v1868 = vadd.f32 %v242, %v1867
  %v1869 = vpop.f32.mrf.mxu0
  %1870 = vmatprep.mubr.bf16.mxu0 0
  %1871 = vmatmul.mubr.bf16.gmra.mxu0 %v394
  %v1872 = vpop.f32.mrf.mxu0
  %v1873 = vadd.f32 %v247, %v1872
  %v1874 = vpop.f32.mrf.mxu0
  %v1875 = vpop.f32.mrf.mxu0
  %v1876 = vadd.f32 %v252, %v1875
  %v1877 = vpop.f32.mrf.mxu0
  %1878 = vmatprep.mubr.bf16.mxu0 0
  %1879 = vmatmul.mubr.bf16.gmra.mxu0 %v397
  %v1880 = vpop.f32.mrf.mxu0
  %v1881 = vadd.f32 %v257, %v1880
  %v1882 = vpop.f32.mrf.mxu0
  %v1883 = vpop.f32.mrf.mxu0
  %v1884 = vadd.f32 %v262, %v1883
  %v1885 = vpop.f32.mrf.mxu0
  %1886 = vdwg.mxu0
  %v1887 = vpack.c.bf16 %v1764, %v1761
  %v1888 = vpack.c.bf16 %v1772, %v1769
  %v1889 = vpack.c.bf16 %v1780, %v1777
  %v1890 = vpack.c.bf16 %v1788, %v1785
  %v1891 = vpack.c.bf16 %v1796, %v1793
  %v1892 = vpack.c.bf16 %v1804, %v1801
  %v1893 = vpack.c.bf16 %v1812, %v1809
  %v1894 = vpack.c.bf16 %v1820, %v1817
  %v1895 = vpack.c.bf16 %v1828, %v1825
  %v1896 = vpack.c.bf16 %v1836, %v1833
  %v1897 = vpack.c.bf16 %v1844, %v1841
  %v1898 = vpack.c.bf16 %v1852, %v1849
  %v1899 = vpack.c.bf16 %v1860, %v1857
  %v1900 = vpack.c.bf16 %v1868, %v1865
  %v1901 = vpack.c.bf16 %v1876, %v1873
  %v1902 = vpack.c.bf16 %v1884, %v1881
  %v1911 = vunpack.c.l.b16 %v1887
  %v1912 = vunpack.c.h.b16 %v1887
  %v1913 = vunpack.c.l.b16 %v1888
  %v1914 = vunpack.c.h.b16 %v1888
  %v1915 = vunpack.c.l.b16 %v1889
  %v1916 = vunpack.c.h.b16 %v1889
  %v1917 = vunpack.c.l.b16 %v1890
  %v1918 = vunpack.c.h.b16 %v1890
  %v1919 = vunpack.c.l.b16 %v1891
  %v1920 = vunpack.c.h.b16 %v1891
  %v1921 = vunpack.c.l.b16 %v1892
  %v1922 = vunpack.c.h.b16 %v1892
  %v1923 = vunpack.c.l.b16 %v1893
  %v1924 = vunpack.c.h.b16 %v1893
  %v1925 = vunpack.c.l.b16 %v1894
  %v1926 = vunpack.c.h.b16 %v1894
  %v1927 = vpack.c.b16 %v1911, %v1911
  %v1928 = vpack.c.b16 %v1912, %v1912
  %v1929 = vpack.c.b16 %v1913, %v1913
  %v1930 = vpack.c.b16 %v1914, %v1914
  %v1931 = vpack.c.b16 %v1915, %v1915
  %v1932 = vpack.c.b16 %v1916, %v1916
  %v1933 = vpack.c.b16 %v1917, %v1917
  %v1934 = vpack.c.b16 %v1918, %v1918
  %v1935 = vpack.c.b16 %v1919, %v1919
  %v1936 = vpack.c.b16 %v1920, %v1920
  %v1937 = vpack.c.b16 %v1921, %v1921
  %v1938 = vpack.c.b16 %v1922, %v1922
  %v1939 = vpack.c.b16 %v1923, %v1923
  %v1940 = vpack.c.b16 %v1924, %v1924
  %v1941 = vpack.c.b16 %v1925, %v1925
  %v1942 = vpack.c.b16 %v1926, %v1926
  %s1959 = scalar_lea.vmem [#allocation2], 256
  %1960 = vst.msk [vmem:[%s1959] sm:$0xf] %vm632, %v1927
  %1961 = vst.msk [vmem:[%s1959 + $0x4] sm:$0xf] %vm632, %v1928
  %1962 = vst.msk [vmem:[%s1959 + $0x8] sm:$0xf] %vm632, %v1929
  %1963 = vst.msk [vmem:[%s1959 + $0xc] sm:$0xf] %vm632, %v1930
  %1964 = vst.msk [vmem:[%s1959 + $0x10] sm:$0xf] %vm632, %v1931
  %1965 = vst.msk [vmem:[%s1959 + $0x14] sm:$0xf] %vm632, %v1932
  %1966 = vst.msk [vmem:[%s1959 + $0x18] sm:$0xf] %vm632, %v1933
  %1967 = vst.msk [vmem:[%s1959 + $0x1c] sm:$0xf] %vm632, %v1934
  %1968 = vst.msk [vmem:[%s1959 + $0x20] sm:$0xf] %vm632, %v1935
  %1969 = vst.msk [vmem:[%s1959 + $0x24] sm:$0xf] %vm632, %v1936
  %1970 = vst.msk [vmem:[%s1959 + $0x28] sm:$0xf] %vm632, %v1937
  %1971 = vst.msk [vmem:[%s1959 + $0x2c] sm:$0xf] %vm632, %v1938
  %1972 = vst.msk [vmem:[%s1959 + $0x30] sm:$0xf] %vm632, %v1939
  %1973 = vst.msk [vmem:[%s1959 + $0x34] sm:$0xf] %vm632, %v1940
  %1974 = vst.msk [vmem:[%s1959 + $0x38] sm:$0xf] %vm632, %v1941
  %1975 = vst.msk [vmem:[%s1959 + $0x3c] sm:$0xf] %vm632, %v1942
  %v1984 = vunpack.c.l.b16 %v1895
  %v1985 = vunpack.c.h.b16 %v1895
  %v1986 = vunpack.c.l.b16 %v1896
  %v1987 = vunpack.c.h.b16 %v1896
  %v1988 = vunpack.c.l.b16 %v1897
  %v1989 = vunpack.c.h.b16 %v1897
  %v1990 = vunpack.c.l.b16 %v1898
  %v1991 = vunpack.c.h.b16 %v1898
  %v1992 = vunpack.c.l.b16 %v1899
  %v1993 = vunpack.c.h.b16 %v1899
  %v1994 = vunpack.c.l.b16 %v1900
  %v1995 = vunpack.c.h.b16 %v1900
  %v1996 = vunpack.c.l.b16 %v1901
  %v1997 = vunpack.c.h.b16 %v1901
  %v1998 = vunpack.c.l.b16 %v1902
  %v1999 = vunpack.c.h.b16 %v1902
  %v2000 = vpack.c.b16 %v1984, %v1984
  %v2001 = vpack.c.b16 %v1985, %v1985
  %v2002 = vpack.c.b16 %v1986, %v1986
  %v2003 = vpack.c.b16 %v1987, %v1987
  %v2004 = vpack.c.b16 %v1988, %v1988
  %v2005 = vpack.c.b16 %v1989, %v1989
  %v2006 = vpack.c.b16 %v1990, %v1990
  %v2007 = vpack.c.b16 %v1991, %v1991
  %v2008 = vpack.c.b16 %v1992, %v1992
  %v2009 = vpack.c.b16 %v1993, %v1993
  %v2010 = vpack.c.b16 %v1994, %v1994
  %v2011 = vpack.c.b16 %v1995, %v1995
  %v2012 = vpack.c.b16 %v1996, %v1996
  %v2013 = vpack.c.b16 %v1997, %v1997
  %v2014 = vpack.c.b16 %v1998, %v1998
  %v2015 = vpack.c.b16 %v1999, %v1999
  %s2032 = scalar_lea.vmem [#allocation3], 256
  %2033 = vst.msk [vmem:[%s2032] sm:$0xf] %vm632, %v2000
  %2034 = vst.msk [vmem:[%s2032 + $0x4] sm:$0xf] %vm632, %v2001
  %2035 = vst.msk [vmem:[%s2032 + $0x8] sm:$0xf] %vm632, %v2002
  %2036 = vst.msk [vmem:[%s2032 + $0xc] sm:$0xf] %vm632, %v2003
  %2037 = vst.msk [vmem:[%s2032 + $0x10] sm:$0xf] %vm632, %v2004
  %2038 = vst.msk [vmem:[%s2032 + $0x14] sm:$0xf] %vm632, %v2005
  %2039 = vst.msk [vmem:[%s2032 + $0x18] sm:$0xf] %vm632, %v2006
  %2040 = vst.msk [vmem:[%s2032 + $0x1c] sm:$0xf] %vm632, %v2007
  %2041 = vst.msk [vmem:[%s2032 + $0x20] sm:$0xf] %vm632, %v2008
  %2042 = vst.msk [vmem:[%s2032 + $0x24] sm:$0xf] %vm632, %v2009
  %2043 = vst.msk [vmem:[%s2032 + $0x28] sm:$0xf] %vm632, %v2010
  %2044 = vst.msk [vmem:[%s2032 + $0x2c] sm:$0xf] %vm632, %v2011
  %2045 = vst.msk [vmem:[%s2032 + $0x30] sm:$0xf] %vm632, %v2012
  %2046 = vst.msk [vmem:[%s2032 + $0x34] sm:$0xf] %vm632, %v2013
  %2047 = vst.msk [vmem:[%s2032 + $0x38] sm:$0xf] %vm632, %v2014
  %2048 = vst.msk [vmem:[%s2032 + $0x3c] sm:$0xf] %vm632, %v2015
  %s2049 = scalar_lea.vmem %s0, 40
  %v2050 = vld [vmem:[%s2049] sm:$0xf]
  %v2051 = vld [vmem:[%s2049 + $0x4] sm:$0xf]
  %v2054 = vunpack.c.l.b16 %v2050
  %v2055 = vunpack.c.l.b16 %v2051
  %v2056 = vpack.c.b16 %v2055, %v2054
  %2058 = vmatprep.subr.bf16.mxu0 0
  %2059 = vmatpush1.bf16.msra.mxu0 0
  %2060 = vmatprep.subr.bf16.mxu0 0
  %2061 = vmatpush1.bf16.msra.mxu0 0
  %2062 = vmatprep.subr.bf16.mxu0 0
  %2063 = vmatpush1.bf16.msra.mxu0 0
  %2064 = vmatprep.subr.bf16.mxu0 0
  %2065 = vmatpush1.bf16.msra.mxu0 0
  %2066 = vmatprep.subr.bf16.mxu0 0
  %2067 = vmatpush1.bf16.msra.mxu0 0
  %2068 = vmatprep.subr.bf16.mxu0 0
  %2069 = vmatpush1.bf16.msra.mxu0 0
  %2070 = vmatprep.subr.bf16.mxu0 0
  %2071 = vmatpush1.bf16.msra.mxu0 0
  %2072 = vmatprep.subr.bf16.mxu0 0
  %2073 = vmatpush1.bf16.msra.mxu0 %v2056
  %2074 = vmatprep.subr.bf16.mxu0 0
  %2075 = vmatpush2.bf16.msra.mxu0 0
  %2076 = vmatprep.subr.bf16.mxu0 0
  %2077 = vmatpush2.bf16.msra.mxu0 0
  %2078 = vmatprep.subr.bf16.mxu0 0
  %2079 = vmatpush2.bf16.msra.mxu0 0
  %2080 = vmatprep.subr.bf16.mxu0 0
  %2081 = vmatpush2.bf16.msra.mxu0 0
  %2082 = vmatprep.subr.bf16.mxu0 0
  %2083 = vmatpush2.bf16.msra.mxu0 0
  %2084 = vmatprep.subr.bf16.mxu0 0
  %2085 = vmatpush2.bf16.msra.mxu0 0
  %2086 = vmatprep.subr.bf16.mxu0 0
  %2087 = vmatpush2.bf16.msra.mxu0 0
  %2088 = vmatprep.subr.bf16.mxu0 0
  %2089 = vmatpush2.bf16.msra.mxu0 0
  %2090 = vmatprep.mubr.bf16.mxu0 0
  %2091 = vmatmul.mubr.bf16.gmra.mxu0 %v352
  %v2092 = vpop.f32.mrf.mxu0
  %v2093 = vadd.f32 %v107, %v2092
  %v2094 = vpop.f32.mrf.mxu0
  %v2095 = vpop.f32.mrf.mxu0
  %v2096 = vadd.f32 %v112, %v2095
  %v2097 = vpop.f32.mrf.mxu0
  %2098 = vmatprep.mubr.bf16.mxu0 0
  %2099 = vmatmul.mubr.bf16.gmra.mxu0 %v355
  %v2100 = vpop.f32.mrf.mxu0
  %v2101 = vadd.f32 %v117, %v2100
  %v2102 = vpop.f32.mrf.mxu0
  %v2103 = vpop.f32.mrf.mxu0
  %v2104 = vadd.f32 %v122, %v2103
  %v2105 = vpop.f32.mrf.mxu0
  %2106 = vmatprep.mubr.bf16.mxu0 0
  %2107 = vmatmul.mubr.bf16.gmra.mxu0 %v358
  %v2108 = vpop.f32.mrf.mxu0
  %v2109 = vadd.f32 %v127, %v2108
  %v2110 = vpop.f32.mrf.mxu0
  %v2111 = vpop.f32.mrf.mxu0
  %v2112 = vadd.f32 %v132, %v2111
  %v2113 = vpop.f32.mrf.mxu0
  %2114 = vmatprep.mubr.bf16.mxu0 0
  %2115 = vmatmul.mubr.bf16.gmra.mxu0 %v361
  %v2116 = vpop.f32.mrf.mxu0
  %v2117 = vadd.f32 %v137, %v2116
  %v2118 = vpop.f32.mrf.mxu0
  %v2119 = vpop.f32.mrf.mxu0
  %v2120 = vadd.f32 %v142, %v2119
  %v2121 = vpop.f32.mrf.mxu0
  %2122 = vmatprep.mubr.bf16.mxu0 0
  %2123 = vmatmul.mubr.bf16.gmra.mxu0 %v364
  %v2124 = vpop.f32.mrf.mxu0
  %v2125 = vadd.f32 %v147, %v2124
  %v2126 = vpop.f32.mrf.mxu0
  %v2127 = vpop.f32.mrf.mxu0
  %v2128 = vadd.f32 %v152, %v2127
  %v2129 = vpop.f32.mrf.mxu0
  %2130 = vmatprep.mubr.bf16.mxu0 0
  %2131 = vmatmul.mubr.bf16.gmra.mxu0 %v367
  %v2132 = vpop.f32.mrf.mxu0
  %v2133 = vadd.f32 %v157, %v2132
  %v2134 = vpop.f32.mrf.mxu0
  %v2135 = vpop.f32.mrf.mxu0
  %v2136 = vadd.f32 %v162, %v2135
  %v2137 = vpop.f32.mrf.mxu0
  %2138 = vmatprep.mubr.bf16.mxu0 0
  %2139 = vmatmul.mubr.bf16.gmra.mxu0 %v370
  %v2140 = vpop.f32.mrf.mxu0
  %v2141 = vadd.f32 %v167, %v2140
  %v2142 = vpop.f32.mrf.mxu0
  %v2143 = vpop.f32.mrf.mxu0
  %v2144 = vadd.f32 %v172, %v2143
  %v2145 = vpop.f32.mrf.mxu0
  %2146 = vmatprep.mubr.bf16.mxu0 0
  %2147 = vmatmul.mubr.bf16.gmra.mxu0 %v373
  %v2148 = vpop.f32.mrf.mxu0
  %v2149 = vadd.f32 %v177, %v2148
  %v2150 = vpop.f32.mrf.mxu0
  %v2151 = vpop.f32.mrf.mxu0
  %v2152 = vadd.f32 %v182, %v2151
  %v2153 = vpop.f32.mrf.mxu0
  %2154 = vmatprep.mubr.bf16.mxu0 0
  %2155 = vmatmul.mubr.bf16.gmra.mxu0 %v376
  %v2156 = vpop.f32.mrf.mxu0
  %v2157 = vadd.f32 %v187, %v2156
  %v2158 = vpop.f32.mrf.mxu0
  %v2159 = vpop.f32.mrf.mxu0
  %v2160 = vadd.f32 %v192, %v2159
  %v2161 = vpop.f32.mrf.mxu0
  %2162 = vmatprep.mubr.bf16.mxu0 0
  %2163 = vmatmul.mubr.bf16.gmra.mxu0 %v379
  %v2164 = vpop.f32.mrf.mxu0
  %v2165 = vadd.f32 %v197, %v2164
  %v2166 = vpop.f32.mrf.mxu0
  %v2167 = vpop.f32.mrf.mxu0
  %v2168 = vadd.f32 %v202, %v2167
  %v2169 = vpop.f32.mrf.mxu0
  %2170 = vmatprep.mubr.bf16.mxu0 0
  %2171 = vmatmul.mubr.bf16.gmra.mxu0 %v382
  %v2172 = vpop.f32.mrf.mxu0
  %v2173 = vadd.f32 %v207, %v2172
  %v2174 = vpop.f32.mrf.mxu0
  %v2175 = vpop.f32.mrf.mxu0
  %v2176 = vadd.f32 %v212, %v2175
  %v2177 = vpop.f32.mrf.mxu0
  %2178 = vmatprep.mubr.bf16.mxu0 0
  %2179 = vmatmul.mubr.bf16.gmra.mxu0 %v385
  %v2180 = vpop.f32.mrf.mxu0
  %v2181 = vadd.f32 %v217, %v2180
  %v2182 = vpop.f32.mrf.mxu0
  %v2183 = vpop.f32.mrf.mxu0
  %v2184 = vadd.f32 %v222, %v2183
  %v2185 = vpop.f32.mrf.mxu0
  %2186 = vmatprep.mubr.bf16.mxu0 0
  %2187 = vmatmul.mubr.bf16.gmra.mxu0 %v388
  %v2188 = vpop.f32.mrf.mxu0
  %v2189 = vadd.f32 %v227, %v2188
  %v2190 = vpop.f32.mrf.mxu0
  %v2191 = vpop.f32.mrf.mxu0
  %v2192 = vadd.f32 %v232, %v2191
  %v2193 = vpop.f32.mrf.mxu0
  %2194 = vmatprep.mubr.bf16.mxu0 0
  %2195 = vmatmul.mubr.bf16.gmra.mxu0 %v391
  %v2196 = vpop.f32.mrf.mxu0
  %v2197 = vadd.f32 %v237, %v2196
  %v2198 = vpop.f32.mrf.mxu0
  %v2199 = vpop.f32.mrf.mxu0
  %v2200 = vadd.f32 %v242, %v2199
  %v2201 = vpop.f32.mrf.mxu0
  %2202 = vmatprep.mubr.bf16.mxu0 0
  %2203 = vmatmul.mubr.bf16.gmra.mxu0 %v394
  %v2204 = vpop.f32.mrf.mxu0
  %v2205 = vadd.f32 %v247, %v2204
  %v2206 = vpop.f32.mrf.mxu0
  %v2207 = vpop.f32.mrf.mxu0
  %v2208 = vadd.f32 %v252, %v2207
  %v2209 = vpop.f32.mrf.mxu0
  %2210 = vmatprep.mubr.bf16.mxu0 0
  %2211 = vmatmul.mubr.bf16.gmra.mxu0 %v397
  %v2212 = vpop.f32.mrf.mxu0
  %v2213 = vadd.f32 %v257, %v2212
  %v2214 = vpop.f32.mrf.mxu0
  %v2215 = vpop.f32.mrf.mxu0
  %v2216 = vadd.f32 %v262, %v2215
  %v2217 = vpop.f32.mrf.mxu0
  %2218 = vdwg.mxu0
  %v2219 = vpack.c.bf16 %v2096, %v2093
  %v2220 = vpack.c.bf16 %v2104, %v2101
  %v2221 = vpack.c.bf16 %v2112, %v2109
  %v2222 = vpack.c.bf16 %v2120, %v2117
  %v2223 = vpack.c.bf16 %v2128, %v2125
  %v2224 = vpack.c.bf16 %v2136, %v2133
  %v2225 = vpack.c.bf16 %v2144, %v2141
  %v2226 = vpack.c.bf16 %v2152, %v2149
  %v2227 = vpack.c.bf16 %v2160, %v2157
  %v2228 = vpack.c.bf16 %v2168, %v2165
  %v2229 = vpack.c.bf16 %v2176, %v2173
  %v2230 = vpack.c.bf16 %v2184, %v2181
  %v2231 = vpack.c.bf16 %v2192, %v2189
  %v2232 = vpack.c.bf16 %v2200, %v2197
  %v2233 = vpack.c.bf16 %v2208, %v2205
  %v2234 = vpack.c.bf16 %v2216, %v2213
  %v2243 = vunpack.c.l.b16 %v2219
  %v2244 = vunpack.c.h.b16 %v2219
  %v2245 = vunpack.c.l.b16 %v2220
  %v2246 = vunpack.c.h.b16 %v2220
  %v2247 = vunpack.c.l.b16 %v2221
  %v2248 = vunpack.c.h.b16 %v2221
  %v2249 = vunpack.c.l.b16 %v2222
  %v2250 = vunpack.c.h.b16 %v2222
  %v2251 = vunpack.c.l.b16 %v2223
  %v2252 = vunpack.c.h.b16 %v2223
  %v2253 = vunpack.c.l.b16 %v2224
  %v2254 = vunpack.c.h.b16 %v2224
  %v2255 = vunpack.c.l.b16 %v2225
  %v2256 = vunpack.c.h.b16 %v2225
  %v2257 = vunpack.c.l.b16 %v2226
  %v2258 = vunpack.c.h.b16 %v2226
  %v2259 = vpack.c.b16 %v2243, %v2243
  %v2260 = vpack.c.b16 %v2244, %v2244
  %v2261 = vpack.c.b16 %v2245, %v2245
  %v2262 = vpack.c.b16 %v2246, %v2246
  %v2263 = vpack.c.b16 %v2247, %v2247
  %v2264 = vpack.c.b16 %v2248, %v2248
  %v2265 = vpack.c.b16 %v2249, %v2249
  %v2266 = vpack.c.b16 %v2250, %v2250
  %v2267 = vpack.c.b16 %v2251, %v2251
  %v2268 = vpack.c.b16 %v2252, %v2252
  %v2269 = vpack.c.b16 %v2253, %v2253
  %v2270 = vpack.c.b16 %v2254, %v2254
  %v2271 = vpack.c.b16 %v2255, %v2255
  %v2272 = vpack.c.b16 %v2256, %v2256
  %v2273 = vpack.c.b16 %v2257, %v2257
  %v2274 = vpack.c.b16 %v2258, %v2258
  %s2291 = scalar_lea.vmem [#allocation2], 320
  %2292 = vst.msk [vmem:[%s2291] sm:$0xf] %vm632, %v2259
  %2293 = vst.msk [vmem:[%s2291 + $0x4] sm:$0xf] %vm632, %v2260
  %2294 = vst.msk [vmem:[%s2291 + $0x8] sm:$0xf] %vm632, %v2261
  %2295 = vst.msk [vmem:[%s2291 + $0xc] sm:$0xf] %vm632, %v2262
  %2296 = vst.msk [vmem:[%s2291 + $0x10] sm:$0xf] %vm632, %v2263
  %2297 = vst.msk [vmem:[%s2291 + $0x14] sm:$0xf] %vm632, %v2264
  %2298 = vst.msk [vmem:[%s2291 + $0x18] sm:$0xf] %vm632, %v2265
  %2299 = vst.msk [vmem:[%s2291 + $0x1c] sm:$0xf] %vm632, %v2266
  %2300 = vst.msk [vmem:[%s2291 + $0x20] sm:$0xf] %vm632, %v2267
  %2301 = vst.msk [vmem:[%s2291 + $0x24] sm:$0xf] %vm632, %v2268
  %2302 = vst.msk [vmem:[%s2291 + $0x28] sm:$0xf] %vm632, %v2269
  %2303 = vst.msk [vmem:[%s2291 + $0x2c] sm:$0xf] %vm632, %v2270
  %2304 = vst.msk [vmem:[%s2291 + $0x30] sm:$0xf] %vm632, %v2271
  %2305 = vst.msk [vmem:[%s2291 + $0x34] sm:$0xf] %vm632, %v2272
  %2306 = vst.msk [vmem:[%s2291 + $0x38] sm:$0xf] %vm632, %v2273
  %2307 = vst.msk [vmem:[%s2291 + $0x3c] sm:$0xf] %vm632, %v2274
  %v2316 = vunpack.c.l.b16 %v2227
  %v2317 = vunpack.c.h.b16 %v2227
  %v2318 = vunpack.c.l.b16 %v2228
  %v2319 = vunpack.c.h.b16 %v2228
  %v2320 = vunpack.c.l.b16 %v2229
  %v2321 = vunpack.c.h.b16 %v2229
  %v2322 = vunpack.c.l.b16 %v2230
  %v2323 = vunpack.c.h.b16 %v2230
  %v2324 = vunpack.c.l.b16 %v2231
  %v2325 = vunpack.c.h.b16 %v2231
  %v2326 = vunpack.c.l.b16 %v2232
  %v2327 = vunpack.c.h.b16 %v2232
  %v2328 = vunpack.c.l.b16 %v2233
  %v2329 = vunpack.c.h.b16 %v2233
  %v2330 = vunpack.c.l.b16 %v2234
  %v2331 = vunpack.c.h.b16 %v2234
  %v2332 = vpack.c.b16 %v2316, %v2316
  %v2333 = vpack.c.b16 %v2317, %v2317
  %v2334 = vpack.c.b16 %v2318, %v2318
  %v2335 = vpack.c.b16 %v2319, %v2319
  %v2336 = vpack.c.b16 %v2320, %v2320
  %v2337 = vpack.c.b16 %v2321, %v2321
  %v2338 = vpack.c.b16 %v2322, %v2322
  %v2339 = vpack.c.b16 %v2323, %v2323
  %v2340 = vpack.c.b16 %v2324, %v2324
  %v2341 = vpack.c.b16 %v2325, %v2325
  %v2342 = vpack.c.b16 %v2326, %v2326
  %v2343 = vpack.c.b16 %v2327, %v2327
  %v2344 = vpack.c.b16 %v2328, %v2328
  %v2345 = vpack.c.b16 %v2329, %v2329
  %v2346 = vpack.c.b16 %v2330, %v2330
  %v2347 = vpack.c.b16 %v2331, %v2331
  %s2364 = scalar_lea.vmem [#allocation3], 320
  %2365 = vst.msk [vmem:[%s2364] sm:$0xf] %vm632, %v2332
  %2366 = vst.msk [vmem:[%s2364 + $0x4] sm:$0xf] %vm632, %v2333
  %2367 = vst.msk [vmem:[%s2364 + $0x8] sm:$0xf] %vm632, %v2334
  %2368 = vst.msk [vmem:[%s2364 + $0xc] sm:$0xf] %vm632, %v2335
  %2369 = vst.msk [vmem:[%s2364 + $0x10] sm:$0xf] %vm632, %v2336
  %2370 = vst.msk [vmem:[%s2364 + $0x14] sm:$0xf] %vm632, %v2337
  %2371 = vst.msk [vmem:[%s2364 + $0x18] sm:$0xf] %vm632, %v2338
  %2372 = vst.msk [vmem:[%s2364 + $0x1c] sm:$0xf] %vm632, %v2339
  %2373 = vst.msk [vmem:[%s2364 + $0x20] sm:$0xf] %vm632, %v2340
  %2374 = vst.msk [vmem:[%s2364 + $0x24] sm:$0xf] %vm632, %v2341
  %2375 = vst.msk [vmem:[%s2364 + $0x28] sm:$0xf] %vm632, %v2342
  %2376 = vst.msk [vmem:[%s2364 + $0x2c] sm:$0xf] %vm632, %v2343
  %2377 = vst.msk [vmem:[%s2364 + $0x30] sm:$0xf] %vm632, %v2344
  %2378 = vst.msk [vmem:[%s2364 + $0x34] sm:$0xf] %vm632, %v2345
  %2379 = vst.msk [vmem:[%s2364 + $0x38] sm:$0xf] %vm632, %v2346
  %2380 = vst.msk [vmem:[%s2364 + $0x3c] sm:$0xf] %vm632, %v2347
  %s2381 = scalar_lea.vmem %s0, 48
  %v2382 = vld [vmem:[%s2381] sm:$0xf]
  %v2383 = vld [vmem:[%s2381 + $0x4] sm:$0xf]
  %v2386 = vunpack.c.l.b16 %v2382
  %v2387 = vunpack.c.l.b16 %v2383
  %v2388 = vpack.c.b16 %v2387, %v2386
  %2390 = vmatprep.subr.bf16.mxu0 0
  %2391 = vmatpush1.bf16.msra.mxu0 0
  %2392 = vmatprep.subr.bf16.mxu0 0
  %2393 = vmatpush1.bf16.msra.mxu0 0
  %2394 = vmatprep.subr.bf16.mxu0 0
  %2395 = vmatpush1.bf16.msra.mxu0 0
  %2396 = vmatprep.subr.bf16.mxu0 0
  %2397 = vmatpush1.bf16.msra.mxu0 0
  %2398 = vmatprep.subr.bf16.mxu0 0
  %2399 = vmatpush1.bf16.msra.mxu0 0
  %2400 = vmatprep.subr.bf16.mxu0 0
  %2401 = vmatpush1.bf16.msra.mxu0 0
  %2402 = vmatprep.subr.bf16.mxu0 0
  %2403 = vmatpush1.bf16.msra.mxu0 0
  %2404 = vmatprep.subr.bf16.mxu0 0
  %2405 = vmatpush1.bf16.msra.mxu0 %v2388
  %2406 = vmatprep.subr.bf16.mxu0 0
  %2407 = vmatpush2.bf16.msra.mxu0 0
  %2408 = vmatprep.subr.bf16.mxu0 0
  %2409 = vmatpush2.bf16.msra.mxu0 0
  %2410 = vmatprep.subr.bf16.mxu0 0
  %2411 = vmatpush2.bf16.msra.mxu0 0
  %2412 = vmatprep.subr.bf16.mxu0 0
  %2413 = vmatpush2.bf16.msra.mxu0 0
  %2414 = vmatprep.subr.bf16.mxu0 0
  %2415 = vmatpush2.bf16.msra.mxu0 0
  %2416 = vmatprep.subr.bf16.mxu0 0
  %2417 = vmatpush2.bf16.msra.mxu0 0
  %2418 = vmatprep.subr.bf16.mxu0 0
  %2419 = vmatpush2.bf16.msra.mxu0 0
  %2420 = vmatprep.subr.bf16.mxu0 0
  %2421 = vmatpush2.bf16.msra.mxu0 0
  %2422 = vmatprep.mubr.bf16.mxu0 0
  %2423 = vmatmul.mubr.bf16.gmra.mxu0 %v352
  %v2424 = vpop.f32.mrf.mxu0
  %v2425 = vadd.f32 %v107, %v2424
  %v2426 = vpop.f32.mrf.mxu0
  %v2427 = vpop.f32.mrf.mxu0
  %v2428 = vadd.f32 %v112, %v2427
  %v2429 = vpop.f32.mrf.mxu0
  %2430 = vmatprep.mubr.bf16.mxu0 0
  %2431 = vmatmul.mubr.bf16.gmra.mxu0 %v355
  %v2432 = vpop.f32.mrf.mxu0
  %v2433 = vadd.f32 %v117, %v2432
  %v2434 = vpop.f32.mrf.mxu0
  %v2435 = vpop.f32.mrf.mxu0
  %v2436 = vadd.f32 %v122, %v2435
  %v2437 = vpop.f32.mrf.mxu0
  %2438 = vmatprep.mubr.bf16.mxu0 0
  %2439 = vmatmul.mubr.bf16.gmra.mxu0 %v358
  %v2440 = vpop.f32.mrf.mxu0
  %v2441 = vadd.f32 %v127, %v2440
  %v2442 = vpop.f32.mrf.mxu0
  %v2443 = vpop.f32.mrf.mxu0
  %v2444 = vadd.f32 %v132, %v2443
  %v2445 = vpop.f32.mrf.mxu0
  %2446 = vmatprep.mubr.bf16.mxu0 0
  %2447 = vmatmul.mubr.bf16.gmra.mxu0 %v361
  %v2448 = vpop.f32.mrf.mxu0
  %v2449 = vadd.f32 %v137, %v2448
  %v2450 = vpop.f32.mrf.mxu0
  %v2451 = vpop.f32.mrf.mxu0
  %v2452 = vadd.f32 %v142, %v2451
  %v2453 = vpop.f32.mrf.mxu0
  %2454 = vmatprep.mubr.bf16.mxu0 0
  %2455 = vmatmul.mubr.bf16.gmra.mxu0 %v364
  %v2456 = vpop.f32.mrf.mxu0
  %v2457 = vadd.f32 %v147, %v2456
  %v2458 = vpop.f32.mrf.mxu0
  %v2459 = vpop.f32.mrf.mxu0
  %v2460 = vadd.f32 %v152, %v2459
  %v2461 = vpop.f32.mrf.mxu0
  %2462 = vmatprep.mubr.bf16.mxu0 0
  %2463 = vmatmul.mubr.bf16.gmra.mxu0 %v367
  %v2464 = vpop.f32.mrf.mxu0
  %v2465 = vadd.f32 %v157, %v2464
  %v2466 = vpop.f32.mrf.mxu0
  %v2467 = vpop.f32.mrf.mxu0
  %v2468 = vadd.f32 %v162, %v2467
  %v2469 = vpop.f32.mrf.mxu0
  %2470 = vmatprep.mubr.bf16.mxu0 0
  %2471 = vmatmul.mubr.bf16.gmra.mxu0 %v370
  %v2472 = vpop.f32.mrf.mxu0
  %v2473 = vadd.f32 %v167, %v2472
  %v2474 = vpop.f32.mrf.mxu0
  %v2475 = vpop.f32.mrf.mxu0
  %v2476 = vadd.f32 %v172, %v2475
  %v2477 = vpop.f32.mrf.mxu0
  %2478 = vmatprep.mubr.bf16.mxu0 0
  %2479 = vmatmul.mubr.bf16.gmra.mxu0 %v373
  %v2480 = vpop.f32.mrf.mxu0
  %v2481 = vadd.f32 %v177, %v2480
  %v2482 = vpop.f32.mrf.mxu0
  %v2483 = vpop.f32.mrf.mxu0
  %v2484 = vadd.f32 %v182, %v2483
  %v2485 = vpop.f32.mrf.mxu0
  %2486 = vmatprep.mubr.bf16.mxu0 0
  %2487 = vmatmul.mubr.bf16.gmra.mxu0 %v376
  %v2488 = vpop.f32.mrf.mxu0
  %v2489 = vadd.f32 %v187, %v2488
  %v2490 = vpop.f32.mrf.mxu0
  %v2491 = vpop.f32.mrf.mxu0
  %v2492 = vadd.f32 %v192, %v2491
  %v2493 = vpop.f32.mrf.mxu0
  %2494 = vmatprep.mubr.bf16.mxu0 0
  %2495 = vmatmul.mubr.bf16.gmra.mxu0 %v379
  %v2496 = vpop.f32.mrf.mxu0
  %v2497 = vadd.f32 %v197, %v2496
  %v2498 = vpop.f32.mrf.mxu0
  %v2499 = vpop.f32.mrf.mxu0
  %v2500 = vadd.f32 %v202, %v2499
  %v2501 = vpop.f32.mrf.mxu0
  %2502 = vmatprep.mubr.bf16.mxu0 0
  %2503 = vmatmul.mubr.bf16.gmra.mxu0 %v382
  %v2504 = vpop.f32.mrf.mxu0
  %v2505 = vadd.f32 %v207, %v2504
  %v2506 = vpop.f32.mrf.mxu0
  %v2507 = vpop.f32.mrf.mxu0
  %v2508 = vadd.f32 %v212, %v2507
  %v2509 = vpop.f32.mrf.mxu0
  %2510 = vmatprep.mubr.bf16.mxu0 0
  %2511 = vmatmul.mubr.bf16.gmra.mxu0 %v385
  %v2512 = vpop.f32.mrf.mxu0
  %v2513 = vadd.f32 %v217, %v2512
  %v2514 = vpop.f32.mrf.mxu0
  %v2515 = vpop.f32.mrf.mxu0
  %v2516 = vadd.f32 %v222, %v2515
  %v2517 = vpop.f32.mrf.mxu0
  %2518 = vmatprep.mubr.bf16.mxu0 0
  %2519 = vmatmul.mubr.bf16.gmra.mxu0 %v388
  %v2520 = vpop.f32.mrf.mxu0
  %v2521 = vadd.f32 %v227, %v2520
  %v2522 = vpop.f32.mrf.mxu0
  %v2523 = vpop.f32.mrf.mxu0
  %v2524 = vadd.f32 %v232, %v2523
  %v2525 = vpop.f32.mrf.mxu0
  %2526 = vmatprep.mubr.bf16.mxu0 0
  %2527 = vmatmul.mubr.bf16.gmra.mxu0 %v391
  %v2528 = vpop.f32.mrf.mxu0
  %v2529 = vadd.f32 %v237, %v2528
  %v2530 = vpop.f32.mrf.mxu0
  %v2531 = vpop.f32.mrf.mxu0
  %v2532 = vadd.f32 %v242, %v2531
  %v2533 = vpop.f32.mrf.mxu0
  %2534 = vmatprep.mubr.bf16.mxu0 0
  %2535 = vmatmul.mubr.bf16.gmra.mxu0 %v394
  %v2536 = vpop.f32.mrf.mxu0
  %v2537 = vadd.f32 %v247, %v2536
  %v2538 = vpop.f32.mrf.mxu0
  %v2539 = vpop.f32.mrf.mxu0
  %v2540 = vadd.f32 %v252, %v2539
  %v2541 = vpop.f32.mrf.mxu0
  %2542 = vmatprep.mubr.bf16.mxu0 0
  %2543 = vmatmul.mubr.bf16.gmra.mxu0 %v397
  %v2544 = vpop.f32.mrf.mxu0
  %v2545 = vadd.f32 %v257, %v2544
  %v2546 = vpop.f32.mrf.mxu0
  %v2547 = vpop.f32.mrf.mxu0
  %v2548 = vadd.f32 %v262, %v2547
  %v2549 = vpop.f32.mrf.mxu0
  %2550 = vdwg.mxu0
  %v2551 = vpack.c.bf16 %v2428, %v2425
  %v2552 = vpack.c.bf16 %v2436, %v2433
  %v2553 = vpack.c.bf16 %v2444, %v2441
  %v2554 = vpack.c.bf16 %v2452, %v2449
  %v2555 = vpack.c.bf16 %v2460, %v2457
  %v2556 = vpack.c.bf16 %v2468, %v2465
  %v2557 = vpack.c.bf16 %v2476, %v2473
  %v2558 = vpack.c.bf16 %v2484, %v2481
  %v2559 = vpack.c.bf16 %v2492, %v2489
  %v2560 = vpack.c.bf16 %v2500, %v2497
  %v2561 = vpack.c.bf16 %v2508, %v2505
  %v2562 = vpack.c.bf16 %v2516, %v2513
  %v2563 = vpack.c.bf16 %v2524, %v2521
  %v2564 = vpack.c.bf16 %v2532, %v2529
  %v2565 = vpack.c.bf16 %v2540, %v2537
  %v2566 = vpack.c.bf16 %v2548, %v2545
  %v2575 = vunpack.c.l.b16 %v2551
  %v2576 = vunpack.c.h.b16 %v2551
  %v2577 = vunpack.c.l.b16 %v2552
  %v2578 = vunpack.c.h.b16 %v2552
  %v2579 = vunpack.c.l.b16 %v2553
  %v2580 = vunpack.c.h.b16 %v2553
  %v2581 = vunpack.c.l.b16 %v2554
  %v2582 = vunpack.c.h.b16 %v2554
  %v2583 = vunpack.c.l.b16 %v2555
  %v2584 = vunpack.c.h.b16 %v2555
  %v2585 = vunpack.c.l.b16 %v2556
  %v2586 = vunpack.c.h.b16 %v2556
  %v2587 = vunpack.c.l.b16 %v2557
  %v2588 = vunpack.c.h.b16 %v2557
  %v2589 = vunpack.c.l.b16 %v2558
  %v2590 = vunpack.c.h.b16 %v2558
  %v2591 = vpack.c.b16 %v2575, %v2575
  %v2592 = vpack.c.b16 %v2576, %v2576
  %v2593 = vpack.c.b16 %v2577, %v2577
  %v2594 = vpack.c.b16 %v2578, %v2578
  %v2595 = vpack.c.b16 %v2579, %v2579
  %v2596 = vpack.c.b16 %v2580, %v2580
  %v2597 = vpack.c.b16 %v2581, %v2581
  %v2598 = vpack.c.b16 %v2582, %v2582
  %v2599 = vpack.c.b16 %v2583, %v2583
  %v2600 = vpack.c.b16 %v2584, %v2584
  %v2601 = vpack.c.b16 %v2585, %v2585
  %v2602 = vpack.c.b16 %v2586, %v2586
  %v2603 = vpack.c.b16 %v2587, %v2587
  %v2604 = vpack.c.b16 %v2588, %v2588
  %v2605 = vpack.c.b16 %v2589, %v2589
  %v2606 = vpack.c.b16 %v2590, %v2590
  %s2623 = scalar_lea.vmem [#allocation2], 384
  %2624 = vst.msk [vmem:[%s2623] sm:$0xf] %vm632, %v2591
  %2625 = vst.msk [vmem:[%s2623 + $0x4] sm:$0xf] %vm632, %v2592
  %2626 = vst.msk [vmem:[%s2623 + $0x8] sm:$0xf] %vm632, %v2593
  %2627 = vst.msk [vmem:[%s2623 + $0xc] sm:$0xf] %vm632, %v2594
  %2628 = vst.msk [vmem:[%s2623 + $0x10] sm:$0xf] %vm632, %v2595
  %2629 = vst.msk [vmem:[%s2623 + $0x14] sm:$0xf] %vm632, %v2596
  %2630 = vst.msk [vmem:[%s2623 + $0x18] sm:$0xf] %vm632, %v2597
  %2631 = vst.msk [vmem:[%s2623 + $0x1c] sm:$0xf] %vm632, %v2598
  %2632 = vst.msk [vmem:[%s2623 + $0x20] sm:$0xf] %vm632, %v2599
  %2633 = vst.msk [vmem:[%s2623 + $0x24] sm:$0xf] %vm632, %v2600
  %2634 = vst.msk [vmem:[%s2623 + $0x28] sm:$0xf] %vm632, %v2601
  %2635 = vst.msk [vmem:[%s2623 + $0x2c] sm:$0xf] %vm632, %v2602
  %2636 = vst.msk [vmem:[%s2623 + $0x30] sm:$0xf] %vm632, %v2603
  %2637 = vst.msk [vmem:[%s2623 + $0x34] sm:$0xf] %vm632, %v2604
  %2638 = vst.msk [vmem:[%s2623 + $0x38] sm:$0xf] %vm632, %v2605
  %2639 = vst.msk [vmem:[%s2623 + $0x3c] sm:$0xf] %vm632, %v2606
  %v2648 = vunpack.c.l.b16 %v2559
  %v2649 = vunpack.c.h.b16 %v2559
  %v2650 = vunpack.c.l.b16 %v2560
  %v2651 = vunpack.c.h.b16 %v2560
  %v2652 = vunpack.c.l.b16 %v2561
  %v2653 = vunpack.c.h.b16 %v2561
  %v2654 = vunpack.c.l.b16 %v2562
  %v2655 = vunpack.c.h.b16 %v2562
  %v2656 = vunpack.c.l.b16 %v2563
  %v2657 = vunpack.c.h.b16 %v2563
  %v2658 = vunpack.c.l.b16 %v2564
  %v2659 = vunpack.c.h.b16 %v2564
  %v2660 = vunpack.c.l.b16 %v2565
  %v2661 = vunpack.c.h.b16 %v2565
  %v2662 = vunpack.c.l.b16 %v2566
  %v2663 = vunpack.c.h.b16 %v2566
  %v2664 = vpack.c.b16 %v2648, %v2648
  %v2665 = vpack.c.b16 %v2649, %v2649
  %v2666 = vpack.c.b16 %v2650, %v2650
  %v2667 = vpack.c.b16 %v2651, %v2651
  %v2668 = vpack.c.b16 %v2652, %v2652
  %v2669 = vpack.c.b16 %v2653, %v2653
  %v2670 = vpack.c.b16 %v2654, %v2654
  %v2671 = vpack.c.b16 %v2655, %v2655
  %v2672 = vpack.c.b16 %v2656, %v2656
  %v2673 = vpack.c.b16 %v2657, %v2657
  %v2674 = vpack.c.b16 %v2658, %v2658
  %v2675 = vpack.c.b16 %v2659, %v2659
  %v2676 = vpack.c.b16 %v2660, %v2660
  %v2677 = vpack.c.b16 %v2661, %v2661
  %v2678 = vpack.c.b16 %v2662, %v2662
  %v2679 = vpack.c.b16 %v2663, %v2663
  %s2696 = scalar_lea.vmem [#allocation3], 384
  %2697 = vst.msk [vmem:[%s2696] sm:$0xf] %vm632, %v2664
  %2698 = vst.msk [vmem:[%s2696 + $0x4] sm:$0xf] %vm632, %v2665
  %2699 = vst.msk [vmem:[%s2696 + $0x8] sm:$0xf] %vm632, %v2666
  %2700 = vst.msk [vmem:[%s2696 + $0xc] sm:$0xf] %vm632, %v2667
  %2701 = vst.msk [vmem:[%s2696 + $0x10] sm:$0xf] %vm632, %v2668
  %2702 = vst.msk [vmem:[%s2696 + $0x14] sm:$0xf] %vm632, %v2669
  %2703 = vst.msk [vmem:[%s2696 + $0x18] sm:$0xf] %vm632, %v2670
  %2704 = vst.msk [vmem:[%s2696 + $0x1c] sm:$0xf] %vm632, %v2671
  %2705 = vst.msk [vmem:[%s2696 + $0x20] sm:$0xf] %vm632, %v2672
  %2706 = vst.msk [vmem:[%s2696 + $0x24] sm:$0xf] %vm632, %v2673
  %2707 = vst.msk [vmem:[%s2696 + $0x28] sm:$0xf] %vm632, %v2674
  %2708 = vst.msk [vmem:[%s2696 + $0x2c] sm:$0xf] %vm632, %v2675
  %2709 = vst.msk [vmem:[%s2696 + $0x30] sm:$0xf] %vm632, %v2676
  %2710 = vst.msk [vmem:[%s2696 + $0x34] sm:$0xf] %vm632, %v2677
  %2711 = vst.msk [vmem:[%s2696 + $0x38] sm:$0xf] %vm632, %v2678
  %2712 = vst.msk [vmem:[%s2696 + $0x3c] sm:$0xf] %vm632, %v2679
  %s2713 = scalar_lea.vmem %s0, 56
  %v2714 = vld [vmem:[%s2713] sm:$0xf]
  %v2715 = vld [vmem:[%s2713 + $0x4] sm:$0xf]
  %v2718 = vunpack.c.l.b16 %v2714
  %v2719 = vunpack.c.l.b16 %v2715
  %v2720 = vpack.c.b16 %v2719, %v2718
  %2722 = vmatprep.subr.bf16.mxu0 0
  %2723 = vmatpush1.bf16.msra.mxu0 0
  %2724 = vmatprep.subr.bf16.mxu0 0
  %2725 = vmatpush1.bf16.msra.mxu0 0
  %2726 = vmatprep.subr.bf16.mxu0 0
  %2727 = vmatpush1.bf16.msra.mxu0 0
  %2728 = vmatprep.subr.bf16.mxu0 0
  %2729 = vmatpush1.bf16.msra.mxu0 0
  %2730 = vmatprep.subr.bf16.mxu0 0
  %2731 = vmatpush1.bf16.msra.mxu0 0
  %2732 = vmatprep.subr.bf16.mxu0 0
  %2733 = vmatpush1.bf16.msra.mxu0 0
  %2734 = vmatprep.subr.bf16.mxu0 0
  %2735 = vmatpush1.bf16.msra.mxu0 0
  %2736 = vmatprep.subr.bf16.mxu0 0
  %2737 = vmatpush1.bf16.msra.mxu0 %v2720
  %2738 = vmatprep.subr.bf16.mxu0 0
  %2739 = vmatpush2.bf16.msra.mxu0 0
  %2740 = vmatprep.subr.bf16.mxu0 0
  %2741 = vmatpush2.bf16.msra.mxu0 0
  %2742 = vmatprep.subr.bf16.mxu0 0
  %2743 = vmatpush2.bf16.msra.mxu0 0
  %2744 = vmatprep.subr.bf16.mxu0 0
  %2745 = vmatpush2.bf16.msra.mxu0 0
  %2746 = vmatprep.subr.bf16.mxu0 0
  %2747 = vmatpush2.bf16.msra.mxu0 0
  %2748 = vmatprep.subr.bf16.mxu0 0
  %2749 = vmatpush2.bf16.msra.mxu0 0
  %2750 = vmatprep.subr.bf16.mxu0 0
  %2751 = vmatpush2.bf16.msra.mxu0 0
  %2752 = vmatprep.subr.bf16.mxu0 0
  %2753 = vmatpush2.bf16.msra.mxu0 0
  %2754 = vmatprep.mubr.bf16.mxu0 0
  %2755 = vmatmul.mubr.bf16.gmra.mxu0 %v352
  %v2756 = vpop.f32.mrf.mxu0
  %v2757 = vadd.f32 %v107, %v2756
  %v2758 = vpop.f32.mrf.mxu0
  %v2759 = vpop.f32.mrf.mxu0
  %v2760 = vadd.f32 %v112, %v2759
  %v2761 = vpop.f32.mrf.mxu0
  %2762 = vmatprep.mubr.bf16.mxu0 0
  %2763 = vmatmul.mubr.bf16.gmra.mxu0 %v355
  %v2764 = vpop.f32.mrf.mxu0
  %v2765 = vadd.f32 %v117, %v2764
  %v2766 = vpop.f32.mrf.mxu0
  %v2767 = vpop.f32.mrf.mxu0
  %v2768 = vadd.f32 %v122, %v2767
  %v2769 = vpop.f32.mrf.mxu0
  %2770 = vmatprep.mubr.bf16.mxu0 0
  %2771 = vmatmul.mubr.bf16.gmra.mxu0 %v358
  %v2772 = vpop.f32.mrf.mxu0
  %v2773 = vadd.f32 %v127, %v2772
  %v2774 = vpop.f32.mrf.mxu0
  %v2775 = vpop.f32.mrf.mxu0
  %v2776 = vadd.f32 %v132, %v2775
  %v2777 = vpop.f32.mrf.mxu0
  %2778 = vmatprep.mubr.bf16.mxu0 0
  %2779 = vmatmul.mubr.bf16.gmra.mxu0 %v361
  %v2780 = vpop.f32.mrf.mxu0
  %v2781 = vadd.f32 %v137, %v2780
  %v2782 = vpop.f32.mrf.mxu0
  %v2783 = vpop.f32.mrf.mxu0
  %v2784 = vadd.f32 %v142, %v2783
  %v2785 = vpop.f32.mrf.mxu0
  %2786 = vmatprep.mubr.bf16.mxu0 0
  %2787 = vmatmul.mubr.bf16.gmra.mxu0 %v364
  %v2788 = vpop.f32.mrf.mxu0
  %v2789 = vadd.f32 %v147, %v2788
  %v2790 = vpop.f32.mrf.mxu0
  %v2791 = vpop.f32.mrf.mxu0
  %v2792 = vadd.f32 %v152, %v2791
  %v2793 = vpop.f32.mrf.mxu0
  %2794 = vmatprep.mubr.bf16.mxu0 0
  %2795 = vmatmul.mubr.bf16.gmra.mxu0 %v367
  %v2796 = vpop.f32.mrf.mxu0
  %v2797 = vadd.f32 %v157, %v2796
  %v2798 = vpop.f32.mrf.mxu0
  %v2799 = vpop.f32.mrf.mxu0
  %v2800 = vadd.f32 %v162, %v2799
  %v2801 = vpop.f32.mrf.mxu0
  %2802 = vmatprep.mubr.bf16.mxu0 0
  %2803 = vmatmul.mubr.bf16.gmra.mxu0 %v370
  %v2804 = vpop.f32.mrf.mxu0
  %v2805 = vadd.f32 %v167, %v2804
  %v2806 = vpop.f32.mrf.mxu0
  %v2807 = vpop.f32.mrf.mxu0
  %v2808 = vadd.f32 %v172, %v2807
  %v2809 = vpop.f32.mrf.mxu0
  %2810 = vmatprep.mubr.bf16.mxu0 0
  %2811 = vmatmul.mubr.bf16.gmra.mxu0 %v373
  %v2812 = vpop.f32.mrf.mxu0
  %v2813 = vadd.f32 %v177, %v2812
  %v2814 = vpop.f32.mrf.mxu0
  %v2815 = vpop.f32.mrf.mxu0
  %v2816 = vadd.f32 %v182, %v2815
  %v2817 = vpop.f32.mrf.mxu0
  %2818 = vmatprep.mubr.bf16.mxu0 0
  %2819 = vmatmul.mubr.bf16.gmra.mxu0 %v376
  %v2820 = vpop.f32.mrf.mxu0
  %v2821 = vadd.f32 %v187, %v2820
  %v2822 = vpop.f32.mrf.mxu0
  %v2823 = vpop.f32.mrf.mxu0
  %v2824 = vadd.f32 %v192, %v2823
  %v2825 = vpop.f32.mrf.mxu0
  %2826 = vmatprep.mubr.bf16.mxu0 0
  %2827 = vmatmul.mubr.bf16.gmra.mxu0 %v379
  %v2828 = vpop.f32.mrf.mxu0
  %v2829 = vadd.f32 %v197, %v2828
  %v2830 = vpop.f32.mrf.mxu0
  %v2831 = vpop.f32.mrf.mxu0
  %v2832 = vadd.f32 %v202, %v2831
  %v2833 = vpop.f32.mrf.mxu0
  %2834 = vmatprep.mubr.bf16.mxu0 0
  %2835 = vmatmul.mubr.bf16.gmra.mxu0 %v382
  %v2836 = vpop.f32.mrf.mxu0
  %v2837 = vadd.f32 %v207, %v2836
  %v2838 = vpop.f32.mrf.mxu0
  %v2839 = vpop.f32.mrf.mxu0
  %v2840 = vadd.f32 %v212, %v2839
  %v2841 = vpop.f32.mrf.mxu0
  %2842 = vmatprep.mubr.bf16.mxu0 0
  %2843 = vmatmul.mubr.bf16.gmra.mxu0 %v385
  %v2844 = vpop.f32.mrf.mxu0
  %v2845 = vadd.f32 %v217, %v2844
  %v2846 = vpop.f32.mrf.mxu0
  %v2847 = vpop.f32.mrf.mxu0
  %v2848 = vadd.f32 %v222, %v2847
  %v2849 = vpop.f32.mrf.mxu0
  %2850 = vmatprep.mubr.bf16.mxu0 0
  %2851 = vmatmul.mubr.bf16.gmra.mxu0 %v388
  %v2852 = vpop.f32.mrf.mxu0
  %v2853 = vadd.f32 %v227, %v2852
  %v2854 = vpop.f32.mrf.mxu0
  %v2855 = vpop.f32.mrf.mxu0
  %v2856 = vadd.f32 %v232, %v2855
  %v2857 = vpop.f32.mrf.mxu0
  %2858 = vmatprep.mubr.bf16.mxu0 0
  %2859 = vmatmul.mubr.bf16.gmra.mxu0 %v391
  %v2860 = vpop.f32.mrf.mxu0
  %v2861 = vadd.f32 %v237, %v2860
  %v2862 = vpop.f32.mrf.mxu0
  %v2863 = vpop.f32.mrf.mxu0
  %v2864 = vadd.f32 %v242, %v2863
  %v2865 = vpop.f32.mrf.mxu0
  %2866 = vmatprep.mubr.bf16.mxu0 0
  %2867 = vmatmul.mubr.bf16.gmra.mxu0 %v394
  %v2868 = vpop.f32.mrf.mxu0
  %v2869 = vadd.f32 %v247, %v2868
  %v2870 = vpop.f32.mrf.mxu0
  %v2871 = vpop.f32.mrf.mxu0
  %v2872 = vadd.f32 %v252, %v2871
  %v2873 = vpop.f32.mrf.mxu0
  %2874 = vmatprep.mubr.bf16.mxu0 0
  %2875 = vmatmul.mubr.bf16.gmra.mxu0 %v397
  %v2876 = vpop.f32.mrf.mxu0
  %v2877 = vadd.f32 %v257, %v2876
  %v2878 = vpop.f32.mrf.mxu0
  %v2879 = vpop.f32.mrf.mxu0
  %v2880 = vadd.f32 %v262, %v2879
  %v2881 = vpop.f32.mrf.mxu0
  %2882 = vdwg.mxu0
  %v2883 = vpack.c.bf16 %v2760, %v2757
  %v2884 = vpack.c.bf16 %v2768, %v2765
  %v2885 = vpack.c.bf16 %v2776, %v2773
  %v2886 = vpack.c.bf16 %v2784, %v2781
  %v2887 = vpack.c.bf16 %v2792, %v2789
  %v2888 = vpack.c.bf16 %v2800, %v2797
  %v2889 = vpack.c.bf16 %v2808, %v2805
  %v2890 = vpack.c.bf16 %v2816, %v2813
  %v2891 = vpack.c.bf16 %v2824, %v2821
  %v2892 = vpack.c.bf16 %v2832, %v2829
  %v2893 = vpack.c.bf16 %v2840, %v2837
  %v2894 = vpack.c.bf16 %v2848, %v2845
  %v2895 = vpack.c.bf16 %v2856, %v2853
  %v2896 = vpack.c.bf16 %v2864, %v2861
  %v2897 = vpack.c.bf16 %v2872, %v2869
  %v2898 = vpack.c.bf16 %v2880, %v2877
  %v2907 = vunpack.c.l.b16 %v2883
  %v2908 = vunpack.c.h.b16 %v2883
  %v2909 = vunpack.c.l.b16 %v2884
  %v2910 = vunpack.c.h.b16 %v2884
  %v2911 = vunpack.c.l.b16 %v2885
  %v2912 = vunpack.c.h.b16 %v2885
  %v2913 = vunpack.c.l.b16 %v2886
  %v2914 = vunpack.c.h.b16 %v2886
  %v2915 = vunpack.c.l.b16 %v2887
  %v2916 = vunpack.c.h.b16 %v2887
  %v2917 = vunpack.c.l.b16 %v2888
  %v2918 = vunpack.c.h.b16 %v2888
  %v2919 = vunpack.c.l.b16 %v2889
  %v2920 = vunpack.c.h.b16 %v2889
  %v2921 = vunpack.c.l.b16 %v2890
  %v2922 = vunpack.c.h.b16 %v2890
  %v2923 = vpack.c.b16 %v2907, %v2907
  %v2924 = vpack.c.b16 %v2908, %v2908
  %v2925 = vpack.c.b16 %v2909, %v2909
  %v2926 = vpack.c.b16 %v2910, %v2910
  %v2927 = vpack.c.b16 %v2911, %v2911
  %v2928 = vpack.c.b16 %v2912, %v2912
  %v2929 = vpack.c.b16 %v2913, %v2913
  %v2930 = vpack.c.b16 %v2914, %v2914
  %v2931 = vpack.c.b16 %v2915, %v2915
  %v2932 = vpack.c.b16 %v2916, %v2916
  %v2933 = vpack.c.b16 %v2917, %v2917
  %v2934 = vpack.c.b16 %v2918, %v2918
  %v2935 = vpack.c.b16 %v2919, %v2919
  %v2936 = vpack.c.b16 %v2920, %v2920
  %v2937 = vpack.c.b16 %v2921, %v2921
  %v2938 = vpack.c.b16 %v2922, %v2922
  %s2955 = scalar_lea.vmem [#allocation2], 448
  %2956 = vst.msk [vmem:[%s2955] sm:$0xf] %vm632, %v2923
  %2957 = vst.msk [vmem:[%s2955 + $0x4] sm:$0xf] %vm632, %v2924
  %2958 = vst.msk [vmem:[%s2955 + $0x8] sm:$0xf] %vm632, %v2925
  %2959 = vst.msk [vmem:[%s2955 + $0xc] sm:$0xf] %vm632, %v2926
  %2960 = vst.msk [vmem:[%s2955 + $0x10] sm:$0xf] %vm632, %v2927
  %2961 = vst.msk [vmem:[%s2955 + $0x14] sm:$0xf] %vm632, %v2928
  %2962 = vst.msk [vmem:[%s2955 + $0x18] sm:$0xf] %vm632, %v2929
  %2963 = vst.msk [vmem:[%s2955 + $0x1c] sm:$0xf] %vm632, %v2930
  %2964 = vst.msk [vmem:[%s2955 + $0x20] sm:$0xf] %vm632, %v2931
  %2965 = vst.msk [vmem:[%s2955 + $0x24] sm:$0xf] %vm632, %v2932
  %2966 = vst.msk [vmem:[%s2955 + $0x28] sm:$0xf] %vm632, %v2933
  %2967 = vst.msk [vmem:[%s2955 + $0x2c] sm:$0xf] %vm632, %v2934
  %2968 = vst.msk [vmem:[%s2955 + $0x30] sm:$0xf] %vm632, %v2935
  %2969 = vst.msk [vmem:[%s2955 + $0x34] sm:$0xf] %vm632, %v2936
  %2970 = vst.msk [vmem:[%s2955 + $0x38] sm:$0xf] %vm632, %v2937
  %2971 = vst.msk [vmem:[%s2955 + $0x3c] sm:$0xf] %vm632, %v2938
  %v2980 = vunpack.c.l.b16 %v2891
  %v2981 = vunpack.c.h.b16 %v2891
  %v2982 = vunpack.c.l.b16 %v2892
  %v2983 = vunpack.c.h.b16 %v2892
  %v2984 = vunpack.c.l.b16 %v2893
  %v2985 = vunpack.c.h.b16 %v2893
  %v2986 = vunpack.c.l.b16 %v2894
  %v2987 = vunpack.c.h.b16 %v2894
  %v2988 = vunpack.c.l.b16 %v2895
  %v2989 = vunpack.c.h.b16 %v2895
  %v2990 = vunpack.c.l.b16 %v2896
  %v2991 = vunpack.c.h.b16 %v2896
  %v2992 = vunpack.c.l.b16 %v2897
  %v2993 = vunpack.c.h.b16 %v2897
  %v2994 = vunpack.c.l.b16 %v2898
  %v2995 = vunpack.c.h.b16 %v2898
  %v2996 = vpack.c.b16 %v2980, %v2980
  %v2997 = vpack.c.b16 %v2981, %v2981
  %v2998 = vpack.c.b16 %v2982, %v2982
  %v2999 = vpack.c.b16 %v2983, %v2983
  %v3000 = vpack.c.b16 %v2984, %v2984
  %v3001 = vpack.c.b16 %v2985, %v2985
  %v3002 = vpack.c.b16 %v2986, %v2986
  %v3003 = vpack.c.b16 %v2987, %v2987
  %v3004 = vpack.c.b16 %v2988, %v2988
  %v3005 = vpack.c.b16 %v2989, %v2989
  %v3006 = vpack.c.b16 %v2990, %v2990
  %v3007 = vpack.c.b16 %v2991, %v2991
  %v3008 = vpack.c.b16 %v2992, %v2992
  %v3009 = vpack.c.b16 %v2993, %v2993
  %v3010 = vpack.c.b16 %v2994, %v2994
  %v3011 = vpack.c.b16 %v2995, %v2995
  %s3028 = scalar_lea.vmem [#allocation3], 448
  %3029 = vst.msk [vmem:[%s3028] sm:$0xf] %vm632, %v2996
  %3030 = vst.msk [vmem:[%s3028 + $0x4] sm:$0xf] %vm632, %v2997
  %3031 = vst.msk [vmem:[%s3028 + $0x8] sm:$0xf] %vm632, %v2998
  %3032 = vst.msk [vmem:[%s3028 + $0xc] sm:$0xf] %vm632, %v2999
  %3033 = vst.msk [vmem:[%s3028 + $0x10] sm:$0xf] %vm632, %v3000
  %3034 = vst.msk [vmem:[%s3028 + $0x14] sm:$0xf] %vm632, %v3001
  %3035 = vst.msk [vmem:[%s3028 + $0x18] sm:$0xf] %vm632, %v3002
  %3036 = vst.msk [vmem:[%s3028 + $0x1c] sm:$0xf] %vm632, %v3003
  %3037 = vst.msk [vmem:[%s3028 + $0x20] sm:$0xf] %vm632, %v3004
  %3038 = vst.msk [vmem:[%s3028 + $0x24] sm:$0xf] %vm632, %v3005
  %3039 = vst.msk [vmem:[%s3028 + $0x28] sm:$0xf] %vm632, %v3006
  %3040 = vst.msk [vmem:[%s3028 + $0x2c] sm:$0xf] %vm632, %v3007
  %3041 = vst.msk [vmem:[%s3028 + $0x30] sm:$0xf] %vm632, %v3008
  %3042 = vst.msk [vmem:[%s3028 + $0x34] sm:$0xf] %vm632, %v3009
  %3043 = vst.msk [vmem:[%s3028 + $0x38] sm:$0xf] %vm632, %v3010
  %3044 = vst.msk [vmem:[%s3028 + $0x3c] sm:$0xf] %vm632, %v3011
  %v3045 = vld [vmem:[%s3] sm:$0xf]
  %v3046 = vld [vmem:[%s3 + $0x4] sm:$0xf]
  %v3047 = vld [vmem:[%s3 + $0x8] sm:$0xf]
  %v3048 = vld [vmem:[%s3 + $0xc] sm:$0xf]
  %v3049 = vld [vmem:[%s3 + $0x10] sm:$0xf]
  %v3050 = vld [vmem:[%s3 + $0x14] sm:$0xf]
  %v3051 = vld [vmem:[%s3 + $0x18] sm:$0xf]
  %v3052 = vld [vmem:[%s3 + $0x1c] sm:$0xf]
  %v3053 = vld [vmem:[%s3 + $0x20] sm:$0xf]
  %v3054 = vld [vmem:[%s3 + $0x24] sm:$0xf]
  %v3055 = vld [vmem:[%s3 + $0x28] sm:$0xf]
  %v3056 = vld [vmem:[%s3 + $0x2c] sm:$0xf]
  %v3057 = vld [vmem:[%s3 + $0x30] sm:$0xf]
  %v3058 = vld [vmem:[%s3 + $0x34] sm:$0xf]
  %v3059 = vld [vmem:[%s3 + $0x38] sm:$0xf]
  %v3060 = vld [vmem:[%s3 + $0x3c] sm:$0xf]
  %v3061 = vld [vmem:[%s3 + $0x40] sm:$0xf]
  %v3062 = vld [vmem:[%s3 + $0x44] sm:$0xf]
  %v3063 = vld [vmem:[%s3 + $0x48] sm:$0xf]
  %v3064 = vld [vmem:[%s3 + $0x4c] sm:$0xf]
  %v3065 = vld [vmem:[%s3 + $0x50] sm:$0xf]
  %v3066 = vld [vmem:[%s3 + $0x54] sm:$0xf]
  %v3067 = vld [vmem:[%s3 + $0x58] sm:$0xf]
  %v3068 = vld [vmem:[%s3 + $0x5c] sm:$0xf]
  %v3069 = vld [vmem:[%s3 + $0x60] sm:$0xf]
  %v3070 = vld [vmem:[%s3 + $0x64] sm:$0xf]
  %v3071 = vld [vmem:[%s3 + $0x68] sm:$0xf]
  %v3072 = vld [vmem:[%s3 + $0x6c] sm:$0xf]
  %v3073 = vld [vmem:[%s3 + $0x70] sm:$0xf]
  %v3074 = vld [vmem:[%s3 + $0x74] sm:$0xf]
  %v3075 = vld [vmem:[%s3 + $0x78] sm:$0xf]
  %v3076 = vld [vmem:[%s3 + $0x7c] sm:$0xf]
  %v3077 = vld [vmem:[%s1] sm:$0x1]
  %v3110 = vunpack.c.l.b16 %v3045
  %v3111 = vunpack.c.l.b16 %v3046
  %v3112 = vunpack.c.l.b16 %v3047
  %v3113 = vunpack.c.l.b16 %v3048
  %v3114 = vunpack.c.l.b16 %v3049
  %v3115 = vunpack.c.l.b16 %v3050
  %v3116 = vunpack.c.l.b16 %v3051
  %v3117 = vunpack.c.l.b16 %v3052
  %v3118 = vunpack.c.l.b16 %v3053
  %v3119 = vunpack.c.l.b16 %v3054
  %v3120 = vunpack.c.l.b16 %v3055
  %v3121 = vunpack.c.l.b16 %v3056
  %v3122 = vunpack.c.l.b16 %v3057
  %v3123 = vunpack.c.l.b16 %v3058
  %v3124 = vunpack.c.l.b16 %v3059
  %v3125 = vunpack.c.l.b16 %v3060
  %v3126 = vunpack.c.l.b16 %v3061
  %v3127 = vunpack.c.l.b16 %v3062
  %v3128 = vunpack.c.l.b16 %v3063
  %v3129 = vunpack.c.l.b16 %v3064
  %v3130 = vunpack.c.l.b16 %v3065
  %v3131 = vunpack.c.l.b16 %v3066
  %v3132 = vunpack.c.l.b16 %v3067
  %v3133 = vunpack.c.l.b16 %v3068
  %v3134 = vunpack.c.l.b16 %v3069
  %v3135 = vunpack.c.l.b16 %v3070
  %v3136 = vunpack.c.l.b16 %v3071
  %v3137 = vunpack.c.l.b16 %v3072
  %v3138 = vunpack.c.l.b16 %v3073
  %v3139 = vunpack.c.l.b16 %v3074
  %v3140 = vunpack.c.l.b16 %v3075
  %v3141 = vunpack.c.l.b16 %v3076
  %v3142 = vpack.c.b16 %v3111, %v3110
  %v3143 = vpack.c.b16 %v3113, %v3112
  %v3144 = vpack.c.b16 %v3115, %v3114
  %v3145 = vpack.c.b16 %v3117, %v3116
  %v3146 = vpack.c.b16 %v3119, %v3118
  %v3147 = vpack.c.b16 %v3121, %v3120
  %v3148 = vpack.c.b16 %v3123, %v3122
  %v3149 = vpack.c.b16 %v3125, %v3124
  %v3150 = vpack.c.b16 %v3127, %v3126
  %v3151 = vpack.c.b16 %v3129, %v3128
  %v3152 = vpack.c.b16 %v3131, %v3130
  %v3153 = vpack.c.b16 %v3133, %v3132
  %v3154 = vpack.c.b16 %v3135, %v3134
  %v3155 = vpack.c.b16 %v3137, %v3136
  %v3156 = vpack.c.b16 %v3139, %v3138
  %v3157 = vpack.c.b16 %v3141, %v3140
  %vm3158 = vcmask 523264
  %v3160 = vsel %vm3158, %v3142, 0
  %v3163 = vsel %vm3158, %v3143, 0
  %v3166 = vsel %vm3158, %v3144, 0
  %v3169 = vsel %vm3158, %v3145, 0
  %v3172 = vsel %vm3158, %v3146, 0
  %v3175 = vsel %vm3158, %v3147, 0
  %v3178 = vsel %vm3158, %v3148, 0
  %v3181 = vsel %vm3158, %v3149, 0
  %v3184 = vsel %vm3158, %v3150, 0
  %v3187 = vsel %vm3158, %v3151, 0
  %v3190 = vsel %vm3158, %v3152, 0
  %v3193 = vsel %vm3158, %v3153, 0
  %v3196 = vsel %vm3158, %v3154, 0
  %v3199 = vsel %vm3158, %v3155, 0
  %v3202 = vsel %vm3158, %v3156, 0
  %v3205 = vsel %vm3158, %v3157, 0
  %3207 = vmatprep.subr.bf16.mxu0 0
  %3208 = vmatpush1.bf16.msra.mxu0 0
  %3209 = vmatprep.subr.bf16.mxu0 0
  %3210 = vmatpush1.bf16.msra.mxu0 0
  %3211 = vmatprep.subr.bf16.mxu0 0
  %3212 = vmatpush1.bf16.msra.mxu0 0
  %3213 = vmatprep.subr.bf16.mxu0 0
  %3214 = vmatpush1.bf16.msra.mxu0 0
  %3215 = vmatprep.subr.bf16.mxu0 0
  %3216 = vmatpush1.bf16.msra.mxu0 0
  %3217 = vmatprep.subr.bf16.mxu0 0
  %3218 = vmatpush1.bf16.msra.mxu0 0
  %3219 = vmatprep.subr.bf16.mxu0 0
  %3220 = vmatpush1.bf16.msra.mxu0 0
  %3221 = vmatprep.subr.bf16.mxu0 0
  %3222 = vmatpush1.bf16.msra.mxu0 0
  %3223 = vmatprep.subr.bf16.mxu0 0
  %3224 = vmatpush2.bf16.msra.mxu0 0
  %3225 = vmatprep.subr.bf16.mxu0 0
  %3226 = vmatpush2.bf16.msra.mxu0 0
  %3227 = vmatprep.subr.bf16.mxu0 0
  %3228 = vmatpush2.bf16.msra.mxu0 0
  %3229 = vmatprep.subr.bf16.mxu0 0
  %3230 = vmatpush2.bf16.msra.mxu0 0
  %3231 = vmatprep.subr.bf16.mxu0 0
  %3232 = vmatpush2.bf16.msra.mxu0 0
  %3233 = vmatprep.subr.bf16.mxu0 0
  %3234 = vmatpush2.bf16.msra.mxu0 0
  %3235 = vmatprep.subr.bf16.mxu0 0
  %3236 = vmatpush2.bf16.msra.mxu0 0
  %3237 = vmatprep.subr.bf16.mxu0 0
  %3238 = vmatpush2.bf16.msra.mxu0 0
  %3239 = vmatprep.mubr.bf16.mxu0 0
  %3240 = vmatmul.mubr.bf16.gmra.mxu0 %v3160
  %v3241 = vpop.f32.mrf.mxu0
  %v3242 = vadd.f32 0.0, %v3241
  %v3243 = vpop.f32.mrf.mxu0
  %v3244 = vpop.f32.mrf.mxu0
  %v3245 = vadd.f32 0.0, %v3244
  %v3246 = vpop.f32.mrf.mxu0
  %3247 = vmatprep.mubr.bf16.mxu0 0
  %3248 = vmatmul.mubr.bf16.gmra.mxu0 %v3163
  %v3249 = vpop.f32.mrf.mxu0
  %v3250 = vadd.f32 0.0, %v3249
  %v3251 = vpop.f32.mrf.mxu0
  %v3252 = vpop.f32.mrf.mxu0
  %v3253 = vadd.f32 0.0, %v3252
  %v3254 = vpop.f32.mrf.mxu0
  %3255 = vmatprep.mubr.bf16.mxu0 0
  %3256 = vmatmul.mubr.bf16.gmra.mxu0 %v3166
  %v3257 = vpop.f32.mrf.mxu0
  %v3258 = vadd.f32 0.0, %v3257
  %v3259 = vpop.f32.mrf.mxu0
  %v3260 = vpop.f32.mrf.mxu0
  %v3261 = vadd.f32 0.0, %v3260
  %v3262 = vpop.f32.mrf.mxu0
  %3263 = vmatprep.mubr.bf16.mxu0 0
  %3264 = vmatmul.mubr.bf16.gmra.mxu0 %v3169
  %v3265 = vpop.f32.mrf.mxu0
  %v3266 = vadd.f32 0.0, %v3265
  %v3267 = vpop.f32.mrf.mxu0
  %v3268 = vpop.f32.mrf.mxu0
  %v3269 = vadd.f32 0.0, %v3268
  %v3270 = vpop.f32.mrf.mxu0
  %3271 = vmatprep.mubr.bf16.mxu0 0
  %3272 = vmatmul.mubr.bf16.gmra.mxu0 %v3172
  %v3273 = vpop.f32.mrf.mxu0
  %v3274 = vadd.f32 0.0, %v3273
  %v3275 = vpop.f32.mrf.mxu0
  %v3276 = vpop.f32.mrf.mxu0
  %v3277 = vadd.f32 0.0, %v3276
  %v3278 = vpop.f32.mrf.mxu0
  %3279 = vmatprep.mubr.bf16.mxu0 0
  %3280 = vmatmul.mubr.bf16.gmra.mxu0 %v3175
  %v3281 = vpop.f32.mrf.mxu0
  %v3282 = vadd.f32 0.0, %v3281
  %v3283 = vpop.f32.mrf.mxu0
  %v3284 = vpop.f32.mrf.mxu0
  %v3285 = vadd.f32 0.0, %v3284
  %v3286 = vpop.f32.mrf.mxu0
  %3287 = vmatprep.mubr.bf16.mxu0 0
  %3288 = vmatmul.mubr.bf16.gmra.mxu0 %v3178
  %v3289 = vpop.f32.mrf.mxu0
  %v3290 = vadd.f32 0.0, %v3289
  %v3291 = vpop.f32.mrf.mxu0
  %v3292 = vpop.f32.mrf.mxu0
  %v3293 = vadd.f32 0.0, %v3292
  %v3294 = vpop.f32.mrf.mxu0
  %3295 = vmatprep.mubr.bf16.mxu0 0
  %3296 = vmatmul.mubr.bf16.gmra.mxu0 %v3181
  %v3297 = vpop.f32.mrf.mxu0
  %v3298 = vadd.f32 0.0, %v3297
  %v3299 = vpop.f32.mrf.mxu0
  %v3300 = vpop.f32.mrf.mxu0
  %v3301 = vadd.f32 0.0, %v3300
  %v3302 = vpop.f32.mrf.mxu0
  %3303 = vmatprep.mubr.bf16.mxu0 0
  %3304 = vmatmul.mubr.bf16.gmra.mxu0 %v3184
  %v3305 = vpop.f32.mrf.mxu0
  %v3306 = vadd.f32 0.0, %v3305
  %v3307 = vpop.f32.mrf.mxu0
  %v3308 = vpop.f32.mrf.mxu0
  %v3309 = vadd.f32 0.0, %v3308
  %v3310 = vpop.f32.mrf.mxu0
  %3311 = vmatprep.mubr.bf16.mxu0 0
  %3312 = vmatmul.mubr.bf16.gmra.mxu0 %v3187
  %v3313 = vpop.f32.mrf.mxu0
  %v3314 = vadd.f32 0.0, %v3313
  %v3315 = vpop.f32.mrf.mxu0
  %v3316 = vpop.f32.mrf.mxu0
  %v3317 = vadd.f32 0.0, %v3316
  %v3318 = vpop.f32.mrf.mxu0
  %3319 = vmatprep.mubr.bf16.mxu0 0
  %3320 = vmatmul.mubr.bf16.gmra.mxu0 %v3190
  %v3321 = vpop.f32.mrf.mxu0
  %v3322 = vadd.f32 0.0, %v3321
  %v3323 = vpop.f32.mrf.mxu0
  %v3324 = vpop.f32.mrf.mxu0
  %v3325 = vadd.f32 0.0, %v3324
  %v3326 = vpop.f32.mrf.mxu0
  %3327 = vmatprep.mubr.bf16.mxu0 0
  %3328 = vmatmul.mubr.bf16.gmra.mxu0 %v3193
  %v3329 = vpop.f32.mrf.mxu0
  %v3330 = vadd.f32 0.0, %v3329
  %v3331 = vpop.f32.mrf.mxu0
  %v3332 = vpop.f32.mrf.mxu0
  %v3333 = vadd.f32 0.0, %v3332
  %v3334 = vpop.f32.mrf.mxu0
  %3335 = vmatprep.mubr.bf16.mxu0 0
  %3336 = vmatmul.mubr.bf16.gmra.mxu0 %v3196
  %v3337 = vpop.f32.mrf.mxu0
  %v3338 = vadd.f32 0.0, %v3337
  %v3339 = vpop.f32.mrf.mxu0
  %v3340 = vpop.f32.mrf.mxu0
  %v3341 = vadd.f32 0.0, %v3340
  %v3342 = vpop.f32.mrf.mxu0
  %3343 = vmatprep.mubr.bf16.mxu0 0
  %3344 = vmatmul.mubr.bf16.gmra.mxu0 %v3199
  %v3345 = vpop.f32.mrf.mxu0
  %v3346 = vadd.f32 0.0, %v3345
  %v3347 = vpop.f32.mrf.mxu0
  %v3348 = vpop.f32.mrf.mxu0
  %v3349 = vadd.f32 0.0, %v3348
  %v3350 = vpop.f32.mrf.mxu0
  %3351 = vmatprep.mubr.bf16.mxu0 0
  %3352 = vmatmul.mubr.bf16.gmra.mxu0 %v3202
  %v3353 = vpop.f32.mrf.mxu0
  %v3354 = vadd.f32 0.0, %v3353
  %v3355 = vpop.f32.mrf.mxu0
  %v3356 = vpop.f32.mrf.mxu0
  %v3357 = vadd.f32 0.0, %v3356
  %v3358 = vpop.f32.mrf.mxu0
  %3359 = vmatprep.mubr.bf16.mxu0 0
  %3360 = vmatmul.mubr.bf16.gmra.mxu0 %v3205
  %v3361 = vpop.f32.mrf.mxu0
  %v3362 = vadd.f32 0.0, %v3361
  %v3363 = vpop.f32.mrf.mxu0
  %v3364 = vpop.f32.mrf.mxu0
  %v3365 = vadd.f32 0.0, %v3364
  %v3366 = vpop.f32.mrf.mxu0
  %3367 = vdwg.mxu0
  %v3368 = vld [vmem:[#allocation2] sm:$0xf]
  %v3369 = vld [vmem:[#allocation2 + $0x4] sm:$0xf]
  %v3370 = vld [vmem:[#allocation2 + $0x8] sm:$0xf]
  %v3371 = vld [vmem:[#allocation2 + $0xc] sm:$0xf]
  %v3372 = vld [vmem:[#allocation2 + $0x10] sm:$0xf]
  %v3373 = vld [vmem:[#allocation2 + $0x14] sm:$0xf]
  %v3374 = vld [vmem:[#allocation2 + $0x18] sm:$0xf]
  %v3375 = vld [vmem:[#allocation2 + $0x1c] sm:$0xf]
  %v3376 = vld [vmem:[#allocation2 + $0x20] sm:$0xf]
  %v3377 = vld [vmem:[#allocation2 + $0x24] sm:$0xf]
  %v3378 = vld [vmem:[#allocation2 + $0x28] sm:$0xf]
  %v3379 = vld [vmem:[#allocation2 + $0x2c] sm:$0xf]
  %v3380 = vld [vmem:[#allocation2 + $0x30] sm:$0xf]
  %v3381 = vld [vmem:[#allocation2 + $0x34] sm:$0xf]
  %v3382 = vld [vmem:[#allocation2 + $0x38] sm:$0xf]
  %v3383 = vld [vmem:[#allocation2 + $0x3c] sm:$0xf]
  %v3384 = vunpack.c.l.bf16 %v3368
  %v3385 = vunpack.c.l.bf16 %v3369
  %v3386 = vunpack.c.l.bf16 %v3370
  %v3387 = vunpack.c.l.bf16 %v3371
  %v3388 = vunpack.c.l.bf16 %v3372
  %v3389 = vunpack.c.l.bf16 %v3373
  %v3390 = vunpack.c.l.bf16 %v3374
  %v3391 = vunpack.c.l.bf16 %v3375
  %v3392 = vunpack.c.l.bf16 %v3376
  %v3393 = vunpack.c.l.bf16 %v3377
  %v3394 = vunpack.c.l.bf16 %v3378
  %v3395 = vunpack.c.l.bf16 %v3379
  %v3396 = vunpack.c.l.bf16 %v3380
  %v3397 = vunpack.c.l.bf16 %v3381
  %v3398 = vunpack.c.l.bf16 %v3382
  %v3399 = vunpack.c.l.bf16 %v3383
  %v3400 = vadd.f32 %v3242, %v3384
  %v3401 = vadd.f32 %v3245, %v3385
  %v3402 = vadd.f32 %v3250, %v3386
  %v3403 = vadd.f32 %v3253, %v3387
  %v3404 = vadd.f32 %v3258, %v3388
  %v3405 = vadd.f32 %v3261, %v3389
  %v3406 = vadd.f32 %v3266, %v3390
  %v3407 = vadd.f32 %v3269, %v3391
  %v3408 = vadd.f32 %v3274, %v3392
  %v3409 = vadd.f32 %v3277, %v3393
  %v3410 = vadd.f32 %v3282, %v3394
  %v3411 = vadd.f32 %v3285, %v3395
  %v3412 = vadd.f32 %v3290, %v3396
  %v3413 = vadd.f32 %v3293, %v3397
  %v3414 = vadd.f32 %v3298, %v3398
  %v3415 = vadd.f32 %v3301, %v3399
  %v3416 = vld [vmem:[%s3028] sm:$0xf]
  %v3417 = vld [vmem:[%s3028 + $0x4] sm:$0xf]
  %v3418 = vld [vmem:[%s3028 + $0x8] sm:$0xf]
  %v3419 = vld [vmem:[%s3028 + $0xc] sm:$0xf]
  %v3420 = vld [vmem:[%s3028 + $0x10] sm:$0xf]
  %v3421 = vld [vmem:[%s3028 + $0x14] sm:$0xf]
  %v3422 = vld [vmem:[%s3028 + $0x18] sm:$0xf]
  %v3423 = vld [vmem:[%s3028 + $0x1c] sm:$0xf]
  %v3424 = vld [vmem:[%s3028 + $0x20] sm:$0xf]
  %v3425 = vld [vmem:[%s3028 + $0x24] sm:$0xf]
  %v3426 = vld [vmem:[%s3028 + $0x28] sm:$0xf]
  %v3427 = vld [vmem:[%s3028 + $0x2c] sm:$0xf]
  %v3428 = vld [vmem:[%s3028 + $0x30] sm:$0xf]
  %v3429 = vld [vmem:[%s3028 + $0x34] sm:$0xf]
  %v3430 = vld [vmem:[%s3028 + $0x38] sm:$0xf]
  %v3431 = vld [vmem:[%s3028 + $0x3c] sm:$0xf]
  %v3432 = vunpack.c.l.bf16 %v3416
  %v3433 = vunpack.c.l.bf16 %v3417
  %v3434 = vunpack.c.l.bf16 %v3418
  %v3435 = vunpack.c.l.bf16 %v3419
  %v3436 = vunpack.c.l.bf16 %v3420
  %v3437 = vunpack.c.l.bf16 %v3421
  %v3438 = vunpack.c.l.bf16 %v3422
  %v3439 = vunpack.c.l.bf16 %v3423
  %v3440 = vunpack.c.l.bf16 %v3424
  %v3441 = vunpack.c.l.bf16 %v3425
  %v3442 = vunpack.c.l.bf16 %v3426
  %v3443 = vunpack.c.l.bf16 %v3427
  %v3444 = vunpack.c.l.bf16 %v3428
  %v3445 = vunpack.c.l.bf16 %v3429
  %v3446 = vunpack.c.l.bf16 %v3430
  %v3447 = vunpack.c.l.bf16 %v3431
  %v3448 = vadd.f32 %v3306, %v3432
  %v3449 = vadd.f32 %v3309, %v3433
  %v3450 = vadd.f32 %v3314, %v3434
  %v3451 = vadd.f32 %v3317, %v3435
  %v3452 = vadd.f32 %v3322, %v3436
  %v3453 = vadd.f32 %v3325, %v3437
  %v3454 = vadd.f32 %v3330, %v3438
  %v3455 = vadd.f32 %v3333, %v3439
  %v3456 = vadd.f32 %v3338, %v3440
  %v3457 = vadd.f32 %v3341, %v3441
  %v3458 = vadd.f32 %v3346, %v3442
  %v3459 = vadd.f32 %v3349, %v3443
  %v3460 = vadd.f32 %v3354, %v3444
  %v3461 = vadd.f32 %v3357, %v3445
  %v3462 = vadd.f32 %v3362, %v3446
  %v3463 = vadd.f32 %v3365, %v3447
  %vm3464 = vcmp.gt.s32.totalorder %v3077, 0
  %vm3465 = vcmp.gt.s32.totalorder %v3077, 7
  %v3466 = vxor.u32 %v3400, 2147483648
  %v3467 = vxor.u32 %v3401, 2147483648
  %v3468 = vxor.u32 %v3402, 2147483648
  %v3469 = vxor.u32 %v3403, 2147483648
  %v3470 = vmul.f32 %v3466, 1.442695
  %v3471 = vpow.pop %v3470
  %v3472 = vmul.f32 %v3467, 1.442695
  %v3473 = vpow.pop %v3472
  %v3474 = vmul.f32 %v3468, 1.442695
  %v3475 = vpow.pop %v3474
  %v3476 = vmul.f32 %v3469, 1.442695
  %v3477 = vpow.pop %v3476
  %v3478 = vadd.f32 %v3471, 1.0
  %v3479 = vadd.f32 %v3473, 1.0
  %v3480 = vadd.f32 %v3475, 1.0
  %v3481 = vadd.f32 %v3477, 1.0
  %v3482 = vrcp.pop %v3478
  %v3483 = vmul.f32 1.0, %v3482
  %v3484 = vrcp.pop %v3479
  %v3485 = vmul.f32 1.0, %v3484
  %v3486 = vrcp.pop %v3480
  %v3487 = vmul.f32 1.0, %v3486
  %v3488 = vrcp.pop %v3481
  %v3489 = vmul.f32 1.0, %v3488
  %v3490 = vxor.u32 %v3404, 2147483648
  %v3491 = vxor.u32 %v3405, 2147483648
  %v3492 = vxor.u32 %v3406, 2147483648
  %v3493 = vxor.u32 %v3407, 2147483648
  %v3494 = vmul.f32 %v3490, 1.442695
  %v3495 = vpow.pop %v3494
  %v3496 = vmul.f32 %v3491, 1.442695
  %v3497 = vpow.pop %v3496
  %v3498 = vmul.f32 %v3492, 1.442695
  %v3499 = vpow.pop %v3498
  %v3500 = vmul.f32 %v3493, 1.442695
  %v3501 = vpow.pop %v3500
  %v3502 = vadd.f32 %v3495, 1.0
  %v3503 = vadd.f32 %v3497, 1.0
  %v3504 = vadd.f32 %v3499, 1.0
  %v3505 = vadd.f32 %v3501, 1.0
  %v3506 = vrcp.pop %v3502
  %v3507 = vmul.f32 1.0, %v3506
  %v3508 = vrcp.pop %v3503
  %v3509 = vmul.f32 1.0, %v3508
  %v3510 = vrcp.pop %v3504
  %v3511 = vmul.f32 1.0, %v3510
  %v3512 = vrcp.pop %v3505
  %v3513 = vmul.f32 1.0, %v3512
  %v3514 = vtanh.pop %v3408
  %v3515 = vtanh.pop %v3409
  %v3516 = vtanh.pop %v3410
  %v3517 = vtanh.pop %v3411
  %v3518 = vxor.u32 %v3412, 2147483648
  %v3519 = vxor.u32 %v3413, 2147483648
  %v3520 = vxor.u32 %v3414, 2147483648
  %v3521 = vxor.u32 %v3415, 2147483648
  %v3522 = vmul.f32 %v3518, 1.442695
  %v3523 = vpow.pop %v3522
  %v3524 = vmul.f32 %v3519, 1.442695
  %v3525 = vpow.pop %v3524
  %v3526 = vmul.f32 %v3520, 1.442695
  %v3527 = vpow.pop %v3526
  %v3528 = vmul.f32 %v3521, 1.442695
  %v3529 = vpow.pop %v3528
  %v3530 = vadd.f32 %v3523, 1.0
  %v3531 = vadd.f32 %v3525, 1.0
  %v3532 = vadd.f32 %v3527, 1.0
  %v3533 = vadd.f32 %v3529, 1.0
  %v3534 = vrcp.pop %v3530
  %v3535 = vmul.f32 1.0, %v3534
  %v3536 = vrcp.pop %v3531
  %v3537 = vmul.f32 1.0, %v3536
  %v3538 = vrcp.pop %v3532
  %v3539 = vmul.f32 1.0, %v3538
  %v3540 = vrcp.pop %v3533
  %v3541 = vmul.f32 1.0, %v3540
  %v3542 = vmul.f32 %v3507, 0.0
  %v3543 = vmul.f32 %v3509, 0.0
  %v3544 = vmul.f32 %v3511, 0.0
  %v3545 = vmul.f32 %v3513, 0.0
  %v3546 = vmul.f32 %v3483, %v3514
  %v3547 = vmul.f32 %v3485, %v3515
  %v3548 = vmul.f32 %v3487, %v3516
  %v3549 = vmul.f32 %v3489, %v3517
  %v3550 = vadd.f32 %v3542, %v3546
  %v3551 = vadd.f32 %v3543, %v3547
  %v3552 = vadd.f32 %v3544, %v3548
  %v3553 = vadd.f32 %v3545, %v3549
  %v3554 = vtanh.pop %v3550
  %v3555 = vtanh.pop %v3551
  %v3556 = vtanh.pop %v3552
  %v3557 = vtanh.pop %v3553
  %v3558 = vmul.f32 %v3535, %v3554
  %v3559 = vmul.f32 %v3537, %v3555
  %v3560 = vmul.f32 %v3539, %v3556
  %v3561 = vmul.f32 %v3541, %v3557
  %v3562 = vsel %vm3464, 1, 0
  %v3563 = vlaneseq
  %v3564 = vshrl.u32 %v3563, 7
  %v3565 = vsub.s32 0, %v3564
  %v3566 = vrot.slane %v3562, %v3565
  %vm3567 = vcmp.eq.s32.totalorder %v3566, 1
  %v3568 = vsel %vm3567, %v3558, 0.0
  %v3569 = vsel %vm3567, %v3559, 0.0
  %v3570 = vsel %vm3567, %v3560, 0.0
  %v3571 = vsel %vm3567, %v3561, 0.0
  %v3572 = vsel %vm3567, %v3550, 0.0
  %v3573 = vsel %vm3567, %v3551, 0.0
  %v3574 = vsel %vm3567, %v3552, 0.0
  %v3575 = vsel %vm3567, %v3553, 0.0
  %v3576 = vxor.u32 %v3448, 2147483648
  %v3577 = vxor.u32 %v3449, 2147483648
  %v3578 = vxor.u32 %v3450, 2147483648
  %v3579 = vxor.u32 %v3451, 2147483648
  %v3580 = vmul.f32 %v3576, 1.442695
  %v3581 = vpow.pop %v3580
  %v3582 = vmul.f32 %v3577, 1.442695
  %v3583 = vpow.pop %v3582
  %v3584 = vmul.f32 %v3578, 1.442695
  %v3585 = vpow.pop %v3584
  %v3586 = vmul.f32 %v3579, 1.442695
  %v3587 = vpow.pop %v3586
  %v3588 = vadd.f32 %v3581, 1.0
  %v3589 = vadd.f32 %v3583, 1.0
  %v3590 = vadd.f32 %v3585, 1.0
  %v3591 = vadd.f32 %v3587, 1.0
  %v3592 = vrcp.pop %v3588
  %v3593 = vmul.f32 1.0, %v3592
  %v3594 = vrcp.pop %v3589
  %v3595 = vmul.f32 1.0, %v3594
  %v3596 = vrcp.pop %v3590
  %v3597 = vmul.f32 1.0, %v3596
  %v3598 = vrcp.pop %v3591
  %v3599 = vmul.f32 1.0, %v3598
  %v3600 = vxor.u32 %v3452, 2147483648
  %v3601 = vxor.u32 %v3453, 2147483648
  %v3602 = vxor.u32 %v3454, 2147483648
  %v3603 = vxor.u32 %v3455, 2147483648
  %v3604 = vmul.f32 %v3600, 1.442695
  %v3605 = vpow.pop %v3604
  %v3606 = vmul.f32 %v3601, 1.442695
  %v3607 = vpow.pop %v3606
  %v3608 = vmul.f32 %v3602, 1.442695
  %v3609 = vpow.pop %v3608
  %v3610 = vmul.f32 %v3603, 1.442695
  %v3611 = vpow.pop %v3610
  %v3612 = vadd.f32 %v3605, 1.0
  %v3613 = vadd.f32 %v3607, 1.0
  %v3614 = vadd.f32 %v3609, 1.0
  %v3615 = vadd.f32 %v3611, 1.0
  %v3616 = vrcp.pop %v3612
  %v3617 = vmul.f32 1.0, %v3616
  %v3618 = vrcp.pop %v3613
  %v3619 = vmul.f32 1.0, %v3618
  %v3620 = vrcp.pop %v3614
  %v3621 = vmul.f32 1.0, %v3620
  %v3622 = vrcp.pop %v3615
  %v3623 = vmul.f32 1.0, %v3622
  %v3624 = vtanh.pop %v3456
  %v3625 = vtanh.pop %v3457
  %v3626 = vtanh.pop %v3458
  %v3627 = vtanh.pop %v3459
  %v3628 = vxor.u32 %v3460, 2147483648
  %v3629 = vxor.u32 %v3461, 2147483648
  %v3630 = vxor.u32 %v3462, 2147483648
  %v3631 = vxor.u32 %v3463, 2147483648
  %v3632 = vmul.f32 %v3628, 1.442695
  %v3633 = vpow.pop %v3632
  %v3634 = vmul.f32 %v3629, 1.442695
  %v3635 = vpow.pop %v3634
  %v3636 = vmul.f32 %v3630, 1.442695
  %v3637 = vpow.pop %v3636
  %v3638 = vmul.f32 %v3631, 1.442695
  %v3639 = vpow.pop %v3638
  %v3640 = vadd.f32 %v3633, 1.0
  %v3641 = vadd.f32 %v3635, 1.0
  %v3642 = vadd.f32 %v3637, 1.0
  %v3643 = vadd.f32 %v3639, 1.0
  %v3644 = vrcp.pop %v3640
  %v3645 = vmul.f32 1.0, %v3644
  %v3646 = vrcp.pop %v3641
  %v3647 = vmul.f32 1.0, %v3646
  %v3648 = vrcp.pop %v3642
  %v3649 = vmul.f32 1.0, %v3648
  %v3650 = vrcp.pop %v3643
  %v3651 = vmul.f32 1.0, %v3650
  %v3652 = vmul.f32 %v3617, 0.0
  %v3653 = vmul.f32 %v3619, 0.0
  %v3654 = vmul.f32 %v3621, 0.0
  %v3655 = vmul.f32 %v3623, 0.0
  %v3656 = vmul.f32 %v3593, %v3624
  %v3657 = vmul.f32 %v3595, %v3625
  %v3658 = vmul.f32 %v3597, %v3626
  %v3659 = vmul.f32 %v3599, %v3627
  %v3660 = vadd.f32 %v3652, %v3656
  %v3661 = vadd.f32 %v3653, %v3657
  %v3662 = vadd.f32 %v3654, %v3658
  %v3663 = vadd.f32 %v3655, %v3659
  %v3664 = vtanh.pop %v3660
  %v3665 = vtanh.pop %v3661
  %v3666 = vtanh.pop %v3662
  %v3667 = vtanh.pop %v3663
  %v3668 = vmul.f32 %v3645, %v3664
  %v3669 = vmul.f32 %v3647, %v3665
  %v3670 = vmul.f32 %v3649, %v3666
  %v3671 = vmul.f32 %v3651, %v3667
  %v3672 = vsel %vm3465, 1, 0
  %v3673 = vlaneseq
  %v3674 = vshrl.u32 %v3673, 7
  %v3675 = vsub.s32 0, %v3674
  %v3676 = vrot.slane %v3672, %v3675
  %vm3677 = vcmp.eq.s32.totalorder %v3676, 1
  %v3678 = vsel %vm3677, %v3668, 0.0
  %v3679 = vsel %vm3677, %v3669, 0.0
  %v3680 = vsel %vm3677, %v3670, 0.0
  %v3681 = vsel %vm3677, %v3671, 0.0
  %v3682 = vsel %vm3677, %v3660, 0.0
  %v3683 = vsel %vm3677, %v3661, 0.0
  %v3684 = vsel %vm3677, %v3662, 0.0
  %v3685 = vsel %vm3677, %v3663, 0.0
  %v3686 = vpack.c.bf16 %v3569, %v3568
  %v3687 = vpack.c.bf16 %v3571, %v3570
  %v3690 = vunpack.c.l.b16 %v3686
  %v3691 = vunpack.c.h.b16 %v3686
  %v3692 = vunpack.c.l.b16 %v3687
  %v3693 = vunpack.c.h.b16 %v3687
  %v3694 = vpack.c.b16 %v3690, %v3690
  %v3695 = vpack.c.b16 %v3691, %v3691
  %v3696 = vpack.c.b16 %v3692, %v3692
  %v3697 = vpack.c.b16 %v3693, %v3693
  %3702 = vst.msk [vmem:[#allocation4] sm:$0xf] %vm632, %v3694
  %3703 = vst.msk [vmem:[#allocation4 + $0x4] sm:$0xf] %vm632, %v3695
  %3704 = vst.msk [vmem:[#allocation4 + $0x8] sm:$0xf] %vm632, %v3696
  %3705 = vst.msk [vmem:[#allocation4 + $0xc] sm:$0xf] %vm632, %v3697
  %v3706 = vpack.c.bf16 %v3679, %v3678
  %v3707 = vpack.c.bf16 %v3681, %v3680
  %v3710 = vunpack.c.l.b16 %v3706
  %v3711 = vunpack.c.h.b16 %v3706
  %v3712 = vunpack.c.l.b16 %v3707
  %v3713 = vunpack.c.h.b16 %v3707
  %v3714 = vpack.c.b16 %v3710, %v3710
  %v3715 = vpack.c.b16 %v3711, %v3711
  %v3716 = vpack.c.b16 %v3712, %v3712
  %v3717 = vpack.c.b16 %v3713, %v3713
  %s3722 = scalar_lea.vmem [#allocation5], 112
  %3723 = vst.msk [vmem:[%s3722] sm:$0xf] %vm632, %v3714
  %3724 = vst.msk [vmem:[%s3722 + $0x4] sm:$0xf] %vm632, %v3715
  %3725 = vst.msk [vmem:[%s3722 + $0x8] sm:$0xf] %vm632, %v3716
  %3726 = vst.msk [vmem:[%s3722 + $0xc] sm:$0xf] %vm632, %v3717
  %3727 = vmatprep.subr.bf16.mxu0 0
  %3728 = vmatpush1.bf16.msra.mxu0 0
  %3729 = vmatprep.subr.bf16.mxu0 0
  %3730 = vmatpush1.bf16.msra.mxu0 0
  %3731 = vmatprep.subr.bf16.mxu0 0
  %3732 = vmatpush1.bf16.msra.mxu0 0
  %3733 = vmatprep.subr.bf16.mxu0 0
  %3734 = vmatpush1.bf16.msra.mxu0 0
  %3735 = vmatprep.subr.bf16.mxu0 0
  %3736 = vmatpush1.bf16.msra.mxu0 %v3707
  %3737 = vmatprep.subr.bf16.mxu0 0
  %3738 = vmatpush1.bf16.msra.mxu0 %v3706
  %3739 = vmatprep.subr.bf16.mxu0 0
  %3740 = vmatpush1.bf16.msra.mxu0 %v3687
  %3741 = vmatprep.subr.bf16.mxu0 0
  %3742 = vmatpush1.bf16.msra.mxu0 %v3686
  %3743 = vmatprep.subr.bf16.mxu0 0
  %3744 = vmatpush2.bf16.msra.mxu0 0
  %3745 = vmatprep.subr.bf16.mxu0 0
  %3746 = vmatpush2.bf16.msra.mxu0 0
  %3747 = vmatprep.subr.bf16.mxu0 0
  %3748 = vmatpush2.bf16.msra.mxu0 0
  %3749 = vmatprep.subr.bf16.mxu0 0
  %3750 = vmatpush2.bf16.msra.mxu0 0
  %3751 = vmatprep.subr.bf16.mxu0 0
  %3752 = vmatpush2.bf16.msra.mxu0 0
  %3753 = vmatprep.subr.bf16.mxu0 0
  %3754 = vmatpush2.bf16.msra.mxu0 0
  %3755 = vmatprep.subr.bf16.mxu0 0
  %3756 = vmatpush2.bf16.msra.mxu0 0
  %3757 = vmatprep.subr.bf16.mxu0 0
  %3758 = vmatpush2.bf16.msra.mxu0 0
  %3759 = vmatprep.mubr.bf16.mxu0 0
  %3760 = vmatmul.mubr.bf16.gmra.mxu0 %v3160
  %v3761 = vpop.f32.mrf.mxu0
  %v3762 = vadd.f32 0.0, %v3761
  %v3763 = vpop.f32.mrf.mxu0
  %v3764 = vpop.f32.mrf.mxu0
  %v3765 = vadd.f32 0.0, %v3764
  %v3766 = vpop.f32.mrf.mxu0
  %3767 = vmatprep.mubr.bf16.mxu0 0
  %3768 = vmatmul.mubr.bf16.gmra.mxu0 %v3163
  %v3769 = vpop.f32.mrf.mxu0
  %v3770 = vadd.f32 0.0, %v3769
  %v3771 = vpop.f32.mrf.mxu0
  %v3772 = vpop.f32.mrf.mxu0
  %v3773 = vadd.f32 0.0, %v3772
  %v3774 = vpop.f32.mrf.mxu0
  %3775 = vmatprep.mubr.bf16.mxu0 0
  %3776 = vmatmul.mubr.bf16.gmra.mxu0 %v3166
  %v3777 = vpop.f32.mrf.mxu0
  %v3778 = vadd.f32 0.0, %v3777
  %v3779 = vpop.f32.mrf.mxu0
  %v3780 = vpop.f32.mrf.mxu0
  %v3781 = vadd.f32 0.0, %v3780
  %v3782 = vpop.f32.mrf.mxu0
  %3783 = vmatprep.mubr.bf16.mxu0 0
  %3784 = vmatmul.mubr.bf16.gmra.mxu0 %v3169
  %v3785 = vpop.f32.mrf.mxu0
  %v3786 = vadd.f32 0.0, %v3785
  %v3787 = vpop.f32.mrf.mxu0
  %v3788 = vpop.f32.mrf.mxu0
  %v3789 = vadd.f32 0.0, %v3788
  %v3790 = vpop.f32.mrf.mxu0
  %3791 = vmatprep.mubr.bf16.mxu0 0
  %3792 = vmatmul.mubr.bf16.gmra.mxu0 %v3172
  %v3793 = vpop.f32.mrf.mxu0
  %v3794 = vadd.f32 0.0, %v3793
  %v3795 = vpop.f32.mrf.mxu0
  %v3796 = vpop.f32.mrf.mxu0
  %v3797 = vadd.f32 0.0, %v3796
  %v3798 = vpop.f32.mrf.mxu0
  %3799 = vmatprep.mubr.bf16.mxu0 0
  %3800 = vmatmul.mubr.bf16.gmra.mxu0 %v3175
  %v3801 = vpop.f32.mrf.mxu0
  %v3802 = vadd.f32 0.0, %v3801
  %v3803 = vpop.f32.mrf.mxu0
  %v3804 = vpop.f32.mrf.mxu0
  %v3805 = vadd.f32 0.0, %v3804
  %v3806 = vpop.f32.mrf.mxu0
  %3807 = vmatprep.mubr.bf16.mxu0 0
  %3808 = vmatmul.mubr.bf16.gmra.mxu0 %v3178
  %v3809 = vpop.f32.mrf.mxu0
  %v3810 = vadd.f32 0.0, %v3809
  %v3811 = vpop.f32.mrf.mxu0
  %v3812 = vpop.f32.mrf.mxu0
  %v3813 = vadd.f32 0.0, %v3812
  %v3814 = vpop.f32.mrf.mxu0
  %3815 = vmatprep.mubr.bf16.mxu0 0
  %3816 = vmatmul.mubr.bf16.gmra.mxu0 %v3181
  %v3817 = vpop.f32.mrf.mxu0
  %v3818 = vadd.f32 0.0, %v3817
  %v3819 = vpop.f32.mrf.mxu0
  %v3820 = vpop.f32.mrf.mxu0
  %v3821 = vadd.f32 0.0, %v3820
  %v3822 = vpop.f32.mrf.mxu0
  %3823 = vmatprep.mubr.bf16.mxu0 0
  %3824 = vmatmul.mubr.bf16.gmra.mxu0 %v3184
  %v3825 = vpop.f32.mrf.mxu0
  %v3826 = vadd.f32 0.0, %v3825
  %v3827 = vpop.f32.mrf.mxu0
  %v3828 = vpop.f32.mrf.mxu0
  %v3829 = vadd.f32 0.0, %v3828
  %v3830 = vpop.f32.mrf.mxu0
  %3831 = vmatprep.mubr.bf16.mxu0 0
  %3832 = vmatmul.mubr.bf16.gmra.mxu0 %v3187
  %v3833 = vpop.f32.mrf.mxu0
  %v3834 = vadd.f32 0.0, %v3833
  %v3835 = vpop.f32.mrf.mxu0
  %v3836 = vpop.f32.mrf.mxu0
  %v3837 = vadd.f32 0.0, %v3836
  %v3838 = vpop.f32.mrf.mxu0
  %3839 = vmatprep.mubr.bf16.mxu0 0
  %3840 = vmatmul.mubr.bf16.gmra.mxu0 %v3190
  %v3841 = vpop.f32.mrf.mxu0
  %v3842 = vadd.f32 0.0, %v3841
  %v3843 = vpop.f32.mrf.mxu0
  %v3844 = vpop.f32.mrf.mxu0
  %v3845 = vadd.f32 0.0, %v3844
  %v3846 = vpop.f32.mrf.mxu0
  %3847 = vmatprep.mubr.bf16.mxu0 0
  %3848 = vmatmul.mubr.bf16.gmra.mxu0 %v3193
  %v3849 = vpop.f32.mrf.mxu0
  %v3850 = vadd.f32 0.0, %v3849
  %v3851 = vpop.f32.mrf.mxu0
  %v3852 = vpop.f32.mrf.mxu0
  %v3853 = vadd.f32 0.0, %v3852
  %v3854 = vpop.f32.mrf.mxu0
  %3855 = vmatprep.mubr.bf16.mxu0 0
  %3856 = vmatmul.mubr.bf16.gmra.mxu0 %v3196
  %v3857 = vpop.f32.mrf.mxu0
  %v3858 = vadd.f32 0.0, %v3857
  %v3859 = vpop.f32.mrf.mxu0
  %v3860 = vpop.f32.mrf.mxu0
  %v3861 = vadd.f32 0.0, %v3860
  %v3862 = vpop.f32.mrf.mxu0
  %3863 = vmatprep.mubr.bf16.mxu0 0
  %3864 = vmatmul.mubr.bf16.gmra.mxu0 %v3199
  %v3865 = vpop.f32.mrf.mxu0
  %v3866 = vadd.f32 0.0, %v3865
  %v3867 = vpop.f32.mrf.mxu0
  %v3868 = vpop.f32.mrf.mxu0
  %v3869 = vadd.f32 0.0, %v3868
  %v3870 = vpop.f32.mrf.mxu0
  %3871 = vmatprep.mubr.bf16.mxu0 0
  %3872 = vmatmul.mubr.bf16.gmra.mxu0 %v3202
  %v3873 = vpop.f32.mrf.mxu0
  %v3874 = vadd.f32 0.0, %v3873
  %v3875 = vpop.f32.mrf.mxu0
  %v3876 = vpop.f32.mrf.mxu0
  %v3877 = vadd.f32 0.0, %v3876
  %v3878 = vpop.f32.mrf.mxu0
  %3879 = vmatprep.mubr.bf16.mxu0 0
  %3880 = vmatmul.mubr.bf16.gmra.mxu0 %v3205
  %v3881 = vpop.f32.mrf.mxu0
  %v3882 = vadd.f32 0.0, %v3881
  %v3883 = vpop.f32.mrf.mxu0
  %v3884 = vpop.f32.mrf.mxu0
  %v3885 = vadd.f32 0.0, %v3884
  %v3886 = vpop.f32.mrf.mxu0
  %3887 = vdwg.mxu0
  %v3888 = vld [vmem:[%s963] sm:$0xf]
  %v3889 = vld [vmem:[%s963 + $0x4] sm:$0xf]
  %v3890 = vld [vmem:[%s963 + $0x8] sm:$0xf]
  %v3891 = vld [vmem:[%s963 + $0xc] sm:$0xf]
  %v3892 = vld [vmem:[%s963 + $0x10] sm:$0xf]
  %v3893 = vld [vmem:[%s963 + $0x14] sm:$0xf]
  %v3894 = vld [vmem:[%s963 + $0x18] sm:$0xf]
  %v3895 = vld [vmem:[%s963 + $0x1c] sm:$0xf]
  %v3896 = vld [vmem:[%s963 + $0x20] sm:$0xf]
  %v3897 = vld [vmem:[%s963 + $0x24] sm:$0xf]
  %v3898 = vld [vmem:[%s963 + $0x28] sm:$0xf]
  %v3899 = vld [vmem:[%s963 + $0x2c] sm:$0xf]
  %v3900 = vld [vmem:[%s963 + $0x30] sm:$0xf]
  %v3901 = vld [vmem:[%s963 + $0x34] sm:$0xf]
  %v3902 = vld [vmem:[%s963 + $0x38] sm:$0xf]
  %v3903 = vld [vmem:[%s963 + $0x3c] sm:$0xf]
  %v3904 = vunpack.c.l.bf16 %v3888
  %v3905 = vunpack.c.l.bf16 %v3889
  %v3906 = vunpack.c.l.bf16 %v3890
  %v3907 = vunpack.c.l.bf16 %v3891
  %v3908 = vunpack.c.l.bf16 %v3892
  %v3909 = vunpack.c.l.bf16 %v3893
  %v3910 = vunpack.c.l.bf16 %v3894
  %v3911 = vunpack.c.l.bf16 %v3895
  %v3912 = vunpack.c.l.bf16 %v3896
  %v3913 = vunpack.c.l.bf16 %v3897
  %v3914 = vunpack.c.l.bf16 %v3898
  %v3915 = vunpack.c.l.bf16 %v3899
  %v3916 = vunpack.c.l.bf16 %v3900
  %v3917 = vunpack.c.l.bf16 %v3901
  %v3918 = vunpack.c.l.bf16 %v3902
  %v3919 = vunpack.c.l.bf16 %v3903
  %v3920 = vadd.f32 %v3762, %v3904
  %v3921 = vadd.f32 %v3765, %v3905
  %v3922 = vadd.f32 %v3770, %v3906
  %v3923 = vadd.f32 %v3773, %v3907
  %v3924 = vadd.f32 %v3778, %v3908
  %v3925 = vadd.f32 %v3781, %v3909
  %v3926 = vadd.f32 %v3786, %v3910
  %v3927 = vadd.f32 %v3789, %v3911
  %v3928 = vadd.f32 %v3794, %v3912
  %v3929 = vadd.f32 %v3797, %v3913
  %v3930 = vadd.f32 %v3802, %v3914
  %v3931 = vadd.f32 %v3805, %v3915
  %v3932 = vadd.f32 %v3810, %v3916
  %v3933 = vadd.f32 %v3813, %v3917
  %v3934 = vadd.f32 %v3818, %v3918
  %v3935 = vadd.f32 %v3821, %v3919
  %v3936 = vld [vmem:[%s2696] sm:$0xf]
  %v3937 = vld [vmem:[%s2696 + $0x4] sm:$0xf]
  %v3938 = vld [vmem:[%s2696 + $0x8] sm:$0xf]
  %v3939 = vld [vmem:[%s2696 + $0xc] sm:$0xf]
  %v3940 = vld [vmem:[%s2696 + $0x10] sm:$0xf]
  %v3941 = vld [vmem:[%s2696 + $0x14] sm:$0xf]
  %v3942 = vld [vmem:[%s2696 + $0x18] sm:$0xf]
  %v3943 = vld [vmem:[%s2696 + $0x1c] sm:$0xf]
  %v3944 = vld [vmem:[%s2696 + $0x20] sm:$0xf]
  %v3945 = vld [vmem:[%s2696 + $0x24] sm:$0xf]
  %v3946 = vld [vmem:[%s2696 + $0x28] sm:$0xf]
  %v3947 = vld [vmem:[%s2696 + $0x2c] sm:$0xf]
  %v3948 = vld [vmem:[%s2696 + $0x30] sm:$0xf]
  %v3949 = vld [vmem:[%s2696 + $0x34] sm:$0xf]
  %v3950 = vld [vmem:[%s2696 + $0x38] sm:$0xf]
  %v3951 = vld [vmem:[%s2696 + $0x3c] sm:$0xf]
  %v3952 = vunpack.c.l.bf16 %v3936
  %v3953 = vunpack.c.l.bf16 %v3937
  %v3954 = vunpack.c.l.bf16 %v3938
  %v3955 = vunpack.c.l.bf16 %v3939
  %v3956 = vunpack.c.l.bf16 %v3940
  %v3957 = vunpack.c.l.bf16 %v3941
  %v3958 = vunpack.c.l.bf16 %v3942
  %v3959 = vunpack.c.l.bf16 %v3943
  %v3960 = vunpack.c.l.bf16 %v3944
  %v3961 = vunpack.c.l.bf16 %v3945
  %v3962 = vunpack.c.l.bf16 %v3946
  %v3963 = vunpack.c.l.bf16 %v3947
  %v3964 = vunpack.c.l.bf16 %v3948
  %v3965 = vunpack.c.l.bf16 %v3949
  %v3966 = vunpack.c.l.bf16 %v3950
  %v3967 = vunpack.c.l.bf16 %v3951
  %v3968 = vadd.f32 %v3826, %v3952
  %v3969 = vadd.f32 %v3829, %v3953
  %v3970 = vadd.f32 %v3834, %v3954
  %v3971 = vadd.f32 %v3837, %v3955
  %v3972 = vadd.f32 %v3842, %v3956
  %v3973 = vadd.f32 %v3845, %v3957
  %v3974 = vadd.f32 %v3850, %v3958
  %v3975 = vadd.f32 %v3853, %v3959
  %v3976 = vadd.f32 %v3858, %v3960
  %v3977 = vadd.f32 %v3861, %v3961
  %v3978 = vadd.f32 %v3866, %v3962
  %v3979 = vadd.f32 %v3869, %v3963
  %v3980 = vadd.f32 %v3874, %v3964
  %v3981 = vadd.f32 %v3877, %v3965
  %v3982 = vadd.f32 %v3882, %v3966
  %v3983 = vadd.f32 %v3885, %v3967
  %vm3984 = vcmp.gt.s32.totalorder %v3077, 1
  %vm3985 = vcmp.gt.s32.totalorder %v3077, 6
  %v3986 = vxor.u32 %v3920, 2147483648
  %v3987 = vxor.u32 %v3921, 2147483648
  %v3988 = vxor.u32 %v3922, 2147483648
  %v3989 = vxor.u32 %v3923, 2147483648
  %v3990 = vmul.f32 %v3986, 1.442695
  %v3991 = vpow.pop %v3990
  %v3992 = vmul.f32 %v3987, 1.442695
  %v3993 = vpow.pop %v3992
  %v3994 = vmul.f32 %v3988, 1.442695
  %v3995 = vpow.pop %v3994
  %v3996 = vmul.f32 %v3989, 1.442695
  %v3997 = vpow.pop %v3996
  %v3998 = vadd.f32 %v3991, 1.0
  %v3999 = vadd.f32 %v3993, 1.0
  %v4000 = vadd.f32 %v3995, 1.0
  %v4001 = vadd.f32 %v3997, 1.0
  %v4002 = vrcp.pop %v3998
  %v4003 = vmul.f32 1.0, %v4002
  %v4004 = vrcp.pop %v3999
  %v4005 = vmul.f32 1.0, %v4004
  %v4006 = vrcp.pop %v4000
  %v4007 = vmul.f32 1.0, %v4006
  %v4008 = vrcp.pop %v4001
  %v4009 = vmul.f32 1.0, %v4008
  %v4010 = vxor.u32 %v3924, 2147483648
  %v4011 = vxor.u32 %v3925, 2147483648
  %v4012 = vxor.u32 %v3926, 2147483648
  %v4013 = vxor.u32 %v3927, 2147483648
  %v4014 = vmul.f32 %v4010, 1.442695
  %v4015 = vpow.pop %v4014
  %v4016 = vmul.f32 %v4011, 1.442695
  %v4017 = vpow.pop %v4016
  %v4018 = vmul.f32 %v4012, 1.442695
  %v4019 = vpow.pop %v4018
  %v4020 = vmul.f32 %v4013, 1.442695
  %v4021 = vpow.pop %v4020
  %v4022 = vadd.f32 %v4015, 1.0
  %v4023 = vadd.f32 %v4017, 1.0
  %v4024 = vadd.f32 %v4019, 1.0
  %v4025 = vadd.f32 %v4021, 1.0
  %v4026 = vrcp.pop %v4022
  %v4027 = vmul.f32 1.0, %v4026
  %v4028 = vrcp.pop %v4023
  %v4029 = vmul.f32 1.0, %v4028
  %v4030 = vrcp.pop %v4024
  %v4031 = vmul.f32 1.0, %v4030
  %v4032 = vrcp.pop %v4025
  %v4033 = vmul.f32 1.0, %v4032
  %v4034 = vtanh.pop %v3928
  %v4035 = vtanh.pop %v3929
  %v4036 = vtanh.pop %v3930
  %v4037 = vtanh.pop %v3931
  %v4038 = vxor.u32 %v3932, 2147483648
  %v4039 = vxor.u32 %v3933, 2147483648
  %v4040 = vxor.u32 %v3934, 2147483648
  %v4041 = vxor.u32 %v3935, 2147483648
  %v4042 = vmul.f32 %v4038, 1.442695
  %v4043 = vpow.pop %v4042
  %v4044 = vmul.f32 %v4039, 1.442695
  %v4045 = vpow.pop %v4044
  %v4046 = vmul.f32 %v4040, 1.442695
  %v4047 = vpow.pop %v4046
  %v4048 = vmul.f32 %v4041, 1.442695
  %v4049 = vpow.pop %v4048
  %v4050 = vadd.f32 %v4043, 1.0
  %v4051 = vadd.f32 %v4045, 1.0
  %v4052 = vadd.f32 %v4047, 1.0
  %v4053 = vadd.f32 %v4049, 1.0
  %v4054 = vrcp.pop %v4050
  %v4055 = vmul.f32 1.0, %v4054
  %v4056 = vrcp.pop %v4051
  %v4057 = vmul.f32 1.0, %v4056
  %v4058 = vrcp.pop %v4052
  %v4059 = vmul.f32 1.0, %v4058
  %v4060 = vrcp.pop %v4053
  %v4061 = vmul.f32 1.0, %v4060
  %v4062 = vmul.f32 %v4027, %v3572
  %v4063 = vmul.f32 %v4029, %v3573
  %v4064 = vmul.f32 %v4031, %v3574
  %v4065 = vmul.f32 %v4033, %v3575
  %v4066 = vmul.f32 %v4003, %v4034
  %v4067 = vmul.f32 %v4005, %v4035
  %v4068 = vmul.f32 %v4007, %v4036
  %v4069 = vmul.f32 %v4009, %v4037
  %v4070 = vadd.f32 %v4062, %v4066
  %v4071 = vadd.f32 %v4063, %v4067
  %v4072 = vadd.f32 %v4064, %v4068
  %v4073 = vadd.f32 %v4065, %v4069
  %v4074 = vtanh.pop %v4070
  %v4075 = vtanh.pop %v4071
  %v4076 = vtanh.pop %v4072
  %v4077 = vtanh.pop %v4073
  %v4078 = vmul.f32 %v4055, %v4074
  %v4079 = vmul.f32 %v4057, %v4075
  %v4080 = vmul.f32 %v4059, %v4076
  %v4081 = vmul.f32 %v4061, %v4077
  %v4082 = vsel %vm3984, 1, 0
  %v4083 = vlaneseq
  %v4084 = vshrl.u32 %v4083, 7
  %v4085 = vsub.s32 0, %v4084
  %v4086 = vrot.slane %v4082, %v4085
  %vm4087 = vcmp.eq.s32.totalorder %v4086, 1
  %v4088 = vsel %vm4087, %v4078, %v3568
  %v4089 = vsel %vm4087, %v4079, %v3569
  %v4090 = vsel %vm4087, %v4080, %v3570
  %v4091 = vsel %vm4087, %v4081, %v3571
  %v4092 = vsel %vm4087, %v4070, %v3572
  %v4093 = vsel %vm4087, %v4071, %v3573
  %v4094 = vsel %vm4087, %v4072, %v3574
  %v4095 = vsel %vm4087, %v4073, %v3575
  %v4096 = vxor.u32 %v3968, 2147483648
  %v4097 = vxor.u32 %v3969, 2147483648
  %v4098 = vxor.u32 %v3970, 2147483648
  %v4099 = vxor.u32 %v3971, 2147483648
  %v4100 = vmul.f32 %v4096, 1.442695
  %v4101 = vpow.pop %v4100
  %v4102 = vmul.f32 %v4097, 1.442695
  %v4103 = vpow.pop %v4102
  %v4104 = vmul.f32 %v4098, 1.442695
  %v4105 = vpow.pop %v4104
  %v4106 = vmul.f32 %v4099, 1.442695
  %v4107 = vpow.pop %v4106
  %v4108 = vadd.f32 %v4101, 1.0
  %v4109 = vadd.f32 %v4103, 1.0
  %v4110 = vadd.f32 %v4105, 1.0
  %v4111 = vadd.f32 %v4107, 1.0
  %v4112 = vrcp.pop %v4108
  %v4113 = vmul.f32 1.0, %v4112
  %v4114 = vrcp.pop %v4109
  %v4115 = vmul.f32 1.0, %v4114
  %v4116 = vrcp.pop %v4110
  %v4117 = vmul.f32 1.0, %v4116
  %v4118 = vrcp.pop %v4111
  %v4119 = vmul.f32 1.0, %v4118
  %v4120 = vxor.u32 %v3972, 2147483648
  %v4121 = vxor.u32 %v3973, 2147483648
  %v4122 = vxor.u32 %v3974, 2147483648
  %v4123 = vxor.u32 %v3975, 2147483648
  %v4124 = vmul.f32 %v4120, 1.442695
  %v4125 = vpow.pop %v4124
  %v4126 = vmul.f32 %v4121, 1.442695
  %v4127 = vpow.pop %v4126
  %v4128 = vmul.f32 %v4122, 1.442695
  %v4129 = vpow.pop %v4128
  %v4130 = vmul.f32 %v4123, 1.442695
  %v4131 = vpow.pop %v4130
  %v4132 = vadd.f32 %v4125, 1.0
  %v4133 = vadd.f32 %v4127, 1.0
  %v4134 = vadd.f32 %v4129, 1.0
  %v4135 = vadd.f32 %v4131, 1.0
  %v4136 = vrcp.pop %v4132
  %v4137 = vmul.f32 1.0, %v4136
  %v4138 = vrcp.pop %v4133
  %v4139 = vmul.f32 1.0, %v4138
  %v4140 = vrcp.pop %v4134
  %v4141 = vmul.f32 1.0, %v4140
  %v4142 = vrcp.pop %v4135
  %v4143 = vmul.f32 1.0, %v4142
  %v4144 = vtanh.pop %v3976
  %v4145 = vtanh.pop %v3977
  %v4146 = vtanh.pop %v3978
  %v4147 = vtanh.pop %v3979
  %v4148 = vxor.u32 %v3980, 2147483648
  %v4149 = vxor.u32 %v3981, 2147483648
  %v4150 = vxor.u32 %v3982, 2147483648
  %v4151 = vxor.u32 %v3983, 2147483648
  %v4152 = vmul.f32 %v4148, 1.442695
  %v4153 = vpow.pop %v4152
  %v4154 = vmul.f32 %v4149, 1.442695
  %v4155 = vpow.pop %v4154
  %v4156 = vmul.f32 %v4150, 1.442695
  %v4157 = vpow.pop %v4156
  %v4158 = vmul.f32 %v4151, 1.442695
  %v4159 = vpow.pop %v4158
  %v4160 = vadd.f32 %v4153, 1.0
  %v4161 = vadd.f32 %v4155, 1.0
  %v4162 = vadd.f32 %v4157, 1.0
  %v4163 = vadd.f32 %v4159, 1.0
  %v4164 = vrcp.pop %v4160
  %v4165 = vmul.f32 1.0, %v4164
  %v4166 = vrcp.pop %v4161
  %v4167 = vmul.f32 1.0, %v4166
  %v4168 = vrcp.pop %v4162
  %v4169 = vmul.f32 1.0, %v4168
  %v4170 = vrcp.pop %v4163
  %v4171 = vmul.f32 1.0, %v4170
  %v4172 = vmul.f32 %v4137, %v3682
  %v4173 = vmul.f32 %v4139, %v3683
  %v4174 = vmul.f32 %v4141, %v3684
  %v4175 = vmul.f32 %v4143, %v3685
  %v4176 = vmul.f32 %v4113, %v4144
  %v4177 = vmul.f32 %v4115, %v4145
  %v4178 = vmul.f32 %v4117, %v4146
  %v4179 = vmul.f32 %v4119, %v4147
  %v4180 = vadd.f32 %v4172, %v4176
  %v4181 = vadd.f32 %v4173, %v4177
  %v4182 = vadd.f32 %v4174, %v4178
  %v4183 = vadd.f32 %v4175, %v4179
  %v4184 = vtanh.pop %v4180
  %v4185 = vtanh.pop %v4181
  %v4186 = vtanh.pop %v4182
  %v4187 = vtanh.pop %v4183
  %v4188 = vmul.f32 %v4165, %v4184
  %v4189 = vmul.f32 %v4167, %v4185
  %v4190 = vmul.f32 %v4169, %v4186
  %v4191 = vmul.f32 %v4171, %v4187
  %v4192 = vsel %vm3985, 1, 0
  %v4193 = vlaneseq
  %v4194 = vshrl.u32 %v4193, 7
  %v4195 = vsub.s32 0, %v4194
  %v4196 = vrot.slane %v4192, %v4195
  %vm4197 = vcmp.eq.s32.totalorder %v4196, 1
  %v4198 = vsel %vm4197, %v4188, %v3678
  %v4199 = vsel %vm4197, %v4189, %v3679
  %v4200 = vsel %vm4197, %v4190, %v3680
  %v4201 = vsel %vm4197, %v4191, %v3681
  %v4202 = vsel %vm4197, %v4180, %v3682
  %v4203 = vsel %vm4197, %v4181, %v3683
  %v4204 = vsel %vm4197, %v4182, %v3684
  %v4205 = vsel %vm4197, %v4183, %v3685
  %v4206 = vsel %vm4087, %v4078, 0.0
  %v4207 = vsel %vm4087, %v4079, 0.0
  %v4208 = vsel %vm4087, %v4080, 0.0
  %v4209 = vsel %vm4087, %v4081, 0.0
  %v4210 = vpack.c.bf16 %v4207, %v4206
  %v4211 = vpack.c.bf16 %v4209, %v4208
  %v4214 = vunpack.c.l.b16 %v4210
  %v4215 = vunpack.c.h.b16 %v4210
  %v4216 = vunpack.c.l.b16 %v4211
  %v4217 = vunpack.c.h.b16 %v4211
  %v4218 = vpack.c.b16 %v4214, %v4214
  %v4219 = vpack.c.b16 %v4215, %v4215
  %v4220 = vpack.c.b16 %v4216, %v4216
  %v4221 = vpack.c.b16 %v4217, %v4217
  %s4226 = scalar_lea.vmem [#allocation4], 16
  %4227 = vst.msk [vmem:[%s4226] sm:$0xf] %vm632, %v4218
  %4228 = vst.msk [vmem:[%s4226 + $0x4] sm:$0xf] %vm632, %v4219
  %4229 = vst.msk [vmem:[%s4226 + $0x8] sm:$0xf] %vm632, %v4220
  %4230 = vst.msk [vmem:[%s4226 + $0xc] sm:$0xf] %vm632, %v4221
  %v4231 = vsel %vm4197, %v4188, 0.0
  %v4232 = vsel %vm4197, %v4189, 0.0
  %v4233 = vsel %vm4197, %v4190, 0.0
  %v4234 = vsel %vm4197, %v4191, 0.0
  %v4235 = vpack.c.bf16 %v4232, %v4231
  %v4236 = vpack.c.bf16 %v4234, %v4233
  %v4239 = vunpack.c.l.b16 %v4235
  %v4240 = vunpack.c.h.b16 %v4235
  %v4241 = vunpack.c.l.b16 %v4236
  %v4242 = vunpack.c.h.b16 %v4236
  %v4243 = vpack.c.b16 %v4239, %v4239
  %v4244 = vpack.c.b16 %v4240, %v4240
  %v4245 = vpack.c.b16 %v4241, %v4241
  %v4246 = vpack.c.b16 %v4242, %v4242
  %s4251 = scalar_lea.vmem [#allocation5], 96
  %4252 = vst.msk [vmem:[%s4251] sm:$0xf] %vm632, %v4243
  %4253 = vst.msk [vmem:[%s4251 + $0x4] sm:$0xf] %vm632, %v4244
  %4254 = vst.msk [vmem:[%s4251 + $0x8] sm:$0xf] %vm632, %v4245
  %4255 = vst.msk [vmem:[%s4251 + $0xc] sm:$0xf] %vm632, %v4246
  %v4256 = vpack.c.bf16 %v4089, %v4088
  %v4257 = vpack.c.bf16 %v4091, %v4090
  %v4258 = vpack.c.bf16 %v4199, %v4198
  %v4259 = vpack.c.bf16 %v4201, %v4200
  %4260 = vmatprep.subr.bf16.mxu0 0
  %4261 = vmatpush1.bf16.msra.mxu0 0
  %4262 = vmatprep.subr.bf16.mxu0 0
  %4263 = vmatpush1.bf16.msra.mxu0 0
  %4264 = vmatprep.subr.bf16.mxu0 0
  %4265 = vmatpush1.bf16.msra.mxu0 0
  %4266 = vmatprep.subr.bf16.mxu0 0
  %4267 = vmatpush1.bf16.msra.mxu0 0
  %4268 = vmatprep.subr.bf16.mxu0 0
  %4269 = vmatpush1.bf16.msra.mxu0 %v4259
  %4270 = vmatprep.subr.bf16.mxu0 0
  %4271 = vmatpush1.bf16.msra.mxu0 %v4258
  %4272 = vmatprep.subr.bf16.mxu0 0
  %4273 = vmatpush1.bf16.msra.mxu0 %v4257
  %4274 = vmatprep.subr.bf16.mxu0 0
  %4275 = vmatpush1.bf16.msra.mxu0 %v4256
  %4276 = vmatprep.subr.bf16.mxu0 0
  %4277 = vmatpush2.bf16.msra.mxu0 0
  %4278 = vmatprep.subr.bf16.mxu0 0
  %4279 = vmatpush2.bf16.msra.mxu0 0
  %4280 = vmatprep.subr.bf16.mxu0 0
  %4281 = vmatpush2.bf16.msra.mxu0 0
  %4282 = vmatprep.subr.bf16.mxu0 0
  %4283 = vmatpush2.bf16.msra.mxu0 0
  %4284 = vmatprep.subr.bf16.mxu0 0
  %4285 = vmatpush2.bf16.msra.mxu0 0
  %4286 = vmatprep.subr.bf16.mxu0 0
  %4287 = vmatpush2.bf16.msra.mxu0 0
  %4288 = vmatprep.subr.bf16.mxu0 0
  %4289 = vmatpush2.bf16.msra.mxu0 0
  %4290 = vmatprep.subr.bf16.mxu0 0
  %4291 = vmatpush2.bf16.msra.mxu0 0
  %4292 = vmatprep.mubr.bf16.mxu0 0
  %4293 = vmatmul.mubr.bf16.gmra.mxu0 %v3160
  %v4294 = vpop.f32.mrf.mxu0
  %v4295 = vadd.f32 0.0, %v4294
  %v4296 = vpop.f32.mrf.mxu0
  %v4297 = vpop.f32.mrf.mxu0
  %v4298 = vadd.f32 0.0, %v4297
  %v4299 = vpop.f32.mrf.mxu0
  %4300 = vmatprep.mubr.bf16.mxu0 0
  %4301 = vmatmul.mubr.bf16.gmra.mxu0 %v3163
  %v4302 = vpop.f32.mrf.mxu0
  %v4303 = vadd.f32 0.0, %v4302
  %v4304 = vpop.f32.mrf.mxu0
  %v4305 = vpop.f32.mrf.mxu0
  %v4306 = vadd.f32 0.0, %v4305
  %v4307 = vpop.f32.mrf.mxu0
  %4308 = vmatprep.mubr.bf16.mxu0 0
  %4309 = vmatmul.mubr.bf16.gmra.mxu0 %v3166
  %v4310 = vpop.f32.mrf.mxu0
  %v4311 = vadd.f32 0.0, %v4310
  %v4312 = vpop.f32.mrf.mxu0
  %v4313 = vpop.f32.mrf.mxu0
  %v4314 = vadd.f32 0.0, %v4313
  %v4315 = vpop.f32.mrf.mxu0
  %4316 = vmatprep.mubr.bf16.mxu0 0
  %4317 = vmatmul.mubr.bf16.gmra.mxu0 %v3169
  %v4318 = vpop.f32.mrf.mxu0
  %v4319 = vadd.f32 0.0, %v4318
  %v4320 = vpop.f32.mrf.mxu0
  %v4321 = vpop.f32.mrf.mxu0
  %v4322 = vadd.f32 0.0, %v4321
  %v4323 = vpop.f32.mrf.mxu0
  %4324 = vmatprep.mubr.bf16.mxu0 0
  %4325 = vmatmul.mubr.bf16.gmra.mxu0 %v3172
  %v4326 = vpop.f32.mrf.mxu0
  %v4327 = vadd.f32 0.0, %v4326
  %v4328 = vpop.f32.mrf.mxu0
  %v4329 = vpop.f32.mrf.mxu0
  %v4330 = vadd.f32 0.0, %v4329
  %v4331 = vpop.f32.mrf.mxu0
  %4332 = vmatprep.mubr.bf16.mxu0 0
  %4333 = vmatmul.mubr.bf16.gmra.mxu0 %v3175
  %v4334 = vpop.f32.mrf.mxu0
  %v4335 = vadd.f32 0.0, %v4334
  %v4336 = vpop.f32.mrf.mxu0
  %v4337 = vpop.f32.mrf.mxu0
  %v4338 = vadd.f32 0.0, %v4337
  %v4339 = vpop.f32.mrf.mxu0
  %4340 = vmatprep.mubr.bf16.mxu0 0
  %4341 = vmatmul.mubr.bf16.gmra.mxu0 %v3178
  %v4342 = vpop.f32.mrf.mxu0
  %v4343 = vadd.f32 0.0, %v4342
  %v4344 = vpop.f32.mrf.mxu0
  %v4345 = vpop.f32.mrf.mxu0
  %v4346 = vadd.f32 0.0, %v4345
  %v4347 = vpop.f32.mrf.mxu0
  %4348 = vmatprep.mubr.bf16.mxu0 0
  %4349 = vmatmul.mubr.bf16.gmra.mxu0 %v3181
  %v4350 = vpop.f32.mrf.mxu0
  %v4351 = vadd.f32 0.0, %v4350
  %v4352 = vpop.f32.mrf.mxu0
  %v4353 = vpop.f32.mrf.mxu0
  %v4354 = vadd.f32 0.0, %v4353
  %v4355 = vpop.f32.mrf.mxu0
  %4356 = vmatprep.mubr.bf16.mxu0 0
  %4357 = vmatmul.mubr.bf16.gmra.mxu0 %v3184
  %v4358 = vpop.f32.mrf.mxu0
  %v4359 = vadd.f32 0.0, %v4358
  %v4360 = vpop.f32.mrf.mxu0
  %v4361 = vpop.f32.mrf.mxu0
  %v4362 = vadd.f32 0.0, %v4361
  %v4363 = vpop.f32.mrf.mxu0
  %4364 = vmatprep.mubr.bf16.mxu0 0
  %4365 = vmatmul.mubr.bf16.gmra.mxu0 %v3187
  %v4366 = vpop.f32.mrf.mxu0
  %v4367 = vadd.f32 0.0, %v4366
  %v4368 = vpop.f32.mrf.mxu0
  %v4369 = vpop.f32.mrf.mxu0
  %v4370 = vadd.f32 0.0, %v4369
  %v4371 = vpop.f32.mrf.mxu0
  %4372 = vmatprep.mubr.bf16.mxu0 0
  %4373 = vmatmul.mubr.bf16.gmra.mxu0 %v3190
  %v4374 = vpop.f32.mrf.mxu0
  %v4375 = vadd.f32 0.0, %v4374
  %v4376 = vpop.f32.mrf.mxu0
  %v4377 = vpop.f32.mrf.mxu0
  %v4378 = vadd.f32 0.0, %v4377
  %v4379 = vpop.f32.mrf.mxu0
  %4380 = vmatprep.mubr.bf16.mxu0 0
  %4381 = vmatmul.mubr.bf16.gmra.mxu0 %v3193
  %v4382 = vpop.f32.mrf.mxu0
  %v4383 = vadd.f32 0.0, %v4382
  %v4384 = vpop.f32.mrf.mxu0
  %v4385 = vpop.f32.mrf.mxu0
  %v4386 = vadd.f32 0.0, %v4385
  %v4387 = vpop.f32.mrf.mxu0
  %4388 = vmatprep.mubr.bf16.mxu0 0
  %4389 = vmatmul.mubr.bf16.gmra.mxu0 %v3196
  %v4390 = vpop.f32.mrf.mxu0
  %v4391 = vadd.f32 0.0, %v4390
  %v4392 = vpop.f32.mrf.mxu0
  %v4393 = vpop.f32.mrf.mxu0
  %v4394 = vadd.f32 0.0, %v4393
  %v4395 = vpop.f32.mrf.mxu0
  %4396 = vmatprep.mubr.bf16.mxu0 0
  %4397 = vmatmul.mubr.bf16.gmra.mxu0 %v3199
  %v4398 = vpop.f32.mrf.mxu0
  %v4399 = vadd.f32 0.0, %v4398
  %v4400 = vpop.f32.mrf.mxu0
  %v4401 = vpop.f32.mrf.mxu0
  %v4402 = vadd.f32 0.0, %v4401
  %v4403 = vpop.f32.mrf.mxu0
  %4404 = vmatprep.mubr.bf16.mxu0 0
  %4405 = vmatmul.mubr.bf16.gmra.mxu0 %v3202
  %v4406 = vpop.f32.mrf.mxu0
  %v4407 = vadd.f32 0.0, %v4406
  %v4408 = vpop.f32.mrf.mxu0
  %v4409 = vpop.f32.mrf.mxu0
  %v4410 = vadd.f32 0.0, %v4409
  %v4411 = vpop.f32.mrf.mxu0
  %4412 = vmatprep.mubr.bf16.mxu0 0
  %4413 = vmatmul.mubr.bf16.gmra.mxu0 %v3205
  %v4414 = vpop.f32.mrf.mxu0
  %v4415 = vadd.f32 0.0, %v4414
  %v4416 = vpop.f32.mrf.mxu0
  %v4417 = vpop.f32.mrf.mxu0
  %v4418 = vadd.f32 0.0, %v4417
  %v4419 = vpop.f32.mrf.mxu0
  %4420 = vdwg.mxu0
  %v4421 = vld [vmem:[%s1295] sm:$0xf]
  %v4422 = vld [vmem:[%s1295 + $0x4] sm:$0xf]
  %v4423 = vld [vmem:[%s1295 + $0x8] sm:$0xf]
  %v4424 = vld [vmem:[%s1295 + $0xc] sm:$0xf]
  %v4425 = vld [vmem:[%s1295 + $0x10] sm:$0xf]
  %v4426 = vld [vmem:[%s1295 + $0x14] sm:$0xf]
  %v4427 = vld [vmem:[%s1295 + $0x18] sm:$0xf]
  %v4428 = vld [vmem:[%s1295 + $0x1c] sm:$0xf]
  %v4429 = vld [vmem:[%s1295 + $0x20] sm:$0xf]
  %v4430 = vld [vmem:[%s1295 + $0x24] sm:$0xf]
  %v4431 = vld [vmem:[%s1295 + $0x28] sm:$0xf]
  %v4432 = vld [vmem:[%s1295 + $0x2c] sm:$0xf]
  %v4433 = vld [vmem:[%s1295 + $0x30] sm:$0xf]
  %v4434 = vld [vmem:[%s1295 + $0x34] sm:$0xf]
  %v4435 = vld [vmem:[%s1295 + $0x38] sm:$0xf]
  %v4436 = vld [vmem:[%s1295 + $0x3c] sm:$0xf]
  %v4437 = vunpack.c.l.bf16 %v4421
  %v4438 = vunpack.c.l.bf16 %v4422
  %v4439 = vunpack.c.l.bf16 %v4423
  %v4440 = vunpack.c.l.bf16 %v4424
  %v4441 = vunpack.c.l.bf16 %v4425
  %v4442 = vunpack.c.l.bf16 %v4426
  %v4443 = vunpack.c.l.bf16 %v4427
  %v4444 = vunpack.c.l.bf16 %v4428
  %v4445 = vunpack.c.l.bf16 %v4429
  %v4446 = vunpack.c.l.bf16 %v4430
  %v4447 = vunpack.c.l.bf16 %v4431
  %v4448 = vunpack.c.l.bf16 %v4432
  %v4449 = vunpack.c.l.bf16 %v4433
  %v4450 = vunpack.c.l.bf16 %v4434
  %v4451 = vunpack.c.l.bf16 %v4435
  %v4452 = vunpack.c.l.bf16 %v4436
  %v4453 = vadd.f32 %v4295, %v4437
  %v4454 = vadd.f32 %v4298, %v4438
  %v4455 = vadd.f32 %v4303, %v4439
  %v4456 = vadd.f32 %v4306, %v4440
  %v4457 = vadd.f32 %v4311, %v4441
  %v4458 = vadd.f32 %v4314, %v4442
  %v4459 = vadd.f32 %v4319, %v4443
  %v4460 = vadd.f32 %v4322, %v4444
  %v4461 = vadd.f32 %v4327, %v4445
  %v4462 = vadd.f32 %v4330, %v4446
  %v4463 = vadd.f32 %v4335, %v4447
  %v4464 = vadd.f32 %v4338, %v4448
  %v4465 = vadd.f32 %v4343, %v4449
  %v4466 = vadd.f32 %v4346, %v4450
  %v4467 = vadd.f32 %v4351, %v4451
  %v4468 = vadd.f32 %v4354, %v4452
  %v4469 = vld [vmem:[%s2364] sm:$0xf]
  %v4470 = vld [vmem:[%s2364 + $0x4] sm:$0xf]
  %v4471 = vld [vmem:[%s2364 + $0x8] sm:$0xf]
  %v4472 = vld [vmem:[%s2364 + $0xc] sm:$0xf]
  %v4473 = vld [vmem:[%s2364 + $0x10] sm:$0xf]
  %v4474 = vld [vmem:[%s2364 + $0x14] sm:$0xf]
  %v4475 = vld [vmem:[%s2364 + $0x18] sm:$0xf]
  %v4476 = vld [vmem:[%s2364 + $0x1c] sm:$0xf]
  %v4477 = vld [vmem:[%s2364 + $0x20] sm:$0xf]
  %v4478 = vld [vmem:[%s2364 + $0x24] sm:$0xf]
  %v4479 = vld [vmem:[%s2364 + $0x28] sm:$0xf]
  %v4480 = vld [vmem:[%s2364 + $0x2c] sm:$0xf]
  %v4481 = vld [vmem:[%s2364 + $0x30] sm:$0xf]
  %v4482 = vld [vmem:[%s2364 + $0x34] sm:$0xf]
  %v4483 = vld [vmem:[%s2364 + $0x38] sm:$0xf]
  %v4484 = vld [vmem:[%s2364 + $0x3c] sm:$0xf]
  %v4485 = vunpack.c.l.bf16 %v4469
  %v4486 = vunpack.c.l.bf16 %v4470
  %v4487 = vunpack.c.l.bf16 %v4471
  %v4488 = vunpack.c.l.bf16 %v4472
  %v4489 = vunpack.c.l.bf16 %v4473
  %v4490 = vunpack.c.l.bf16 %v4474
  %v4491 = vunpack.c.l.bf16 %v4475
  %v4492 = vunpack.c.l.bf16 %v4476
  %v4493 = vunpack.c.l.bf16 %v4477
  %v4494 = vunpack.c.l.bf16 %v4478
  %v4495 = vunpack.c.l.bf16 %v4479
  %v4496 = vunpack.c.l.bf16 %v4480
  %v4497 = vunpack.c.l.bf16 %v4481
  %v4498 = vunpack.c.l.bf16 %v4482
  %v4499 = vunpack.c.l.bf16 %v4483
  %v4500 = vunpack.c.l.bf16 %v4484
  %v4501 = vadd.f32 %v4359, %v4485
  %v4502 = vadd.f32 %v4362, %v4486
  %v4503 = vadd.f32 %v4367, %v4487
  %v4504 = vadd.f32 %v4370, %v4488
  %v4505 = vadd.f32 %v4375, %v4489
  %v4506 = vadd.f32 %v4378, %v4490
  %v4507 = vadd.f32 %v4383, %v4491
  %v4508 = vadd.f32 %v4386, %v4492
  %v4509 = vadd.f32 %v4391, %v4493
  %v4510 = vadd.f32 %v4394, %v4494
  %v4511 = vadd.f32 %v4399, %v4495
  %v4512 = vadd.f32 %v4402, %v4496
  %v4513 = vadd.f32 %v4407, %v4497
  %v4514 = vadd.f32 %v4410, %v4498
  %v4515 = vadd.f32 %v4415, %v4499
  %v4516 = vadd.f32 %v4418, %v4500
  %vm4517 = vcmp.gt.s32.totalorder %v3077, 2
  %vm4518 = vcmp.gt.s32.totalorder %v3077, 5
  %v4519 = vxor.u32 %v4453, 2147483648
  %v4520 = vxor.u32 %v4454, 2147483648
  %v4521 = vxor.u32 %v4455, 2147483648
  %v4522 = vxor.u32 %v4456, 2147483648
  %v4523 = vmul.f32 %v4519, 1.442695
  %v4524 = vpow.pop %v4523
  %v4525 = vmul.f32 %v4520, 1.442695
  %v4526 = vpow.pop %v4525
  %v4527 = vmul.f32 %v4521, 1.442695
  %v4528 = vpow.pop %v4527
  %v4529 = vmul.f32 %v4522, 1.442695
  %v4530 = vpow.pop %v4529
  %v4531 = vadd.f32 %v4524, 1.0
  %v4532 = vadd.f32 %v4526, 1.0
  %v4533 = vadd.f32 %v4528, 1.0
  %v4534 = vadd.f32 %v4530, 1.0
  %v4535 = vrcp.pop %v4531
  %v4536 = vmul.f32 1.0, %v4535
  %v4537 = vrcp.pop %v4532
  %v4538 = vmul.f32 1.0, %v4537
  %v4539 = vrcp.pop %v4533
  %v4540 = vmul.f32 1.0, %v4539
  %v4541 = vrcp.pop %v4534
  %v4542 = vmul.f32 1.0, %v4541
  %v4543 = vxor.u32 %v4457, 2147483648
  %v4544 = vxor.u32 %v4458, 2147483648
  %v4545 = vxor.u32 %v4459, 2147483648
  %v4546 = vxor.u32 %v4460, 2147483648
  %v4547 = vmul.f32 %v4543, 1.442695
  %v4548 = vpow.pop %v4547
  %v4549 = vmul.f32 %v4544, 1.442695
  %v4550 = vpow.pop %v4549
  %v4551 = vmul.f32 %v4545, 1.442695
  %v4552 = vpow.pop %v4551
  %v4553 = vmul.f32 %v4546, 1.442695
  %v4554 = vpow.pop %v4553
  %v4555 = vadd.f32 %v4548, 1.0
  %v4556 = vadd.f32 %v4550, 1.0
  %v4557 = vadd.f32 %v4552, 1.0
  %v4558 = vadd.f32 %v4554, 1.0
  %v4559 = vrcp.pop %v4555
  %v4560 = vmul.f32 1.0, %v4559
  %v4561 = vrcp.pop %v4556
  %v4562 = vmul.f32 1.0, %v4561
  %v4563 = vrcp.pop %v4557
  %v4564 = vmul.f32 1.0, %v4563
  %v4565 = vrcp.pop %v4558
  %v4566 = vmul.f32 1.0, %v4565
  %v4567 = vtanh.pop %v4461
  %v4568 = vtanh.pop %v4462
  %v4569 = vtanh.pop %v4463
  %v4570 = vtanh.pop %v4464
  %v4571 = vxor.u32 %v4465, 2147483648
  %v4572 = vxor.u32 %v4466, 2147483648
  %v4573 = vxor.u32 %v4467, 2147483648
  %v4574 = vxor.u32 %v4468, 2147483648
  %v4575 = vmul.f32 %v4571, 1.442695
  %v4576 = vpow.pop %v4575
  %v4577 = vmul.f32 %v4572, 1.442695
  %v4578 = vpow.pop %v4577
  %v4579 = vmul.f32 %v4573, 1.442695
  %v4580 = vpow.pop %v4579
  %v4581 = vmul.f32 %v4574, 1.442695
  %v4582 = vpow.pop %v4581
  %v4583 = vadd.f32 %v4576, 1.0
  %v4584 = vadd.f32 %v4578, 1.0
  %v4585 = vadd.f32 %v4580, 1.0
  %v4586 = vadd.f32 %v4582, 1.0
  %v4587 = vrcp.pop %v4583
  %v4588 = vmul.f32 1.0, %v4587
  %v4589 = vrcp.pop %v4584
  %v4590 = vmul.f32 1.0, %v4589
  %v4591 = vrcp.pop %v4585
  %v4592 = vmul.f32 1.0, %v4591
  %v4593 = vrcp.pop %v4586
  %v4594 = vmul.f32 1.0, %v4593
  %v4595 = vmul.f32 %v4560, %v4092
  %v4596 = vmul.f32 %v4562, %v4093
  %v4597 = vmul.f32 %v4564, %v4094
  %v4598 = vmul.f32 %v4566, %v4095
  %v4599 = vmul.f32 %v4536, %v4567
  %v4600 = vmul.f32 %v4538, %v4568
  %v4601 = vmul.f32 %v4540, %v4569
  %v4602 = vmul.f32 %v4542, %v4570
  %v4603 = vadd.f32 %v4595, %v4599
  %v4604 = vadd.f32 %v4596, %v4600
  %v4605 = vadd.f32 %v4597, %v4601
  %v4606 = vadd.f32 %v4598, %v4602
  %v4607 = vtanh.pop %v4603
  %v4608 = vtanh.pop %v4604
  %v4609 = vtanh.pop %v4605
  %v4610 = vtanh.pop %v4606
  %v4611 = vmul.f32 %v4588, %v4607
  %v4612 = vmul.f32 %v4590, %v4608
  %v4613 = vmul.f32 %v4592, %v4609
  %v4614 = vmul.f32 %v4594, %v4610
  %v4615 = vsel %vm4517, 1, 0
  %v4616 = vlaneseq
  %v4617 = vshrl.u32 %v4616, 7
  %v4618 = vsub.s32 0, %v4617
  %v4619 = vrot.slane %v4615, %v4618
  %vm4620 = vcmp.eq.s32.totalorder %v4619, 1
  %v4621 = vsel %vm4620, %v4611, %v4088
  %v4622 = vsel %vm4620, %v4612, %v4089
  %v4623 = vsel %vm4620, %v4613, %v4090
  %v4624 = vsel %vm4620, %v4614, %v4091
  %v4625 = vsel %vm4620, %v4603, %v4092
  %v4626 = vsel %vm4620, %v4604, %v4093
  %v4627 = vsel %vm4620, %v4605, %v4094
  %v4628 = vsel %vm4620, %v4606, %v4095
  %v4629 = vxor.u32 %v4501, 2147483648
  %v4630 = vxor.u32 %v4502, 2147483648
  %v4631 = vxor.u32 %v4503, 2147483648
  %v4632 = vxor.u32 %v4504, 2147483648
  %v4633 = vmul.f32 %v4629, 1.442695
  %v4634 = vpow.pop %v4633
  %v4635 = vmul.f32 %v4630, 1.442695
  %v4636 = vpow.pop %v4635
  %v4637 = vmul.f32 %v4631, 1.442695
  %v4638 = vpow.pop %v4637
  %v4639 = vmul.f32 %v4632, 1.442695
  %v4640 = vpow.pop %v4639
  %v4641 = vadd.f32 %v4634, 1.0
  %v4642 = vadd.f32 %v4636, 1.0
  %v4643 = vadd.f32 %v4638, 1.0
  %v4644 = vadd.f32 %v4640, 1.0
  %v4645 = vrcp.pop %v4641
  %v4646 = vmul.f32 1.0, %v4645
  %v4647 = vrcp.pop %v4642
  %v4648 = vmul.f32 1.0, %v4647
  %v4649 = vrcp.pop %v4643
  %v4650 = vmul.f32 1.0, %v4649
  %v4651 = vrcp.pop %v4644
  %v4652 = vmul.f32 1.0, %v4651
  %v4653 = vxor.u32 %v4505, 2147483648
  %v4654 = vxor.u32 %v4506, 2147483648
  %v4655 = vxor.u32 %v4507, 2147483648
  %v4656 = vxor.u32 %v4508, 2147483648
  %v4657 = vmul.f32 %v4653, 1.442695
  %v4658 = vpow.pop %v4657
  %v4659 = vmul.f32 %v4654, 1.442695
  %v4660 = vpow.pop %v4659
  %v4661 = vmul.f32 %v4655, 1.442695
  %v4662 = vpow.pop %v4661
  %v4663 = vmul.f32 %v4656, 1.442695
  %v4664 = vpow.pop %v4663
  %v4665 = vadd.f32 %v4658, 1.0
  %v4666 = vadd.f32 %v4660, 1.0
  %v4667 = vadd.f32 %v4662, 1.0
  %v4668 = vadd.f32 %v4664, 1.0
  %v4669 = vrcp.pop %v4665
  %v4670 = vmul.f32 1.0, %v4669
  %v4671 = vrcp.pop %v4666
  %v4672 = vmul.f32 1.0, %v4671
  %v4673 = vrcp.pop %v4667
  %v4674 = vmul.f32 1.0, %v4673
  %v4675 = vrcp.pop %v4668
  %v4676 = vmul.f32 1.0, %v4675
  %v4677 = vtanh.pop %v4509
  %v4678 = vtanh.pop %v4510
  %v4679 = vtanh.pop %v4511
  %v4680 = vtanh.pop %v4512
  %v4681 = vxor.u32 %v4513, 2147483648
  %v4682 = vxor.u32 %v4514, 2147483648
  %v4683 = vxor.u32 %v4515, 2147483648
  %v4684 = vxor.u32 %v4516, 2147483648
  %v4685 = vmul.f32 %v4681, 1.442695
  %v4686 = vpow.pop %v4685
  %v4687 = vmul.f32 %v4682, 1.442695
  %v4688 = vpow.pop %v4687
  %v4689 = vmul.f32 %v4683, 1.442695
  %v4690 = vpow.pop %v4689
  %v4691 = vmul.f32 %v4684, 1.442695
  %v4692 = vpow.pop %v4691
  %v4693 = vadd.f32 %v4686, 1.0
  %v4694 = vadd.f32 %v4688, 1.0
  %v4695 = vadd.f32 %v4690, 1.0
  %v4696 = vadd.f32 %v4692, 1.0
  %v4697 = vrcp.pop %v4693
  %v4698 = vmul.f32 1.0, %v4697
  %v4699 = vrcp.pop %v4694
  %v4700 = vmul.f32 1.0, %v4699
  %v4701 = vrcp.pop %v4695
  %v4702 = vmul.f32 1.0, %v4701
  %v4703 = vrcp.pop %v4696
  %v4704 = vmul.f32 1.0, %v4703
  %v4705 = vmul.f32 %v4670, %v4202
  %v4706 = vmul.f32 %v4672, %v4203
  %v4707 = vmul.f32 %v4674, %v4204
  %v4708 = vmul.f32 %v4676, %v4205
  %v4709 = vmul.f32 %v4646, %v4677
  %v4710 = vmul.f32 %v4648, %v4678
  %v4711 = vmul.f32 %v4650, %v4679
  %v4712 = vmul.f32 %v4652, %v4680
  %v4713 = vadd.f32 %v4705, %v4709
  %v4714 = vadd.f32 %v4706, %v4710
  %v4715 = vadd.f32 %v4707, %v4711
  %v4716 = vadd.f32 %v4708, %v4712
  %v4717 = vtanh.pop %v4713
  %v4718 = vtanh.pop %v4714
  %v4719 = vtanh.pop %v4715
  %v4720 = vtanh.pop %v4716
  %v4721 = vmul.f32 %v4698, %v4717
  %v4722 = vmul.f32 %v4700, %v4718
  %v4723 = vmul.f32 %v4702, %v4719
  %v4724 = vmul.f32 %v4704, %v4720
  %v4725 = vsel %vm4518, 1, 0
  %v4726 = vlaneseq
  %v4727 = vshrl.u32 %v4726, 7
  %v4728 = vsub.s32 0, %v4727
  %v4729 = vrot.slane %v4725, %v4728
  %vm4730 = vcmp.eq.s32.totalorder %v4729, 1
  %v4731 = vsel %vm4730, %v4721, %v4198
  %v4732 = vsel %vm4730, %v4722, %v4199
  %v4733 = vsel %vm4730, %v4723, %v4200
  %v4734 = vsel %vm4730, %v4724, %v4201
  %v4735 = vsel %vm4730, %v4713, %v4202
  %v4736 = vsel %vm4730, %v4714, %v4203
  %v4737 = vsel %vm4730, %v4715, %v4204
  %v4738 = vsel %vm4730, %v4716, %v4205
  %v4739 = vsel %vm4620, %v4611, 0.0
  %v4740 = vsel %vm4620, %v4612, 0.0
  %v4741 = vsel %vm4620, %v4613, 0.0
  %v4742 = vsel %vm4620, %v4614, 0.0
  %v4743 = vpack.c.bf16 %v4740, %v4739
  %v4744 = vpack.c.bf16 %v4742, %v4741
  %v4747 = vunpack.c.l.b16 %v4743
  %v4748 = vunpack.c.h.b16 %v4743
  %v4749 = vunpack.c.l.b16 %v4744
  %v4750 = vunpack.c.h.b16 %v4744
  %v4751 = vpack.c.b16 %v4747, %v4747
  %v4752 = vpack.c.b16 %v4748, %v4748
  %v4753 = vpack.c.b16 %v4749, %v4749
  %v4754 = vpack.c.b16 %v4750, %v4750
  %s4759 = scalar_lea.vmem [#allocation4], 32
  %4760 = vst.msk [vmem:[%s4759] sm:$0xf] %vm632, %v4751
  %4761 = vst.msk [vmem:[%s4759 + $0x4] sm:$0xf] %vm632, %v4752
  %4762 = vst.msk [vmem:[%s4759 + $0x8] sm:$0xf] %vm632, %v4753
  %4763 = vst.msk [vmem:[%s4759 + $0xc] sm:$0xf] %vm632, %v4754
  %v4764 = vsel %vm4730, %v4721, 0.0
  %v4765 = vsel %vm4730, %v4722, 0.0
  %v4766 = vsel %vm4730, %v4723, 0.0
  %v4767 = vsel %vm4730, %v4724, 0.0
  %v4768 = vpack.c.bf16 %v4765, %v4764
  %v4769 = vpack.c.bf16 %v4767, %v4766
  %v4772 = vunpack.c.l.b16 %v4768
  %v4773 = vunpack.c.h.b16 %v4768
  %v4774 = vunpack.c.l.b16 %v4769
  %v4775 = vunpack.c.h.b16 %v4769
  %v4776 = vpack.c.b16 %v4772, %v4772
  %v4777 = vpack.c.b16 %v4773, %v4773
  %v4778 = vpack.c.b16 %v4774, %v4774
  %v4779 = vpack.c.b16 %v4775, %v4775
  %s4784 = scalar_lea.vmem [#allocation5], 80
  %4785 = vst.msk [vmem:[%s4784] sm:$0xf] %vm632, %v4776
  %4786 = vst.msk [vmem:[%s4784 + $0x4] sm:$0xf] %vm632, %v4777
  %4787 = vst.msk [vmem:[%s4784 + $0x8] sm:$0xf] %vm632, %v4778
  %4788 = vst.msk [vmem:[%s4784 + $0xc] sm:$0xf] %vm632, %v4779
  %v4789 = vpack.c.bf16 %v4622, %v4621
  %v4790 = vpack.c.bf16 %v4624, %v4623
  %v4791 = vpack.c.bf16 %v4732, %v4731
  %v4792 = vpack.c.bf16 %v4734, %v4733
  %4793 = vmatprep.subr.bf16.mxu0 0
  %4794 = vmatpush1.bf16.msra.mxu0 0
  %4795 = vmatprep.subr.bf16.mxu0 0
  %4796 = vmatpush1.bf16.msra.mxu0 0
  %4797 = vmatprep.subr.bf16.mxu0 0
  %4798 = vmatpush1.bf16.msra.mxu0 0
  %4799 = vmatprep.subr.bf16.mxu0 0
  %4800 = vmatpush1.bf16.msra.mxu0 0
  %4801 = vmatprep.subr.bf16.mxu0 0
  %4802 = vmatpush1.bf16.msra.mxu0 %v4792
  %4803 = vmatprep.subr.bf16.mxu0 0
  %4804 = vmatpush1.bf16.msra.mxu0 %v4791
  %4805 = vmatprep.subr.bf16.mxu0 0
  %4806 = vmatpush1.bf16.msra.mxu0 %v4790
  %4807 = vmatprep.subr.bf16.mxu0 0
  %4808 = vmatpush1.bf16.msra.mxu0 %v4789
  %4809 = vmatprep.subr.bf16.mxu0 0
  %4810 = vmatpush2.bf16.msra.mxu0 0
  %4811 = vmatprep.subr.bf16.mxu0 0
  %4812 = vmatpush2.bf16.msra.mxu0 0
  %4813 = vmatprep.subr.bf16.mxu0 0
  %4814 = vmatpush2.bf16.msra.mxu0 0
  %4815 = vmatprep.subr.bf16.mxu0 0
  %4816 = vmatpush2.bf16.msra.mxu0 0
  %4817 = vmatprep.subr.bf16.mxu0 0
  %4818 = vmatpush2.bf16.msra.mxu0 0
  %4819 = vmatprep.subr.bf16.mxu0 0
  %4820 = vmatpush2.bf16.msra.mxu0 0
  %4821 = vmatprep.subr.bf16.mxu0 0
  %4822 = vmatpush2.bf16.msra.mxu0 0
  %4823 = vmatprep.subr.bf16.mxu0 0
  %4824 = vmatpush2.bf16.msra.mxu0 0
  %4825 = vmatprep.mubr.bf16.mxu0 0
  %4826 = vmatmul.mubr.bf16.gmra.mxu0 %v3160
  %v4827 = vpop.f32.mrf.mxu0
  %v4828 = vadd.f32 0.0, %v4827
  %v4829 = vpop.f32.mrf.mxu0
  %v4830 = vpop.f32.mrf.mxu0
  %v4831 = vadd.f32 0.0, %v4830
  %v4832 = vpop.f32.mrf.mxu0
  %4833 = vmatprep.mubr.bf16.mxu0 0
  %4834 = vmatmul.mubr.bf16.gmra.mxu0 %v3163
  %v4835 = vpop.f32.mrf.mxu0
  %v4836 = vadd.f32 0.0, %v4835
  %v4837 = vpop.f32.mrf.mxu0
  %v4838 = vpop.f32.mrf.mxu0
  %v4839 = vadd.f32 0.0, %v4838
  %v4840 = vpop.f32.mrf.mxu0
  %4841 = vmatprep.mubr.bf16.mxu0 0
  %4842 = vmatmul.mubr.bf16.gmra.mxu0 %v3166
  %v4843 = vpop.f32.mrf.mxu0
  %v4844 = vadd.f32 0.0, %v4843
  %v4845 = vpop.f32.mrf.mxu0
  %v4846 = vpop.f32.mrf.mxu0
  %v4847 = vadd.f32 0.0, %v4846
  %v4848 = vpop.f32.mrf.mxu0
  %4849 = vmatprep.mubr.bf16.mxu0 0
  %4850 = vmatmul.mubr.bf16.gmra.mxu0 %v3169
  %v4851 = vpop.f32.mrf.mxu0
  %v4852 = vadd.f32 0.0, %v4851
  %v4853 = vpop.f32.mrf.mxu0
  %v4854 = vpop.f32.mrf.mxu0
  %v4855 = vadd.f32 0.0, %v4854
  %v4856 = vpop.f32.mrf.mxu0
  %4857 = vmatprep.mubr.bf16.mxu0 0
  %4858 = vmatmul.mubr.bf16.gmra.mxu0 %v3172
  %v4859 = vpop.f32.mrf.mxu0
  %v4860 = vadd.f32 0.0, %v4859
  %v4861 = vpop.f32.mrf.mxu0
  %v4862 = vpop.f32.mrf.mxu0
  %v4863 = vadd.f32 0.0, %v4862
  %v4864 = vpop.f32.mrf.mxu0
  %4865 = vmatprep.mubr.bf16.mxu0 0
  %4866 = vmatmul.mubr.bf16.gmra.mxu0 %v3175
  %v4867 = vpop.f32.mrf.mxu0
  %v4868 = vadd.f32 0.0, %v4867
  %v4869 = vpop.f32.mrf.mxu0
  %v4870 = vpop.f32.mrf.mxu0
  %v4871 = vadd.f32 0.0, %v4870
  %v4872 = vpop.f32.mrf.mxu0
  %4873 = vmatprep.mubr.bf16.mxu0 0
  %4874 = vmatmul.mubr.bf16.gmra.mxu0 %v3178
  %v4875 = vpop.f32.mrf.mxu0
  %v4876 = vadd.f32 0.0, %v4875
  %v4877 = vpop.f32.mrf.mxu0
  %v4878 = vpop.f32.mrf.mxu0
  %v4879 = vadd.f32 0.0, %v4878
  %v4880 = vpop.f32.mrf.mxu0
  %4881 = vmatprep.mubr.bf16.mxu0 0
  %4882 = vmatmul.mubr.bf16.gmra.mxu0 %v3181
  %v4883 = vpop.f32.mrf.mxu0
  %v4884 = vadd.f32 0.0, %v4883
  %v4885 = vpop.f32.mrf.mxu0
  %v4886 = vpop.f32.mrf.mxu0
  %v4887 = vadd.f32 0.0, %v4886
  %v4888 = vpop.f32.mrf.mxu0
  %4889 = vmatprep.mubr.bf16.mxu0 0
  %4890 = vmatmul.mubr.bf16.gmra.mxu0 %v3184
  %v4891 = vpop.f32.mrf.mxu0
  %v4892 = vadd.f32 0.0, %v4891
  %v4893 = vpop.f32.mrf.mxu0
  %v4894 = vpop.f32.mrf.mxu0
  %v4895 = vadd.f32 0.0, %v4894
  %v4896 = vpop.f32.mrf.mxu0
  %4897 = vmatprep.mubr.bf16.mxu0 0
  %4898 = vmatmul.mubr.bf16.gmra.mxu0 %v3187
  %v4899 = vpop.f32.mrf.mxu0
  %v4900 = vadd.f32 0.0, %v4899
  %v4901 = vpop.f32.mrf.mxu0
  %v4902 = vpop.f32.mrf.mxu0
  %v4903 = vadd.f32 0.0, %v4902
  %v4904 = vpop.f32.mrf.mxu0
  %4905 = vmatprep.mubr.bf16.mxu0 0
  %4906 = vmatmul.mubr.bf16.gmra.mxu0 %v3190
  %v4907 = vpop.f32.mrf.mxu0
  %v4908 = vadd.f32 0.0, %v4907
  %v4909 = vpop.f32.mrf.mxu0
  %v4910 = vpop.f32.mrf.mxu0
  %v4911 = vadd.f32 0.0, %v4910
  %v4912 = vpop.f32.mrf.mxu0
  %4913 = vmatprep.mubr.bf16.mxu0 0
  %4914 = vmatmul.mubr.bf16.gmra.mxu0 %v3193
  %v4915 = vpop.f32.mrf.mxu0
  %v4916 = vadd.f32 0.0, %v4915
  %v4917 = vpop.f32.mrf.mxu0
  %v4918 = vpop.f32.mrf.mxu0
  %v4919 = vadd.f32 0.0, %v4918
  %v4920 = vpop.f32.mrf.mxu0
  %4921 = vmatprep.mubr.bf16.mxu0 0
  %4922 = vmatmul.mubr.bf16.gmra.mxu0 %v3196
  %v4923 = vpop.f32.mrf.mxu0
  %v4924 = vadd.f32 0.0, %v4923
  %v4925 = vpop.f32.mrf.mxu0
  %v4926 = vpop.f32.mrf.mxu0
  %v4927 = vadd.f32 0.0, %v4926
  %v4928 = vpop.f32.mrf.mxu0
  %4929 = vmatprep.mubr.bf16.mxu0 0
  %4930 = vmatmul.mubr.bf16.gmra.mxu0 %v3199
  %v4931 = vpop.f32.mrf.mxu0
  %v4932 = vadd.f32 0.0, %v4931
  %v4933 = vpop.f32.mrf.mxu0
  %v4934 = vpop.f32.mrf.mxu0
  %v4935 = vadd.f32 0.0, %v4934
  %v4936 = vpop.f32.mrf.mxu0
  %4937 = vmatprep.mubr.bf16.mxu0 0
  %4938 = vmatmul.mubr.bf16.gmra.mxu0 %v3202
  %v4939 = vpop.f32.mrf.mxu0
  %v4940 = vadd.f32 0.0, %v4939
  %v4941 = vpop.f32.mrf.mxu0
  %v4942 = vpop.f32.mrf.mxu0
  %v4943 = vadd.f32 0.0, %v4942
  %v4944 = vpop.f32.mrf.mxu0
  %4945 = vmatprep.mubr.bf16.mxu0 0
  %4946 = vmatmul.mubr.bf16.gmra.mxu0 %v3205
  %v4947 = vpop.f32.mrf.mxu0
  %v4948 = vadd.f32 0.0, %v4947
  %v4949 = vpop.f32.mrf.mxu0
  %v4950 = vpop.f32.mrf.mxu0
  %v4951 = vadd.f32 0.0, %v4950
  %v4952 = vpop.f32.mrf.mxu0
  %4953 = vdwg.mxu0
  %v4954 = vld [vmem:[%s1627] sm:$0xf]
  %v4955 = vld [vmem:[%s1627 + $0x4] sm:$0xf]
  %v4956 = vld [vmem:[%s1627 + $0x8] sm:$0xf]
  %v4957 = vld [vmem:[%s1627 + $0xc] sm:$0xf]
  %v4958 = vld [vmem:[%s1627 + $0x10] sm:$0xf]
  %v4959 = vld [vmem:[%s1627 + $0x14] sm:$0xf]
  %v4960 = vld [vmem:[%s1627 + $0x18] sm:$0xf]
  %v4961 = vld [vmem:[%s1627 + $0x1c] sm:$0xf]
  %v4962 = vld [vmem:[%s1627 + $0x20] sm:$0xf]
  %v4963 = vld [vmem:[%s1627 + $0x24] sm:$0xf]
  %v4964 = vld [vmem:[%s1627 + $0x28] sm:$0xf]
  %v4965 = vld [vmem:[%s1627 + $0x2c] sm:$0xf]
  %v4966 = vld [vmem:[%s1627 + $0x30] sm:$0xf]
  %v4967 = vld [vmem:[%s1627 + $0x34] sm:$0xf]
  %v4968 = vld [vmem:[%s1627 + $0x38] sm:$0xf]
  %v4969 = vld [vmem:[%s1627 + $0x3c] sm:$0xf]
  %v4970 = vunpack.c.l.bf16 %v4954
  %v4971 = vunpack.c.l.bf16 %v4955
  %v4972 = vunpack.c.l.bf16 %v4956
  %v4973 = vunpack.c.l.bf16 %v4957
  %v4974 = vunpack.c.l.bf16 %v4958
  %v4975 = vunpack.c.l.bf16 %v4959
  %v4976 = vunpack.c.l.bf16 %v4960
  %v4977 = vunpack.c.l.bf16 %v4961
  %v4978 = vunpack.c.l.bf16 %v4962
  %v4979 = vunpack.c.l.bf16 %v4963
  %v4980 = vunpack.c.l.bf16 %v4964
  %v4981 = vunpack.c.l.bf16 %v4965
  %v4982 = vunpack.c.l.bf16 %v4966
  %v4983 = vunpack.c.l.bf16 %v4967
  %v4984 = vunpack.c.l.bf16 %v4968
  %v4985 = vunpack.c.l.bf16 %v4969
  %v4986 = vadd.f32 %v4828, %v4970
  %v4987 = vadd.f32 %v4831, %v4971
  %v4988 = vadd.f32 %v4836, %v4972
  %v4989 = vadd.f32 %v4839, %v4973
  %v4990 = vadd.f32 %v4844, %v4974
  %v4991 = vadd.f32 %v4847, %v4975
  %v4992 = vadd.f32 %v4852, %v4976
  %v4993 = vadd.f32 %v4855, %v4977
  %v4994 = vadd.f32 %v4860, %v4978
  %v4995 = vadd.f32 %v4863, %v4979
  %v4996 = vadd.f32 %v4868, %v4980
  %v4997 = vadd.f32 %v4871, %v4981
  %v4998 = vadd.f32 %v4876, %v4982
  %v4999 = vadd.f32 %v4879, %v4983
  %v5000 = vadd.f32 %v4884, %v4984
  %v5001 = vadd.f32 %v4887, %v4985
  %v5002 = vld [vmem:[%s2032] sm:$0xf]
  %v5003 = vld [vmem:[%s2032 + $0x4] sm:$0xf]
  %v5004 = vld [vmem:[%s2032 + $0x8] sm:$0xf]
  %v5005 = vld [vmem:[%s2032 + $0xc] sm:$0xf]
  %v5006 = vld [vmem:[%s2032 + $0x10] sm:$0xf]
  %v5007 = vld [vmem:[%s2032 + $0x14] sm:$0xf]
  %v5008 = vld [vmem:[%s2032 + $0x18] sm:$0xf]
  %v5009 = vld [vmem:[%s2032 + $0x1c] sm:$0xf]
  %v5010 = vld [vmem:[%s2032 + $0x20] sm:$0xf]
  %v5011 = vld [vmem:[%s2032 + $0x24] sm:$0xf]
  %v5012 = vld [vmem:[%s2032 + $0x28] sm:$0xf]
  %v5013 = vld [vmem:[%s2032 + $0x2c] sm:$0xf]
  %v5014 = vld [vmem:[%s2032 + $0x30] sm:$0xf]
  %v5015 = vld [vmem:[%s2032 + $0x34] sm:$0xf]
  %v5016 = vld [vmem:[%s2032 + $0x38] sm:$0xf]
  %v5017 = vld [vmem:[%s2032 + $0x3c] sm:$0xf]
  %v5018 = vunpack.c.l.bf16 %v5002
  %v5019 = vunpack.c.l.bf16 %v5003
  %v5020 = vunpack.c.l.bf16 %v5004
  %v5021 = vunpack.c.l.bf16 %v5005
  %v5022 = vunpack.c.l.bf16 %v5006
  %v5023 = vunpack.c.l.bf16 %v5007
  %v5024 = vunpack.c.l.bf16 %v5008
  %v5025 = vunpack.c.l.bf16 %v5009
  %v5026 = vunpack.c.l.bf16 %v5010
  %v5027 = vunpack.c.l.bf16 %v5011
  %v5028 = vunpack.c.l.bf16 %v5012
  %v5029 = vunpack.c.l.bf16 %v5013
  %v5030 = vunpack.c.l.bf16 %v5014
  %v5031 = vunpack.c.l.bf16 %v5015
  %v5032 = vunpack.c.l.bf16 %v5016
  %v5033 = vunpack.c.l.bf16 %v5017
  %v5034 = vadd.f32 %v4892, %v5018
  %v5035 = vadd.f32 %v4895, %v5019
  %v5036 = vadd.f32 %v4900, %v5020
  %v5037 = vadd.f32 %v4903, %v5021
  %v5038 = vadd.f32 %v4908, %v5022
  %v5039 = vadd.f32 %v4911, %v5023
  %v5040 = vadd.f32 %v4916, %v5024
  %v5041 = vadd.f32 %v4919, %v5025
  %v5042 = vadd.f32 %v4924, %v5026
  %v5043 = vadd.f32 %v4927, %v5027
  %v5044 = vadd.f32 %v4932, %v5028
  %v5045 = vadd.f32 %v4935, %v5029
  %v5046 = vadd.f32 %v4940, %v5030
  %v5047 = vadd.f32 %v4943, %v5031
  %v5048 = vadd.f32 %v4948, %v5032
  %v5049 = vadd.f32 %v4951, %v5033
  %vm5050 = vcmp.gt.s32.totalorder %v3077, 3
  %vm5051 = vcmp.gt.s32.totalorder %v3077, 4
  %v5052 = vxor.u32 %v4986, 2147483648
  %v5053 = vxor.u32 %v4987, 2147483648
  %v5054 = vxor.u32 %v4988, 2147483648
  %v5055 = vxor.u32 %v4989, 2147483648
  %v5056 = vmul.f32 %v5052, 1.442695
  %v5057 = vpow.pop %v5056
  %v5058 = vmul.f32 %v5053, 1.442695
  %v5059 = vpow.pop %v5058
  %v5060 = vmul.f32 %v5054, 1.442695
  %v5061 = vpow.pop %v5060
  %v5062 = vmul.f32 %v5055, 1.442695
  %v5063 = vpow.pop %v5062
  %v5064 = vadd.f32 %v5057, 1.0
  %v5065 = vadd.f32 %v5059, 1.0
  %v5066 = vadd.f32 %v5061, 1.0
  %v5067 = vadd.f32 %v5063, 1.0
  %v5068 = vrcp.pop %v5064
  %v5069 = vmul.f32 1.0, %v5068
  %v5070 = vrcp.pop %v5065
  %v5071 = vmul.f32 1.0, %v5070
  %v5072 = vrcp.pop %v5066
  %v5073 = vmul.f32 1.0, %v5072
  %v5074 = vrcp.pop %v5067
  %v5075 = vmul.f32 1.0, %v5074
  %v5076 = vxor.u32 %v4990, 2147483648
  %v5077 = vxor.u32 %v4991, 2147483648
  %v5078 = vxor.u32 %v4992, 2147483648
  %v5079 = vxor.u32 %v4993, 2147483648
  %v5080 = vmul.f32 %v5076, 1.442695
  %v5081 = vpow.pop %v5080
  %v5082 = vmul.f32 %v5077, 1.442695
  %v5083 = vpow.pop %v5082
  %v5084 = vmul.f32 %v5078, 1.442695
  %v5085 = vpow.pop %v5084
  %v5086 = vmul.f32 %v5079, 1.442695
  %v5087 = vpow.pop %v5086
  %v5088 = vadd.f32 %v5081, 1.0
  %v5089 = vadd.f32 %v5083, 1.0
  %v5090 = vadd.f32 %v5085, 1.0
  %v5091 = vadd.f32 %v5087, 1.0
  %v5092 = vrcp.pop %v5088
  %v5093 = vmul.f32 1.0, %v5092
  %v5094 = vrcp.pop %v5089
  %v5095 = vmul.f32 1.0, %v5094
  %v5096 = vrcp.pop %v5090
  %v5097 = vmul.f32 1.0, %v5096
  %v5098 = vrcp.pop %v5091
  %v5099 = vmul.f32 1.0, %v5098
  %v5100 = vtanh.pop %v4994
  %v5101 = vtanh.pop %v4995
  %v5102 = vtanh.pop %v4996
  %v5103 = vtanh.pop %v4997
  %v5104 = vxor.u32 %v4998, 2147483648
  %v5105 = vxor.u32 %v4999, 2147483648
  %v5106 = vxor.u32 %v5000, 2147483648
  %v5107 = vxor.u32 %v5001, 2147483648
  %v5108 = vmul.f32 %v5104, 1.442695
  %v5109 = vpow.pop %v5108
  %v5110 = vmul.f32 %v5105, 1.442695
  %v5111 = vpow.pop %v5110
  %v5112 = vmul.f32 %v5106, 1.442695
  %v5113 = vpow.pop %v5112
  %v5114 = vmul.f32 %v5107, 1.442695
  %v5115 = vpow.pop %v5114
  %v5116 = vadd.f32 %v5109, 1.0
  %v5117 = vadd.f32 %v5111, 1.0
  %v5118 = vadd.f32 %v5113, 1.0
  %v5119 = vadd.f32 %v5115, 1.0
  %v5120 = vrcp.pop %v5116
  %v5121 = vmul.f32 1.0, %v5120
  %v5122 = vrcp.pop %v5117
  %v5123 = vmul.f32 1.0, %v5122
  %v5124 = vrcp.pop %v5118
  %v5125 = vmul.f32 1.0, %v5124
  %v5126 = vrcp.pop %v5119
  %v5127 = vmul.f32 1.0, %v5126
  %v5128 = vmul.f32 %v5093, %v4625
  %v5129 = vmul.f32 %v5095, %v4626
  %v5130 = vmul.f32 %v5097, %v4627
  %v5131 = vmul.f32 %v5099, %v4628
  %v5132 = vmul.f32 %v5069, %v5100
  %v5133 = vmul.f32 %v5071, %v5101
  %v5134 = vmul.f32 %v5073, %v5102
  %v5135 = vmul.f32 %v5075, %v5103
  %v5136 = vadd.f32 %v5128, %v5132
  %v5137 = vadd.f32 %v5129, %v5133
  %v5138 = vadd.f32 %v5130, %v5134
  %v5139 = vadd.f32 %v5131, %v5135
  %v5140 = vtanh.pop %v5136
  %v5141 = vtanh.pop %v5137
  %v5142 = vtanh.pop %v5138
  %v5143 = vtanh.pop %v5139
  %v5144 = vmul.f32 %v5121, %v5140
  %v5145 = vmul.f32 %v5123, %v5141
  %v5146 = vmul.f32 %v5125, %v5142
  %v5147 = vmul.f32 %v5127, %v5143
  %v5148 = vsel %vm5050, 1, 0
  %v5149 = vlaneseq
  %v5150 = vshrl.u32 %v5149, 7
  %v5151 = vsub.s32 0, %v5150
  %v5152 = vrot.slane %v5148, %v5151
  %vm5153 = vcmp.eq.s32.totalorder %v5152, 1
  %v5154 = vsel %vm5153, %v5144, %v4621
  %v5155 = vsel %vm5153, %v5145, %v4622
  %v5156 = vsel %vm5153, %v5146, %v4623
  %v5157 = vsel %vm5153, %v5147, %v4624
  %v5158 = vsel %vm5153, %v5136, %v4625
  %v5159 = vsel %vm5153, %v5137, %v4626
  %v5160 = vsel %vm5153, %v5138, %v4627
  %v5161 = vsel %vm5153, %v5139, %v4628
  %v5162 = vxor.u32 %v5034, 2147483648
  %v5163 = vxor.u32 %v5035, 2147483648
  %v5164 = vxor.u32 %v5036, 2147483648
  %v5165 = vxor.u32 %v5037, 2147483648
  %v5166 = vmul.f32 %v5162, 1.442695
  %v5167 = vpow.pop %v5166
  %v5168 = vmul.f32 %v5163, 1.442695
  %v5169 = vpow.pop %v5168
  %v5170 = vmul.f32 %v5164, 1.442695
  %v5171 = vpow.pop %v5170
  %v5172 = vmul.f32 %v5165, 1.442695
  %v5173 = vpow.pop %v5172
  %v5174 = vadd.f32 %v5167, 1.0
  %v5175 = vadd.f32 %v5169, 1.0
  %v5176 = vadd.f32 %v5171, 1.0
  %v5177 = vadd.f32 %v5173, 1.0
  %v5178 = vrcp.pop %v5174
  %v5179 = vmul.f32 1.0, %v5178
  %v5180 = vrcp.pop %v5175
  %v5181 = vmul.f32 1.0, %v5180
  %v5182 = vrcp.pop %v5176
  %v5183 = vmul.f32 1.0, %v5182
  %v5184 = vrcp.pop %v5177
  %v5185 = vmul.f32 1.0, %v5184
  %v5186 = vxor.u32 %v5038, 2147483648
  %v5187 = vxor.u32 %v5039, 2147483648
  %v5188 = vxor.u32 %v5040, 2147483648
  %v5189 = vxor.u32 %v5041, 2147483648
  %v5190 = vmul.f32 %v5186, 1.442695
  %v5191 = vpow.pop %v5190
  %v5192 = vmul.f32 %v5187, 1.442695
  %v5193 = vpow.pop %v5192
  %v5194 = vmul.f32 %v5188, 1.442695
  %v5195 = vpow.pop %v5194
  %v5196 = vmul.f32 %v5189, 1.442695
  %v5197 = vpow.pop %v5196
  %v5198 = vadd.f32 %v5191, 1.0
  %v5199 = vadd.f32 %v5193, 1.0
  %v5200 = vadd.f32 %v5195, 1.0
  %v5201 = vadd.f32 %v5197, 1.0
  %v5202 = vrcp.pop %v5198
  %v5203 = vmul.f32 1.0, %v5202
  %v5204 = vrcp.pop %v5199
  %v5205 = vmul.f32 1.0, %v5204
  %v5206 = vrcp.pop %v5200
  %v5207 = vmul.f32 1.0, %v5206
  %v5208 = vrcp.pop %v5201
  %v5209 = vmul.f32 1.0, %v5208
  %v5210 = vtanh.pop %v5042
  %v5211 = vtanh.pop %v5043
  %v5212 = vtanh.pop %v5044
  %v5213 = vtanh.pop %v5045
  %v5214 = vxor.u32 %v5046, 2147483648
  %v5215 = vxor.u32 %v5047, 2147483648
  %v5216 = vxor.u32 %v5048, 2147483648
  %v5217 = vxor.u32 %v5049, 2147483648
  %v5218 = vmul.f32 %v5214, 1.442695
  %v5219 = vpow.pop %v5218
  %v5220 = vmul.f32 %v5215, 1.442695
  %v5221 = vpow.pop %v5220
  %v5222 = vmul.f32 %v5216, 1.442695
  %v5223 = vpow.pop %v5222
  %v5224 = vmul.f32 %v5217, 1.442695
  %v5225 = vpow.pop %v5224
  %v5226 = vadd.f32 %v5219, 1.0
  %v5227 = vadd.f32 %v5221, 1.0
  %v5228 = vadd.f32 %v5223, 1.0
  %v5229 = vadd.f32 %v5225, 1.0
  %v5230 = vrcp.pop %v5226
  %v5231 = vmul.f32 1.0, %v5230
  %v5232 = vrcp.pop %v5227
  %v5233 = vmul.f32 1.0, %v5232
  %v5234 = vrcp.pop %v5228
  %v5235 = vmul.f32 1.0, %v5234
  %v5236 = vrcp.pop %v5229
  %v5237 = vmul.f32 1.0, %v5236
  %v5238 = vmul.f32 %v5203, %v4735
  %v5239 = vmul.f32 %v5205, %v4736
  %v5240 = vmul.f32 %v5207, %v4737
  %v5241 = vmul.f32 %v5209, %v4738
  %v5242 = vmul.f32 %v5179, %v5210
  %v5243 = vmul.f32 %v5181, %v5211
  %v5244 = vmul.f32 %v5183, %v5212
  %v5245 = vmul.f32 %v5185, %v5213
  %v5246 = vadd.f32 %v5238, %v5242
  %v5247 = vadd.f32 %v5239, %v5243
  %v5248 = vadd.f32 %v5240, %v5244
  %v5249 = vadd.f32 %v5241, %v5245
  %v5250 = vtanh.pop %v5246
  %v5251 = vtanh.pop %v5247
  %v5252 = vtanh.pop %v5248
  %v5253 = vtanh.pop %v5249
  %v5254 = vmul.f32 %v5231, %v5250
  %v5255 = vmul.f32 %v5233, %v5251
  %v5256 = vmul.f32 %v5235, %v5252
  %v5257 = vmul.f32 %v5237, %v5253
  %v5258 = vsel %vm5051, 1, 0
  %v5259 = vlaneseq
  %v5260 = vshrl.u32 %v5259, 7
  %v5261 = vsub.s32 0, %v5260
  %v5262 = vrot.slane %v5258, %v5261
  %vm5263 = vcmp.eq.s32.totalorder %v5262, 1
  %v5264 = vsel %vm5263, %v5254, %v4731
  %v5265 = vsel %vm5263, %v5255, %v4732
  %v5266 = vsel %vm5263, %v5256, %v4733
  %v5267 = vsel %vm5263, %v5257, %v4734
  %v5268 = vsel %vm5263, %v5246, %v4735
  %v5269 = vsel %vm5263, %v5247, %v4736
  %v5270 = vsel %vm5263, %v5248, %v4737
  %v5271 = vsel %vm5263, %v5249, %v4738
  %v5272 = vsel %vm5153, %v5144, 0.0
  %v5273 = vsel %vm5153, %v5145, 0.0
  %v5274 = vsel %vm5153, %v5146, 0.0
  %v5275 = vsel %vm5153, %v5147, 0.0
  %v5276 = vpack.c.bf16 %v5273, %v5272
  %v5277 = vpack.c.bf16 %v5275, %v5274
  %v5280 = vunpack.c.l.b16 %v5276
  %v5281 = vunpack.c.h.b16 %v5276
  %v5282 = vunpack.c.l.b16 %v5277
  %v5283 = vunpack.c.h.b16 %v5277
  %v5284 = vpack.c.b16 %v5280, %v5280
  %v5285 = vpack.c.b16 %v5281, %v5281
  %v5286 = vpack.c.b16 %v5282, %v5282
  %v5287 = vpack.c.b16 %v5283, %v5283
  %s5292 = scalar_lea.vmem [#allocation4], 48
  %5293 = vst.msk [vmem:[%s5292] sm:$0xf] %vm632, %v5284
  %5294 = vst.msk [vmem:[%s5292 + $0x4] sm:$0xf] %vm632, %v5285
  %5295 = vst.msk [vmem:[%s5292 + $0x8] sm:$0xf] %vm632, %v5286
  %5296 = vst.msk [vmem:[%s5292 + $0xc] sm:$0xf] %vm632, %v5287
  %v5297 = vsel %vm5263, %v5254, 0.0
  %v5298 = vsel %vm5263, %v5255, 0.0
  %v5299 = vsel %vm5263, %v5256, 0.0
  %v5300 = vsel %vm5263, %v5257, 0.0
  %v5301 = vpack.c.bf16 %v5298, %v5297
  %v5302 = vpack.c.bf16 %v5300, %v5299
  %v5305 = vunpack.c.l.b16 %v5301
  %v5306 = vunpack.c.h.b16 %v5301
  %v5307 = vunpack.c.l.b16 %v5302
  %v5308 = vunpack.c.h.b16 %v5302
  %v5309 = vpack.c.b16 %v5305, %v5305
  %v5310 = vpack.c.b16 %v5306, %v5306
  %v5311 = vpack.c.b16 %v5307, %v5307
  %v5312 = vpack.c.b16 %v5308, %v5308
  %s5317 = scalar_lea.vmem [#allocation5], 64
  %5318 = vst.msk [vmem:[%s5317] sm:$0xf] %vm632, %v5309
  %5319 = vst.msk [vmem:[%s5317 + $0x4] sm:$0xf] %vm632, %v5310
  %5320 = vst.msk [vmem:[%s5317 + $0x8] sm:$0xf] %vm632, %v5311
  %5321 = vst.msk [vmem:[%s5317 + $0xc] sm:$0xf] %vm632, %v5312
  %v5322 = vpack.c.bf16 %v5155, %v5154
  %v5323 = vpack.c.bf16 %v5157, %v5156
  %v5324 = vpack.c.bf16 %v5265, %v5264
  %v5325 = vpack.c.bf16 %v5267, %v5266
  %5326 = vmatprep.subr.bf16.mxu0 0
  %5327 = vmatpush1.bf16.msra.mxu0 0
  %5328 = vmatprep.subr.bf16.mxu0 0
  %5329 = vmatpush1.bf16.msra.mxu0 0
  %5330 = vmatprep.subr.bf16.mxu0 0
  %5331 = vmatpush1.bf16.msra.mxu0 0
  %5332 = vmatprep.subr.bf16.mxu0 0
  %5333 = vmatpush1.bf16.msra.mxu0 0
  %5334 = vmatprep.subr.bf16.mxu0 0
  %5335 = vmatpush1.bf16.msra.mxu0 %v5325
  %5336 = vmatprep.subr.bf16.mxu0 0
  %5337 = vmatpush1.bf16.msra.mxu0 %v5324
  %5338 = vmatprep.subr.bf16.mxu0 0
  %5339 = vmatpush1.bf16.msra.mxu0 %v5323
  %5340 = vmatprep.subr.bf16.mxu0 0
  %5341 = vmatpush1.bf16.msra.mxu0 %v5322
  %5342 = vmatprep.subr.bf16.mxu0 0
  %5343 = vmatpush2.bf16.msra.mxu0 0
  %5344 = vmatprep.subr.bf16.mxu0 0
  %5345 = vmatpush2.bf16.msra.mxu0 0
  %5346 = vmatprep.subr.bf16.mxu0 0
  %5347 = vmatpush2.bf16.msra.mxu0 0
  %5348 = vmatprep.subr.bf16.mxu0 0
  %5349 = vmatpush2.bf16.msra.mxu0 0
  %5350 = vmatprep.subr.bf16.mxu0 0
  %5351 = vmatpush2.bf16.msra.mxu0 0
  %5352 = vmatprep.subr.bf16.mxu0 0
  %5353 = vmatpush2.bf16.msra.mxu0 0
  %5354 = vmatprep.subr.bf16.mxu0 0
  %5355 = vmatpush2.bf16.msra.mxu0 0
  %5356 = vmatprep.subr.bf16.mxu0 0
  %5357 = vmatpush2.bf16.msra.mxu0 0
  %5358 = vmatprep.mubr.bf16.mxu0 0
  %5359 = vmatmul.mubr.bf16.gmra.mxu0 %v3160
  %v5360 = vpop.f32.mrf.mxu0
  %v5361 = vadd.f32 0.0, %v5360
  %v5362 = vpop.f32.mrf.mxu0
  %v5363 = vpop.f32.mrf.mxu0
  %v5364 = vadd.f32 0.0, %v5363
  %v5365 = vpop.f32.mrf.mxu0
  %5366 = vmatprep.mubr.bf16.mxu0 0
  %5367 = vmatmul.mubr.bf16.gmra.mxu0 %v3163
  %v5368 = vpop.f32.mrf.mxu0
  %v5369 = vadd.f32 0.0, %v5368
  %v5370 = vpop.f32.mrf.mxu0
  %v5371 = vpop.f32.mrf.mxu0
  %v5372 = vadd.f32 0.0, %v5371
  %v5373 = vpop.f32.mrf.mxu0
  %5374 = vmatprep.mubr.bf16.mxu0 0
  %5375 = vmatmul.mubr.bf16.gmra.mxu0 %v3166
  %v5376 = vpop.f32.mrf.mxu0
  %v5377 = vadd.f32 0.0, %v5376
  %v5378 = vpop.f32.mrf.mxu0
  %v5379 = vpop.f32.mrf.mxu0
  %v5380 = vadd.f32 0.0, %v5379
  %v5381 = vpop.f32.mrf.mxu0
  %5382 = vmatprep.mubr.bf16.mxu0 0
  %5383 = vmatmul.mubr.bf16.gmra.mxu0 %v3169
  %v5384 = vpop.f32.mrf.mxu0
  %v5385 = vadd.f32 0.0, %v5384
  %v5386 = vpop.f32.mrf.mxu0
  %v5387 = vpop.f32.mrf.mxu0
  %v5388 = vadd.f32 0.0, %v5387
  %v5389 = vpop.f32.mrf.mxu0
  %5390 = vmatprep.mubr.bf16.mxu0 0
  %5391 = vmatmul.mubr.bf16.gmra.mxu0 %v3172
  %v5392 = vpop.f32.mrf.mxu0
  %v5393 = vadd.f32 0.0, %v5392
  %v5394 = vpop.f32.mrf.mxu0
  %v5395 = vpop.f32.mrf.mxu0
  %v5396 = vadd.f32 0.0, %v5395
  %v5397 = vpop.f32.mrf.mxu0
  %5398 = vmatprep.mubr.bf16.mxu0 0
  %5399 = vmatmul.mubr.bf16.gmra.mxu0 %v3175
  %v5400 = vpop.f32.mrf.mxu0
  %v5401 = vadd.f32 0.0, %v5400
  %v5402 = vpop.f32.mrf.mxu0
  %v5403 = vpop.f32.mrf.mxu0
  %v5404 = vadd.f32 0.0, %v5403
  %v5405 = vpop.f32.mrf.mxu0
  %5406 = vmatprep.mubr.bf16.mxu0 0
  %5407 = vmatmul.mubr.bf16.gmra.mxu0 %v3178
  %v5408 = vpop.f32.mrf.mxu0
  %v5409 = vadd.f32 0.0, %v5408
  %v5410 = vpop.f32.mrf.mxu0
  %v5411 = vpop.f32.mrf.mxu0
  %v5412 = vadd.f32 0.0, %v5411
  %v5413 = vpop.f32.mrf.mxu0
  %5414 = vmatprep.mubr.bf16.mxu0 0
  %5415 = vmatmul.mubr.bf16.gmra.mxu0 %v3181
  %v5416 = vpop.f32.mrf.mxu0
  %v5417 = vadd.f32 0.0, %v5416
  %v5418 = vpop.f32.mrf.mxu0
  %v5419 = vpop.f32.mrf.mxu0
  %v5420 = vadd.f32 0.0, %v5419
  %v5421 = vpop.f32.mrf.mxu0
  %5422 = vmatprep.mubr.bf16.mxu0 0
  %5423 = vmatmul.mubr.bf16.gmra.mxu0 %v3184
  %v5424 = vpop.f32.mrf.mxu0
  %v5425 = vadd.f32 0.0, %v5424
  %v5426 = vpop.f32.mrf.mxu0
  %v5427 = vpop.f32.mrf.mxu0
  %v5428 = vadd.f32 0.0, %v5427
  %v5429 = vpop.f32.mrf.mxu0
  %5430 = vmatprep.mubr.bf16.mxu0 0
  %5431 = vmatmul.mubr.bf16.gmra.mxu0 %v3187
  %v5432 = vpop.f32.mrf.mxu0
  %v5433 = vadd.f32 0.0, %v5432
  %v5434 = vpop.f32.mrf.mxu0
  %v5435 = vpop.f32.mrf.mxu0
  %v5436 = vadd.f32 0.0, %v5435
  %v5437 = vpop.f32.mrf.mxu0
  %5438 = vmatprep.mubr.bf16.mxu0 0
  %5439 = vmatmul.mubr.bf16.gmra.mxu0 %v3190
  %v5440 = vpop.f32.mrf.mxu0
  %v5441 = vadd.f32 0.0, %v5440
  %v5442 = vpop.f32.mrf.mxu0
  %v5443 = vpop.f32.mrf.mxu0
  %v5444 = vadd.f32 0.0, %v5443
  %v5445 = vpop.f32.mrf.mxu0
  %5446 = vmatprep.mubr.bf16.mxu0 0
  %5447 = vmatmul.mubr.bf16.gmra.mxu0 %v3193
  %v5448 = vpop.f32.mrf.mxu0
  %v5449 = vadd.f32 0.0, %v5448
  %v5450 = vpop.f32.mrf.mxu0
  %v5451 = vpop.f32.mrf.mxu0
  %v5452 = vadd.f32 0.0, %v5451
  %v5453 = vpop.f32.mrf.mxu0
  %5454 = vmatprep.mubr.bf16.mxu0 0
  %5455 = vmatmul.mubr.bf16.gmra.mxu0 %v3196
  %v5456 = vpop.f32.mrf.mxu0
  %v5457 = vadd.f32 0.0, %v5456
  %v5458 = vpop.f32.mrf.mxu0
  %v5459 = vpop.f32.mrf.mxu0
  %v5460 = vadd.f32 0.0, %v5459
  %v5461 = vpop.f32.mrf.mxu0
  %5462 = vmatprep.mubr.bf16.mxu0 0
  %5463 = vmatmul.mubr.bf16.gmra.mxu0 %v3199
  %v5464 = vpop.f32.mrf.mxu0
  %v5465 = vadd.f32 0.0, %v5464
  %v5466 = vpop.f32.mrf.mxu0
  %v5467 = vpop.f32.mrf.mxu0
  %v5468 = vadd.f32 0.0, %v5467
  %v5469 = vpop.f32.mrf.mxu0
  %5470 = vmatprep.mubr.bf16.mxu0 0
  %5471 = vmatmul.mubr.bf16.gmra.mxu0 %v3202
  %v5472 = vpop.f32.mrf.mxu0
  %v5473 = vadd.f32 0.0, %v5472
  %v5474 = vpop.f32.mrf.mxu0
  %v5475 = vpop.f32.mrf.mxu0
  %v5476 = vadd.f32 0.0, %v5475
  %v5477 = vpop.f32.mrf.mxu0
  %5478 = vmatprep.mubr.bf16.mxu0 0
  %5479 = vmatmul.mubr.bf16.gmra.mxu0 %v3205
  %v5480 = vpop.f32.mrf.mxu0
  %v5481 = vadd.f32 0.0, %v5480
  %v5482 = vpop.f32.mrf.mxu0
  %v5483 = vpop.f32.mrf.mxu0
  %v5484 = vadd.f32 0.0, %v5483
  %v5485 = vpop.f32.mrf.mxu0
  %5486 = vdwg.mxu0
  %v5487 = vld [vmem:[%s1959] sm:$0xf]
  %v5488 = vld [vmem:[%s1959 + $0x4] sm:$0xf]
  %v5489 = vld [vmem:[%s1959 + $0x8] sm:$0xf]
  %v5490 = vld [vmem:[%s1959 + $0xc] sm:$0xf]
  %v5491 = vld [vmem:[%s1959 + $0x10] sm:$0xf]
  %v5492 = vld [vmem:[%s1959 + $0x14] sm:$0xf]
  %v5493 = vld [vmem:[%s1959 + $0x18] sm:$0xf]
  %v5494 = vld [vmem:[%s1959 + $0x1c] sm:$0xf]
  %v5495 = vld [vmem:[%s1959 + $0x20] sm:$0xf]
  %v5496 = vld [vmem:[%s1959 + $0x24] sm:$0xf]
  %v5497 = vld [vmem:[%s1959 + $0x28] sm:$0xf]
  %v5498 = vld [vmem:[%s1959 + $0x2c] sm:$0xf]
  %v5499 = vld [vmem:[%s1959 + $0x30] sm:$0xf]
  %v5500 = vld [vmem:[%s1959 + $0x34] sm:$0xf]
  %v5501 = vld [vmem:[%s1959 + $0x38] sm:$0xf]
  %v5502 = vld [vmem:[%s1959 + $0x3c] sm:$0xf]
  %v5503 = vunpack.c.l.bf16 %v5487
  %v5504 = vunpack.c.l.bf16 %v5488
  %v5505 = vunpack.c.l.bf16 %v5489
  %v5506 = vunpack.c.l.bf16 %v5490
  %v5507 = vunpack.c.l.bf16 %v5491
  %v5508 = vunpack.c.l.bf16 %v5492
  %v5509 = vunpack.c.l.bf16 %v5493
  %v5510 = vunpack.c.l.bf16 %v5494
  %v5511 = vunpack.c.l.bf16 %v5495
  %v5512 = vunpack.c.l.bf16 %v5496
  %v5513 = vunpack.c.l.bf16 %v5497
  %v5514 = vunpack.c.l.bf16 %v5498
  %v5515 = vunpack.c.l.bf16 %v5499
  %v5516 = vunpack.c.l.bf16 %v5500
  %v5517 = vunpack.c.l.bf16 %v5501
  %v5518 = vunpack.c.l.bf16 %v5502
  %v5519 = vadd.f32 %v5361, %v5503
  %v5520 = vadd.f32 %v5364, %v5504
  %v5521 = vadd.f32 %v5369, %v5505
  %v5522 = vadd.f32 %v5372, %v5506
  %v5523 = vadd.f32 %v5377, %v5507
  %v5524 = vadd.f32 %v5380, %v5508
  %v5525 = vadd.f32 %v5385, %v5509
  %v5526 = vadd.f32 %v5388, %v5510
  %v5527 = vadd.f32 %v5393, %v5511
  %v5528 = vadd.f32 %v5396, %v5512
  %v5529 = vadd.f32 %v5401, %v5513
  %v5530 = vadd.f32 %v5404, %v5514
  %v5531 = vadd.f32 %v5409, %v5515
  %v5532 = vadd.f32 %v5412, %v5516
  %v5533 = vadd.f32 %v5417, %v5517
  %v5534 = vadd.f32 %v5420, %v5518
  %v5535 = vld [vmem:[%s1700] sm:$0xf]
  %v5536 = vld [vmem:[%s1700 + $0x4] sm:$0xf]
  %v5537 = vld [vmem:[%s1700 + $0x8] sm:$0xf]
  %v5538 = vld [vmem:[%s1700 + $0xc] sm:$0xf]
  %v5539 = vld [vmem:[%s1700 + $0x10] sm:$0xf]
  %v5540 = vld [vmem:[%s1700 + $0x14] sm:$0xf]
  %v5541 = vld [vmem:[%s1700 + $0x18] sm:$0xf]
  %v5542 = vld [vmem:[%s1700 + $0x1c] sm:$0xf]
  %v5543 = vld [vmem:[%s1700 + $0x20] sm:$0xf]
  %v5544 = vld [vmem:[%s1700 + $0x24] sm:$0xf]
  %v5545 = vld [vmem:[%s1700 + $0x28] sm:$0xf]
  %v5546 = vld [vmem:[%s1700 + $0x2c] sm:$0xf]
  %v5547 = vld [vmem:[%s1700 + $0x30] sm:$0xf]
  %v5548 = vld [vmem:[%s1700 + $0x34] sm:$0xf]
  %v5549 = vld [vmem:[%s1700 + $0x38] sm:$0xf]
  %v5550 = vld [vmem:[%s1700 + $0x3c] sm:$0xf]
  %v5551 = vunpack.c.l.bf16 %v5535
  %v5552 = vunpack.c.l.bf16 %v5536
  %v5553 = vunpack.c.l.bf16 %v5537
  %v5554 = vunpack.c.l.bf16 %v5538
  %v5555 = vunpack.c.l.bf16 %v5539
  %v5556 = vunpack.c.l.bf16 %v5540
  %v5557 = vunpack.c.l.bf16 %v5541
  %v5558 = vunpack.c.l.bf16 %v5542
  %v5559 = vunpack.c.l.bf16 %v5543
  %v5560 = vunpack.c.l.bf16 %v5544
  %v5561 = vunpack.c.l.bf16 %v5545
  %v5562 = vunpack.c.l.bf16 %v5546
  %v5563 = vunpack.c.l.bf16 %v5547
  %v5564 = vunpack.c.l.bf16 %v5548
  %v5565 = vunpack.c.l.bf16 %v5549
  %v5566 = vunpack.c.l.bf16 %v5550
  %v5567 = vadd.f32 %v5425, %v5551
  %v5568 = vadd.f32 %v5428, %v5552
  %v5569 = vadd.f32 %v5433, %v5553
  %v5570 = vadd.f32 %v5436, %v5554
  %v5571 = vadd.f32 %v5441, %v5555
  %v5572 = vadd.f32 %v5444, %v5556
  %v5573 = vadd.f32 %v5449, %v5557
  %v5574 = vadd.f32 %v5452, %v5558
  %v5575 = vadd.f32 %v5457, %v5559
  %v5576 = vadd.f32 %v5460, %v5560
  %v5577 = vadd.f32 %v5465, %v5561
  %v5578 = vadd.f32 %v5468, %v5562
  %v5579 = vadd.f32 %v5473, %v5563
  %v5580 = vadd.f32 %v5476, %v5564
  %v5581 = vadd.f32 %v5481, %v5565
  %v5582 = vadd.f32 %v5484, %v5566
  %v5583 = vxor.u32 %v5519, 2147483648
  %v5584 = vxor.u32 %v5520, 2147483648
  %v5585 = vxor.u32 %v5521, 2147483648
  %v5586 = vxor.u32 %v5522, 2147483648
  %v5587 = vmul.f32 %v5583, 1.442695
  %v5588 = vpow.pop %v5587
  %v5589 = vmul.f32 %v5584, 1.442695
  %v5590 = vpow.pop %v5589
  %v5591 = vmul.f32 %v5585, 1.442695
  %v5592 = vpow.pop %v5591
  %v5593 = vmul.f32 %v5586, 1.442695
  %v5594 = vpow.pop %v5593
  %v5595 = vadd.f32 %v5588, 1.0
  %v5596 = vadd.f32 %v5590, 1.0
  %v5597 = vadd.f32 %v5592, 1.0
  %v5598 = vadd.f32 %v5594, 1.0
  %v5599 = vrcp.pop %v5595
  %v5600 = vmul.f32 1.0, %v5599
  %v5601 = vrcp.pop %v5596
  %v5602 = vmul.f32 1.0, %v5601
  %v5603 = vrcp.pop %v5597
  %v5604 = vmul.f32 1.0, %v5603
  %v5605 = vrcp.pop %v5598
  %v5606 = vmul.f32 1.0, %v5605
  %v5607 = vxor.u32 %v5523, 2147483648
  %v5608 = vxor.u32 %v5524, 2147483648
  %v5609 = vxor.u32 %v5525, 2147483648
  %v5610 = vxor.u32 %v5526, 2147483648
  %v5611 = vmul.f32 %v5607, 1.442695
  %v5612 = vpow.pop %v5611
  %v5613 = vmul.f32 %v5608, 1.442695
  %v5614 = vpow.pop %v5613
  %v5615 = vmul.f32 %v5609, 1.442695
  %v5616 = vpow.pop %v5615
  %v5617 = vmul.f32 %v5610, 1.442695
  %v5618 = vpow.pop %v5617
  %v5619 = vadd.f32 %v5612, 1.0
  %v5620 = vadd.f32 %v5614, 1.0
  %v5621 = vadd.f32 %v5616, 1.0
  %v5622 = vadd.f32 %v5618, 1.0
  %v5623 = vrcp.pop %v5619
  %v5624 = vmul.f32 1.0, %v5623
  %v5625 = vrcp.pop %v5620
  %v5626 = vmul.f32 1.0, %v5625
  %v5627 = vrcp.pop %v5621
  %v5628 = vmul.f32 1.0, %v5627
  %v5629 = vrcp.pop %v5622
  %v5630 = vmul.f32 1.0, %v5629
  %v5631 = vtanh.pop %v5527
  %v5632 = vtanh.pop %v5528
  %v5633 = vtanh.pop %v5529
  %v5634 = vtanh.pop %v5530
  %v5635 = vxor.u32 %v5531, 2147483648
  %v5636 = vxor.u32 %v5532, 2147483648
  %v5637 = vxor.u32 %v5533, 2147483648
  %v5638 = vxor.u32 %v5534, 2147483648
  %v5639 = vmul.f32 %v5635, 1.442695
  %v5640 = vpow.pop %v5639
  %v5641 = vmul.f32 %v5636, 1.442695
  %v5642 = vpow.pop %v5641
  %v5643 = vmul.f32 %v5637, 1.442695
  %v5644 = vpow.pop %v5643
  %v5645 = vmul.f32 %v5638, 1.442695
  %v5646 = vpow.pop %v5645
  %v5647 = vadd.f32 %v5640, 1.0
  %v5648 = vadd.f32 %v5642, 1.0
  %v5649 = vadd.f32 %v5644, 1.0
  %v5650 = vadd.f32 %v5646, 1.0
  %v5651 = vrcp.pop %v5647
  %v5652 = vmul.f32 1.0, %v5651
  %v5653 = vrcp.pop %v5648
  %v5654 = vmul.f32 1.0, %v5653
  %v5655 = vrcp.pop %v5649
  %v5656 = vmul.f32 1.0, %v5655
  %v5657 = vrcp.pop %v5650
  %v5658 = vmul.f32 1.0, %v5657
  %v5659 = vmul.f32 %v5624, %v5158
  %v5660 = vmul.f32 %v5626, %v5159
  %v5661 = vmul.f32 %v5628, %v5160
  %v5662 = vmul.f32 %v5630, %v5161
  %v5663 = vmul.f32 %v5600, %v5631
  %v5664 = vmul.f32 %v5602, %v5632
  %v5665 = vmul.f32 %v5604, %v5633
  %v5666 = vmul.f32 %v5606, %v5634
  %v5667 = vadd.f32 %v5659, %v5663
  %v5668 = vadd.f32 %v5660, %v5664
  %v5669 = vadd.f32 %v5661, %v5665
  %v5670 = vadd.f32 %v5662, %v5666
  %v5671 = vtanh.pop %v5667
  %v5672 = vtanh.pop %v5668
  %v5673 = vtanh.pop %v5669
  %v5674 = vtanh.pop %v5670
  %v5675 = vmul.f32 %v5652, %v5671
  %v5676 = vmul.f32 %v5654, %v5672
  %v5677 = vmul.f32 %v5656, %v5673
  %v5678 = vmul.f32 %v5658, %v5674
  %v5679 = vsel %vm5263, %v5675, %v5154
  %v5680 = vsel %vm5263, %v5676, %v5155
  %v5681 = vsel %vm5263, %v5677, %v5156
  %v5682 = vsel %vm5263, %v5678, %v5157
  %v5683 = vsel %vm5263, %v5667, %v5158
  %v5684 = vsel %vm5263, %v5668, %v5159
  %v5685 = vsel %vm5263, %v5669, %v5160
  %v5686 = vsel %vm5263, %v5670, %v5161
  %v5687 = vxor.u32 %v5567, 2147483648
  %v5688 = vxor.u32 %v5568, 2147483648
  %v5689 = vxor.u32 %v5569, 2147483648
  %v5690 = vxor.u32 %v5570, 2147483648
  %v5691 = vmul.f32 %v5687, 1.442695
  %v5692 = vpow.pop %v5691
  %v5693 = vmul.f32 %v5688, 1.442695
  %v5694 = vpow.pop %v5693
  %v5695 = vmul.f32 %v5689, 1.442695
  %v5696 = vpow.pop %v5695
  %v5697 = vmul.f32 %v5690, 1.442695
  %v5698 = vpow.pop %v5697
  %v5699 = vadd.f32 %v5692, 1.0
  %v5700 = vadd.f32 %v5694, 1.0
  %v5701 = vadd.f32 %v5696, 1.0
  %v5702 = vadd.f32 %v5698, 1.0
  %v5703 = vrcp.pop %v5699
  %v5704 = vmul.f32 1.0, %v5703
  %v5705 = vrcp.pop %v5700
  %v5706 = vmul.f32 1.0, %v5705
  %v5707 = vrcp.pop %v5701
  %v5708 = vmul.f32 1.0, %v5707
  %v5709 = vrcp.pop %v5702
  %v5710 = vmul.f32 1.0, %v5709
  %v5711 = vxor.u32 %v5571, 2147483648
  %v5712 = vxor.u32 %v5572, 2147483648
  %v5713 = vxor.u32 %v5573, 2147483648
  %v5714 = vxor.u32 %v5574, 2147483648
  %v5715 = vmul.f32 %v5711, 1.442695
  %v5716 = vpow.pop %v5715
  %v5717 = vmul.f32 %v5712, 1.442695
  %v5718 = vpow.pop %v5717
  %v5719 = vmul.f32 %v5713, 1.442695
  %v5720 = vpow.pop %v5719
  %v5721 = vmul.f32 %v5714, 1.442695
  %v5722 = vpow.pop %v5721
  %v5723 = vadd.f32 %v5716, 1.0
  %v5724 = vadd.f32 %v5718, 1.0
  %v5725 = vadd.f32 %v5720, 1.0
  %v5726 = vadd.f32 %v5722, 1.0
  %v5727 = vrcp.pop %v5723
  %v5728 = vmul.f32 1.0, %v5727
  %v5729 = vrcp.pop %v5724
  %v5730 = vmul.f32 1.0, %v5729
  %v5731 = vrcp.pop %v5725
  %v5732 = vmul.f32 1.0, %v5731
  %v5733 = vrcp.pop %v5726
  %v5734 = vmul.f32 1.0, %v5733
  %v5735 = vtanh.pop %v5575
  %v5736 = vtanh.pop %v5576
  %v5737 = vtanh.pop %v5577
  %v5738 = vtanh.pop %v5578
  %v5739 = vxor.u32 %v5579, 2147483648
  %v5740 = vxor.u32 %v5580, 2147483648
  %v5741 = vxor.u32 %v5581, 2147483648
  %v5742 = vxor.u32 %v5582, 2147483648
  %v5743 = vmul.f32 %v5739, 1.442695
  %v5744 = vpow.pop %v5743
  %v5745 = vmul.f32 %v5740, 1.442695
  %v5746 = vpow.pop %v5745
  %v5747 = vmul.f32 %v5741, 1.442695
  %v5748 = vpow.pop %v5747
  %v5749 = vmul.f32 %v5742, 1.442695
  %v5750 = vpow.pop %v5749
  %v5751 = vadd.f32 %v5744, 1.0
  %v5752 = vadd.f32 %v5746, 1.0
  %v5753 = vadd.f32 %v5748, 1.0
  %v5754 = vadd.f32 %v5750, 1.0
  %v5755 = vrcp.pop %v5751
  %v5756 = vmul.f32 1.0, %v5755
  %v5757 = vrcp.pop %v5752
  %v5758 = vmul.f32 1.0, %v5757
  %v5759 = vrcp.pop %v5753
  %v5760 = vmul.f32 1.0, %v5759
  %v5761 = vrcp.pop %v5754
  %v5762 = vmul.f32 1.0, %v5761
  %v5763 = vmul.f32 %v5728, %v5268
  %v5764 = vmul.f32 %v5730, %v5269
  %v5765 = vmul.f32 %v5732, %v5270
  %v5766 = vmul.f32 %v5734, %v5271
  %v5767 = vmul.f32 %v5704, %v5735
  %v5768 = vmul.f32 %v5706, %v5736
  %v5769 = vmul.f32 %v5708, %v5737
  %v5770 = vmul.f32 %v5710, %v5738
  %v5771 = vadd.f32 %v5763, %v5767
  %v5772 = vadd.f32 %v5764, %v5768
  %v5773 = vadd.f32 %v5765, %v5769
  %v5774 = vadd.f32 %v5766, %v5770
  %v5775 = vtanh.pop %v5771
  %v5776 = vtanh.pop %v5772
  %v5777 = vtanh.pop %v5773
  %v5778 = vtanh.pop %v5774
  %v5779 = vmul.f32 %v5756, %v5775
  %v5780 = vmul.f32 %v5758, %v5776
  %v5781 = vmul.f32 %v5760, %v5777
  %v5782 = vmul.f32 %v5762, %v5778
  %v5783 = vsel %vm5153, %v5779, %v5264
  %v5784 = vsel %vm5153, %v5780, %v5265
  %v5785 = vsel %vm5153, %v5781, %v5266
  %v5786 = vsel %vm5153, %v5782, %v5267
  %v5787 = vsel %vm5153, %v5771, %v5268
  %v5788 = vsel %vm5153, %v5772, %v5269
  %v5789 = vsel %vm5153, %v5773, %v5270
  %v5790 = vsel %vm5153, %v5774, %v5271
  %v5791 = vsel %vm5263, %v5675, 0.0
  %v5792 = vsel %vm5263, %v5676, 0.0
  %v5793 = vsel %vm5263, %v5677, 0.0
  %v5794 = vsel %vm5263, %v5678, 0.0
  %v5795 = vpack.c.bf16 %v5792, %v5791
  %v5796 = vpack.c.bf16 %v5794, %v5793
  %v5799 = vunpack.c.l.b16 %v5795
  %v5800 = vunpack.c.h.b16 %v5795
  %v5801 = vunpack.c.l.b16 %v5796
  %v5802 = vunpack.c.h.b16 %v5796
  %v5803 = vpack.c.b16 %v5799, %v5799
  %v5804 = vpack.c.b16 %v5800, %v5800
  %v5805 = vpack.c.b16 %v5801, %v5801
  %v5806 = vpack.c.b16 %v5802, %v5802
  %s5811 = scalar_lea.vmem [#allocation4], 64
  %5812 = vst.msk [vmem:[%s5811] sm:$0xf] %vm632, %v5803
  %5813 = vst.msk [vmem:[%s5811 + $0x4] sm:$0xf] %vm632, %v5804
  %5814 = vst.msk [vmem:[%s5811 + $0x8] sm:$0xf] %vm632, %v5805
  %5815 = vst.msk [vmem:[%s5811 + $0xc] sm:$0xf] %vm632, %v5806
  %v5816 = vsel %vm5153, %v5779, 0.0
  %v5817 = vsel %vm5153, %v5780, 0.0
  %v5818 = vsel %vm5153, %v5781, 0.0
  %v5819 = vsel %vm5153, %v5782, 0.0
  %v5820 = vpack.c.bf16 %v5817, %v5816
  %v5821 = vpack.c.bf16 %v5819, %v5818
  %v5824 = vunpack.c.l.b16 %v5820
  %v5825 = vunpack.c.h.b16 %v5820
  %v5826 = vunpack.c.l.b16 %v5821
  %v5827 = vunpack.c.h.b16 %v5821
  %v5828 = vpack.c.b16 %v5824, %v5824
  %v5829 = vpack.c.b16 %v5825, %v5825
  %v5830 = vpack.c.b16 %v5826, %v5826
  %v5831 = vpack.c.b16 %v5827, %v5827
  %s5836 = scalar_lea.vmem [#allocation5], 48
  %5837 = vst.msk [vmem:[%s5836] sm:$0xf] %vm632, %v5828
  %5838 = vst.msk [vmem:[%s5836 + $0x4] sm:$0xf] %vm632, %v5829
  %5839 = vst.msk [vmem:[%s5836 + $0x8] sm:$0xf] %vm632, %v5830
  %5840 = vst.msk [vmem:[%s5836 + $0xc] sm:$0xf] %vm632, %v5831
  %v5841 = vpack.c.bf16 %v5680, %v5679
  %v5842 = vpack.c.bf16 %v5682, %v5681
  %v5843 = vpack.c.bf16 %v5784, %v5783
  %v5844 = vpack.c.bf16 %v5786, %v5785
  %5845 = vmatprep.subr.bf16.mxu0 0
  %5846 = vmatpush1.bf16.msra.mxu0 0
  %5847 = vmatprep.subr.bf16.mxu0 0
  %5848 = vmatpush1.bf16.msra.mxu0 0
  %5849 = vmatprep.subr.bf16.mxu0 0
  %5850 = vmatpush1.bf16.msra.mxu0 0
  %5851 = vmatprep.subr.bf16.mxu0 0
  %5852 = vmatpush1.bf16.msra.mxu0 0
  %5853 = vmatprep.subr.bf16.mxu0 0
  %5854 = vmatpush1.bf16.msra.mxu0 %v5844
  %5855 = vmatprep.subr.bf16.mxu0 0
  %5856 = vmatpush1.bf16.msra.mxu0 %v5843
  %5857 = vmatprep.subr.bf16.mxu0 0
  %5858 = vmatpush1.bf16.msra.mxu0 %v5842
  %5859 = vmatprep.subr.bf16.mxu0 0
  %5860 = vmatpush1.bf16.msra.mxu0 %v5841
  %5861 = vmatprep.subr.bf16.mxu0 0
  %5862 = vmatpush2.bf16.msra.mxu0 0
  %5863 = vmatprep.subr.bf16.mxu0 0
  %5864 = vmatpush2.bf16.msra.mxu0 0
  %5865 = vmatprep.subr.bf16.mxu0 0
  %5866 = vmatpush2.bf16.msra.mxu0 0
  %5867 = vmatprep.subr.bf16.mxu0 0
  %5868 = vmatpush2.bf16.msra.mxu0 0
  %5869 = vmatprep.subr.bf16.mxu0 0
  %5870 = vmatpush2.bf16.msra.mxu0 0
  %5871 = vmatprep.subr.bf16.mxu0 0
  %5872 = vmatpush2.bf16.msra.mxu0 0
  %5873 = vmatprep.subr.bf16.mxu0 0
  %5874 = vmatpush2.bf16.msra.mxu0 0
  %5875 = vmatprep.subr.bf16.mxu0 0
  %5876 = vmatpush2.bf16.msra.mxu0 0
  %5877 = vmatprep.mubr.bf16.mxu0 0
  %5878 = vmatmul.mubr.bf16.gmra.mxu0 %v3160
  %v5879 = vpop.f32.mrf.mxu0
  %v5880 = vadd.f32 0.0, %v5879
  %v5881 = vpop.f32.mrf.mxu0
  %v5882 = vpop.f32.mrf.mxu0
  %v5883 = vadd.f32 0.0, %v5882
  %v5884 = vpop.f32.mrf.mxu0
  %5885 = vmatprep.mubr.bf16.mxu0 0
  %5886 = vmatmul.mubr.bf16.gmra.mxu0 %v3163
  %v5887 = vpop.f32.mrf.mxu0
  %v5888 = vadd.f32 0.0, %v5887
  %v5889 = vpop.f32.mrf.mxu0
  %v5890 = vpop.f32.mrf.mxu0
  %v5891 = vadd.f32 0.0, %v5890
  %v5892 = vpop.f32.mrf.mxu0
  %5893 = vmatprep.mubr.bf16.mxu0 0
  %5894 = vmatmul.mubr.bf16.gmra.mxu0 %v3166
  %v5895 = vpop.f32.mrf.mxu0
  %v5896 = vadd.f32 0.0, %v5895
  %v5897 = vpop.f32.mrf.mxu0
  %v5898 = vpop.f32.mrf.mxu0
  %v5899 = vadd.f32 0.0, %v5898
  %v5900 = vpop.f32.mrf.mxu0
  %5901 = vmatprep.mubr.bf16.mxu0 0
  %5902 = vmatmul.mubr.bf16.gmra.mxu0 %v3169
  %v5903 = vpop.f32.mrf.mxu0
  %v5904 = vadd.f32 0.0, %v5903
  %v5905 = vpop.f32.mrf.mxu0
  %v5906 = vpop.f32.mrf.mxu0
  %v5907 = vadd.f32 0.0, %v5906
  %v5908 = vpop.f32.mrf.mxu0
  %5909 = vmatprep.mubr.bf16.mxu0 0
  %5910 = vmatmul.mubr.bf16.gmra.mxu0 %v3172
  %v5911 = vpop.f32.mrf.mxu0
  %v5912 = vadd.f32 0.0, %v5911
  %v5913 = vpop.f32.mrf.mxu0
  %v5914 = vpop.f32.mrf.mxu0
  %v5915 = vadd.f32 0.0, %v5914
  %v5916 = vpop.f32.mrf.mxu0
  %5917 = vmatprep.mubr.bf16.mxu0 0
  %5918 = vmatmul.mubr.bf16.gmra.mxu0 %v3175
  %v5919 = vpop.f32.mrf.mxu0
  %v5920 = vadd.f32 0.0, %v5919
  %v5921 = vpop.f32.mrf.mxu0
  %v5922 = vpop.f32.mrf.mxu0
  %v5923 = vadd.f32 0.0, %v5922
  %v5924 = vpop.f32.mrf.mxu0
  %5925 = vmatprep.mubr.bf16.mxu0 0
  %5926 = vmatmul.mubr.bf16.gmra.mxu0 %v3178
  %v5927 = vpop.f32.mrf.mxu0
  %v5928 = vadd.f32 0.0, %v5927
  %v5929 = vpop.f32.mrf.mxu0
  %v5930 = vpop.f32.mrf.mxu0
  %v5931 = vadd.f32 0.0, %v5930
  %v5932 = vpop.f32.mrf.mxu0
  %5933 = vmatprep.mubr.bf16.mxu0 0
  %5934 = vmatmul.mubr.bf16.gmra.mxu0 %v3181
  %v5935 = vpop.f32.mrf.mxu0
  %v5936 = vadd.f32 0.0, %v5935
  %v5937 = vpop.f32.mrf.mxu0
  %v5938 = vpop.f32.mrf.mxu0
  %v5939 = vadd.f32 0.0, %v5938
  %v5940 = vpop.f32.mrf.mxu0
  %5941 = vmatprep.mubr.bf16.mxu0 0
  %5942 = vmatmul.mubr.bf16.gmra.mxu0 %v3184
  %v5943 = vpop.f32.mrf.mxu0
  %v5944 = vadd.f32 0.0, %v5943
  %v5945 = vpop.f32.mrf.mxu0
  %v5946 = vpop.f32.mrf.mxu0
  %v5947 = vadd.f32 0.0, %v5946
  %v5948 = vpop.f32.mrf.mxu0
  %5949 = vmatprep.mubr.bf16.mxu0 0
  %5950 = vmatmul.mubr.bf16.gmra.mxu0 %v3187
  %v5951 = vpop.f32.mrf.mxu0
  %v5952 = vadd.f32 0.0, %v5951
  %v5953 = vpop.f32.mrf.mxu0
  %v5954 = vpop.f32.mrf.mxu0
  %v5955 = vadd.f32 0.0, %v5954
  %v5956 = vpop.f32.mrf.mxu0
  %5957 = vmatprep.mubr.bf16.mxu0 0
  %5958 = vmatmul.mubr.bf16.gmra.mxu0 %v3190
  %v5959 = vpop.f32.mrf.mxu0
  %v5960 = vadd.f32 0.0, %v5959
  %v5961 = vpop.f32.mrf.mxu0
  %v5962 = vpop.f32.mrf.mxu0
  %v5963 = vadd.f32 0.0, %v5962
  %v5964 = vpop.f32.mrf.mxu0
  %5965 = vmatprep.mubr.bf16.mxu0 0
  %5966 = vmatmul.mubr.bf16.gmra.mxu0 %v3193
  %v5967 = vpop.f32.mrf.mxu0
  %v5968 = vadd.f32 0.0, %v5967
  %v5969 = vpop.f32.mrf.mxu0
  %v5970 = vpop.f32.mrf.mxu0
  %v5971 = vadd.f32 0.0, %v5970
  %v5972 = vpop.f32.mrf.mxu0
  %5973 = vmatprep.mubr.bf16.mxu0 0
  %5974 = vmatmul.mubr.bf16.gmra.mxu0 %v3196
  %v5975 = vpop.f32.mrf.mxu0
  %v5976 = vadd.f32 0.0, %v5975
  %v5977 = vpop.f32.mrf.mxu0
  %v5978 = vpop.f32.mrf.mxu0
  %v5979 = vadd.f32 0.0, %v5978
  %v5980 = vpop.f32.mrf.mxu0
  %5981 = vmatprep.mubr.bf16.mxu0 0
  %5982 = vmatmul.mubr.bf16.gmra.mxu0 %v3199
  %v5983 = vpop.f32.mrf.mxu0
  %v5984 = vadd.f32 0.0, %v5983
  %v5985 = vpop.f32.mrf.mxu0
  %v5986 = vpop.f32.mrf.mxu0
  %v5987 = vadd.f32 0.0, %v5986
  %v5988 = vpop.f32.mrf.mxu0
  %5989 = vmatprep.mubr.bf16.mxu0 0
  %5990 = vmatmul.mubr.bf16.gmra.mxu0 %v3202
  %v5991 = vpop.f32.mrf.mxu0
  %v5992 = vadd.f32 0.0, %v5991
  %v5993 = vpop.f32.mrf.mxu0
  %v5994 = vpop.f32.mrf.mxu0
  %v5995 = vadd.f32 0.0, %v5994
  %v5996 = vpop.f32.mrf.mxu0
  %5997 = vmatprep.mubr.bf16.mxu0 0
  %5998 = vmatmul.mubr.bf16.gmra.mxu0 %v3205
  %v5999 = vpop.f32.mrf.mxu0
  %v6000 = vadd.f32 0.0, %v5999
  %v6001 = vpop.f32.mrf.mxu0
  %v6002 = vpop.f32.mrf.mxu0
  %v6003 = vadd.f32 0.0, %v6002
  %v6004 = vpop.f32.mrf.mxu0
  %6005 = vdwg.mxu0
  %v6006 = vld [vmem:[%s2291] sm:$0xf]
  %v6007 = vld [vmem:[%s2291 + $0x4] sm:$0xf]
  %v6008 = vld [vmem:[%s2291 + $0x8] sm:$0xf]
  %v6009 = vld [vmem:[%s2291 + $0xc] sm:$0xf]
  %v6010 = vld [vmem:[%s2291 + $0x10] sm:$0xf]
  %v6011 = vld [vmem:[%s2291 + $0x14] sm:$0xf]
  %v6012 = vld [vmem:[%s2291 + $0x18] sm:$0xf]
  %v6013 = vld [vmem:[%s2291 + $0x1c] sm:$0xf]
  %v6014 = vld [vmem:[%s2291 + $0x20] sm:$0xf]
  %v6015 = vld [vmem:[%s2291 + $0x24] sm:$0xf]
  %v6016 = vld [vmem:[%s2291 + $0x28] sm:$0xf]
  %v6017 = vld [vmem:[%s2291 + $0x2c] sm:$0xf]
  %v6018 = vld [vmem:[%s2291 + $0x30] sm:$0xf]
  %v6019 = vld [vmem:[%s2291 + $0x34] sm:$0xf]
  %v6020 = vld [vmem:[%s2291 + $0x38] sm:$0xf]
  %v6021 = vld [vmem:[%s2291 + $0x3c] sm:$0xf]
  %v6022 = vunpack.c.l.bf16 %v6006
  %v6023 = vunpack.c.l.bf16 %v6007
  %v6024 = vunpack.c.l.bf16 %v6008
  %v6025 = vunpack.c.l.bf16 %v6009
  %v6026 = vunpack.c.l.bf16 %v6010
  %v6027 = vunpack.c.l.bf16 %v6011
  %v6028 = vunpack.c.l.bf16 %v6012
  %v6029 = vunpack.c.l.bf16 %v6013
  %v6030 = vunpack.c.l.bf16 %v6014
  %v6031 = vunpack.c.l.bf16 %v6015
  %v6032 = vunpack.c.l.bf16 %v6016
  %v6033 = vunpack.c.l.bf16 %v6017
  %v6034 = vunpack.c.l.bf16 %v6018
  %v6035 = vunpack.c.l.bf16 %v6019
  %v6036 = vunpack.c.l.bf16 %v6020
  %v6037 = vunpack.c.l.bf16 %v6021
  %v6038 = vadd.f32 %v5880, %v6022
  %v6039 = vadd.f32 %v5883, %v6023
  %v6040 = vadd.f32 %v5888, %v6024
  %v6041 = vadd.f32 %v5891, %v6025
  %v6042 = vadd.f32 %v5896, %v6026
  %v6043 = vadd.f32 %v5899, %v6027
  %v6044 = vadd.f32 %v5904, %v6028
  %v6045 = vadd.f32 %v5907, %v6029
  %v6046 = vadd.f32 %v5912, %v6030
  %v6047 = vadd.f32 %v5915, %v6031
  %v6048 = vadd.f32 %v5920, %v6032
  %v6049 = vadd.f32 %v5923, %v6033
  %v6050 = vadd.f32 %v5928, %v6034
  %v6051 = vadd.f32 %v5931, %v6035
  %v6052 = vadd.f32 %v5936, %v6036
  %v6053 = vadd.f32 %v5939, %v6037
  %v6054 = vld [vmem:[%s1368] sm:$0xf]
  %v6055 = vld [vmem:[%s1368 + $0x4] sm:$0xf]
  %v6056 = vld [vmem:[%s1368 + $0x8] sm:$0xf]
  %v6057 = vld [vmem:[%s1368 + $0xc] sm:$0xf]
  %v6058 = vld [vmem:[%s1368 + $0x10] sm:$0xf]
  %v6059 = vld [vmem:[%s1368 + $0x14] sm:$0xf]
  %v6060 = vld [vmem:[%s1368 + $0x18] sm:$0xf]
  %v6061 = vld [vmem:[%s1368 + $0x1c] sm:$0xf]
  %v6062 = vld [vmem:[%s1368 + $0x20] sm:$0xf]
  %v6063 = vld [vmem:[%s1368 + $0x24] sm:$0xf]
  %v6064 = vld [vmem:[%s1368 + $0x28] sm:$0xf]
  %v6065 = vld [vmem:[%s1368 + $0x2c] sm:$0xf]
  %v6066 = vld [vmem:[%s1368 + $0x30] sm:$0xf]
  %v6067 = vld [vmem:[%s1368 + $0x34] sm:$0xf]
  %v6068 = vld [vmem:[%s1368 + $0x38] sm:$0xf]
  %v6069 = vld [vmem:[%s1368 + $0x3c] sm:$0xf]
  %v6070 = vunpack.c.l.bf16 %v6054
  %v6071 = vunpack.c.l.bf16 %v6055
  %v6072 = vunpack.c.l.bf16 %v6056
  %v6073 = vunpack.c.l.bf16 %v6057
  %v6074 = vunpack.c.l.bf16 %v6058
  %v6075 = vunpack.c.l.bf16 %v6059
  %v6076 = vunpack.c.l.bf16 %v6060
  %v6077 = vunpack.c.l.bf16 %v6061
  %v6078 = vunpack.c.l.bf16 %v6062
  %v6079 = vunpack.c.l.bf16 %v6063
  %v6080 = vunpack.c.l.bf16 %v6064
  %v6081 = vunpack.c.l.bf16 %v6065
  %v6082 = vunpack.c.l.bf16 %v6066
  %v6083 = vunpack.c.l.bf16 %v6067
  %v6084 = vunpack.c.l.bf16 %v6068
  %v6085 = vunpack.c.l.bf16 %v6069
  %v6086 = vadd.f32 %v5944, %v6070
  %v6087 = vadd.f32 %v5947, %v6071
  %v6088 = vadd.f32 %v5952, %v6072
  %v6089 = vadd.f32 %v5955, %v6073
  %v6090 = vadd.f32 %v5960, %v6074
  %v6091 = vadd.f32 %v5963, %v6075
  %v6092 = vadd.f32 %v5968, %v6076
  %v6093 = vadd.f32 %v5971, %v6077
  %v6094 = vadd.f32 %v5976, %v6078
  %v6095 = vadd.f32 %v5979, %v6079
  %v6096 = vadd.f32 %v5984, %v6080
  %v6097 = vadd.f32 %v5987, %v6081
  %v6098 = vadd.f32 %v5992, %v6082
  %v6099 = vadd.f32 %v5995, %v6083
  %v6100 = vadd.f32 %v6000, %v6084
  %v6101 = vadd.f32 %v6003, %v6085
  %v6102 = vxor.u32 %v6038, 2147483648
  %v6103 = vxor.u32 %v6039, 2147483648
  %v6104 = vxor.u32 %v6040, 2147483648
  %v6105 = vxor.u32 %v6041, 2147483648
  %v6106 = vmul.f32 %v6102, 1.442695
  %v6107 = vpow.pop %v6106
  %v6108 = vmul.f32 %v6103, 1.442695
  %v6109 = vpow.pop %v6108
  %v6110 = vmul.f32 %v6104, 1.442695
  %v6111 = vpow.pop %v6110
  %v6112 = vmul.f32 %v6105, 1.442695
  %v6113 = vpow.pop %v6112
  %v6114 = vadd.f32 %v6107, 1.0
  %v6115 = vadd.f32 %v6109, 1.0
  %v6116 = vadd.f32 %v6111, 1.0
  %v6117 = vadd.f32 %v6113, 1.0
  %v6118 = vrcp.pop %v6114
  %v6119 = vmul.f32 1.0, %v6118
  %v6120 = vrcp.pop %v6115
  %v6121 = vmul.f32 1.0, %v6120
  %v6122 = vrcp.pop %v6116
  %v6123 = vmul.f32 1.0, %v6122
  %v6124 = vrcp.pop %v6117
  %v6125 = vmul.f32 1.0, %v6124
  %v6126 = vxor.u32 %v6042, 2147483648
  %v6127 = vxor.u32 %v6043, 2147483648
  %v6128 = vxor.u32 %v6044, 2147483648
  %v6129 = vxor.u32 %v6045, 2147483648
  %v6130 = vmul.f32 %v6126, 1.442695
  %v6131 = vpow.pop %v6130
  %v6132 = vmul.f32 %v6127, 1.442695
  %v6133 = vpow.pop %v6132
  %v6134 = vmul.f32 %v6128, 1.442695
  %v6135 = vpow.pop %v6134
  %v6136 = vmul.f32 %v6129, 1.442695
  %v6137 = vpow.pop %v6136
  %v6138 = vadd.f32 %v6131, 1.0
  %v6139 = vadd.f32 %v6133, 1.0
  %v6140 = vadd.f32 %v6135, 1.0
  %v6141 = vadd.f32 %v6137, 1.0
  %v6142 = vrcp.pop %v6138
  %v6143 = vmul.f32 1.0, %v6142
  %v6144 = vrcp.pop %v6139
  %v6145 = vmul.f32 1.0, %v6144
  %v6146 = vrcp.pop %v6140
  %v6147 = vmul.f32 1.0, %v6146
  %v6148 = vrcp.pop %v6141
  %v6149 = vmul.f32 1.0, %v6148
  %v6150 = vtanh.pop %v6046
  %v6151 = vtanh.pop %v6047
  %v6152 = vtanh.pop %v6048
  %v6153 = vtanh.pop %v6049
  %v6154 = vxor.u32 %v6050, 2147483648
  %v6155 = vxor.u32 %v6051, 2147483648
  %v6156 = vxor.u32 %v6052, 2147483648
  %v6157 = vxor.u32 %v6053, 2147483648
  %v6158 = vmul.f32 %v6154, 1.442695
  %v6159 = vpow.pop %v6158
  %v6160 = vmul.f32 %v6155, 1.442695
  %v6161 = vpow.pop %v6160
  %v6162 = vmul.f32 %v6156, 1.442695
  %v6163 = vpow.pop %v6162
  %v6164 = vmul.f32 %v6157, 1.442695
  %v6165 = vpow.pop %v6164
  %v6166 = vadd.f32 %v6159, 1.0
  %v6167 = vadd.f32 %v6161, 1.0
  %v6168 = vadd.f32 %v6163, 1.0
  %v6169 = vadd.f32 %v6165, 1.0
  %v6170 = vrcp.pop %v6166
  %v6171 = vmul.f32 1.0, %v6170
  %v6172 = vrcp.pop %v6167
  %v6173 = vmul.f32 1.0, %v6172
  %v6174 = vrcp.pop %v6168
  %v6175 = vmul.f32 1.0, %v6174
  %v6176 = vrcp.pop %v6169
  %v6177 = vmul.f32 1.0, %v6176
  %v6178 = vmul.f32 %v6143, %v5683
  %v6179 = vmul.f32 %v6145, %v5684
  %v6180 = vmul.f32 %v6147, %v5685
  %v6181 = vmul.f32 %v6149, %v5686
  %v6182 = vmul.f32 %v6119, %v6150
  %v6183 = vmul.f32 %v6121, %v6151
  %v6184 = vmul.f32 %v6123, %v6152
  %v6185 = vmul.f32 %v6125, %v6153
  %v6186 = vadd.f32 %v6178, %v6182
  %v6187 = vadd.f32 %v6179, %v6183
  %v6188 = vadd.f32 %v6180, %v6184
  %v6189 = vadd.f32 %v6181, %v6185
  %v6190 = vtanh.pop %v6186
  %v6191 = vtanh.pop %v6187
  %v6192 = vtanh.pop %v6188
  %v6193 = vtanh.pop %v6189
  %v6194 = vmul.f32 %v6171, %v6190
  %v6195 = vmul.f32 %v6173, %v6191
  %v6196 = vmul.f32 %v6175, %v6192
  %v6197 = vmul.f32 %v6177, %v6193
  %v6198 = vsel %vm4730, %v6194, %v5679
  %v6199 = vsel %vm4730, %v6195, %v5680
  %v6200 = vsel %vm4730, %v6196, %v5681
  %v6201 = vsel %vm4730, %v6197, %v5682
  %v6202 = vsel %vm4730, %v6186, %v5683
  %v6203 = vsel %vm4730, %v6187, %v5684
  %v6204 = vsel %vm4730, %v6188, %v5685
  %v6205 = vsel %vm4730, %v6189, %v5686
  %v6206 = vxor.u32 %v6086, 2147483648
  %v6207 = vxor.u32 %v6087, 2147483648
  %v6208 = vxor.u32 %v6088, 2147483648
  %v6209 = vxor.u32 %v6089, 2147483648
  %v6210 = vmul.f32 %v6206, 1.442695
  %v6211 = vpow.pop %v6210
  %v6212 = vmul.f32 %v6207, 1.442695
  %v6213 = vpow.pop %v6212
  %v6214 = vmul.f32 %v6208, 1.442695
  %v6215 = vpow.pop %v6214
  %v6216 = vmul.f32 %v6209, 1.442695
  %v6217 = vpow.pop %v6216
  %v6218 = vadd.f32 %v6211, 1.0
  %v6219 = vadd.f32 %v6213, 1.0
  %v6220 = vadd.f32 %v6215, 1.0
  %v6221 = vadd.f32 %v6217, 1.0
  %v6222 = vrcp.pop %v6218
  %v6223 = vmul.f32 1.0, %v6222
  %v6224 = vrcp.pop %v6219
  %v6225 = vmul.f32 1.0, %v6224
  %v6226 = vrcp.pop %v6220
  %v6227 = vmul.f32 1.0, %v6226
  %v6228 = vrcp.pop %v6221
  %v6229 = vmul.f32 1.0, %v6228
  %v6230 = vxor.u32 %v6090, 2147483648
  %v6231 = vxor.u32 %v6091, 2147483648
  %v6232 = vxor.u32 %v6092, 2147483648
  %v6233 = vxor.u32 %v6093, 2147483648
  %v6234 = vmul.f32 %v6230, 1.442695
  %v6235 = vpow.pop %v6234
  %v6236 = vmul.f32 %v6231, 1.442695
  %v6237 = vpow.pop %v6236
  %v6238 = vmul.f32 %v6232, 1.442695
  %v6239 = vpow.pop %v6238
  %v6240 = vmul.f32 %v6233, 1.442695
  %v6241 = vpow.pop %v6240
  %v6242 = vadd.f32 %v6235, 1.0
  %v6243 = vadd.f32 %v6237, 1.0
  %v6244 = vadd.f32 %v6239, 1.0
  %v6245 = vadd.f32 %v6241, 1.0
  %v6246 = vrcp.pop %v6242
  %v6247 = vmul.f32 1.0, %v6246
  %v6248 = vrcp.pop %v6243
  %v6249 = vmul.f32 1.0, %v6248
  %v6250 = vrcp.pop %v6244
  %v6251 = vmul.f32 1.0, %v6250
  %v6252 = vrcp.pop %v6245
  %v6253 = vmul.f32 1.0, %v6252
  %v6254 = vtanh.pop %v6094
  %v6255 = vtanh.pop %v6095
  %v6256 = vtanh.pop %v6096
  %v6257 = vtanh.pop %v6097
  %v6258 = vxor.u32 %v6098, 2147483648
  %v6259 = vxor.u32 %v6099, 2147483648
  %v6260 = vxor.u32 %v6100, 2147483648
  %v6261 = vxor.u32 %v6101, 2147483648
  %v6262 = vmul.f32 %v6258, 1.442695
  %v6263 = vpow.pop %v6262
  %v6264 = vmul.f32 %v6259, 1.442695
  %v6265 = vpow.pop %v6264
  %v6266 = vmul.f32 %v6260, 1.442695
  %v6267 = vpow.pop %v6266
  %v6268 = vmul.f32 %v6261, 1.442695
  %v6269 = vpow.pop %v6268
  %v6270 = vadd.f32 %v6263, 1.0
  %v6271 = vadd.f32 %v6265, 1.0
  %v6272 = vadd.f32 %v6267, 1.0
  %v6273 = vadd.f32 %v6269, 1.0
  %v6274 = vrcp.pop %v6270
  %v6275 = vmul.f32 1.0, %v6274
  %v6276 = vrcp.pop %v6271
  %v6277 = vmul.f32 1.0, %v6276
  %v6278 = vrcp.pop %v6272
  %v6279 = vmul.f32 1.0, %v6278
  %v6280 = vrcp.pop %v6273
  %v6281 = vmul.f32 1.0, %v6280
  %v6282 = vmul.f32 %v6247, %v5787
  %v6283 = vmul.f32 %v6249, %v5788
  %v6284 = vmul.f32 %v6251, %v5789
  %v6285 = vmul.f32 %v6253, %v5790
  %v6286 = vmul.f32 %v6223, %v6254
  %v6287 = vmul.f32 %v6225, %v6255
  %v6288 = vmul.f32 %v6227, %v6256
  %v6289 = vmul.f32 %v6229, %v6257
  %v6290 = vadd.f32 %v6282, %v6286
  %v6291 = vadd.f32 %v6283, %v6287
  %v6292 = vadd.f32 %v6284, %v6288
  %v6293 = vadd.f32 %v6285, %v6289
  %v6294 = vtanh.pop %v6290
  %v6295 = vtanh.pop %v6291
  %v6296 = vtanh.pop %v6292
  %v6297 = vtanh.pop %v6293
  %v6298 = vmul.f32 %v6275, %v6294
  %v6299 = vmul.f32 %v6277, %v6295
  %v6300 = vmul.f32 %v6279, %v6296
  %v6301 = vmul.f32 %v6281, %v6297
  %v6302 = vsel %vm4620, %v6298, %v5783
  %v6303 = vsel %vm4620, %v6299, %v5784
  %v6304 = vsel %vm4620, %v6300, %v5785
  %v6305 = vsel %vm4620, %v6301, %v5786
  %v6306 = vsel %vm4620, %v6290, %v5787
  %v6307 = vsel %vm4620, %v6291, %v5788
  %v6308 = vsel %vm4620, %v6292, %v5789
  %v6309 = vsel %vm4620, %v6293, %v5790
  %v6310 = vsel %vm4730, %v6194, 0.0
  %v6311 = vsel %vm4730, %v6195, 0.0
  %v6312 = vsel %vm4730, %v6196, 0.0
  %v6313 = vsel %vm4730, %v6197, 0.0
  %v6314 = vpack.c.bf16 %v6311, %v6310
  %v6315 = vpack.c.bf16 %v6313, %v6312
  %v6318 = vunpack.c.l.b16 %v6314
  %v6319 = vunpack.c.h.b16 %v6314
  %v6320 = vunpack.c.l.b16 %v6315
  %v6321 = vunpack.c.h.b16 %v6315
  %v6322 = vpack.c.b16 %v6318, %v6318
  %v6323 = vpack.c.b16 %v6319, %v6319
  %v6324 = vpack.c.b16 %v6320, %v6320
  %v6325 = vpack.c.b16 %v6321, %v6321
  %s6330 = scalar_lea.vmem [#allocation4], 80
  %6331 = vst.msk [vmem:[%s6330] sm:$0xf] %vm632, %v6322
  %6332 = vst.msk [vmem:[%s6330 + $0x4] sm:$0xf] %vm632, %v6323
  %6333 = vst.msk [vmem:[%s6330 + $0x8] sm:$0xf] %vm632, %v6324
  %6334 = vst.msk [vmem:[%s6330 + $0xc] sm:$0xf] %vm632, %v6325
  %v6335 = vsel %vm4620, %v6298, 0.0
  %v6336 = vsel %vm4620, %v6299, 0.0
  %v6337 = vsel %vm4620, %v6300, 0.0
  %v6338 = vsel %vm4620, %v6301, 0.0
  %v6339 = vpack.c.bf16 %v6336, %v6335
  %v6340 = vpack.c.bf16 %v6338, %v6337
  %v6343 = vunpack.c.l.b16 %v6339
  %v6344 = vunpack.c.h.b16 %v6339
  %v6345 = vunpack.c.l.b16 %v6340
  %v6346 = vunpack.c.h.b16 %v6340
  %v6347 = vpack.c.b16 %v6343, %v6343
  %v6348 = vpack.c.b16 %v6344, %v6344
  %v6349 = vpack.c.b16 %v6345, %v6345
  %v6350 = vpack.c.b16 %v6346, %v6346
  %s6355 = scalar_lea.vmem [#allocation5], 32
  %6356 = vst.msk [vmem:[%s6355] sm:$0xf] %vm632, %v6347
  %6357 = vst.msk [vmem:[%s6355 + $0x4] sm:$0xf] %vm632, %v6348
  %6358 = vst.msk [vmem:[%s6355 + $0x8] sm:$0xf] %vm632, %v6349
  %6359 = vst.msk [vmem:[%s6355 + $0xc] sm:$0xf] %vm632, %v6350
  %v6360 = vpack.c.bf16 %v6199, %v6198
  %v6361 = vpack.c.bf16 %v6201, %v6200
  %v6362 = vpack.c.bf16 %v6303, %v6302
  %v6363 = vpack.c.bf16 %v6305, %v6304
  %6364 = vmatprep.subr.bf16.mxu0 0
  %6365 = vmatpush1.bf16.msra.mxu0 0
  %6366 = vmatprep.subr.bf16.mxu0 0
  %6367 = vmatpush1.bf16.msra.mxu0 0
  %6368 = vmatprep.subr.bf16.mxu0 0
  %6369 = vmatpush1.bf16.msra.mxu0 0
  %6370 = vmatprep.subr.bf16.mxu0 0
  %6371 = vmatpush1.bf16.msra.mxu0 0
  %6372 = vmatprep.subr.bf16.mxu0 0
  %6373 = vmatpush1.bf16.msra.mxu0 %v6363
  %6374 = vmatprep.subr.bf16.mxu0 0
  %6375 = vmatpush1.bf16.msra.mxu0 %v6362
  %6376 = vmatprep.subr.bf16.mxu0 0
  %6377 = vmatpush1.bf16.msra.mxu0 %v6361
  %6378 = vmatprep.subr.bf16.mxu0 0
  %6379 = vmatpush1.bf16.msra.mxu0 %v6360
  %6380 = vmatprep.subr.bf16.mxu0 0
  %6381 = vmatpush2.bf16.msra.mxu0 0
  %6382 = vmatprep.subr.bf16.mxu0 0
  %6383 = vmatpush2.bf16.msra.mxu0 0
  %6384 = vmatprep.subr.bf16.mxu0 0
  %6385 = vmatpush2.bf16.msra.mxu0 0
  %6386 = vmatprep.subr.bf16.mxu0 0
  %6387 = vmatpush2.bf16.msra.mxu0 0
  %6388 = vmatprep.subr.bf16.mxu0 0
  %6389 = vmatpush2.bf16.msra.mxu0 0
  %6390 = vmatprep.subr.bf16.mxu0 0
  %6391 = vmatpush2.bf16.msra.mxu0 0
  %6392 = vmatprep.subr.bf16.mxu0 0
  %6393 = vmatpush2.bf16.msra.mxu0 0
  %6394 = vmatprep.subr.bf16.mxu0 0
  %6395 = vmatpush2.bf16.msra.mxu0 0
  %6396 = vmatprep.mubr.bf16.mxu0 0
  %6397 = vmatmul.mubr.bf16.gmra.mxu0 %v3160
  %v6398 = vpop.f32.mrf.mxu0
  %v6399 = vadd.f32 0.0, %v6398
  %v6400 = vpop.f32.mrf.mxu0
  %v6401 = vpop.f32.mrf.mxu0
  %v6402 = vadd.f32 0.0, %v6401
  %v6403 = vpop.f32.mrf.mxu0
  %6404 = vmatprep.mubr.bf16.mxu0 0
  %6405 = vmatmul.mubr.bf16.gmra.mxu0 %v3163
  %v6406 = vpop.f32.mrf.mxu0
  %v6407 = vadd.f32 0.0, %v6406
  %v6408 = vpop.f32.mrf.mxu0
  %v6409 = vpop.f32.mrf.mxu0
  %v6410 = vadd.f32 0.0, %v6409
  %v6411 = vpop.f32.mrf.mxu0
  %6412 = vmatprep.mubr.bf16.mxu0 0
  %6413 = vmatmul.mubr.bf16.gmra.mxu0 %v3166
  %v6414 = vpop.f32.mrf.mxu0
  %v6415 = vadd.f32 0.0, %v6414
  %v6416 = vpop.f32.mrf.mxu0
  %v6417 = vpop.f32.mrf.mxu0
  %v6418 = vadd.f32 0.0, %v6417
  %v6419 = vpop.f32.mrf.mxu0
  %6420 = vmatprep.mubr.bf16.mxu0 0
  %6421 = vmatmul.mubr.bf16.gmra.mxu0 %v3169
  %v6422 = vpop.f32.mrf.mxu0
  %v6423 = vadd.f32 0.0, %v6422
  %v6424 = vpop.f32.mrf.mxu0
  %v6425 = vpop.f32.mrf.mxu0
  %v6426 = vadd.f32 0.0, %v6425
  %v6427 = vpop.f32.mrf.mxu0
  %6428 = vmatprep.mubr.bf16.mxu0 0
  %6429 = vmatmul.mubr.bf16.gmra.mxu0 %v3172
  %v6430 = vpop.f32.mrf.mxu0
  %v6431 = vadd.f32 0.0, %v6430
  %v6432 = vpop.f32.mrf.mxu0
  %v6433 = vpop.f32.mrf.mxu0
  %v6434 = vadd.f32 0.0, %v6433
  %v6435 = vpop.f32.mrf.mxu0
  %6436 = vmatprep.mubr.bf16.mxu0 0
  %6437 = vmatmul.mubr.bf16.gmra.mxu0 %v3175
  %v6438 = vpop.f32.mrf.mxu0
  %v6439 = vadd.f32 0.0, %v6438
  %v6440 = vpop.f32.mrf.mxu0
  %v6441 = vpop.f32.mrf.mxu0
  %v6442 = vadd.f32 0.0, %v6441
  %v6443 = vpop.f32.mrf.mxu0
  %6444 = vmatprep.mubr.bf16.mxu0 0
  %6445 = vmatmul.mubr.bf16.gmra.mxu0 %v3178
  %v6446 = vpop.f32.mrf.mxu0
  %v6447 = vadd.f32 0.0, %v6446
  %v6448 = vpop.f32.mrf.mxu0
  %v6449 = vpop.f32.mrf.mxu0
  %v6450 = vadd.f32 0.0, %v6449
  %v6451 = vpop.f32.mrf.mxu0
  %6452 = vmatprep.mubr.bf16.mxu0 0
  %6453 = vmatmul.mubr.bf16.gmra.mxu0 %v3181
  %v6454 = vpop.f32.mrf.mxu0
  %v6455 = vadd.f32 0.0, %v6454
  %v6456 = vpop.f32.mrf.mxu0
  %v6457 = vpop.f32.mrf.mxu0
  %v6458 = vadd.f32 0.0, %v6457
  %v6459 = vpop.f32.mrf.mxu0
  %6460 = vmatprep.mubr.bf16.mxu0 0
  %6461 = vmatmul.mubr.bf16.gmra.mxu0 %v3184
  %v6462 = vpop.f32.mrf.mxu0
  %v6463 = vadd.f32 0.0, %v6462
  %v6464 = vpop.f32.mrf.mxu0
  %v6465 = vpop.f32.mrf.mxu0
  %v6466 = vadd.f32 0.0, %v6465
  %v6467 = vpop.f32.mrf.mxu0
  %6468 = vmatprep.mubr.bf16.mxu0 0
  %6469 = vmatmul.mubr.bf16.gmra.mxu0 %v3187
  %v6470 = vpop.f32.mrf.mxu0
  %v6471 = vadd.f32 0.0, %v6470
  %v6472 = vpop.f32.mrf.mxu0
  %v6473 = vpop.f32.mrf.mxu0
  %v6474 = vadd.f32 0.0, %v6473
  %v6475 = vpop.f32.mrf.mxu0
  %6476 = vmatprep.mubr.bf16.mxu0 0
  %6477 = vmatmul.mubr.bf16.gmra.mxu0 %v3190
  %v6478 = vpop.f32.mrf.mxu0
  %v6479 = vadd.f32 0.0, %v6478
  %v6480 = vpop.f32.mrf.mxu0
  %v6481 = vpop.f32.mrf.mxu0
  %v6482 = vadd.f32 0.0, %v6481
  %v6483 = vpop.f32.mrf.mxu0
  %6484 = vmatprep.mubr.bf16.mxu0 0
  %6485 = vmatmul.mubr.bf16.gmra.mxu0 %v3193
  %v6486 = vpop.f32.mrf.mxu0
  %v6487 = vadd.f32 0.0, %v6486
  %v6488 = vpop.f32.mrf.mxu0
  %v6489 = vpop.f32.mrf.mxu0
  %v6490 = vadd.f32 0.0, %v6489
  %v6491 = vpop.f32.mrf.mxu0
  %6492 = vmatprep.mubr.bf16.mxu0 0
  %6493 = vmatmul.mubr.bf16.gmra.mxu0 %v3196
  %v6494 = vpop.f32.mrf.mxu0
  %v6495 = vadd.f32 0.0, %v6494
  %v6496 = vpop.f32.mrf.mxu0
  %v6497 = vpop.f32.mrf.mxu0
  %v6498 = vadd.f32 0.0, %v6497
  %v6499 = vpop.f32.mrf.mxu0
  %6500 = vmatprep.mubr.bf16.mxu0 0
  %6501 = vmatmul.mubr.bf16.gmra.mxu0 %v3199
  %v6502 = vpop.f32.mrf.mxu0
  %v6503 = vadd.f32 0.0, %v6502
  %v6504 = vpop.f32.mrf.mxu0
  %v6505 = vpop.f32.mrf.mxu0
  %v6506 = vadd.f32 0.0, %v6505
  %v6507 = vpop.f32.mrf.mxu0
  %6508 = vmatprep.mubr.bf16.mxu0 0
  %6509 = vmatmul.mubr.bf16.gmra.mxu0 %v3202
  %v6510 = vpop.f32.mrf.mxu0
  %v6511 = vadd.f32 0.0, %v6510
  %v6512 = vpop.f32.mrf.mxu0
  %v6513 = vpop.f32.mrf.mxu0
  %v6514 = vadd.f32 0.0, %v6513
  %v6515 = vpop.f32.mrf.mxu0
  %6516 = vmatprep.mubr.bf16.mxu0 0
  %6517 = vmatmul.mubr.bf16.gmra.mxu0 %v3205
  %v6518 = vpop.f32.mrf.mxu0
  %v6519 = vadd.f32 0.0, %v6518
  %v6520 = vpop.f32.mrf.mxu0
  %v6521 = vpop.f32.mrf.mxu0
  %v6522 = vadd.f32 0.0, %v6521
  %v6523 = vpop.f32.mrf.mxu0
  %6524 = vdwg.mxu0
  %v6525 = vld [vmem:[%s2623] sm:$0xf]
  %v6526 = vld [vmem:[%s2623 + $0x4] sm:$0xf]
  %v6527 = vld [vmem:[%s2623 + $0x8] sm:$0xf]
  %v6528 = vld [vmem:[%s2623 + $0xc] sm:$0xf]
  %v6529 = vld [vmem:[%s2623 + $0x10] sm:$0xf]
  %v6530 = vld [vmem:[%s2623 + $0x14] sm:$0xf]
  %v6531 = vld [vmem:[%s2623 + $0x18] sm:$0xf]
  %v6532 = vld [vmem:[%s2623 + $0x1c] sm:$0xf]
  %v6533 = vld [vmem:[%s2623 + $0x20] sm:$0xf]
  %v6534 = vld [vmem:[%s2623 + $0x24] sm:$0xf]
  %v6535 = vld [vmem:[%s2623 + $0x28] sm:$0xf]
  %v6536 = vld [vmem:[%s2623 + $0x2c] sm:$0xf]
  %v6537 = vld [vmem:[%s2623 + $0x30] sm:$0xf]
  %v6538 = vld [vmem:[%s2623 + $0x34] sm:$0xf]
  %v6539 = vld [vmem:[%s2623 + $0x38] sm:$0xf]
  %v6540 = vld [vmem:[%s2623 + $0x3c] sm:$0xf]
  %v6541 = vunpack.c.l.bf16 %v6525
  %v6542 = vunpack.c.l.bf16 %v6526
  %v6543 = vunpack.c.l.bf16 %v6527
  %v6544 = vunpack.c.l.bf16 %v6528
  %v6545 = vunpack.c.l.bf16 %v6529
  %v6546 = vunpack.c.l.bf16 %v6530
  %v6547 = vunpack.c.l.bf16 %v6531
  %v6548 = vunpack.c.l.bf16 %v6532
  %v6549 = vunpack.c.l.bf16 %v6533
  %v6550 = vunpack.c.l.bf16 %v6534
  %v6551 = vunpack.c.l.bf16 %v6535
  %v6552 = vunpack.c.l.bf16 %v6536
  %v6553 = vunpack.c.l.bf16 %v6537
  %v6554 = vunpack.c.l.bf16 %v6538
  %v6555 = vunpack.c.l.bf16 %v6539
  %v6556 = vunpack.c.l.bf16 %v6540
  %v6557 = vadd.f32 %v6399, %v6541
  %v6558 = vadd.f32 %v6402, %v6542
  %v6559 = vadd.f32 %v6407, %v6543
  %v6560 = vadd.f32 %v6410, %v6544
  %v6561 = vadd.f32 %v6415, %v6545
  %v6562 = vadd.f32 %v6418, %v6546
  %v6563 = vadd.f32 %v6423, %v6547
  %v6564 = vadd.f32 %v6426, %v6548
  %v6565 = vadd.f32 %v6431, %v6549
  %v6566 = vadd.f32 %v6434, %v6550
  %v6567 = vadd.f32 %v6439, %v6551
  %v6568 = vadd.f32 %v6442, %v6552
  %v6569 = vadd.f32 %v6447, %v6553
  %v6570 = vadd.f32 %v6450, %v6554
  %v6571 = vadd.f32 %v6455, %v6555
  %v6572 = vadd.f32 %v6458, %v6556
  %v6573 = vld [vmem:[%s1036] sm:$0xf]
  %v6574 = vld [vmem:[%s1036 + $0x4] sm:$0xf]
  %v6575 = vld [vmem:[%s1036 + $0x8] sm:$0xf]
  %v6576 = vld [vmem:[%s1036 + $0xc] sm:$0xf]
  %v6577 = vld [vmem:[%s1036 + $0x10] sm:$0xf]
  %v6578 = vld [vmem:[%s1036 + $0x14] sm:$0xf]
  %v6579 = vld [vmem:[%s1036 + $0x18] sm:$0xf]
  %v6580 = vld [vmem:[%s1036 + $0x1c] sm:$0xf]
  %v6581 = vld [vmem:[%s1036 + $0x20] sm:$0xf]
  %v6582 = vld [vmem:[%s1036 + $0x24] sm:$0xf]
  %v6583 = vld [vmem:[%s1036 + $0x28] sm:$0xf]
  %v6584 = vld [vmem:[%s1036 + $0x2c] sm:$0xf]
  %v6585 = vld [vmem:[%s1036 + $0x30] sm:$0xf]
  %v6586 = vld [vmem:[%s1036 + $0x34] sm:$0xf]
  %v6587 = vld [vmem:[%s1036 + $0x38] sm:$0xf]
  %v6588 = vld [vmem:[%s1036 + $0x3c] sm:$0xf]
  %v6589 = vunpack.c.l.bf16 %v6573
  %v6590 = vunpack.c.l.bf16 %v6574
  %v6591 = vunpack.c.l.bf16 %v6575
  %v6592 = vunpack.c.l.bf16 %v6576
  %v6593 = vunpack.c.l.bf16 %v6577
  %v6594 = vunpack.c.l.bf16 %v6578
  %v6595 = vunpack.c.l.bf16 %v6579
  %v6596 = vunpack.c.l.bf16 %v6580
  %v6597 = vunpack.c.l.bf16 %v6581
  %v6598 = vunpack.c.l.bf16 %v6582
  %v6599 = vunpack.c.l.bf16 %v6583
  %v6600 = vunpack.c.l.bf16 %v6584
  %v6601 = vunpack.c.l.bf16 %v6585
  %v6602 = vunpack.c.l.bf16 %v6586
  %v6603 = vunpack.c.l.bf16 %v6587
  %v6604 = vunpack.c.l.bf16 %v6588
  %v6605 = vadd.f32 %v6463, %v6589
  %v6606 = vadd.f32 %v6466, %v6590
  %v6607 = vadd.f32 %v6471, %v6591
  %v6608 = vadd.f32 %v6474, %v6592
  %v6609 = vadd.f32 %v6479, %v6593
  %v6610 = vadd.f32 %v6482, %v6594
  %v6611 = vadd.f32 %v6487, %v6595
  %v6612 = vadd.f32 %v6490, %v6596
  %v6613 = vadd.f32 %v6495, %v6597
  %v6614 = vadd.f32 %v6498, %v6598
  %v6615 = vadd.f32 %v6503, %v6599
  %v6616 = vadd.f32 %v6506, %v6600
  %v6617 = vadd.f32 %v6511, %v6601
  %v6618 = vadd.f32 %v6514, %v6602
  %v6619 = vadd.f32 %v6519, %v6603
  %v6620 = vadd.f32 %v6522, %v6604
  %v6621 = vxor.u32 %v6557, 2147483648
  %v6622 = vxor.u32 %v6558, 2147483648
  %v6623 = vxor.u32 %v6559, 2147483648
  %v6624 = vxor.u32 %v6560, 2147483648
  %v6625 = vmul.f32 %v6621, 1.442695
  %v6626 = vpow.pop %v6625
  %v6627 = vmul.f32 %v6622, 1.442695
  %v6628 = vpow.pop %v6627
  %v6629 = vmul.f32 %v6623, 1.442695
  %v6630 = vpow.pop %v6629
  %v6631 = vmul.f32 %v6624, 1.442695
  %v6632 = vpow.pop %v6631
  %v6633 = vadd.f32 %v6626, 1.0
  %v6634 = vadd.f32 %v6628, 1.0
  %v6635 = vadd.f32 %v6630, 1.0
  %v6636 = vadd.f32 %v6632, 1.0
  %v6637 = vrcp.pop %v6633
  %v6638 = vmul.f32 1.0, %v6637
  %v6639 = vrcp.pop %v6634
  %v6640 = vmul.f32 1.0, %v6639
  %v6641 = vrcp.pop %v6635
  %v6642 = vmul.f32 1.0, %v6641
  %v6643 = vrcp.pop %v6636
  %v6644 = vmul.f32 1.0, %v6643
  %v6645 = vxor.u32 %v6561, 2147483648
  %v6646 = vxor.u32 %v6562, 2147483648
  %v6647 = vxor.u32 %v6563, 2147483648
  %v6648 = vxor.u32 %v6564, 2147483648
  %v6649 = vmul.f32 %v6645, 1.442695
  %v6650 = vpow.pop %v6649
  %v6651 = vmul.f32 %v6646, 1.442695
  %v6652 = vpow.pop %v6651
  %v6653 = vmul.f32 %v6647, 1.442695
  %v6654 = vpow.pop %v6653
  %v6655 = vmul.f32 %v6648, 1.442695
  %v6656 = vpow.pop %v6655
  %v6657 = vadd.f32 %v6650, 1.0
  %v6658 = vadd.f32 %v6652, 1.0
  %v6659 = vadd.f32 %v6654, 1.0
  %v6660 = vadd.f32 %v6656, 1.0
  %v6661 = vrcp.pop %v6657
  %v6662 = vmul.f32 1.0, %v6661
  %v6663 = vrcp.pop %v6658
  %v6664 = vmul.f32 1.0, %v6663
  %v6665 = vrcp.pop %v6659
  %v6666 = vmul.f32 1.0, %v6665
  %v6667 = vrcp.pop %v6660
  %v6668 = vmul.f32 1.0, %v6667
  %v6669 = vtanh.pop %v6565
  %v6670 = vtanh.pop %v6566
  %v6671 = vtanh.pop %v6567
  %v6672 = vtanh.pop %v6568
  %v6673 = vxor.u32 %v6569, 2147483648
  %v6674 = vxor.u32 %v6570, 2147483648
  %v6675 = vxor.u32 %v6571, 2147483648
  %v6676 = vxor.u32 %v6572, 2147483648
  %v6677 = vmul.f32 %v6673, 1.442695
  %v6678 = vpow.pop %v6677
  %v6679 = vmul.f32 %v6674, 1.442695
  %v6680 = vpow.pop %v6679
  %v6681 = vmul.f32 %v6675, 1.442695
  %v6682 = vpow.pop %v6681
  %v6683 = vmul.f32 %v6676, 1.442695
  %v6684 = vpow.pop %v6683
  %v6685 = vadd.f32 %v6678, 1.0
  %v6686 = vadd.f32 %v6680, 1.0
  %v6687 = vadd.f32 %v6682, 1.0
  %v6688 = vadd.f32 %v6684, 1.0
  %v6689 = vrcp.pop %v6685
  %v6690 = vmul.f32 1.0, %v6689
  %v6691 = vrcp.pop %v6686
  %v6692 = vmul.f32 1.0, %v6691
  %v6693 = vrcp.pop %v6687
  %v6694 = vmul.f32 1.0, %v6693
  %v6695 = vrcp.pop %v6688
  %v6696 = vmul.f32 1.0, %v6695
  %v6697 = vmul.f32 %v6662, %v6202
  %v6698 = vmul.f32 %v6664, %v6203
  %v6699 = vmul.f32 %v6666, %v6204
  %v6700 = vmul.f32 %v6668, %v6205
  %v6701 = vmul.f32 %v6638, %v6669
  %v6702 = vmul.f32 %v6640, %v6670
  %v6703 = vmul.f32 %v6642, %v6671
  %v6704 = vmul.f32 %v6644, %v6672
  %v6705 = vadd.f32 %v6697, %v6701
  %v6706 = vadd.f32 %v6698, %v6702
  %v6707 = vadd.f32 %v6699, %v6703
  %v6708 = vadd.f32 %v6700, %v6704
  %v6709 = vtanh.pop %v6705
  %v6710 = vtanh.pop %v6706
  %v6711 = vtanh.pop %v6707
  %v6712 = vtanh.pop %v6708
  %v6713 = vmul.f32 %v6690, %v6709
  %v6714 = vmul.f32 %v6692, %v6710
  %v6715 = vmul.f32 %v6694, %v6711
  %v6716 = vmul.f32 %v6696, %v6712
  %v6717 = vsel %vm4197, %v6713, %v6198
  %v6718 = vsel %vm4197, %v6714, %v6199
  %v6719 = vsel %vm4197, %v6715, %v6200
  %v6720 = vsel %vm4197, %v6716, %v6201
  %v6721 = vsel %vm4197, %v6705, %v6202
  %v6722 = vsel %vm4197, %v6706, %v6203
  %v6723 = vsel %vm4197, %v6707, %v6204
  %v6724 = vsel %vm4197, %v6708, %v6205
  %v6725 = vxor.u32 %v6605, 2147483648
  %v6726 = vxor.u32 %v6606, 2147483648
  %v6727 = vxor.u32 %v6607, 2147483648
  %v6728 = vxor.u32 %v6608, 2147483648
  %v6729 = vmul.f32 %v6725, 1.442695
  %v6730 = vpow.pop %v6729
  %v6731 = vmul.f32 %v6726, 1.442695
  %v6732 = vpow.pop %v6731
  %v6733 = vmul.f32 %v6727, 1.442695
  %v6734 = vpow.pop %v6733
  %v6735 = vmul.f32 %v6728, 1.442695
  %v6736 = vpow.pop %v6735
  %v6737 = vadd.f32 %v6730, 1.0
  %v6738 = vadd.f32 %v6732, 1.0
  %v6739 = vadd.f32 %v6734, 1.0
  %v6740 = vadd.f32 %v6736, 1.0
  %v6741 = vrcp.pop %v6737
  %v6742 = vmul.f32 1.0, %v6741
  %v6743 = vrcp.pop %v6738
  %v6744 = vmul.f32 1.0, %v6743
  %v6745 = vrcp.pop %v6739
  %v6746 = vmul.f32 1.0, %v6745
  %v6747 = vrcp.pop %v6740
  %v6748 = vmul.f32 1.0, %v6747
  %v6749 = vxor.u32 %v6609, 2147483648
  %v6750 = vxor.u32 %v6610, 2147483648
  %v6751 = vxor.u32 %v6611, 2147483648
  %v6752 = vxor.u32 %v6612, 2147483648
  %v6753 = vmul.f32 %v6749, 1.442695
  %v6754 = vpow.pop %v6753
  %v6755 = vmul.f32 %v6750, 1.442695
  %v6756 = vpow.pop %v6755
  %v6757 = vmul.f32 %v6751, 1.442695
  %v6758 = vpow.pop %v6757
  %v6759 = vmul.f32 %v6752, 1.442695
  %v6760 = vpow.pop %v6759
  %v6761 = vadd.f32 %v6754, 1.0
  %v6762 = vadd.f32 %v6756, 1.0
  %v6763 = vadd.f32 %v6758, 1.0
  %v6764 = vadd.f32 %v6760, 1.0
  %v6765 = vrcp.pop %v6761
  %v6766 = vmul.f32 1.0, %v6765
  %v6767 = vrcp.pop %v6762
  %v6768 = vmul.f32 1.0, %v6767
  %v6769 = vrcp.pop %v6763
  %v6770 = vmul.f32 1.0, %v6769
  %v6771 = vrcp.pop %v6764
  %v6772 = vmul.f32 1.0, %v6771
  %v6773 = vtanh.pop %v6613
  %v6774 = vtanh.pop %v6614
  %v6775 = vtanh.pop %v6615
  %v6776 = vtanh.pop %v6616
  %v6777 = vxor.u32 %v6617, 2147483648
  %v6778 = vxor.u32 %v6618, 2147483648
  %v6779 = vxor.u32 %v6619, 2147483648
  %v6780 = vxor.u32 %v6620, 2147483648
  %v6781 = vmul.f32 %v6777, 1.442695
  %v6782 = vpow.pop %v6781
  %v6783 = vmul.f32 %v6778, 1.442695
  %v6784 = vpow.pop %v6783
  %v6785 = vmul.f32 %v6779, 1.442695
  %v6786 = vpow.pop %v6785
  %v6787 = vmul.f32 %v6780, 1.442695
  %v6788 = vpow.pop %v6787
  %v6789 = vadd.f32 %v6782, 1.0
  %v6790 = vadd.f32 %v6784, 1.0
  %v6791 = vadd.f32 %v6786, 1.0
  %v6792 = vadd.f32 %v6788, 1.0
  %v6793 = vrcp.pop %v6789
  %v6794 = vmul.f32 1.0, %v6793
  %v6795 = vrcp.pop %v6790
  %v6796 = vmul.f32 1.0, %v6795
  %v6797 = vrcp.pop %v6791
  %v6798 = vmul.f32 1.0, %v6797
  %v6799 = vrcp.pop %v6792
  %v6800 = vmul.f32 1.0, %v6799
  %v6801 = vmul.f32 %v6766, %v6306
  %v6802 = vmul.f32 %v6768, %v6307
  %v6803 = vmul.f32 %v6770, %v6308
  %v6804 = vmul.f32 %v6772, %v6309
  %v6805 = vmul.f32 %v6742, %v6773
  %v6806 = vmul.f32 %v6744, %v6774
  %v6807 = vmul.f32 %v6746, %v6775
  %v6808 = vmul.f32 %v6748, %v6776
  %v6809 = vadd.f32 %v6801, %v6805
  %v6810 = vadd.f32 %v6802, %v6806
  %v6811 = vadd.f32 %v6803, %v6807
  %v6812 = vadd.f32 %v6804, %v6808
  %v6813 = vtanh.pop %v6809
  %v6814 = vtanh.pop %v6810
  %v6815 = vtanh.pop %v6811
  %v6816 = vtanh.pop %v6812
  %v6817 = vmul.f32 %v6794, %v6813
  %v6818 = vmul.f32 %v6796, %v6814
  %v6819 = vmul.f32 %v6798, %v6815
  %v6820 = vmul.f32 %v6800, %v6816
  %v6821 = vsel %vm4087, %v6817, %v6302
  %v6822 = vsel %vm4087, %v6818, %v6303
  %v6823 = vsel %vm4087, %v6819, %v6304
  %v6824 = vsel %vm4087, %v6820, %v6305
  %v6825 = vsel %vm4087, %v6809, %v6306
  %v6826 = vsel %vm4087, %v6810, %v6307
  %v6827 = vsel %vm4087, %v6811, %v6308
  %v6828 = vsel %vm4087, %v6812, %v6309
  %v6829 = vsel %vm4197, %v6713, 0.0
  %v6830 = vsel %vm4197, %v6714, 0.0
  %v6831 = vsel %vm4197, %v6715, 0.0
  %v6832 = vsel %vm4197, %v6716, 0.0
  %v6833 = vpack.c.bf16 %v6830, %v6829
  %v6834 = vpack.c.bf16 %v6832, %v6831
  %v6837 = vunpack.c.l.b16 %v6833
  %v6838 = vunpack.c.h.b16 %v6833
  %v6839 = vunpack.c.l.b16 %v6834
  %v6840 = vunpack.c.h.b16 %v6834
  %v6841 = vpack.c.b16 %v6837, %v6837
  %v6842 = vpack.c.b16 %v6838, %v6838
  %v6843 = vpack.c.b16 %v6839, %v6839
  %v6844 = vpack.c.b16 %v6840, %v6840
  %s6849 = scalar_lea.vmem [#allocation4], 96
  %6850 = vst.msk [vmem:[%s6849] sm:$0xf] %vm632, %v6841
  %6851 = vst.msk [vmem:[%s6849 + $0x4] sm:$0xf] %vm632, %v6842
  %6852 = vst.msk [vmem:[%s6849 + $0x8] sm:$0xf] %vm632, %v6843
  %6853 = vst.msk [vmem:[%s6849 + $0xc] sm:$0xf] %vm632, %v6844
  %v6854 = vsel %vm4087, %v6817, 0.0
  %v6855 = vsel %vm4087, %v6818, 0.0
  %v6856 = vsel %vm4087, %v6819, 0.0
  %v6857 = vsel %vm4087, %v6820, 0.0
  %v6858 = vpack.c.bf16 %v6855, %v6854
  %v6859 = vpack.c.bf16 %v6857, %v6856
  %v6862 = vunpack.c.l.b16 %v6858
  %v6863 = vunpack.c.h.b16 %v6858
  %v6864 = vunpack.c.l.b16 %v6859
  %v6865 = vunpack.c.h.b16 %v6859
  %v6866 = vpack.c.b16 %v6862, %v6862
  %v6867 = vpack.c.b16 %v6863, %v6863
  %v6868 = vpack.c.b16 %v6864, %v6864
  %v6869 = vpack.c.b16 %v6865, %v6865
  %s6874 = scalar_lea.vmem [#allocation5], 16
  %6875 = vst.msk [vmem:[%s6874] sm:$0xf] %vm632, %v6866
  %6876 = vst.msk [vmem:[%s6874 + $0x4] sm:$0xf] %vm632, %v6867
  %6877 = vst.msk [vmem:[%s6874 + $0x8] sm:$0xf] %vm632, %v6868
  %6878 = vst.msk [vmem:[%s6874 + $0xc] sm:$0xf] %vm632, %v6869
  %v6879 = vpack.c.bf16 %v6718, %v6717
  %v6880 = vpack.c.bf16 %v6720, %v6719
  %v6881 = vpack.c.bf16 %v6822, %v6821
  %v6882 = vpack.c.bf16 %v6824, %v6823
  %6883 = vmatprep.subr.bf16.mxu0 0
  %6884 = vmatpush1.bf16.msra.mxu0 0
  %6885 = vmatprep.subr.bf16.mxu0 0
  %6886 = vmatpush1.bf16.msra.mxu0 0
  %6887 = vmatprep.subr.bf16.mxu0 0
  %6888 = vmatpush1.bf16.msra.mxu0 0
  %6889 = vmatprep.subr.bf16.mxu0 0
  %6890 = vmatpush1.bf16.msra.mxu0 0
  %6891 = vmatprep.subr.bf16.mxu0 0
  %6892 = vmatpush1.bf16.msra.mxu0 %v6882
  %6893 = vmatprep.subr.bf16.mxu0 0
  %6894 = vmatpush1.bf16.msra.mxu0 %v6881
  %6895 = vmatprep.subr.bf16.mxu0 0
  %6896 = vmatpush1.bf16.msra.mxu0 %v6880
  %6897 = vmatprep.subr.bf16.mxu0 0
  %6898 = vmatpush1.bf16.msra.mxu0 %v6879
  %6899 = vmatprep.subr.bf16.mxu0 0
  %6900 = vmatpush2.bf16.msra.mxu0 0
  %6901 = vmatprep.subr.bf16.mxu0 0
  %6902 = vmatpush2.bf16.msra.mxu0 0
  %6903 = vmatprep.subr.bf16.mxu0 0
  %6904 = vmatpush2.bf16.msra.mxu0 0
  %6905 = vmatprep.subr.bf16.mxu0 0
  %6906 = vmatpush2.bf16.msra.mxu0 0
  %6907 = vmatprep.subr.bf16.mxu0 0
  %6908 = vmatpush2.bf16.msra.mxu0 0
  %6909 = vmatprep.subr.bf16.mxu0 0
  %6910 = vmatpush2.bf16.msra.mxu0 0
  %6911 = vmatprep.subr.bf16.mxu0 0
  %6912 = vmatpush2.bf16.msra.mxu0 0
  %6913 = vmatprep.subr.bf16.mxu0 0
  %6914 = vmatpush2.bf16.msra.mxu0 0
  %6915 = vmatprep.mubr.bf16.mxu0 0
  %6916 = vmatmul.mubr.bf16.gmra.mxu0 %v3160
  %v6917 = vpop.f32.mrf.mxu0
  %v6918 = vadd.f32 0.0, %v6917
  %v6919 = vpop.f32.mrf.mxu0
  %v6920 = vpop.f32.mrf.mxu0
  %v6921 = vadd.f32 0.0, %v6920
  %v6922 = vpop.f32.mrf.mxu0
  %6923 = vmatprep.mubr.bf16.mxu0 0
  %6924 = vmatmul.mubr.bf16.gmra.mxu0 %v3163
  %v6925 = vpop.f32.mrf.mxu0
  %v6926 = vadd.f32 0.0, %v6925
  %v6927 = vpop.f32.mrf.mxu0
  %v6928 = vpop.f32.mrf.mxu0
  %v6929 = vadd.f32 0.0, %v6928
  %v6930 = vpop.f32.mrf.mxu0
  %6931 = vmatprep.mubr.bf16.mxu0 0
  %6932 = vmatmul.mubr.bf16.gmra.mxu0 %v3166
  %v6933 = vpop.f32.mrf.mxu0
  %v6934 = vadd.f32 0.0, %v6933
  %v6935 = vpop.f32.mrf.mxu0
  %v6936 = vpop.f32.mrf.mxu0
  %v6937 = vadd.f32 0.0, %v6936
  %v6938 = vpop.f32.mrf.mxu0
  %6939 = vmatprep.mubr.bf16.mxu0 0
  %6940 = vmatmul.mubr.bf16.gmra.mxu0 %v3169
  %v6941 = vpop.f32.mrf.mxu0
  %v6942 = vadd.f32 0.0, %v6941
  %v6943 = vpop.f32.mrf.mxu0
  %v6944 = vpop.f32.mrf.mxu0
  %v6945 = vadd.f32 0.0, %v6944
  %v6946 = vpop.f32.mrf.mxu0
  %6947 = vmatprep.mubr.bf16.mxu0 0
  %6948 = vmatmul.mubr.bf16.gmra.mxu0 %v3172
  %v6949 = vpop.f32.mrf.mxu0
  %v6950 = vadd.f32 0.0, %v6949
  %v6951 = vpop.f32.mrf.mxu0
  %v6952 = vpop.f32.mrf.mxu0
  %v6953 = vadd.f32 0.0, %v6952
  %v6954 = vpop.f32.mrf.mxu0
  %6955 = vmatprep.mubr.bf16.mxu0 0
  %6956 = vmatmul.mubr.bf16.gmra.mxu0 %v3175
  %v6957 = vpop.f32.mrf.mxu0
  %v6958 = vadd.f32 0.0, %v6957
  %v6959 = vpop.f32.mrf.mxu0
  %v6960 = vpop.f32.mrf.mxu0
  %v6961 = vadd.f32 0.0, %v6960
  %v6962 = vpop.f32.mrf.mxu0
  %6963 = vmatprep.mubr.bf16.mxu0 0
  %6964 = vmatmul.mubr.bf16.gmra.mxu0 %v3178
  %v6965 = vpop.f32.mrf.mxu0
  %v6966 = vadd.f32 0.0, %v6965
  %v6967 = vpop.f32.mrf.mxu0
  %v6968 = vpop.f32.mrf.mxu0
  %v6969 = vadd.f32 0.0, %v6968
  %v6970 = vpop.f32.mrf.mxu0
  %6971 = vmatprep.mubr.bf16.mxu0 0
  %6972 = vmatmul.mubr.bf16.gmra.mxu0 %v3181
  %v6973 = vpop.f32.mrf.mxu0
  %v6974 = vadd.f32 0.0, %v6973
  %v6975 = vpop.f32.mrf.mxu0
  %v6976 = vpop.f32.mrf.mxu0
  %v6977 = vadd.f32 0.0, %v6976
  %v6978 = vpop.f32.mrf.mxu0
  %6979 = vmatprep.mubr.bf16.mxu0 0
  %6980 = vmatmul.mubr.bf16.gmra.mxu0 %v3184
  %v6981 = vpop.f32.mrf.mxu0
  %v6982 = vadd.f32 0.0, %v6981
  %v6983 = vpop.f32.mrf.mxu0
  %v6984 = vpop.f32.mrf.mxu0
  %v6985 = vadd.f32 0.0, %v6984
  %v6986 = vpop.f32.mrf.mxu0
  %6987 = vmatprep.mubr.bf16.mxu0 0
  %6988 = vmatmul.mubr.bf16.gmra.mxu0 %v3187
  %v6989 = vpop.f32.mrf.mxu0
  %v6990 = vadd.f32 0.0, %v6989
  %v6991 = vpop.f32.mrf.mxu0
  %v6992 = vpop.f32.mrf.mxu0
  %v6993 = vadd.f32 0.0, %v6992
  %v6994 = vpop.f32.mrf.mxu0
  %6995 = vmatprep.mubr.bf16.mxu0 0
  %6996 = vmatmul.mubr.bf16.gmra.mxu0 %v3190
  %v6997 = vpop.f32.mrf.mxu0
  %v6998 = vadd.f32 0.0, %v6997
  %v6999 = vpop.f32.mrf.mxu0
  %v7000 = vpop.f32.mrf.mxu0
  %v7001 = vadd.f32 0.0, %v7000
  %v7002 = vpop.f32.mrf.mxu0
  %7003 = vmatprep.mubr.bf16.mxu0 0
  %7004 = vmatmul.mubr.bf16.gmra.mxu0 %v3193
  %v7005 = vpop.f32.mrf.mxu0
  %v7006 = vadd.f32 0.0, %v7005
  %v7007 = vpop.f32.mrf.mxu0
  %v7008 = vpop.f32.mrf.mxu0
  %v7009 = vadd.f32 0.0, %v7008
  %v7010 = vpop.f32.mrf.mxu0
  %7011 = vmatprep.mubr.bf16.mxu0 0
  %7012 = vmatmul.mubr.bf16.gmra.mxu0 %v3196
  %v7013 = vpop.f32.mrf.mxu0
  %v7014 = vadd.f32 0.0, %v7013
  %v7015 = vpop.f32.mrf.mxu0
  %v7016 = vpop.f32.mrf.mxu0
  %v7017 = vadd.f32 0.0, %v7016
  %v7018 = vpop.f32.mrf.mxu0
  %7019 = vmatprep.mubr.bf16.mxu0 0
  %7020 = vmatmul.mubr.bf16.gmra.mxu0 %v3199
  %v7021 = vpop.f32.mrf.mxu0
  %v7022 = vadd.f32 0.0, %v7021
  %v7023 = vpop.f32.mrf.mxu0
  %v7024 = vpop.f32.mrf.mxu0
  %v7025 = vadd.f32 0.0, %v7024
  %v7026 = vpop.f32.mrf.mxu0
  %7027 = vmatprep.mubr.bf16.mxu0 0
  %7028 = vmatmul.mubr.bf16.gmra.mxu0 %v3202
  %v7029 = vpop.f32.mrf.mxu0
  %v7030 = vadd.f32 0.0, %v7029
  %v7031 = vpop.f32.mrf.mxu0
  %v7032 = vpop.f32.mrf.mxu0
  %v7033 = vadd.f32 0.0, %v7032
  %v7034 = vpop.f32.mrf.mxu0
  %7035 = vmatprep.mubr.bf16.mxu0 0
  %7036 = vmatmul.mubr.bf16.gmra.mxu0 %v3205
  %v7037 = vpop.f32.mrf.mxu0
  %v7038 = vadd.f32 0.0, %v7037
  %v7039 = vpop.f32.mrf.mxu0
  %v7040 = vpop.f32.mrf.mxu0
  %v7041 = vadd.f32 0.0, %v7040
  %v7042 = vpop.f32.mrf.mxu0
  %7043 = vdwg.mxu0
  %v7044 = vld [vmem:[%s2955] sm:$0xf]
  %v7045 = vld [vmem:[%s2955 + $0x4] sm:$0xf]
  %v7046 = vld [vmem:[%s2955 + $0x8] sm:$0xf]
  %v7047 = vld [vmem:[%s2955 + $0xc] sm:$0xf]
  %v7048 = vld [vmem:[%s2955 + $0x10] sm:$0xf]
  %v7049 = vld [vmem:[%s2955 + $0x14] sm:$0xf]
  %v7050 = vld [vmem:[%s2955 + $0x18] sm:$0xf]
  %v7051 = vld [vmem:[%s2955 + $0x1c] sm:$0xf]
  %v7052 = vld [vmem:[%s2955 + $0x20] sm:$0xf]
  %v7053 = vld [vmem:[%s2955 + $0x24] sm:$0xf]
  %v7054 = vld [vmem:[%s2955 + $0x28] sm:$0xf]
  %v7055 = vld [vmem:[%s2955 + $0x2c] sm:$0xf]
  %v7056 = vld [vmem:[%s2955 + $0x30] sm:$0xf]
  %v7057 = vld [vmem:[%s2955 + $0x34] sm:$0xf]
  %v7058 = vld [vmem:[%s2955 + $0x38] sm:$0xf]
  %v7059 = vld [vmem:[%s2955 + $0x3c] sm:$0xf]
  %v7060 = vunpack.c.l.bf16 %v7044
  %v7061 = vunpack.c.l.bf16 %v7045
  %v7062 = vunpack.c.l.bf16 %v7046
  %v7063 = vunpack.c.l.bf16 %v7047
  %v7064 = vunpack.c.l.bf16 %v7048
  %v7065 = vunpack.c.l.bf16 %v7049
  %v7066 = vunpack.c.l.bf16 %v7050
  %v7067 = vunpack.c.l.bf16 %v7051
  %v7068 = vunpack.c.l.bf16 %v7052
  %v7069 = vunpack.c.l.bf16 %v7053
  %v7070 = vunpack.c.l.bf16 %v7054
  %v7071 = vunpack.c.l.bf16 %v7055
  %v7072 = vunpack.c.l.bf16 %v7056
  %v7073 = vunpack.c.l.bf16 %v7057
  %v7074 = vunpack.c.l.bf16 %v7058
  %v7075 = vunpack.c.l.bf16 %v7059
  %v7076 = vadd.f32 %v6918, %v7060
  %v7077 = vadd.f32 %v6921, %v7061
  %v7078 = vadd.f32 %v6926, %v7062
  %v7079 = vadd.f32 %v6929, %v7063
  %v7080 = vadd.f32 %v6934, %v7064
  %v7081 = vadd.f32 %v6937, %v7065
  %v7082 = vadd.f32 %v6942, %v7066
  %v7083 = vadd.f32 %v6945, %v7067
  %v7084 = vadd.f32 %v6950, %v7068
  %v7085 = vadd.f32 %v6953, %v7069
  %v7086 = vadd.f32 %v6958, %v7070
  %v7087 = vadd.f32 %v6961, %v7071
  %v7088 = vadd.f32 %v6966, %v7072
  %v7089 = vadd.f32 %v6969, %v7073
  %v7090 = vadd.f32 %v6974, %v7074
  %v7091 = vadd.f32 %v6977, %v7075
  %v7092 = vld [vmem:[#allocation3] sm:$0xf]
  %v7093 = vld [vmem:[#allocation3 + $0x4] sm:$0xf]
  %v7094 = vld [vmem:[#allocation3 + $0x8] sm:$0xf]
  %v7095 = vld [vmem:[#allocation3 + $0xc] sm:$0xf]
  %v7096 = vld [vmem:[#allocation3 + $0x10] sm:$0xf]
  %v7097 = vld [vmem:[#allocation3 + $0x14] sm:$0xf]
  %v7098 = vld [vmem:[#allocation3 + $0x18] sm:$0xf]
  %v7099 = vld [vmem:[#allocation3 + $0x1c] sm:$0xf]
  %v7100 = vld [vmem:[#allocation3 + $0x20] sm:$0xf]
  %v7101 = vld [vmem:[#allocation3 + $0x24] sm:$0xf]
  %v7102 = vld [vmem:[#allocation3 + $0x28] sm:$0xf]
  %v7103 = vld [vmem:[#allocation3 + $0x2c] sm:$0xf]
  %v7104 = vld [vmem:[#allocation3 + $0x30] sm:$0xf]
  %v7105 = vld [vmem:[#allocation3 + $0x34] sm:$0xf]
  %v7106 = vld [vmem:[#allocation3 + $0x38] sm:$0xf]
  %v7107 = vld [vmem:[#allocation3 + $0x3c] sm:$0xf]
  %v7108 = vunpack.c.l.bf16 %v7092
  %v7109 = vunpack.c.l.bf16 %v7093
  %v7110 = vunpack.c.l.bf16 %v7094
  %v7111 = vunpack.c.l.bf16 %v7095
  %v7112 = vunpack.c.l.bf16 %v7096
  %v7113 = vunpack.c.l.bf16 %v7097
  %v7114 = vunpack.c.l.bf16 %v7098
  %v7115 = vunpack.c.l.bf16 %v7099
  %v7116 = vunpack.c.l.bf16 %v7100
  %v7117 = vunpack.c.l.bf16 %v7101
  %v7118 = vunpack.c.l.bf16 %v7102
  %v7119 = vunpack.c.l.bf16 %v7103
  %v7120 = vunpack.c.l.bf16 %v7104
  %v7121 = vunpack.c.l.bf16 %v7105
  %v7122 = vunpack.c.l.bf16 %v7106
  %v7123 = vunpack.c.l.bf16 %v7107
  %v7124 = vadd.f32 %v6982, %v7108
  %v7125 = vadd.f32 %v6985, %v7109
  %v7126 = vadd.f32 %v6990, %v7110
  %v7127 = vadd.f32 %v6993, %v7111
  %v7128 = vadd.f32 %v6998, %v7112
  %v7129 = vadd.f32 %v7001, %v7113
  %v7130 = vadd.f32 %v7006, %v7114
  %v7131 = vadd.f32 %v7009, %v7115
  %v7132 = vadd.f32 %v7014, %v7116
  %v7133 = vadd.f32 %v7017, %v7117
  %v7134 = vadd.f32 %v7022, %v7118
  %v7135 = vadd.f32 %v7025, %v7119
  %v7136 = vadd.f32 %v7030, %v7120
  %v7137 = vadd.f32 %v7033, %v7121
  %v7138 = vadd.f32 %v7038, %v7122
  %v7139 = vadd.f32 %v7041, %v7123
  %v7140 = vxor.u32 %v7076, 2147483648
  %v7141 = vxor.u32 %v7077, 2147483648
  %v7142 = vxor.u32 %v7078, 2147483648
  %v7143 = vxor.u32 %v7079, 2147483648
  %v7144 = vmul.f32 %v7140, 1.442695
  %v7145 = vpow.pop %v7144
  %v7146 = vmul.f32 %v7141, 1.442695
  %v7147 = vpow.pop %v7146
  %v7148 = vmul.f32 %v7142, 1.442695
  %v7149 = vpow.pop %v7148
  %v7150 = vmul.f32 %v7143, 1.442695
  %v7151 = vpow.pop %v7150
  %v7152 = vadd.f32 %v7145, 1.0
  %v7153 = vadd.f32 %v7147, 1.0
  %v7154 = vadd.f32 %v7149, 1.0
  %v7155 = vadd.f32 %v7151, 1.0
  %v7156 = vrcp.pop %v7152
  %v7157 = vmul.f32 1.0, %v7156
  %v7158 = vrcp.pop %v7153
  %v7159 = vmul.f32 1.0, %v7158
  %v7160 = vrcp.pop %v7154
  %v7161 = vmul.f32 1.0, %v7160
  %v7162 = vrcp.pop %v7155
  %v7163 = vmul.f32 1.0, %v7162
  %v7164 = vxor.u32 %v7080, 2147483648
  %v7165 = vxor.u32 %v7081, 2147483648
  %v7166 = vxor.u32 %v7082, 2147483648
  %v7167 = vxor.u32 %v7083, 2147483648
  %v7168 = vmul.f32 %v7164, 1.442695
  %v7169 = vpow.pop %v7168
  %v7170 = vmul.f32 %v7165, 1.442695
  %v7171 = vpow.pop %v7170
  %v7172 = vmul.f32 %v7166, 1.442695
  %v7173 = vpow.pop %v7172
  %v7174 = vmul.f32 %v7167, 1.442695
  %v7175 = vpow.pop %v7174
  %v7176 = vadd.f32 %v7169, 1.0
  %v7177 = vadd.f32 %v7171, 1.0
  %v7178 = vadd.f32 %v7173, 1.0
  %v7179 = vadd.f32 %v7175, 1.0
  %v7180 = vrcp.pop %v7176
  %v7181 = vmul.f32 1.0, %v7180
  %v7182 = vrcp.pop %v7177
  %v7183 = vmul.f32 1.0, %v7182
  %v7184 = vrcp.pop %v7178
  %v7185 = vmul.f32 1.0, %v7184
  %v7186 = vrcp.pop %v7179
  %v7187 = vmul.f32 1.0, %v7186
  %v7188 = vtanh.pop %v7084
  %v7189 = vtanh.pop %v7085
  %v7190 = vtanh.pop %v7086
  %v7191 = vtanh.pop %v7087
  %v7192 = vxor.u32 %v7088, 2147483648
  %v7193 = vxor.u32 %v7089, 2147483648
  %v7194 = vxor.u32 %v7090, 2147483648
  %v7195 = vxor.u32 %v7091, 2147483648
  %v7196 = vmul.f32 %v7192, 1.442695
  %v7197 = vpow.pop %v7196
  %v7198 = vmul.f32 %v7193, 1.442695
  %v7199 = vpow.pop %v7198
  %v7200 = vmul.f32 %v7194, 1.442695
  %v7201 = vpow.pop %v7200
  %v7202 = vmul.f32 %v7195, 1.442695
  %v7203 = vpow.pop %v7202
  %v7204 = vadd.f32 %v7197, 1.0
  %v7205 = vadd.f32 %v7199, 1.0
  %v7206 = vadd.f32 %v7201, 1.0
  %v7207 = vadd.f32 %v7203, 1.0
  %v7208 = vrcp.pop %v7204
  %v7209 = vmul.f32 1.0, %v7208
  %v7210 = vrcp.pop %v7205
  %v7211 = vmul.f32 1.0, %v7210
  %v7212 = vrcp.pop %v7206
  %v7213 = vmul.f32 1.0, %v7212
  %v7214 = vrcp.pop %v7207
  %v7215 = vmul.f32 1.0, %v7214
  %v7216 = vmul.f32 %v7181, %v6721
  %v7217 = vmul.f32 %v7183, %v6722
  %v7218 = vmul.f32 %v7185, %v6723
  %v7219 = vmul.f32 %v7187, %v6724
  %v7220 = vmul.f32 %v7157, %v7188
  %v7221 = vmul.f32 %v7159, %v7189
  %v7222 = vmul.f32 %v7161, %v7190
  %v7223 = vmul.f32 %v7163, %v7191
  %v7224 = vadd.f32 %v7216, %v7220
  %v7225 = vadd.f32 %v7217, %v7221
  %v7226 = vadd.f32 %v7218, %v7222
  %v7227 = vadd.f32 %v7219, %v7223
  %v7228 = vtanh.pop %v7224
  %v7229 = vtanh.pop %v7225
  %v7230 = vtanh.pop %v7226
  %v7231 = vtanh.pop %v7227
  %v7232 = vmul.f32 %v7209, %v7228
  %v7233 = vmul.f32 %v7211, %v7229
  %v7234 = vmul.f32 %v7213, %v7230
  %v7235 = vmul.f32 %v7215, %v7231
  %v7236 = vxor.u32 %v7124, 2147483648
  %v7237 = vxor.u32 %v7125, 2147483648
  %v7238 = vxor.u32 %v7126, 2147483648
  %v7239 = vxor.u32 %v7127, 2147483648
  %v7240 = vmul.f32 %v7236, 1.442695
  %v7241 = vpow.pop %v7240
  %v7242 = vmul.f32 %v7237, 1.442695
  %v7243 = vpow.pop %v7242
  %v7244 = vmul.f32 %v7238, 1.442695
  %v7245 = vpow.pop %v7244
  %v7246 = vmul.f32 %v7239, 1.442695
  %v7247 = vpow.pop %v7246
  %v7248 = vadd.f32 %v7241, 1.0
  %v7249 = vadd.f32 %v7243, 1.0
  %v7250 = vadd.f32 %v7245, 1.0
  %v7251 = vadd.f32 %v7247, 1.0
  %v7252 = vrcp.pop %v7248
  %v7253 = vmul.f32 1.0, %v7252
  %v7254 = vrcp.pop %v7249
  %v7255 = vmul.f32 1.0, %v7254
  %v7256 = vrcp.pop %v7250
  %v7257 = vmul.f32 1.0, %v7256
  %v7258 = vrcp.pop %v7251
  %v7259 = vmul.f32 1.0, %v7258
  %v7260 = vxor.u32 %v7128, 2147483648
  %v7261 = vxor.u32 %v7129, 2147483648
  %v7262 = vxor.u32 %v7130, 2147483648
  %v7263 = vxor.u32 %v7131, 2147483648
  %v7264 = vmul.f32 %v7260, 1.442695
  %v7265 = vpow.pop %v7264
  %v7266 = vmul.f32 %v7261, 1.442695
  %v7267 = vpow.pop %v7266
  %v7268 = vmul.f32 %v7262, 1.442695
  %v7269 = vpow.pop %v7268
  %v7270 = vmul.f32 %v7263, 1.442695
  %v7271 = vpow.pop %v7270
  %v7272 = vadd.f32 %v7265, 1.0
  %v7273 = vadd.f32 %v7267, 1.0
  %v7274 = vadd.f32 %v7269, 1.0
  %v7275 = vadd.f32 %v7271, 1.0
  %v7276 = vrcp.pop %v7272
  %v7277 = vmul.f32 1.0, %v7276
  %v7278 = vrcp.pop %v7273
  %v7279 = vmul.f32 1.0, %v7278
  %v7280 = vrcp.pop %v7274
  %v7281 = vmul.f32 1.0, %v7280
  %v7282 = vrcp.pop %v7275
  %v7283 = vmul.f32 1.0, %v7282
  %v7284 = vtanh.pop %v7132
  %v7285 = vtanh.pop %v7133
  %v7286 = vtanh.pop %v7134
  %v7287 = vtanh.pop %v7135
  %v7288 = vxor.u32 %v7136, 2147483648
  %v7289 = vxor.u32 %v7137, 2147483648
  %v7290 = vxor.u32 %v7138, 2147483648
  %v7291 = vxor.u32 %v7139, 2147483648
  %v7292 = vmul.f32 %v7288, 1.442695
  %v7293 = vpow.pop %v7292
  %v7294 = vmul.f32 %v7289, 1.442695
  %v7295 = vpow.pop %v7294
  %v7296 = vmul.f32 %v7290, 1.442695
  %v7297 = vpow.pop %v7296
  %v7298 = vmul.f32 %v7291, 1.442695
  %v7299 = vpow.pop %v7298
  %v7300 = vadd.f32 %v7293, 1.0
  %v7301 = vadd.f32 %v7295, 1.0
  %v7302 = vadd.f32 %v7297, 1.0
  %v7303 = vadd.f32 %v7299, 1.0
  %v7304 = vrcp.pop %v7300
  %v7305 = vmul.f32 1.0, %v7304
  %v7306 = vrcp.pop %v7301
  %v7307 = vmul.f32 1.0, %v7306
  %v7308 = vrcp.pop %v7302
  %v7309 = vmul.f32 1.0, %v7308
  %v7310 = vrcp.pop %v7303
  %v7311 = vmul.f32 1.0, %v7310
  %v7312 = vmul.f32 %v7277, %v6825
  %v7313 = vmul.f32 %v7279, %v6826
  %v7314 = vmul.f32 %v7281, %v6827
  %v7315 = vmul.f32 %v7283, %v6828
  %v7316 = vmul.f32 %v7253, %v7284
  %v7317 = vmul.f32 %v7255, %v7285
  %v7318 = vmul.f32 %v7257, %v7286
  %v7319 = vmul.f32 %v7259, %v7287
  %v7320 = vadd.f32 %v7312, %v7316
  %v7321 = vadd.f32 %v7313, %v7317
  %v7322 = vadd.f32 %v7314, %v7318
  %v7323 = vadd.f32 %v7315, %v7319
  %v7324 = vtanh.pop %v7320
  %v7325 = vtanh.pop %v7321
  %v7326 = vtanh.pop %v7322
  %v7327 = vtanh.pop %v7323
  %v7328 = vmul.f32 %v7305, %v7324
  %v7329 = vmul.f32 %v7307, %v7325
  %v7330 = vmul.f32 %v7309, %v7326
  %v7331 = vmul.f32 %v7311, %v7327
  %v7332 = vsel %vm3677, %v7232, 0.0
  %v7333 = vsel %vm3677, %v7233, 0.0
  %v7334 = vsel %vm3677, %v7234, 0.0
  %v7335 = vsel %vm3677, %v7235, 0.0
  %v7336 = vpack.c.bf16 %v7333, %v7332
  %v7337 = vpack.c.bf16 %v7335, %v7334
  %v7340 = vunpack.c.l.b16 %v7336
  %v7341 = vunpack.c.h.b16 %v7336
  %v7342 = vunpack.c.l.b16 %v7337
  %v7343 = vunpack.c.h.b16 %v7337
  %v7344 = vpack.c.b16 %v7340, %v7340
  %v7345 = vpack.c.b16 %v7341, %v7341
  %v7346 = vpack.c.b16 %v7342, %v7342
  %v7347 = vpack.c.b16 %v7343, %v7343
  %s7352 = scalar_lea.vmem [#allocation4], 112
  %7353 = vst.msk [vmem:[%s7352] sm:$0xf] %vm632, %v7344
  %7354 = vst.msk [vmem:[%s7352 + $0x4] sm:$0xf] %vm632, %v7345
  %7355 = vst.msk [vmem:[%s7352 + $0x8] sm:$0xf] %vm632, %v7346
  %7356 = vst.msk [vmem:[%s7352 + $0xc] sm:$0xf] %vm632, %v7347
  %v7357 = vsel %vm3567, %v7328, 0.0
  %v7358 = vsel %vm3567, %v7329, 0.0
  %v7359 = vsel %vm3567, %v7330, 0.0
  %v7360 = vsel %vm3567, %v7331, 0.0
  %v7361 = vpack.c.bf16 %v7358, %v7357
  %v7362 = vpack.c.bf16 %v7360, %v7359
  %v7365 = vunpack.c.l.b16 %v7361
  %v7366 = vunpack.c.h.b16 %v7361
  %v7367 = vunpack.c.l.b16 %v7362
  %v7368 = vunpack.c.h.b16 %v7362
  %v7369 = vpack.c.b16 %v7365, %v7365
  %v7370 = vpack.c.b16 %v7366, %v7366
  %v7371 = vpack.c.b16 %v7367, %v7367
  %v7372 = vpack.c.b16 %v7368, %v7368
  %7377 = vst.msk [vmem:[#allocation5] sm:$0xf] %vm632, %v7369
  %7378 = vst.msk [vmem:[#allocation5 + $0x4] sm:$0xf] %vm632, %v7370
  %7379 = vst.msk [vmem:[#allocation5 + $0x8] sm:$0xf] %vm632, %v7371
  %7380 = vst.msk [vmem:[#allocation5 + $0xc] sm:$0xf] %vm632, %v7372
  %v7381 = vld [vmem:[#allocation4] sm:$0xf]
  %v7382 = vld [vmem:[#allocation4 + $0x4] sm:$0xf]
  %v7383 = vld [vmem:[#allocation4 + $0x8] sm:$0xf]
  %v7384 = vld [vmem:[#allocation4 + $0xc] sm:$0xf]
  %v7385 = vld [vmem:[#allocation4 + $0x10] sm:$0xf]
  %v7386 = vld [vmem:[#allocation4 + $0x14] sm:$0xf]
  %v7387 = vld [vmem:[#allocation4 + $0x18] sm:$0xf]
  %v7388 = vld [vmem:[#allocation4 + $0x1c] sm:$0xf]
  %v7389 = vld [vmem:[#allocation4 + $0x20] sm:$0xf]
  %v7390 = vld [vmem:[#allocation4 + $0x24] sm:$0xf]
  %v7391 = vld [vmem:[#allocation4 + $0x28] sm:$0xf]
  %v7392 = vld [vmem:[#allocation4 + $0x2c] sm:$0xf]
  %v7393 = vld [vmem:[#allocation4 + $0x30] sm:$0xf]
  %v7394 = vld [vmem:[#allocation4 + $0x34] sm:$0xf]
  %v7395 = vld [vmem:[#allocation4 + $0x38] sm:$0xf]
  %v7396 = vld [vmem:[#allocation4 + $0x3c] sm:$0xf]
  %v7397 = vld [vmem:[#allocation4 + $0x40] sm:$0xf]
  %v7398 = vld [vmem:[#allocation4 + $0x44] sm:$0xf]
  %v7399 = vld [vmem:[#allocation4 + $0x48] sm:$0xf]
  %v7400 = vld [vmem:[#allocation4 + $0x4c] sm:$0xf]
  %v7401 = vld [vmem:[#allocation4 + $0x50] sm:$0xf]
  %v7402 = vld [vmem:[#allocation4 + $0x54] sm:$0xf]
  %v7403 = vld [vmem:[#allocation4 + $0x58] sm:$0xf]
  %v7404 = vld [vmem:[#allocation4 + $0x5c] sm:$0xf]
  %v7405 = vld [vmem:[#allocation4 + $0x60] sm:$0xf]
  %v7406 = vld [vmem:[#allocation4 + $0x64] sm:$0xf]
  %v7407 = vld [vmem:[#allocation4 + $0x68] sm:$0xf]
  %v7408 = vld [vmem:[#allocation4 + $0x6c] sm:$0xf]
  %v7409 = vld [vmem:[#allocation4 + $0x70] sm:$0xf]
  %v7410 = vld [vmem:[#allocation4 + $0x74] sm:$0xf]
  %v7411 = vld [vmem:[#allocation4 + $0x78] sm:$0xf]
  %v7412 = vld [vmem:[#allocation4 + $0x7c] sm:$0xf]
  %v7413 = vunpack.c.l.bf16 %v7381
  %v7414 = vunpack.c.l.bf16 %v7382
  %v7415 = vunpack.c.l.bf16 %v7383
  %v7416 = vunpack.c.l.bf16 %v7384
  %v7417 = vunpack.c.l.bf16 %v7385
  %v7418 = vunpack.c.l.bf16 %v7386
  %v7419 = vunpack.c.l.bf16 %v7387
  %v7420 = vunpack.c.l.bf16 %v7388
  %v7421 = vunpack.c.l.bf16 %v7389
  %v7422 = vunpack.c.l.bf16 %v7390
  %v7423 = vunpack.c.l.bf16 %v7391
  %v7424 = vunpack.c.l.bf16 %v7392
  %v7425 = vunpack.c.l.bf16 %v7393
  %v7426 = vunpack.c.l.bf16 %v7394
  %v7427 = vunpack.c.l.bf16 %v7395
  %v7428 = vunpack.c.l.bf16 %v7396
  %v7429 = vunpack.c.l.bf16 %v7397
  %v7430 = vunpack.c.l.bf16 %v7398
  %v7431 = vunpack.c.l.bf16 %v7399
  %v7432 = vunpack.c.l.bf16 %v7400
  %v7433 = vunpack.c.l.bf16 %v7401
  %v7434 = vunpack.c.l.bf16 %v7402
  %v7435 = vunpack.c.l.bf16 %v7403
  %v7436 = vunpack.c.l.bf16 %v7404
  %v7437 = vunpack.c.l.bf16 %v7405
  %v7438 = vunpack.c.l.bf16 %v7406
  %v7439 = vunpack.c.l.bf16 %v7407
  %v7440 = vunpack.c.l.bf16 %v7408
  %v7441 = vunpack.c.l.bf16 %v7409
  %v7442 = vunpack.c.l.bf16 %v7410
  %v7443 = vunpack.c.l.bf16 %v7411
  %v7444 = vunpack.c.l.bf16 %v7412
  %v7445 = vld [vmem:[#allocation5] sm:$0xf]
  %v7446 = vld [vmem:[#allocation5 + $0x4] sm:$0xf]
  %v7447 = vld [vmem:[#allocation5 + $0x8] sm:$0xf]
  %v7448 = vld [vmem:[#allocation5 + $0xc] sm:$0xf]
  %v7449 = vld [vmem:[#allocation5 + $0x10] sm:$0xf]
  %v7450 = vld [vmem:[#allocation5 + $0x14] sm:$0xf]
  %v7451 = vld [vmem:[#allocation5 + $0x18] sm:$0xf]
  %v7452 = vld [vmem:[#allocation5 + $0x1c] sm:$0xf]
  %v7453 = vld [vmem:[#allocation5 + $0x20] sm:$0xf]
  %v7454 = vld [vmem:[#allocation5 + $0x24] sm:$0xf]
  %v7455 = vld [vmem:[#allocation5 + $0x28] sm:$0xf]
  %v7456 = vld [vmem:[#allocation5 + $0x2c] sm:$0xf]
  %v7457 = vld [vmem:[#allocation5 + $0x30] sm:$0xf]
  %v7458 = vld [vmem:[#allocation5 + $0x34] sm:$0xf]
  %v7459 = vld [vmem:[#allocation5 + $0x38] sm:$0xf]
  %v7460 = vld [vmem:[#allocation5 + $0x3c] sm:$0xf]
  %v7461 = vld [vmem:[#allocation5 + $0x40] sm:$0xf]
  %v7462 = vld [vmem:[#allocation5 + $0x44] sm:$0xf]
  %v7463 = vld [vmem:[#allocation5 + $0x48] sm:$0xf]
  %v7464 = vld [vmem:[#allocation5 + $0x4c] sm:$0xf]
  %v7465 = vld [vmem:[#allocation5 + $0x50] sm:$0xf]
  %v7466 = vld [vmem:[#allocation5 + $0x54] sm:$0xf]
  %v7467 = vld [vmem:[#allocation5 + $0x58] sm:$0xf]
  %v7468 = vld [vmem:[#allocation5 + $0x5c] sm:$0xf]
  %v7469 = vld [vmem:[#allocation5 + $0x60] sm:$0xf]
  %v7470 = vld [vmem:[#allocation5 + $0x64] sm:$0xf]
  %v7471 = vld [vmem:[#allocation5 + $0x68] sm:$0xf]
  %v7472 = vld [vmem:[#allocation5 + $0x6c] sm:$0xf]
  %v7473 = vld [vmem:[#allocation5 + $0x70] sm:$0xf]
  %v7474 = vld [vmem:[#allocation5 + $0x74] sm:$0xf]
  %v7475 = vld [vmem:[#allocation5 + $0x78] sm:$0xf]
  %v7476 = vld [vmem:[#allocation5 + $0x7c] sm:$0xf]
  %v7477 = vunpack.c.l.bf16 %v7445
  %v7478 = vunpack.c.l.bf16 %v7446
  %v7479 = vunpack.c.l.bf16 %v7447
  %v7480 = vunpack.c.l.bf16 %v7448
  %v7481 = vunpack.c.l.bf16 %v7449
  %v7482 = vunpack.c.l.bf16 %v7450
  %v7483 = vunpack.c.l.bf16 %v7451
  %v7484 = vunpack.c.l.bf16 %v7452
  %v7485 = vunpack.c.l.bf16 %v7453
  %v7486 = vunpack.c.l.bf16 %v7454
  %v7487 = vunpack.c.l.bf16 %v7455
  %v7488 = vunpack.c.l.bf16 %v7456
  %v7489 = vunpack.c.l.bf16 %v7457
  %v7490 = vunpack.c.l.bf16 %v7458
  %v7491 = vunpack.c.l.bf16 %v7459
  %v7492 = vunpack.c.l.bf16 %v7460
  %v7493 = vunpack.c.l.bf16 %v7461
  %v7494 = vunpack.c.l.bf16 %v7462
  %v7495 = vunpack.c.l.bf16 %v7463
  %v7496 = vunpack.c.l.bf16 %v7464
  %v7497 = vunpack.c.l.bf16 %v7465
  %v7498 = vunpack.c.l.bf16 %v7466
  %v7499 = vunpack.c.l.bf16 %v7467
  %v7500 = vunpack.c.l.bf16 %v7468
  %v7501 = vunpack.c.l.bf16 %v7469
  %v7502 = vunpack.c.l.bf16 %v7470
  %v7503 = vunpack.c.l.bf16 %v7471
  %v7504 = vunpack.c.l.bf16 %v7472
  %v7505 = vunpack.c.l.bf16 %v7473
  %v7506 = vunpack.c.l.bf16 %v7474
  %v7507 = vunpack.c.l.bf16 %v7475
  %v7508 = vunpack.c.l.bf16 %v7476
  %v7509 = vld [vmem:[%s5] sm:$0xff]
  %v7510 = vld [vmem:[%s5 + $0x8] sm:$0xff]
  %v7511 = vld [vmem:[%s5 + $0x10] sm:$0xff]
  %v7512 = vld [vmem:[%s5 + $0x18] sm:$0xff]
  %7514 = vset.pattern.permute.xlu0 0
  %7515 = vperm.xlu0 %7514, %v7509
  %v7516 = vpop.permute.xlu0 %7515
  %7519 = vset.pattern.permute.xlu0 0
  %7520 = vperm.xlu0 %7519, %v7510
  %v7521 = vpop.permute.xlu0 %7520
  %7524 = vset.pattern.permute.xlu0 0
  %7525 = vperm.xlu0 %7524, %v7511
  %v7526 = vpop.permute.xlu0 %7525
  %7529 = vset.pattern.permute.xlu0 0
  %7530 = vperm.xlu0 %7529, %v7512
  %v7531 = vpop.permute.xlu0 %7530
  %v7533 = vmul.f32 %v7413, %v7516
  %v7534 = vmul.f32 %v7414, %v7521
  %v7535 = vmul.f32 %v7415, %v7526
  %v7536 = vmul.f32 %v7416, %v7531
  %v7537 = vmul.f32 %v7417, %v7516
  %v7538 = vmul.f32 %v7418, %v7521
  %v7539 = vmul.f32 %v7419, %v7526
  %v7540 = vmul.f32 %v7420, %v7531
  %v7541 = vmul.f32 %v7421, %v7516
  %v7542 = vmul.f32 %v7422, %v7521
  %v7543 = vmul.f32 %v7423, %v7526
  %v7544 = vmul.f32 %v7424, %v7531
  %v7545 = vmul.f32 %v7425, %v7516
  %v7546 = vmul.f32 %v7426, %v7521
  %v7547 = vmul.f32 %v7427, %v7526
  %v7548 = vmul.f32 %v7428, %v7531
  %v7549 = vmul.f32 %v7429, %v7516
  %v7550 = vmul.f32 %v7430, %v7521
  %v7551 = vmul.f32 %v7431, %v7526
  %v7552 = vmul.f32 %v7432, %v7531
  %v7553 = vmul.f32 %v7433, %v7516
  %v7554 = vmul.f32 %v7434, %v7521
  %v7555 = vmul.f32 %v7435, %v7526
  %v7556 = vmul.f32 %v7436, %v7531
  %v7557 = vmul.f32 %v7437, %v7516
  %v7558 = vmul.f32 %v7438, %v7521
  %v7559 = vmul.f32 %v7439, %v7526
  %v7560 = vmul.f32 %v7440, %v7531
  %v7561 = vmul.f32 %v7441, %v7516
  %v7562 = vmul.f32 %v7442, %v7521
  %v7563 = vmul.f32 %v7443, %v7526
  %v7564 = vmul.f32 %v7444, %v7531
  %vm7565 = vcmask 64512
  %v7566 = vsel %vm7565, %v7533, 0.0
  %v7567 = vsel %vm7565, %v7534, 0.0
  %v7568 = vadd.f32 %v7566, %v7567
  %v7569 = vsel %vm7565, %v7535, 0.0
  %v7570 = vadd.f32 %v7568, %v7569
  %v7571 = vsel %vm7565, %v7536, 0.0
  %v7572 = vadd.f32 %v7570, %v7571
  %v7573 = vrot.slane %v7572, 4
  %v7574 = vadd.f32 %v7572, %v7573
  %v7575 = vrot.slane %v7574, 2
  %v7576 = vadd.f32 %v7574, %v7575
  %v7577 = vrot.slane %v7576, 1
  %v7578 = vadd.f32 %v7576, %v7577
  %v7579 = vsel %vm7565, %v7537, 0.0
  %v7580 = vsel %vm7565, %v7538, 0.0
  %v7581 = vadd.f32 %v7579, %v7580
  %v7582 = vsel %vm7565, %v7539, 0.0
  %v7583 = vadd.f32 %v7581, %v7582
  %v7584 = vsel %vm7565, %v7540, 0.0
  %v7585 = vadd.f32 %v7583, %v7584
  %v7586 = vrot.slane %v7585, 4
  %v7587 = vadd.f32 %v7585, %v7586
  %v7588 = vrot.slane %v7587, 2
  %v7589 = vadd.f32 %v7587, %v7588
  %v7590 = vrot.slane %v7589, 1
  %v7591 = vadd.f32 %v7589, %v7590
  %v7592 = vsel %vm7565, %v7541, 0.0
  %v7593 = vsel %vm7565, %v7542, 0.0
  %v7594 = vadd.f32 %v7592, %v7593
  %v7595 = vsel %vm7565, %v7543, 0.0
  %v7596 = vadd.f32 %v7594, %v7595
  %v7597 = vsel %vm7565, %v7544, 0.0
  %v7598 = vadd.f32 %v7596, %v7597
  %v7599 = vrot.slane %v7598, 4
  %v7600 = vadd.f32 %v7598, %v7599
  %v7601 = vrot.slane %v7600, 2
  %v7602 = vadd.f32 %v7600, %v7601
  %v7603 = vrot.slane %v7602, 1
  %v7604 = vadd.f32 %v7602, %v7603
  %v7605 = vsel %vm7565, %v7545, 0.0
  %v7606 = vsel %vm7565, %v7546, 0.0
  %v7607 = vadd.f32 %v7605, %v7606
  %v7608 = vsel %vm7565, %v7547, 0.0
  %v7609 = vadd.f32 %v7607, %v7608
  %v7610 = vsel %vm7565, %v7548, 0.0
  %v7611 = vadd.f32 %v7609, %v7610
  %v7612 = vrot.slane %v7611, 4
  %v7613 = vadd.f32 %v7611, %v7612
  %v7614 = vrot.slane %v7613, 2
  %v7615 = vadd.f32 %v7613, %v7614
  %v7616 = vrot.slane %v7615, 1
  %v7617 = vadd.f32 %v7615, %v7616
  %v7618 = vsel %vm7565, %v7549, 0.0
  %v7619 = vsel %vm7565, %v7550, 0.0
  %v7620 = vadd.f32 %v7618, %v7619
  %v7621 = vsel %vm7565, %v7551, 0.0
  %v7622 = vadd.f32 %v7620, %v7621
  %v7623 = vsel %vm7565, %v7552, 0.0
  %v7624 = vadd.f32 %v7622, %v7623
  %v7625 = vrot.slane %v7624, 4
  %v7626 = vadd.f32 %v7624, %v7625
  %v7627 = vrot.slane %v7626, 2
  %v7628 = vadd.f32 %v7626, %v7627
  %v7629 = vrot.slane %v7628, 1
  %v7630 = vadd.f32 %v7628, %v7629
  %v7631 = vsel %vm7565, %v7553, 0.0
  %v7632 = vsel %vm7565, %v7554, 0.0
  %v7633 = vadd.f32 %v7631, %v7632
  %v7634 = vsel %vm7565, %v7555, 0.0
  %v7635 = vadd.f32 %v7633, %v7634
  %v7636 = vsel %vm7565, %v7556, 0.0
  %v7637 = vadd.f32 %v7635, %v7636
  %v7638 = vrot.slane %v7637, 4
  %v7639 = vadd.f32 %v7637, %v7638
  %v7640 = vrot.slane %v7639, 2
  %v7641 = vadd.f32 %v7639, %v7640
  %v7642 = vrot.slane %v7641, 1
  %v7643 = vadd.f32 %v7641, %v7642
  %v7644 = vsel %vm7565, %v7557, 0.0
  %v7645 = vsel %vm7565, %v7558, 0.0
  %v7646 = vadd.f32 %v7644, %v7645
  %v7647 = vsel %vm7565, %v7559, 0.0
  %v7648 = vadd.f32 %v7646, %v7647
  %v7649 = vsel %vm7565, %v7560, 0.0
  %v7650 = vadd.f32 %v7648, %v7649
  %v7651 = vrot.slane %v7650, 4
  %v7652 = vadd.f32 %v7650, %v7651
  %v7653 = vrot.slane %v7652, 2
  %v7654 = vadd.f32 %v7652, %v7653
  %v7655 = vrot.slane %v7654, 1
  %v7656 = vadd.f32 %v7654, %v7655
  %v7657 = vsel %vm7565, %v7561, 0.0
  %v7658 = vsel %vm7565, %v7562, 0.0
  %v7659 = vadd.f32 %v7657, %v7658
  %v7660 = vsel %vm7565, %v7563, 0.0
  %v7661 = vadd.f32 %v7659, %v7660
  %v7662 = vsel %vm7565, %v7564, 0.0
  %v7663 = vadd.f32 %v7661, %v7662
  %v7664 = vrot.slane %v7663, 4
  %v7665 = vadd.f32 %v7663, %v7664
  %v7666 = vrot.slane %v7665, 2
  %v7667 = vadd.f32 %v7665, %v7666
  %v7668 = vrot.slane %v7667, 1
  %v7669 = vadd.f32 %v7667, %v7668
  %v7670 = vld [vmem:[%s6] sm:$0xff]
  %v7671 = vld [vmem:[%s6 + $0x8] sm:$0xff]
  %v7672 = vld [vmem:[%s6 + $0x10] sm:$0xff]
  %v7673 = vld [vmem:[%s6 + $0x18] sm:$0xff]
  %7675 = vset.pattern.permute.xlu0 0
  %7676 = vperm.xlu0 %7675, %v7670
  %v7677 = vpop.permute.xlu0 %7676
  %7680 = vset.pattern.permute.xlu0 0
  %7681 = vperm.xlu0 %7680, %v7671
  %v7682 = vpop.permute.xlu0 %7681
  %7685 = vset.pattern.permute.xlu0 0
  %7686 = vperm.xlu0 %7685, %v7672
  %v7687 = vpop.permute.xlu0 %7686
  %7690 = vset.pattern.permute.xlu0 0
  %7691 = vperm.xlu0 %7690, %v7673
  %v7692 = vpop.permute.xlu0 %7691
  %v7694 = vmul.f32 %v7477, %v7677
  %v7695 = vmul.f32 %v7478, %v7682
  %v7696 = vmul.f32 %v7479, %v7687
  %v7697 = vmul.f32 %v7480, %v7692
  %v7698 = vmul.f32 %v7481, %v7677
  %v7699 = vmul.f32 %v7482, %v7682
  %v7700 = vmul.f32 %v7483, %v7687
  %v7701 = vmul.f32 %v7484, %v7692
  %v7702 = vmul.f32 %v7485, %v7677
  %v7703 = vmul.f32 %v7486, %v7682
  %v7704 = vmul.f32 %v7487, %v7687
  %v7705 = vmul.f32 %v7488, %v7692
  %v7706 = vmul.f32 %v7489, %v7677
  %v7707 = vmul.f32 %v7490, %v7682
  %v7708 = vmul.f32 %v7491, %v7687
  %v7709 = vmul.f32 %v7492, %v7692
  %v7710 = vmul.f32 %v7493, %v7677
  %v7711 = vmul.f32 %v7494, %v7682
  %v7712 = vmul.f32 %v7495, %v7687
  %v7713 = vmul.f32 %v7496, %v7692
  %v7714 = vmul.f32 %v7497, %v7677
  %v7715 = vmul.f32 %v7498, %v7682
  %v7716 = vmul.f32 %v7499, %v7687
  %v7717 = vmul.f32 %v7500, %v7692
  %v7718 = vmul.f32 %v7501, %v7677
  %v7719 = vmul.f32 %v7502, %v7682
  %v7720 = vmul.f32 %v7503, %v7687
  %v7721 = vmul.f32 %v7504, %v7692
  %v7722 = vmul.f32 %v7505, %v7677
  %v7723 = vmul.f32 %v7506, %v7682
  %v7724 = vmul.f32 %v7507, %v7687
  %v7725 = vmul.f32 %v7508, %v7692
  %v7726 = vsel %vm7565, %v7694, 0.0
  %v7727 = vsel %vm7565, %v7695, 0.0
  %v7728 = vadd.f32 %v7726, %v7727
  %v7729 = vsel %vm7565, %v7696, 0.0
  %v7730 = vadd.f32 %v7728, %v7729
  %v7731 = vsel %vm7565, %v7697, 0.0
  %v7732 = vadd.f32 %v7730, %v7731
  %v7733 = vrot.slane %v7732, 4
  %v7734 = vadd.f32 %v7732, %v7733
  %v7735 = vrot.slane %v7734, 2
  %v7736 = vadd.f32 %v7734, %v7735
  %v7737 = vrot.slane %v7736, 1
  %v7738 = vadd.f32 %v7736, %v7737
  %v7739 = vsel %vm7565, %v7698, 0.0
  %v7740 = vsel %vm7565, %v7699, 0.0
  %v7741 = vadd.f32 %v7739, %v7740
  %v7742 = vsel %vm7565, %v7700, 0.0
  %v7743 = vadd.f32 %v7741, %v7742
  %v7744 = vsel %vm7565, %v7701, 0.0
  %v7745 = vadd.f32 %v7743, %v7744
  %v7746 = vrot.slane %v7745, 4
  %v7747 = vadd.f32 %v7745, %v7746
  %v7748 = vrot.slane %v7747, 2
  %v7749 = vadd.f32 %v7747, %v7748
  %v7750 = vrot.slane %v7749, 1
  %v7751 = vadd.f32 %v7749, %v7750
  %v7752 = vsel %vm7565, %v7702, 0.0
  %v7753 = vsel %vm7565, %v7703, 0.0
  %v7754 = vadd.f32 %v7752, %v7753
  %v7755 = vsel %vm7565, %v7704, 0.0
  %v7756 = vadd.f32 %v7754, %v7755
  %v7757 = vsel %vm7565, %v7705, 0.0
  %v7758 = vadd.f32 %v7756, %v7757
  %v7759 = vrot.slane %v7758, 4
  %v7760 = vadd.f32 %v7758, %v7759
  %v7761 = vrot.slane %v7760, 2
  %v7762 = vadd.f32 %v7760, %v7761
  %v7763 = vrot.slane %v7762, 1
  %v7764 = vadd.f32 %v7762, %v7763
  %v7765 = vsel %vm7565, %v7706, 0.0
  %v7766 = vsel %vm7565, %v7707, 0.0
  %v7767 = vadd.f32 %v7765, %v7766
  %v7768 = vsel %vm7565, %v7708, 0.0
  %v7769 = vadd.f32 %v7767, %v7768
  %v7770 = vsel %vm7565, %v7709, 0.0
  %v7771 = vadd.f32 %v7769, %v7770
  %v7772 = vrot.slane %v7771, 4
  %v7773 = vadd.f32 %v7771, %v7772
  %v7774 = vrot.slane %v7773, 2
  %v7775 = vadd.f32 %v7773, %v7774
  %v7776 = vrot.slane %v7775, 1
  %v7777 = vadd.f32 %v7775, %v7776
  %v7778 = vsel %vm7565, %v7710, 0.0
  %v7779 = vsel %vm7565, %v7711, 0.0
  %v7780 = vadd.f32 %v7778, %v7779
  %v7781 = vsel %vm7565, %v7712, 0.0
  %v7782 = vadd.f32 %v7780, %v7781
  %v7783 = vsel %vm7565, %v7713, 0.0
  %v7784 = vadd.f32 %v7782, %v7783
  %v7785 = vrot.slane %v7784, 4
  %v7786 = vadd.f32 %v7784, %v7785
  %v7787 = vrot.slane %v7786, 2
  %v7788 = vadd.f32 %v7786, %v7787
  %v7789 = vrot.slane %v7788, 1
  %v7790 = vadd.f32 %v7788, %v7789
  %v7791 = vsel %vm7565, %v7714, 0.0
  %v7792 = vsel %vm7565, %v7715, 0.0
  %v7793 = vadd.f32 %v7791, %v7792
  %v7794 = vsel %vm7565, %v7716, 0.0
  %v7795 = vadd.f32 %v7793, %v7794
  %v7796 = vsel %vm7565, %v7717, 0.0
  %v7797 = vadd.f32 %v7795, %v7796
  %v7798 = vrot.slane %v7797, 4
  %v7799 = vadd.f32 %v7797, %v7798
  %v7800 = vrot.slane %v7799, 2
  %v7801 = vadd.f32 %v7799, %v7800
  %v7802 = vrot.slane %v7801, 1
  %v7803 = vadd.f32 %v7801, %v7802
  %v7804 = vsel %vm7565, %v7718, 0.0
  %v7805 = vsel %vm7565, %v7719, 0.0
  %v7806 = vadd.f32 %v7804, %v7805
  %v7807 = vsel %vm7565, %v7720, 0.0
  %v7808 = vadd.f32 %v7806, %v7807
  %v7809 = vsel %vm7565, %v7721, 0.0
  %v7810 = vadd.f32 %v7808, %v7809
  %v7811 = vrot.slane %v7810, 4
  %v7812 = vadd.f32 %v7810, %v7811
  %v7813 = vrot.slane %v7812, 2
  %v7814 = vadd.f32 %v7812, %v7813
  %v7815 = vrot.slane %v7814, 1
  %v7816 = vadd.f32 %v7814, %v7815
  %v7817 = vsel %vm7565, %v7722, 0.0
  %v7818 = vsel %vm7565, %v7723, 0.0
  %v7819 = vadd.f32 %v7817, %v7818
  %v7820 = vsel %vm7565, %v7724, 0.0
  %v7821 = vadd.f32 %v7819, %v7820
  %v7822 = vsel %vm7565, %v7725, 0.0
  %v7823 = vadd.f32 %v7821, %v7822
  %v7824 = vrot.slane %v7823, 4
  %v7825 = vadd.f32 %v7823, %v7824
  %v7826 = vrot.slane %v7825, 2
  %v7827 = vadd.f32 %v7825, %v7826
  %v7828 = vrot.slane %v7827, 1
  %v7829 = vadd.f32 %v7827, %v7828
  %v7830 = vadd.f32 %v7578, %v7738
  %v7831 = vadd.f32 %v7591, %v7751
  %v7832 = vadd.f32 %v7604, %v7764
  %v7833 = vadd.f32 %v7617, %v7777
  %v7834 = vadd.f32 %v7630, %v7790
  %v7835 = vadd.f32 %v7643, %v7803
  %v7836 = vadd.f32 %v7656, %v7816
  %v7837 = vadd.f32 %v7669, %v7829
  %v7838 = vld [vmem:[#allocation6] sm:$0x1]
  %v7840 = vlaneseq
  %v7841 = vshrl.u32 %v7840, 7
  %v7842 = vsub.s32 0, %v7841
  %v7843 = vrot.slane %v7838, %v7842
  %7844 = vset.pattern.permute.xlu0 0
  %7845 = vperm.xlu0 %7844, %v7843
  %v7846 = vpop.permute.xlu0 %7845
  %v7848 = vadd.f32 %v7830, %v7846
  %v7849 = vadd.f32 %v7831, %v7846
  %v7850 = vadd.f32 %v7832, %v7846
  %v7851 = vadd.f32 %v7833, %v7846
  %v7852 = vadd.f32 %v7834, %v7846
  %v7853 = vadd.f32 %v7835, %v7846
  %v7854 = vadd.f32 %v7836, %v7846
  %v7855 = vadd.f32 %v7837, %v7846
  %v7856 = vlaneseq
  %v7857 = vshrl.u32 %v7856, 7
  %v7858 = vlaneseq
  %v7859 = vshrl.u32 %v7858, 7
  %v7860 = vsub.s32 0, %v7859
  %v7861 = vrot.slane %v3077, %v7860
  %vm7862 = vcmp.lt.s32.totalorder %v7857, %v7861
  %vm7871 = vcmask 1041409
  %v7872 = vsel %vm7871, %v7849, %v7848
  %vm7873 = vcmask 1042434
  %v7874 = vsel %vm7873, %v7850, %v7872
  %vm7875 = vcmask 1043459
  %v7876 = vsel %vm7875, %v7851, %v7874
  %vm7877 = vcmask 1044484
  %v7878 = vsel %vm7877, %v7852, %v7876
  %vm7879 = vcmask 1045509
  %v7880 = vsel %vm7879, %v7853, %v7878
  %vm7881 = vcmask 1046534
  %v7882 = vsel %vm7881, %v7854, %v7880
  %vm7883 = vcmask 1047559
  %v7884 = vsel %vm7883, %v7855, %v7882
  %v7886 = vsel %vm7862, %v7884, -inf
  %v7887 = vsel %vm7565, %v7886, -inf
  %v7888 = vrot.slane %v7887, 4
  %v7889 = vmax.f32 %v7887, %v7888
  %v7890 = vrot.slane %v7889, 2
  %v7891 = vmax.f32 %v7889, %v7890
  %v7892 = vrot.slane %v7891, 1
  %v7893 = vmax.f32 %v7891, %v7892
  %v7894 = vsub.f32 %v7886, %v7893
  %v7895 = vmul.f32 %v7894, 1.442695
  %v7896 = vpow.pop %v7895
  %v7897 = vsel %vm7862, 1, 0
  %v7898 = vcvt.s32.f32 %v7897
  %v7899 = vmul.f32 %v7896, %v7898
  %v7900 = vsel %vm7565, %v7899, 0.0
  %v7901 = vrot.slane %v7900, 4
  %v7902 = vadd.f32 %v7900, %v7901
  %v7903 = vrot.slane %v7902, 2
  %v7904 = vadd.f32 %v7902, %v7903
  %v7905 = vrot.slane %v7904, 1
  %v7906 = vadd.f32 %v7904, %v7905
  %v7907 = vrcp.pop %v7906
  %v7908 = vmul.f32 %v7899, %v7907
  %v7910 = vcombine.high %v7908, %v7908
  %v7912 = vunpack.c.l.s4 1966171168
  %v7913 = vunpack.c.0.s8 %v7912
  %v7914 = vlaneseq
  %v7915 = vshrl.u32 %v7914, 7
  %v7916 = vsub.s32 %v7913, %v7915
  %v7917 = vrot.slane %v7908, %v7916
  %v7919 = vunpack.c.l.s4 1966171168
  %v7920 = vunpack.c.0.s8 %v7919
  %v7921 = vlaneseq
  %v7922 = vshrl.u32 %v7921, 7
  %v7923 = vsub.s32 %v7920, %v7922
  %v7924 = vrot.slane %v7910, %v7923
  %v7925 = vcombine.high %v7917, %v7917
  %v7926 = vcombine.high %v7924, %v7924
  %v7928 = vunpack.c.l.s4 1966171168
  %v7929 = vunpack.c.0.s8 %v7928
  %v7930 = vlaneseq
  %v7931 = vshrl.u32 %v7930, 7
  %v7932 = vsub.s32 %v7929, %v7931
  %v7933 = vrot.slane %v7917, %v7932
  %v7935 = vunpack.c.l.s4 1966171168
  %v7936 = vunpack.c.0.s8 %v7935
  %v7937 = vlaneseq
  %v7938 = vshrl.u32 %v7937, 7
  %v7939 = vsub.s32 %v7936, %v7938
  %v7940 = vrot.slane %v7924, %v7939
  %v7942 = vunpack.c.l.s4 1966171168
  %v7943 = vunpack.c.0.s8 %v7942
  %v7944 = vlaneseq
  %v7945 = vshrl.u32 %v7944, 7
  %v7946 = vsub.s32 %v7943, %v7945
  %v7947 = vrot.slane %v7925, %v7946
  %v7949 = vunpack.c.l.s4 1966171168
  %v7950 = vunpack.c.0.s8 %v7949
  %v7951 = vlaneseq
  %v7952 = vshrl.u32 %v7951, 7
  %v7953 = vsub.s32 %v7950, %v7952
  %v7954 = vrot.slane %v7926, %v7953
  %v7955 = vcombine.high %v7933, %v7933
  %v7956 = vcombine.high %v7940, %v7940
  %v7957 = vcombine.high %v7947, %v7947
  %v7958 = vcombine.high %v7954, %v7954
  %v7959 = vlaneseq
  %v7960 = vshrl.u32 %v7959, 7
  %v7961 = vsub.s32 0, %v7960
  %v7962 = vrot.slane %v7933, %v7961
  %v7963 = vlaneseq
  %v7964 = vshrl.u32 %v7963, 7
  %v7965 = vsub.s32 0, %v7964
  %v7966 = vrot.slane %v7947, %v7965
  %v7967 = vlaneseq
  %v7968 = vshrl.u32 %v7967, 7
  %v7969 = vsub.s32 0, %v7968
  %v7970 = vrot.slane %v7955, %v7969
  %v7971 = vlaneseq
  %v7972 = vshrl.u32 %v7971, 7
  %v7973 = vsub.s32 0, %v7972
  %v7974 = vrot.slane %v7957, %v7973
  %v7975 = vlaneseq
  %v7976 = vshrl.u32 %v7975, 7
  %v7977 = vsub.s32 0, %v7976
  %v7978 = vrot.slane %v7940, %v7977
  %v7979 = vlaneseq
  %v7980 = vshrl.u32 %v7979, 7
  %v7981 = vsub.s32 0, %v7980
  %v7982 = vrot.slane %v7954, %v7981
  %v7983 = vlaneseq
  %v7984 = vshrl.u32 %v7983, 7
  %v7985 = vsub.s32 0, %v7984
  %v7986 = vrot.slane %v7956, %v7985
  %v7987 = vlaneseq
  %v7988 = vshrl.u32 %v7987, 7
  %v7989 = vsub.s32 0, %v7988
  %v7990 = vrot.slane %v7958, %v7989
  %v7999 = vmul.f32 %v7962, %v7413
  %v8000 = vmul.f32 %v7962, %v7414
  %v8001 = vmul.f32 %v7962, %v7415
  %v8002 = vmul.f32 %v7962, %v7416
  %v8003 = vmul.f32 %v7966, %v7417
  %v8004 = vmul.f32 %v7966, %v7418
  %v8005 = vmul.f32 %v7966, %v7419
  %v8006 = vmul.f32 %v7966, %v7420
  %v8007 = vmul.f32 %v7970, %v7421
  %v8008 = vmul.f32 %v7970, %v7422
  %v8009 = vmul.f32 %v7970, %v7423
  %v8010 = vmul.f32 %v7970, %v7424
  %v8011 = vmul.f32 %v7974, %v7425
  %v8012 = vmul.f32 %v7974, %v7426
  %v8013 = vmul.f32 %v7974, %v7427
  %v8014 = vmul.f32 %v7974, %v7428
  %v8015 = vmul.f32 %v7978, %v7429
  %v8016 = vmul.f32 %v7978, %v7430
  %v8017 = vmul.f32 %v7978, %v7431
  %v8018 = vmul.f32 %v7978, %v7432
  %v8019 = vmul.f32 %v7982, %v7433
  %v8020 = vmul.f32 %v7982, %v7434
  %v8021 = vmul.f32 %v7982, %v7435
  %v8022 = vmul.f32 %v7982, %v7436
  %v8023 = vmul.f32 %v7986, %v7437
  %v8024 = vmul.f32 %v7986, %v7438
  %v8025 = vmul.f32 %v7986, %v7439
  %v8026 = vmul.f32 %v7986, %v7440
  %v8027 = vmul.f32 %v7990, %v7441
  %v8028 = vmul.f32 %v7990, %v7442
  %v8029 = vmul.f32 %v7990, %v7443
  %v8030 = vmul.f32 %v7990, %v7444
  %v8031 = vsel %vm7565, %v7999, 0.0
  %v8032 = vsel %vm7565, %v8003, 0.0
  %v8033 = vadd.f32 %v8031, %v8032
  %v8034 = vsel %vm7565, %v8007, 0.0
  %v8035 = vadd.f32 %v8033, %v8034
  %v8036 = vsel %vm7565, %v8011, 0.0
  %v8037 = vadd.f32 %v8035, %v8036
  %v8038 = vsel %vm7565, %v8015, 0.0
  %v8039 = vadd.f32 %v8037, %v8038
  %v8040 = vsel %vm7565, %v8019, 0.0
  %v8041 = vadd.f32 %v8039, %v8040
  %v8042 = vsel %vm7565, %v8023, 0.0
  %v8043 = vadd.f32 %v8041, %v8042
  %v8044 = vsel %vm7565, %v8027, 0.0
  %v8045 = vadd.f32 %v8043, %v8044
  %v8046 = vsel %vm7565, %v8000, 0.0
  %v8047 = vsel %vm7565, %v8004, 0.0
  %v8048 = vadd.f32 %v8046, %v8047
  %v8049 = vsel %vm7565, %v8008, 0.0
  %v8050 = vadd.f32 %v8048, %v8049
  %v8051 = vsel %vm7565, %v8012, 0.0
  %v8052 = vadd.f32 %v8050, %v8051
  %v8053 = vsel %vm7565, %v8016, 0.0
  %v8054 = vadd.f32 %v8052, %v8053
  %v8055 = vsel %vm7565, %v8020, 0.0
  %v8056 = vadd.f32 %v8054, %v8055
  %v8057 = vsel %vm7565, %v8024, 0.0
  %v8058 = vadd.f32 %v8056, %v8057
  %v8059 = vsel %vm7565, %v8028, 0.0
  %v8060 = vadd.f32 %v8058, %v8059
  %v8061 = vsel %vm7565, %v8001, 0.0
  %v8062 = vsel %vm7565, %v8005, 0.0
  %v8063 = vadd.f32 %v8061, %v8062
  %v8064 = vsel %vm7565, %v8009, 0.0
  %v8065 = vadd.f32 %v8063, %v8064
  %v8066 = vsel %vm7565, %v8013, 0.0
  %v8067 = vadd.f32 %v8065, %v8066
  %v8068 = vsel %vm7565, %v8017, 0.0
  %v8069 = vadd.f32 %v8067, %v8068
  %v8070 = vsel %vm7565, %v8021, 0.0
  %v8071 = vadd.f32 %v8069, %v8070
  %v8072 = vsel %vm7565, %v8025, 0.0
  %v8073 = vadd.f32 %v8071, %v8072
  %v8074 = vsel %vm7565, %v8029, 0.0
  %v8075 = vadd.f32 %v8073, %v8074
  %v8076 = vsel %vm7565, %v8002, 0.0
  %v8077 = vsel %vm7565, %v8006, 0.0
  %v8078 = vadd.f32 %v8076, %v8077
  %v8079 = vsel %vm7565, %v8010, 0.0
  %v8080 = vadd.f32 %v8078, %v8079
  %v8081 = vsel %vm7565, %v8014, 0.0
  %v8082 = vadd.f32 %v8080, %v8081
  %v8083 = vsel %vm7565, %v8018, 0.0
  %v8084 = vadd.f32 %v8082, %v8083
  %v8085 = vsel %vm7565, %v8022, 0.0
  %v8086 = vadd.f32 %v8084, %v8085
  %v8087 = vsel %vm7565, %v8026, 0.0
  %v8088 = vadd.f32 %v8086, %v8087
  %v8089 = vsel %vm7565, %v8030, 0.0
  %v8090 = vadd.f32 %v8088, %v8089
  %v8091 = vmul.f32 %v7962, %v7477
  %v8092 = vmul.f32 %v7962, %v7478
  %v8093 = vmul.f32 %v7962, %v7479
  %v8094 = vmul.f32 %v7962, %v7480
  %v8095 = vmul.f32 %v7966, %v7481
  %v8096 = vmul.f32 %v7966, %v7482
  %v8097 = vmul.f32 %v7966, %v7483
  %v8098 = vmul.f32 %v7966, %v7484
  %v8099 = vmul.f32 %v7970, %v7485
  %v8100 = vmul.f32 %v7970, %v7486
  %v8101 = vmul.f32 %v7970, %v7487
  %v8102 = vmul.f32 %v7970, %v7488
  %v8103 = vmul.f32 %v7974, %v7489
  %v8104 = vmul.f32 %v7974, %v7490
  %v8105 = vmul.f32 %v7974, %v7491
  %v8106 = vmul.f32 %v7974, %v7492
  %v8107 = vmul.f32 %v7978, %v7493
  %v8108 = vmul.f32 %v7978, %v7494
  %v8109 = vmul.f32 %v7978, %v7495
  %v8110 = vmul.f32 %v7978, %v7496
  %v8111 = vmul.f32 %v7982, %v7497
  %v8112 = vmul.f32 %v7982, %v7498
  %v8113 = vmul.f32 %v7982, %v7499
  %v8114 = vmul.f32 %v7982, %v7500
  %v8115 = vmul.f32 %v7986, %v7501
  %v8116 = vmul.f32 %v7986, %v7502
  %v8117 = vmul.f32 %v7986, %v7503
  %v8118 = vmul.f32 %v7986, %v7504
  %v8119 = vmul.f32 %v7990, %v7505
  %v8120 = vmul.f32 %v7990, %v7506
  %v8121 = vmul.f32 %v7990, %v7507
  %v8122 = vmul.f32 %v7990, %v7508
  %v8123 = vsel %vm7565, %v8091, 0.0
  %v8124 = vsel %vm7565, %v8095, 0.0
  %v8125 = vadd.f32 %v8123, %v8124
  %v8126 = vsel %vm7565, %v8099, 0.0
  %v8127 = vadd.f32 %v8125, %v8126
  %v8128 = vsel %vm7565, %v8103, 0.0
  %v8129 = vadd.f32 %v8127, %v8128
  %v8130 = vsel %vm7565, %v8107, 0.0
  %v8131 = vadd.f32 %v8129, %v8130
  %v8132 = vsel %vm7565, %v8111, 0.0
  %v8133 = vadd.f32 %v8131, %v8132
  %v8134 = vsel %vm7565, %v8115, 0.0
  %v8135 = vadd.f32 %v8133, %v8134
  %v8136 = vsel %vm7565, %v8119, 0.0
  %v8137 = vadd.f32 %v8135, %v8136
  %v8138 = vsel %vm7565, %v8092, 0.0
  %v8139 = vsel %vm7565, %v8096, 0.0
  %v8140 = vadd.f32 %v8138, %v8139
  %v8141 = vsel %vm7565, %v8100, 0.0
  %v8142 = vadd.f32 %v8140, %v8141
  %v8143 = vsel %vm7565, %v8104, 0.0
  %v8144 = vadd.f32 %v8142, %v8143
  %v8145 = vsel %vm7565, %v8108, 0.0
  %v8146 = vadd.f32 %v8144, %v8145
  %v8147 = vsel %vm7565, %v8112, 0.0
  %v8148 = vadd.f32 %v8146, %v8147
  %v8149 = vsel %vm7565, %v8116, 0.0
  %v8150 = vadd.f32 %v8148, %v8149
  %v8151 = vsel %vm7565, %v8120, 0.0
  %v8152 = vadd.f32 %v8150, %v8151
  %v8153 = vsel %vm7565, %v8093, 0.0
  %v8154 = vsel %vm7565, %v8097, 0.0
  %v8155 = vadd.f32 %v8153, %v8154
  %v8156 = vsel %vm7565, %v8101, 0.0
  %v8157 = vadd.f32 %v8155, %v8156
  %v8158 = vsel %vm7565, %v8105, 0.0
  %v8159 = vadd.f32 %v8157, %v8158
  %v8160 = vsel %vm7565, %v8109, 0.0
  %v8161 = vadd.f32 %v8159, %v8160
  %v8162 = vsel %vm7565, %v8113, 0.0
  %v8163 = vadd.f32 %v8161, %v8162
  %v8164 = vsel %vm7565, %v8117, 0.0
  %v8165 = vadd.f32 %v8163, %v8164
  %v8166 = vsel %vm7565, %v8121, 0.0
  %v8167 = vadd.f32 %v8165, %v8166
  %v8168 = vsel %vm7565, %v8094, 0.0
  %v8169 = vsel %vm7565, %v8098, 0.0
  %v8170 = vadd.f32 %v8168, %v8169
  %v8171 = vsel %vm7565, %v8102, 0.0
  %v8172 = vadd.f32 %v8170, %v8171
  %v8173 = vsel %vm7565, %v8106, 0.0
  %v8174 = vadd.f32 %v8172, %v8173
  %v8175 = vsel %vm7565, %v8110, 0.0
  %v8176 = vadd.f32 %v8174, %v8175
  %v8177 = vsel %vm7565, %v8114, 0.0
  %v8178 = vadd.f32 %v8176, %v8177
  %v8179 = vsel %vm7565, %v8118, 0.0
  %v8180 = vadd.f32 %v8178, %v8179
  %v8181 = vsel %vm7565, %v8122, 0.0
  %v8182 = vadd.f32 %v8180, %v8181
  %v8183 = vpack.c.bf16 %v8060, %v8045
  %v8184 = vpack.c.bf16 %v8090, %v8075
  %v8185 = vpack.c.bf16 %v8152, %v8137
  %v8186 = vpack.c.bf16 %v8182, %v8167
  %v8187 = vld [vmem:[%s8] sm:$0xf]
  %v8188 = vld [vmem:[%s9] sm:$0xff]
  %8190 = vset.pattern.permute.xlu0 0
  %8191 = vperm.xlu0 %8190, %v8188
  %v8192 = vpop.permute.xlu0 %8191
  %v8195 = vsel %vm3158, %v8187, 0
  %8197 = vmatprep.subr.bf16.mxu0 0
  %8198 = vmatpush1.bf16.msra.mxu0 0
  %8199 = vmatprep.subr.bf16.mxu0 0
  %8200 = vmatpush1.bf16.msra.mxu0 0
  %8201 = vmatprep.subr.bf16.mxu0 0
  %8202 = vmatpush1.bf16.msra.mxu0 0
  %8203 = vmatprep.subr.bf16.mxu0 0
  %8204 = vmatpush1.bf16.msra.mxu0 0
  %8205 = vmatprep.subr.bf16.mxu0 0
  %8206 = vmatpush1.bf16.msra.mxu0 %v8186
  %8207 = vmatprep.subr.bf16.mxu0 0
  %8208 = vmatpush1.bf16.msra.mxu0 %v8185
  %8209 = vmatprep.subr.bf16.mxu0 0
  %8210 = vmatpush1.bf16.msra.mxu0 %v8184
  %8211 = vmatprep.subr.bf16.mxu0 0
  %8212 = vmatpush1.bf16.msra.mxu0 %v8183
  %8213 = vmatprep.subr.bf16.mxu0 0
  %8214 = vmatpush2.bf16.msra.mxu0 0
  %8215 = vmatprep.subr.bf16.mxu0 0
  %8216 = vmatpush2.bf16.msra.mxu0 0
  %8217 = vmatprep.subr.bf16.mxu0 0
  %8218 = vmatpush2.bf16.msra.mxu0 0
  %8219 = vmatprep.subr.bf16.mxu0 0
  %8220 = vmatpush2.bf16.msra.mxu0 0
  %8221 = vmatprep.subr.bf16.mxu0 0
  %8222 = vmatpush2.bf16.msra.mxu0 0
  %8223 = vmatprep.subr.bf16.mxu0 0
  %8224 = vmatpush2.bf16.msra.mxu0 0
  %8225 = vmatprep.subr.bf16.mxu0 0
  %8226 = vmatpush2.bf16.msra.mxu0 0
  %8227 = vmatprep.subr.bf16.mxu0 0
  %8228 = vmatpush2.bf16.msra.mxu0 0
  %8229 = vmatprep.mubr.bf16.mxu0 0
  %8230 = vmatmul.mubr.bf16.gmra.mxu0 %v8195
  %v8231 = vpop.f32.mrf.mxu0
  %v8232 = vadd.f32 %v8192, %v8231
  %v8233 = vpop.f32.mrf.mxu0
  %v8234 = vpop.f32.mrf.mxu0
  %v8235 = vpop.f32.mrf.mxu0
  %8236 = vdwg.mxu0
  %8237 = vst.msk [vmem:[%s10] sm:$0xff] %vm7565, %v8232
  // Predicated region
  $region42: #{birnn_attention.1} parent=0 // pred_check
    _
  $region43: #{birnn_attention.1} parent=0 // pred_check_branch
    %8239 = sbr.rel (0) target = $region45
  $region44: #{birnn_attention.1} parent=0 // pred_region
    _
  $region45: #{birnn_attention.1} parent=0 // pred_fallthru
    _
  // Predicated region
  $region46: #{birnn_attention.1} parent=0 // pred_check
    _
  $region47: #{birnn_attention.1} parent=0 // pred_check_branch
    %8241 = sbr.rel (0) target = $region49
  $region48: #{birnn_attention.1} parent=0 // pred_region
    _
  $region49: #{birnn_attention.1} parent=0 // pred_fallthru
    _

</llo_original>
